<compile_context>
chip_gen: v5e
topology: v5e:2x2
jax: 0.10.0
libtpu: 0.0.40
codegen_flags: <defaults>
</compile_context>

<pallas_src>
import math
from functools import partial

import jax
import jax.numpy as jnp
from jax import lax
from jax.experimental import pallas as pl
from jax.experimental.pallas import tpu as pltpu

# ----- model hyperparameters (match the PyTorch module defaults) -----
IN_FEATURES = 68
IN_PAD = 128                 # input features zero-padded to a full lane tile
D_MODEL = 64
NHEAD = 4
HEAD_DIM = D_MODEL // NHEAD
NUM_LAYERS = 3
DIM_FF = 128
OUT_DIM = 12
LN_EPS = 1e-5
MAX_TBS = 512                # cap on TB*S so (TB*S)^2 score/mask tiles stay small
NEG_INF = -1e30              # large finite negative (avoids exp(-inf - -inf) NaNs)


def _layernorm(x, gamma, beta):
    mu = jnp.mean(x, axis=-1, keepdims=True)
    var = jnp.mean((x - mu) ** 2, axis=-1, keepdims=True)
    return (x - mu) * lax.rsqrt(var + LN_EPS) * gamma + beta


# ----------------------------- Pallas kernel -----------------------------
def transformer_time_kernel(
    x_ref,       # (TB*S, 128)          input, features zero-padded to 128
    pe_ref,      # (TB*S, D)            positional enc tiled per item + input bias
    win_ref,     # (128, D)             pre-transposed, zero-padded rows
    wqkv_ref,    # (L, D, 3D)           fused, pre-transposed, Q-scale folded in
    bqkv_ref,    # (L, 1, 3D)           Q-scale folded in
    woh_ref,     # (L, NHEAD, HD, D)    per-head output projection
    bo_ref,      # (L, 1, D)
    w1_ref,      # (L, D, FF)
    b1_ref,      # (L, 1, FF)
    w2_ref,      # (L, FF, D)
    b2_ref,      # (L, 1, D)
    g1_ref,      # (L, 1, D)
    be1_ref,     # (L, 1, D)
    g2_ref,      # (L, 1, D)
    be2_ref,     # (L, 1, D)
    pool_ref,    # (TB, TB*S)           block-diagonal mean-pool matrix
    wout_ref,    # (D, OUT_DIM)
    bout_ref,    # (1, OUT_DIM)
    o_ref,       # (TB, OUT_DIM)
    h_scr,       # VMEM (TB*S, D)
    qkv_scr,     # VMEM (TB*S, 3D)
    mask_scr,    # VMEM (TB*S, TB*S)
    *, tb, seq,
):
    tbs = tb * seq

    # Block-diagonal additive mask, built in-kernel (no O(tbs^2) HBM operand).
    ri = lax.broadcasted_iota(jnp.int32, (tbs, tbs), 0).astype(jnp.float32)
    ci = lax.broadcasted_iota(jnp.int32, (tbs, tbs), 1).astype(jnp.float32)
    inv_s = 1.0 / float(seq)
    same_item = jnp.floor((ri + 0.5) * inv_s) == jnp.floor((ci + 0.5) * inv_s)
    mask_scr[...] = jnp.where(same_item, 0.0, NEG_INF)

    # 1) input projection (lane-aligned K=128) + positional encoding (+ input bias)
    h_scr[...] = (jnp.dot(x_ref[...], win_ref[...],
                          preferred_element_type=jnp.float32) + pe_ref[...])

    # 2) transformer encoder layers (post-norm, relu; dropout = identity),
    #    fully unrolled so all weight slices are static.
    for l in range(NUM_LAYERS):
        h = h_scr[...]                                              # (tbs, D)

        # fused QKV projection: one (tbs, D) x (D, 3D) matmul, lane-dense store
        qkv_scr[...] = (jnp.dot(h, wqkv_ref[l],
                                preferred_element_type=jnp.float32)
                        + bqkv_ref[l])

        # batched per-head attention across all TB items (block-diag masked)
        attn = jnp.zeros((tbs, D_MODEL), jnp.float32)
        for hh in range(NHEAD):
            qo = hh * HEAD_DIM
            ko = D_MODEL + hh * HEAD_DIM
            vo = 2 * D_MODEL + hh * HEAD_DIM
            q_h = qkv_scr[:, qo:qo + HEAD_DIM]                      # (tbs, HD)
            k_h = qkv_scr[:, ko:ko + HEAD_DIM]
            v_h = qkv_scr[:, vo:vo + HEAD_DIM]

            sc = lax.dot_general(q_h, k_h, (((1,), (1,)), ((), ())),
                                 preferred_element_type=jnp.float32)  # (tbs, tbs)
            sc = sc + mask_scr[...]
            sc = sc - jnp.max(sc, axis=-1, keepdims=True)
            p = jnp.exp(sc)
            p = p * pl.reciprocal(jnp.sum(p, axis=-1, keepdims=True),
                                  approx=True)

            # fold Wo per head: attn += P_h @ (V_h @ Wo_h), dense K=tbs, N=64
            vwo = jnp.dot(v_h, woh_ref[l, hh],
                          preferred_element_type=jnp.float32)       # (tbs, D)
            attn = attn + jnp.dot(p, vwo, preferred_element_type=jnp.float32)

        attn = attn + bo_ref[l]
        h1 = _layernorm(h + attn, g1_ref[l], be1_ref[l])

        # feed-forward block
        f = jnp.dot(h1, w1_ref[l], preferred_element_type=jnp.float32) + b1_ref[l]
        f = jnp.maximum(f, 0.0)
        f = jnp.dot(f, w2_ref[l], preferred_element_type=jnp.float32) + b2_ref[l]
        h_scr[...] = _layernorm(h1 + f, g2_ref[l], be2_ref[l])

    # 3) mean pool over sequence (block-diagonal matmul) + output projection
    pooled = jnp.dot(pool_ref[...], h_scr[...],
                     preferred_element_type=jnp.float32)            # (tb, D)
    o_ref[...] = (jnp.dot(pooled, wout_ref[...],
                          preferred_element_type=jnp.float32) + bout_ref[...])


# -------------------- wrapper: weight prep + pallas_call --------------------
def _prepare_kernel_params(params, tb, seq):
    (pe, win, bin_, wqkv, bqkv, wo, bo, w1, b1, w2, b2,
     g1, be1, g2, be2, wout, bout) = params
    D, HD, NH, L = D_MODEL, HEAD_DIM, NHEAD, NUM_LAYERS
    scale = 1.0 / math.sqrt(HD)

    # fused, pre-transposed QKV weight (in, out) with softmax scale folded into Q
    wqkv_t = jnp.transpose(wqkv, (0, 2, 1))                       # (L, D, 3D)
    col_scale = jnp.concatenate([jnp.full((D,), scale, jnp.float32),
                                 jnp.ones((2 * D,), jnp.float32)])
    wqkv_t = wqkv_t * col_scale
    bqkv_s = bqkv * col_scale                                     # (L, 1, 3D)

    # per-head output projection: attn = sum_h O_h @ Wo_h
    wo_heads = jnp.transpose(wo, (0, 2, 1)).reshape(L, NH, HD, D)  # (L,H,HD,D)

    w1_t = jnp.transpose(w1, (0, 2, 1))                           # (L, D, FF)
    w2_t = jnp.transpose(w2, (0, 2, 1))                           # (L, FF, D)

    # input projection: transpose + zero-pad rows 68 -> 128 (lane-aligned K)
    win_t = jnp.zeros((IN_PAD, D), jnp.float32).at[:IN_FEATURES].set(win.T)
    wout_t = wout.T                                               # (D, OUT_DIM)

    pe_plus = jnp.tile(pe[:seq], (tb, 1)) + bin_                  # (tb*seq, D)
    pool = jnp.kron(jnp.eye(tb, dtype=jnp.float32),
                    jnp.full((1, seq), 1.0 / seq, jnp.float32))   # (tb, tb*seq)

    return (pe_plus, win_t, wqkv_t, bqkv_s, wo_heads, bo, w1_t, b1, w2_t, b2,
            g1, be1, g2, be2, pool, wout_t, bout)


def transformer_time_model(x_bct, params, tb=32):
    """x_bct: (B, 68, S) float32 -> (B, 12) float32."""
    B, C, S = x_bct.shape
    assert C == IN_FEATURES
    # merged batch per grid step, capped so (TB*S)^2 attention tiles stay small
    tb_cap = max(1, MAX_TBS // S)
    TB = max(1, min(tb, B, tb_cap))
    B_pad = ((B + TB - 1) // TB) * TB
    G = B_pad // TB

    x_bsf = jnp.transpose(x_bct, (0, 2, 1))                       # (B, S, 68)
    x_bsf = jnp.pad(x_bsf, ((0, B_pad - B), (0, 0), (0, IN_PAD - C)))
    x_g = x_bsf.reshape(G, TB * S, IN_PAD)                        # item-major rows

    weights = _prepare_kernel_params(params, TB, S)

    def full_spec(a):
        n = a.ndim
        return pl.BlockSpec(a.shape, lambda b, n=n: (0,) * n)

    in_specs = ([pl.BlockSpec((None, TB * S, IN_PAD), lambda b: (b, 0, 0))]
                + [full_spec(w) for w in weights])

    kernel = partial(transformer_time_kernel, tb=TB, seq=S)

    out = pl.pallas_call(
        kernel,
        out_shape=jax.ShapeDtypeStruct((G, TB, OUT_DIM), jnp.float32),
        grid_spec=pltpu.PrefetchScalarGridSpec(
            num_scalar_prefetch=0,
            grid=(G,),
            in_specs=in_specs,
            out_specs=pl.BlockSpec((None, TB, OUT_DIM), lambda b: (b, 0, 0)),
            scratch_shapes=[
                pltpu.VMEM((TB * S, D_MODEL), jnp.float32),        # h
                pltpu.VMEM((TB * S, 3 * D_MODEL), jnp.float32),    # fused qkv
                pltpu.VMEM((TB * S, TB * S), jnp.float32),         # block-diag mask
            ],
        ),
        compiler_params=pltpu.CompilerParams(
            dimension_semantics=("parallel",),
            vmem_limit_bytes=32 * 1024 * 1024),
    )(x_g, *weights)

    return out.reshape(B_pad, OUT_DIM)[:B]


# ------------------------- pure-JAX reference -------------------------
def reference_forward(x_bct, params):
    (pe, win, bin_, wqkv, bqkv, wo, bo, w1, b1, w2, b2,
     g1, be1, g2, be2, wout, bout) = params
    x = jnp.transpose(x_bct, (0, 2, 1))                           # (B, S, 68)
    h = x @ win.T + bin_                                          # (B, S, D)
    h = h + pe[None, :x.shape[1]]
    scale = 1.0 / math.sqrt(HEAD_DIM)
    for l in range(NUM_LAYERS):
        qkv = h @ wqkv[l].T + bqkv[l]
        q, k, v = (qkv[..., :D_MODEL], qkv[..., D_MODEL:2 * D_MODEL],
                   qkv[..., 2 * D_MODEL:])
        B, S, _ = q.shape
        qh = q.reshape(B, S, NHEAD, HEAD_DIM).transpose(0, 2, 1, 3)
        kh = k.reshape(B, S, NHEAD, HEAD_DIM).transpose(0, 2, 1, 3)
        vh = v.reshape(B, S, NHEAD, HEAD_DIM).transpose(0, 2, 1, 3)
        sc = jnp.einsum("bhqd,bhkd->bhqk", qh, kh) * scale
        p = jax.nn.softmax(sc, axis=-1)
        oh = jnp.einsum("bhqk,bhkd->bhqd", p, vh)
        oh = oh.transpose(0, 2, 1, 3).reshape(B, S, D_MODEL)
        attn = oh @ wo[l].T + bo[l]
        h = _layernorm(h + attn, g1[l], be1[l])
        f = jnp.maximum(h @ w1[l].T + b1[l], 0.0) @ w2[l].T + b2[l]
        h = _layernorm(h + f, g2[l], be2[l])
    pooled = h.mean(axis=1)
    return pooled @ wout.T + bout


# ------------------------- parameter construction -------------------------
def make_params(key, seq_len):
    keys = jax.random.split(key, 32)
    it = iter(keys)

    def rnd(shape, scale=0.05):
        return scale * jax.random.normal(next(it), shape, dtype=jnp.float32)

    # standard sinusoidal positional encoding, up to seq_len
    position = jnp.arange(seq_len, dtype=jnp.float32)[:, None]
    div_term = jnp.exp(jnp.arange(0, D_MODEL, 2, dtype=jnp.float32)
                       * (-jnp.log(10000.0) / D_MODEL))
    pe = jnp.zeros((seq_len, D_MODEL), jnp.float32)
    pe = pe.at[:, 0::2].set(jnp.sin(position * div_term))
    pe = pe.at[:, 1::2].set(jnp.cos(position * div_term))

    win = rnd((D_MODEL, IN_FEATURES))
    bin_ = rnd((1, D_MODEL))
    wqkv = rnd((NUM_LAYERS, 3 * D_MODEL, D_MODEL))
    bqkv = rnd((NUM_LAYERS, 1, 3 * D_MODEL))
    wo = rnd((NUM_LAYERS, D_MODEL, D_MODEL))
    bo = rnd((NUM_LAYERS, 1, D_MODEL))
    w1 = rnd((NUM_LAYERS, DIM_FF, D_MODEL))
    b1 = rnd((NUM_LAYERS, 1, DIM_FF))
    w2 = rnd((NUM_LAYERS, D_MODEL, DIM_FF))
    b2 = rnd((NUM_LAYERS, 1, DIM_FF // 2))
    b2 = rnd((NUM_LAYERS, 1, D_MODEL))
    g1 = jnp.ones((NUM_LAYERS, 1, D_MODEL), jnp.float32)
    be1 = jnp.zeros((NUM_LAYERS, 1, D_MODEL), jnp.float32)
    g2 = jnp.ones((NUM_LAYERS, 1, D_MODEL), jnp.float32)
    be2 = jnp.zeros((NUM_LAYERS, 1, D_MODEL), jnp.float32)
    wout = rnd((OUT_DIM, D_MODEL))
    bout = rnd((1, OUT_DIM))

    return (pe, win, bin_, wqkv, bqkv, wo, bo, w1, b1, w2, b2,
            g1, be1, g2, be2, wout, bout)


if __name__ == "__main__":
    B, S = 6, 16
    key = jax.random.PRNGKey(0)
    kx, kp = jax.random.split(key)
    x = jax.random.normal(kx, (B, IN_FEATURES, S), dtype=jnp.float32)
    params = make_params(kp, S)

    # tb=4 -> TB=4, B_pad=8, grid of 2 steps (exercises padding + multi-step grid)
    run = jax.jit(partial(transformer_time_model, tb=4))
    out = jax.block_until_ready(run(x, params))
    assert out.shape == (B, OUT_DIM)

    ref = jax.block_until_ready(jax.jit(reference_forward)(x, params))
    max_err = float(jnp.max(jnp.abs(out - ref)))
    assert max_err < 2e-2, f"mismatch vs reference: {max_err}"

    print("KERNEL_OK")
</pallas_src>

<mosaic_0001>
module attributes {stable_mosaic.version = 11 : i64} {
  func.func @transformer_time_kernel(%arg0: i32, %arg1: memref<1x64x128xf32, #tpu.memory_space<vmem>>, %arg2: memref<64x64xf32, #tpu.memory_space<vmem>>, %arg3: memref<128x64xf32, #tpu.memory_space<vmem>>, %arg4: memref<3x64x192xf32, #tpu.memory_space<vmem>>, %arg5: memref<3x1x192xf32, #tpu.memory_space<vmem>>, %arg6: memref<3x4x16x64xf32, #tpu.memory_space<vmem>>, %arg7: memref<3x1x64xf32, #tpu.memory_space<vmem>>, %arg8: memref<3x64x128xf32, #tpu.memory_space<vmem>>, %arg9: memref<3x1x128xf32, #tpu.memory_space<vmem>>, %arg10: memref<3x128x64xf32, #tpu.memory_space<vmem>>, %arg11: memref<3x1x64xf32, #tpu.memory_space<vmem>>, %arg12: memref<3x1x64xf32, #tpu.memory_space<vmem>>, %arg13: memref<3x1x64xf32, #tpu.memory_space<vmem>>, %arg14: memref<3x1x64xf32, #tpu.memory_space<vmem>>, %arg15: memref<3x1x64xf32, #tpu.memory_space<vmem>>, %arg16: memref<4x64xf32, #tpu.memory_space<vmem>>, %arg17: memref<64x12xf32, #tpu.memory_space<vmem>>, %arg18: memref<1x12xf32, #tpu.memory_space<vmem>>, %arg19: memref<1x4x12xf32, #tpu.memory_space<vmem>>, %arg20: memref<64x64xf32, #tpu.memory_space<vmem>>, %arg21: memref<64x192xf32, #tpu.memory_space<vmem>>, %arg22: memref<64x64xf32, #tpu.memory_space<vmem>>) attributes {dimension_semantics = [#tpu.dimension_semantics<parallel>], iteration_bounds = array<i64: 2>, scalar_prefetch = 0 : i64, scratch_operands = 3 : i64, tpu.core_type = #tpu.core_type<tc>, window_params = [{transform_indices = @transform_0, window_bounds = array<i64: 1, 64, 128>}, {pipeline_mode = #tpu.pipeline_mode<synchronous>, transform_indices = @transform_1, window_bounds = array<i64: 64, 64>}, {pipeline_mode = #tpu.pipeline_mode<synchronous>, transform_indices = @transform_2, window_bounds = array<i64: 128, 64>}, {pipeline_mode = #tpu.pipeline_mode<synchronous>, transform_indices = @transform_3, window_bounds = array<i64: 3, 64, 192>}, {pipeline_mode = #tpu.pipeline_mode<synchronous>, transform_indices = @transform_4, window_bounds = array<i64: 3, 1, 192>}, {pipeline_mode = #tpu.pipeline_mode<synchronous>, transform_indices = @transform_5, window_bounds = array<i64: 3, 4, 16, 64>}, {pipeline_mode = #tpu.pipeline_mode<synchronous>, transform_indices = @transform_6, window_bounds = array<i64: 3, 1, 64>}, {pipeline_mode = #tpu.pipeline_mode<synchronous>, transform_indices = @transform_7, window_bounds = array<i64: 3, 64, 128>}, {pipeline_mode = #tpu.pipeline_mode<synchronous>, transform_indices = @transform_8, window_bounds = array<i64: 3, 1, 128>}, {pipeline_mode = #tpu.pipeline_mode<synchronous>, transform_indices = @transform_9, window_bounds = array<i64: 3, 128, 64>}, {pipeline_mode = #tpu.pipeline_mode<synchronous>, transform_indices = @transform_10, window_bounds = array<i64: 3, 1, 64>}, {pipeline_mode = #tpu.pipeline_mode<synchronous>, transform_indices = @transform_11, window_bounds = array<i64: 3, 1, 64>}, {pipeline_mode = #tpu.pipeline_mode<synchronous>, transform_indices = @transform_12, window_bounds = array<i64: 3, 1, 64>}, {pipeline_mode = #tpu.pipeline_mode<synchronous>, transform_indices = @transform_13, window_bounds = array<i64: 3, 1, 64>}, {pipeline_mode = #tpu.pipeline_mode<synchronous>, transform_indices = @transform_14, window_bounds = array<i64: 3, 1, 64>}, {pipeline_mode = #tpu.pipeline_mode<synchronous>, transform_indices = @transform_15, window_bounds = array<i64: 4, 64>}, {pipeline_mode = #tpu.pipeline_mode<synchronous>, transform_indices = @transform_16, window_bounds = array<i64: 64, 12>}, {pipeline_mode = #tpu.pipeline_mode<synchronous>, transform_indices = @transform_17, window_bounds = array<i64: 1, 12>}, {transform_indices = @transform_18, window_bounds = array<i64: 1, 4, 12>}]} {
    %0 = tpu.iota {dimensions = array<i32: 0>} : vector<64x64xi32>
    %1 = arith.sitofp %0 : vector<64x64xi32> to vector<64x64xf32>
    %2 = tpu.iota {dimensions = array<i32: 1>} : vector<64x64xi32>
    %3 = arith.sitofp %2 : vector<64x64xi32> to vector<64x64xf32>
    %cst = arith.constant 5.000000e-01 : f32
    %4 = vector.broadcast %cst : f32 to vector<64x64xf32>
    %5 = arith.addf %1, %4 : vector<64x64xf32>
    %cst_0 = arith.constant 6.250000e-02 : f32
    %6 = vector.broadcast %cst_0 : f32 to vector<64x64xf32>
    %7 = arith.mulf %5, %6 : vector<64x64xf32>
    %8 = math.floor %7 : vector<64x64xf32>
    %cst_1 = arith.constant 5.000000e-01 : f32
    %9 = vector.broadcast %cst_1 : f32 to vector<64x64xf32>
    %10 = arith.addf %3, %9 : vector<64x64xf32>
    %cst_2 = arith.constant 6.250000e-02 : f32
    %11 = vector.broadcast %cst_2 : f32 to vector<64x64xf32>
    %12 = arith.mulf %10, %11 : vector<64x64xf32>
    %13 = math.floor %12 : vector<64x64xf32>
    %14 = arith.cmpf oeq, %8, %13 : vector<64x64xf32>
    %cst_3 = arith.constant 0.000000e+00 : f32
    %cst_4 = arith.constant -1.000000e+30 : f32
    %15 = vector.broadcast %cst_3 : f32 to vector<64x64xf32>
    %16 = vector.broadcast %cst_4 : f32 to vector<64x64xf32>
    %17 = arith.select %14, %15, %16 : vector<64x64xi1>, vector<64x64xf32>
    %c0 = arith.constant 0 : index
    %c0_5 = arith.constant 0 : index
    %18 = vector.load %arg22[%c0, %c0_5] : memref<64x64xf32, #tpu.memory_space<vmem>>, vector<64x64xf32>
    tpu.vector_store %arg22[%c0, %c0_5], %17 {strides = array<i32>} : memref<64x64xf32, #tpu.memory_space<vmem>>, vector<64x64xf32>,
    %c0_6 = arith.constant 0 : index
    %c0_7 = arith.constant 0 : index
    %c0_8 = arith.constant 0 : index
    %19 = vector.load %arg1[%c0_6, %c0_7, %c0_8] : memref<1x64x128xf32, #tpu.memory_space<vmem>>, vector<1x64x128xf32>
    %20 = vector.shape_cast %19 : vector<1x64x128xf32> to vector<64x128xf32>
    %c0_9 = arith.constant 0 : index
    %c0_10 = arith.constant 0 : index
    %21 = vector.load %arg3[%c0_9, %c0_10] : memref<128x64xf32, #tpu.memory_space<vmem>>, vector<128x64xf32>
    %cst_11 = arith.constant dense<0.000000e+00> : vector<64x64xf32>
    %22 = tpu.matmul %20, %21, %cst_11 {dimension_numbers = #tpu.dot_dimension_numbers<[1], [0], [0], [1], [0, 0, 1, 1], [], []>} : vector<64x128xf32>, vector<128x64xf32>, vector<64x64xf32> -> vector<64x64xf32>
    %c0_12 = arith.constant 0 : index
    %c0_13 = arith.constant 0 : index
    %23 = vector.load %arg2[%c0_12, %c0_13] : memref<64x64xf32, #tpu.memory_space<vmem>>, vector<64x64xf32>
    %24 = arith.addf %22, %23 : vector<64x64xf32>
    %c0_14 = arith.constant 0 : index
    %c0_15 = arith.constant 0 : index
    %25 = vector.load %arg20[%c0_14, %c0_15] : memref<64x64xf32, #tpu.memory_space<vmem>>, vector<64x64xf32>
    tpu.vector_store %arg20[%c0_14, %c0_15], %24 {strides = array<i32>} : memref<64x64xf32, #tpu.memory_space<vmem>>, vector<64x64xf32>,
    %c0_16 = arith.constant 0 : index
    %c0_17 = arith.constant 0 : index
    %26 = vector.load %arg20[%c0_16, %c0_17] : memref<64x64xf32, #tpu.memory_space<vmem>>, vector<64x64xf32>
    %c0_18 = arith.constant 0 : index
    %c0_19 = arith.constant 0 : index
    %c0_20 = arith.constant 0 : index
    %27 = vector.load %arg4[%c0_18, %c0_19, %c0_20] : memref<3x64x192xf32, #tpu.memory_space<vmem>>, vector<1x64x192xf32>
    %28 = vector.shape_cast %27 : vector<1x64x192xf32> to vector<64x192xf32>
    %cst_21 = arith.constant dense<0.000000e+00> : vector<64x192xf32>
    %29 = tpu.matmul %26, %28, %cst_21 {dimension_numbers = #tpu.dot_dimension_numbers<[1], [0], [0], [1], [0, 0, 1, 1], [], []>} : vector<64x64xf32>, vector<64x192xf32>, vector<64x192xf32> -> vector<64x192xf32>
    %c0_22 = arith.constant 0 : index
    %c0_23 = arith.constant 0 : index
    %c0_24 = arith.constant 0 : index
    %30 = vector.load %arg5[%c0_22, %c0_23, %c0_24] : memref<3x1x192xf32, #tpu.memory_space<vmem>>, vector<1x1x192xf32>
    %31 = vector.shape_cast %30 : vector<1x1x192xf32> to vector<1x192xf32>
    %32 = vector.broadcast %31 : vector<1x192xf32> to vector<64x192xf32>
    %33 = arith.addf %29, %32 : vector<64x192xf32>
    %c0_25 = arith.constant 0 : index
    %c0_26 = arith.constant 0 : index
    %34 = vector.load %arg21[%c0_25, %c0_26] : memref<64x192xf32, #tpu.memory_space<vmem>>, vector<64x192xf32>
    tpu.vector_store %arg21[%c0_25, %c0_26], %33 {strides = array<i32>} : memref<64x192xf32, #tpu.memory_space<vmem>>, vector<64x192xf32>,
    %cst_27 = arith.constant 0.000000e+00 : f32
    %35 = vector.broadcast %cst_27 : f32 to vector<64x64xf32>
    %c0_28 = arith.constant 0 : index
    %c0_29 = arith.constant 0 : index
    %36 = vector.load %arg21[%c0_28, %c0_29] : memref<64x192xf32, #tpu.memory_space<vmem>>, vector<64x16xf32>
    %c0_30 = arith.constant 0 : index
    %c64 = arith.constant 64 : index
    %37 = vector.load %arg21[%c0_30, %c64] : memref<64x192xf32, #tpu.memory_space<vmem>>, vector<64x16xf32>
    %c0_31 = arith.constant 0 : index
    %c128 = arith.constant 128 : index
    %38 = vector.load %arg21[%c0_31, %c128] : memref<64x192xf32, #tpu.memory_space<vmem>>, vector<64x16xf32>
    %cst_32 = arith.constant dense<0.000000e+00> : vector<64x64xf32>
    %39 = tpu.matmul %36, %37, %cst_32 {dimension_numbers = #tpu.dot_dimension_numbers<[1], [1], [0], [0], [0, 0, 1, 0], [], []>} : vector<64x16xf32>, vector<64x16xf32>, vector<64x64xf32> -> vector<64x64xf32>
    %c0_33 = arith.constant 0 : index
    %c0_34 = arith.constant 0 : index
    %40 = vector.load %arg22[%c0_33, %c0_34] : memref<64x64xf32, #tpu.memory_space<vmem>>, vector<64x64xf32>
    %41 = arith.addf %39, %40 : vector<64x64xf32>
    %cst_35 = arith.constant dense<0xFF800000> : vector<64xf32>
    %42 = vector.multi_reduction <maximumf>, %41, %cst_35 [1] : vector<64x64xf32> to vector<64xf32>
    %43 = vector.shape_cast %42 : vector<64xf32> to vector<64x1xf32>
    %44 = vector.broadcast %43 : vector<64x1xf32> to vector<64x64xf32>
    %45 = arith.subf %41, %44 : vector<64x64xf32>
    %46 = math.exp %45 : vector<64x64xf32>
    %cst_36 = arith.constant dense<0.000000e+00> : vector<64xf32>
    %47 = vector.multi_reduction <add>, %46, %cst_36 [1] : vector<64x64xf32> to vector<64xf32>
    %48 = vector.shape_cast %47 : vector<64xf32> to vector<64x1xf32>
    %49 = tpu.reciprocal %48 {approx = true} : vector<64x1xf32> -> vector<64x1xf32>
    %50 = vector.broadcast %49 : vector<64x1xf32> to vector<64x64xf32>
    %51 = arith.mulf %46, %50 : vector<64x64xf32>
    %c0_37 = arith.constant 0 : index
    %c0_38 = arith.constant 0 : index
    %c0_39 = arith.constant 0 : index
    %c0_40 = arith.constant 0 : index
    %52 = vector.load %arg6[%c0_37, %c0_38, %c0_39, %c0_40] : memref<3x4x16x64xf32, #tpu.memory_space<vmem>>, vector<1x1x16x64xf32>
    %53 = vector.shape_cast %52 : vector<1x1x16x64xf32> to vector<16x64xf32>
    %cst_41 = arith.constant dense<0.000000e+00> : vector<64x64xf32>
    %54 = tpu.matmul %38, %53, %cst_41 {dimension_numbers = #tpu.dot_dimension_numbers<[1], [0], [0], [1], [0, 0, 1, 1], [], []>} : vector<64x16xf32>, vector<16x64xf32>, vector<64x64xf32> -> vector<64x64xf32>
    %cst_42 = arith.constant dense<0.000000e+00> : vector<64x64xf32>
    %55 = tpu.matmul %51, %54, %cst_42 {dimension_numbers = #tpu.dot_dimension_numbers<[1], [0], [0], [1], [0, 0, 1, 1], [], []>} : vector<64x64xf32>, vector<64x64xf32>, vector<64x64xf32> -> vector<64x64xf32>
    %56 = arith.addf %35, %55 : vector<64x64xf32>
    %c0_43 = arith.constant 0 : index
    %c16 = arith.constant 16 : index
    %57 = vector.load %arg21[%c0_43, %c16] : memref<64x192xf32, #tpu.memory_space<vmem>>, vector<64x16xf32>
    %c0_44 = arith.constant 0 : index
    %c80 = arith.constant 80 : index
    %58 = vector.load %arg21[%c0_44, %c80] : memref<64x192xf32, #tpu.memory_space<vmem>>, vector<64x16xf32>
    %c0_45 = arith.constant 0 : index
    %c144 = arith.constant 144 : index
    %59 = vector.load %arg21[%c0_45, %c144] : memref<64x192xf32, #tpu.memory_space<vmem>>, vector<64x16xf32>
    %cst_46 = arith.constant dense<0.000000e+00> : vector<64x64xf32>
    %60 = tpu.matmul %57, %58, %cst_46 {dimension_numbers = #tpu.dot_dimension_numbers<[1], [1], [0], [0], [0, 0, 1, 0], [], []>} : vector<64x16xf32>, vector<64x16xf32>, vector<64x64xf32> -> vector<64x64xf32>
    %c0_47 = arith.constant 0 : index
    %c0_48 = arith.constant 0 : index
    %61 = vector.load %arg22[%c0_47, %c0_48] : memref<64x64xf32, #tpu.memory_space<vmem>>, vector<64x64xf32>
    %62 = arith.addf %60, %61 : vector<64x64xf32>
    %cst_49 = arith.constant dense<0xFF800000> : vector<64xf32>
    %63 = vector.multi_reduction <maximumf>, %62, %cst_49 [1] : vector<64x64xf32> to vector<64xf32>
    %64 = vector.shape_cast %63 : vector<64xf32> to vector<64x1xf32>
    %65 = vector.broadcast %64 : vector<64x1xf32> to vector<64x64xf32>
    %66 = arith.subf %62, %65 : vector<64x64xf32>
    %67 = math.exp %66 : vector<64x64xf32>
    %cst_50 = arith.constant dense<0.000000e+00> : vector<64xf32>
    %68 = vector.multi_reduction <add>, %67, %cst_50 [1] : vector<64x64xf32> to vector<64xf32>
    %69 = vector.shape_cast %68 : vector<64xf32> to vector<64x1xf32>
    %70 = tpu.reciprocal %69 {approx = true} : vector<64x1xf32> -> vector<64x1xf32>
    %71 = vector.broadcast %70 : vector<64x1xf32> to vector<64x64xf32>
    %72 = arith.mulf %67, %71 : vector<64x64xf32>
    %c0_51 = arith.constant 0 : index
    %c1 = arith.constant 1 : index
    %c0_52 = arith.constant 0 : index
    %c0_53 = arith.constant 0 : index
    %73 = vector.load %arg6[%c0_51, %c1, %c0_52, %c0_53] : memref<3x4x16x64xf32, #tpu.memory_space<vmem>>, vector<1x1x16x64xf32>
    %74 = vector.shape_cast %73 : vector<1x1x16x64xf32> to vector<16x64xf32>
    %cst_54 = arith.constant dense<0.000000e+00> : vector<64x64xf32>
    %75 = tpu.matmul %59, %74, %cst_54 {dimension_numbers = #tpu.dot_dimension_numbers<[1], [0], [0], [1], [0, 0, 1, 1], [], []>} : vector<64x16xf32>, vector<16x64xf32>, vector<64x64xf32> -> vector<64x64xf32>
    %cst_55 = arith.constant dense<0.000000e+00> : vector<64x64xf32>
    %76 = tpu.matmul %72, %75, %cst_55 {dimension_numbers = #tpu.dot_dimension_numbers<[1], [0], [0], [1], [0, 0, 1, 1], [], []>} : vector<64x64xf32>, vector<64x64xf32>, vector<64x64xf32> -> vector<64x64xf32>
    %77 = arith.addf %56, %76 : vector<64x64xf32>
    %c0_56 = arith.constant 0 : index
    %c32 = arith.constant 32 : index
    %78 = vector.load %arg21[%c0_56, %c32] : memref<64x192xf32, #tpu.memory_space<vmem>>, vector<64x16xf32>
    %c0_57 = arith.constant 0 : index
    %c96 = arith.constant 96 : index
    %79 = vector.load %arg21[%c0_57, %c96] : memref<64x192xf32, #tpu.memory_space<vmem>>, vector<64x16xf32>
    %c0_58 = arith.constant 0 : index
    %c160 = arith.constant 160 : index
    %80 = vector.load %arg21[%c0_58, %c160] : memref<64x192xf32, #tpu.memory_space<vmem>>, vector<64x16xf32>
    %cst_59 = arith.constant dense<0.000000e+00> : vector<64x64xf32>
    %81 = tpu.matmul %78, %79, %cst_59 {dimension_numbers = #tpu.dot_dimension_numbers<[1], [1], [0], [0], [0, 0, 1, 0], [], []>} : vector<64x16xf32>, vector<64x16xf32>, vector<64x64xf32> -> vector<64x64xf32>
    %c0_60 = arith.constant 0 : index
    %c0_61 = arith.constant 0 : index
    %82 = vector.load %arg22[%c0_60, %c0_61] : memref<64x64xf32, #tpu.memory_space<vmem>>, vector<64x64xf32>
    %83 = arith.addf %81, %82 : vector<64x64xf32>
    %cst_62 = arith.constant dense<0xFF800000> : vector<64xf32>
    %84 = vector.multi_reduction <maximumf>, %83, %cst_62 [1] : vector<64x64xf32> to vector<64xf32>
    %85 = vector.shape_cast %84 : vector<64xf32> to vector<64x1xf32>
    %86 = vector.broadcast %85 : vector<64x1xf32> to vector<64x64xf32>
    %87 = arith.subf %83, %86 : vector<64x64xf32>
    %88 = math.exp %87 : vector<64x64xf32>
    %cst_63 = arith.constant dense<0.000000e+00> : vector<64xf32>
    %89 = vector.multi_reduction <add>, %88, %cst_63 [1] : vector<64x64xf32> to vector<64xf32>
    %90 = vector.shape_cast %89 : vector<64xf32> to vector<64x1xf32>
    %91 = tpu.reciprocal %90 {approx = true} : vector<64x1xf32> -> vector<64x1xf32>
    %92 = vector.broadcast %91 : vector<64x1xf32> to vector<64x64xf32>
    %93 = arith.mulf %88, %92 : vector<64x64xf32>
    %c0_64 = arith.constant 0 : index
    %c2 = arith.constant 2 : index
    %c0_65 = arith.constant 0 : index
    %c0_66 = arith.constant 0 : index
    %94 = vector.load %arg6[%c0_64, %c2, %c0_65, %c0_66] : memref<3x4x16x64xf32, #tpu.memory_space<vmem>>, vector<1x1x16x64xf32>
    %95 = vector.shape_cast %94 : vector<1x1x16x64xf32> to vector<16x64xf32>
    %cst_67 = arith.constant dense<0.000000e+00> : vector<64x64xf32>
    %96 = tpu.matmul %80, %95, %cst_67 {dimension_numbers = #tpu.dot_dimension_numbers<[1], [0], [0], [1], [0, 0, 1, 1], [], []>} : vector<64x16xf32>, vector<16x64xf32>, vector<64x64xf32> -> vector<64x64xf32>
    %cst_68 = arith.constant dense<0.000000e+00> : vector<64x64xf32>
    %97 = tpu.matmul %93, %96, %cst_68 {dimension_numbers = #tpu.dot_dimension_numbers<[1], [0], [0], [1], [0, 0, 1, 1], [], []>} : vector<64x64xf32>, vector<64x64xf32>, vector<64x64xf32> -> vector<64x64xf32>
    %98 = arith.addf %77, %97 : vector<64x64xf32>
    %c0_69 = arith.constant 0 : index
    %c48 = arith.constant 48 : index
    %99 = vector.load %arg21[%c0_69, %c48] : memref<64x192xf32, #tpu.memory_space<vmem>>, vector<64x16xf32>
    %c0_70 = arith.constant 0 : index
    %c112 = arith.constant 112 : index
    %100 = vector.load %arg21[%c0_70, %c112] : memref<64x192xf32, #tpu.memory_space<vmem>>, vector<64x16xf32>
    %c0_71 = arith.constant 0 : index
    %c176 = arith.constant 176 : index
    %101 = vector.load %arg21[%c0_71, %c176] : memref<64x192xf32, #tpu.memory_space<vmem>>, vector<64x16xf32>
    %cst_72 = arith.constant dense<0.000000e+00> : vector<64x64xf32>
    %102 = tpu.matmul %99, %100, %cst_72 {dimension_numbers = #tpu.dot_dimension_numbers<[1], [1], [0], [0], [0, 0, 1, 0], [], []>} : vector<64x16xf32>, vector<64x16xf32>, vector<64x64xf32> -> vector<64x64xf32>
    %c0_73 = arith.constant 0 : index
    %c0_74 = arith.constant 0 : index
    %103 = vector.load %arg22[%c0_73, %c0_74] : memref<64x64xf32, #tpu.memory_space<vmem>>, vector<64x64xf32>
    %104 = arith.addf %102, %103 : vector<64x64xf32>
    %cst_75 = arith.constant dense<0xFF800000> : vector<64xf32>
    %105 = vector.multi_reduction <maximumf>, %104, %cst_75 [1] : vector<64x64xf32> to vector<64xf32>
    %106 = vector.shape_cast %105 : vector<64xf32> to vector<64x1xf32>
    %107 = vector.broadcast %106 : vector<64x1xf32> to vector<64x64xf32>
    %108 = arith.subf %104, %107 : vector<64x64xf32>
    %109 = math.exp %108 : vector<64x64xf32>
    %cst_76 = arith.constant dense<0.000000e+00> : vector<64xf32>
    %110 = vector.multi_reduction <add>, %109, %cst_76 [1] : vector<64x64xf32> to vector<64xf32>
    %111 = vector.shape_cast %110 : vector<64xf32> to vector<64x1xf32>
    %112 = tpu.reciprocal %111 {approx = true} : vector<64x1xf32> -> vector<64x1xf32>
    %113 = vector.broadcast %112 : vector<64x1xf32> to vector<64x64xf32>
    %114 = arith.mulf %109, %113 : vector<64x64xf32>
    %c0_77 = arith.constant 0 : index
    %c3 = arith.constant 3 : index
    %c0_78 = arith.constant 0 : index
    %c0_79 = arith.constant 0 : index
    %115 = vector.load %arg6[%c0_77, %c3, %c0_78, %c0_79] : memref<3x4x16x64xf32, #tpu.memory_space<vmem>>, vector<1x1x16x64xf32>
    %116 = vector.shape_cast %115 : vector<1x1x16x64xf32> to vector<16x64xf32>
    %cst_80 = arith.constant dense<0.000000e+00> : vector<64x64xf32>
    %117 = tpu.matmul %101, %116, %cst_80 {dimension_numbers = #tpu.dot_dimension_numbers<[1], [0], [0], [1], [0, 0, 1, 1], [], []>} : vector<64x16xf32>, vector<16x64xf32>, vector<64x64xf32> -> vector<64x64xf32>
    %cst_81 = arith.constant dense<0.000000e+00> : vector<64x64xf32>
    %118 = tpu.matmul %114, %117, %cst_81 {dimension_numbers = #tpu.dot_dimension_numbers<[1], [0], [0], [1], [0, 0, 1, 1], [], []>} : vector<64x64xf32>, vector<64x64xf32>, vector<64x64xf32> -> vector<64x64xf32>
    %119 = arith.addf %98, %118 : vector<64x64xf32>
    %c0_82 = arith.constant 0 : index
    %c0_83 = arith.constant 0 : index
    %c0_84 = arith.constant 0 : index
    %120 = vector.load %arg7[%c0_82, %c0_83, %c0_84] : memref<3x1x64xf32, #tpu.memory_space<vmem>>, vector<1x1x64xf32>
    %121 = vector.shape_cast %120 : vector<1x1x64xf32> to vector<1x64xf32>
    %122 = vector.broadcast %121 : vector<1x64xf32> to vector<64x64xf32>
    %123 = arith.addf %119, %122 : vector<64x64xf32>
    %124 = arith.addf %26, %123 : vector<64x64xf32>
    %c0_85 = arith.constant 0 : index
    %c0_86 = arith.constant 0 : index
    %c0_87 = arith.constant 0 : index
    %125 = vector.load %arg12[%c0_85, %c0_86, %c0_87] : memref<3x1x64xf32, #tpu.memory_space<vmem>>, vector<1x1x64xf32>
    %126 = vector.shape_cast %125 : vector<1x1x64xf32> to vector<1x64xf32>
    %c0_88 = arith.constant 0 : index
    %c0_89 = arith.constant 0 : index
    %c0_90 = arith.constant 0 : index
    %127 = vector.load %arg13[%c0_88, %c0_89, %c0_90] : memref<3x1x64xf32, #tpu.memory_space<vmem>>, vector<1x1x64xf32>
    %128 = vector.shape_cast %127 : vector<1x1x64xf32> to vector<1x64xf32>
    %cst_91 = arith.constant dense<0.000000e+00> : vector<64xf32>
    %129 = vector.multi_reduction <add>, %124, %cst_91 [1] : vector<64x64xf32> to vector<64xf32>
    %130 = vector.shape_cast %129 : vector<64xf32> to vector<64x1xf32>
    %cst_92 = arith.constant 6.400000e+01 : f32
    %131 = vector.broadcast %cst_92 : f32 to vector<64x1xf32>
    %132 = arith.divf %130, %131 : vector<64x1xf32>
    %133 = vector.broadcast %132 : vector<64x1xf32> to vector<64x64xf32>
    %134 = arith.subf %124, %133 : vector<64x64xf32>
    %135 = arith.mulf %134, %134 : vector<64x64xf32>
    %cst_93 = arith.constant dense<0.000000e+00> : vector<64xf32>
    %136 = vector.multi_reduction <add>, %135, %cst_93 [1] : vector<64x64xf32> to vector<64xf32>
    %137 = vector.shape_cast %136 : vector<64xf32> to vector<64x1xf32>
    %cst_94 = arith.constant 6.400000e+01 : f32
    %138 = vector.broadcast %cst_94 : f32 to vector<64x1xf32>
    %139 = arith.divf %137, %138 : vector<64x1xf32>
    %140 = vector.broadcast %132 : vector<64x1xf32> to vector<64x64xf32>
    %141 = arith.subf %124, %140 : vector<64x64xf32>
    %cst_95 = arith.constant 9.99999974E-6 : f32
    %142 = vector.broadcast %cst_95 : f32 to vector<64x1xf32>
    %143 = arith.addf %139, %142 : vector<64x1xf32>
    %144 = math.rsqrt %143 : vector<64x1xf32>
    %145 = vector.broadcast %144 : vector<64x1xf32> to vector<64x64xf32>
    %146 = arith.mulf %141, %145 : vector<64x64xf32>
    %147 = vector.broadcast %126 : vector<1x64xf32> to vector<64x64xf32>
    %148 = arith.mulf %146, %147 : vector<64x64xf32>
    %149 = vector.broadcast %128 : vector<1x64xf32> to vector<64x64xf32>
    %150 = arith.addf %148, %149 : vector<64x64xf32>
    %c0_96 = arith.constant 0 : index
    %c0_97 = arith.constant 0 : index
    %c0_98 = arith.constant 0 : index
    %151 = vector.load %arg8[%c0_96, %c0_97, %c0_98] : memref<3x64x128xf32, #tpu.memory_space<vmem>>, vector<1x64x128xf32>
    %152 = vector.shape_cast %151 : vector<1x64x128xf32> to vector<64x128xf32>
    %cst_99 = arith.constant dense<0.000000e+00> : vector<64x128xf32>
    %153 = tpu.matmul %150, %152, %cst_99 {dimension_numbers = #tpu.dot_dimension_numbers<[1], [0], [0], [1], [0, 0, 1, 1], [], []>} : vector<64x64xf32>, vector<64x128xf32>, vector<64x128xf32> -> vector<64x128xf32>
    %c0_100 = arith.constant 0 : index
    %c0_101 = arith.constant 0 : index
    %c0_102 = arith.constant 0 : index
    %154 = vector.load %arg9[%c0_100, %c0_101, %c0_102] : memref<3x1x128xf32, #tpu.memory_space<vmem>>, vector<1x1x128xf32>
    %155 = vector.shape_cast %154 : vector<1x1x128xf32> to vector<1x128xf32>
    %156 = vector.broadcast %155 : vector<1x128xf32> to vector<64x128xf32>
    %157 = arith.addf %153, %156 : vector<64x128xf32>
    %cst_103 = arith.constant 0.000000e+00 : f32
    %158 = vector.broadcast %cst_103 : f32 to vector<64x128xf32>
    %159 = arith.maximumf %157, %158 : vector<64x128xf32>
    %c0_104 = arith.constant 0 : index
    %c0_105 = arith.constant 0 : index
    %c0_106 = arith.constant 0 : index
    %160 = vector.load %arg10[%c0_104, %c0_105, %c0_106] : memref<3x128x64xf32, #tpu.memory_space<vmem>>, vector<1x128x64xf32>
    %161 = vector.shape_cast %160 : vector<1x128x64xf32> to vector<128x64xf32>
    %cst_107 = arith.constant dense<0.000000e+00> : vector<64x64xf32>
    %162 = tpu.matmul %159, %161, %cst_107 {dimension_numbers = #tpu.dot_dimension_numbers<[1], [0], [0], [1], [0, 0, 1, 1], [], []>} : vector<64x128xf32>, vector<128x64xf32>, vector<64x64xf32> -> vector<64x64xf32>
    %c0_108 = arith.constant 0 : index
    %c0_109 = arith.constant 0 : index
    %c0_110 = arith.constant 0 : index
    %163 = vector.load %arg11[%c0_108, %c0_109, %c0_110] : memref<3x1x64xf32, #tpu.memory_space<vmem>>, vector<1x1x64xf32>
    %164 = vector.shape_cast %163 : vector<1x1x64xf32> to vector<1x64xf32>
    %165 = vector.broadcast %164 : vector<1x64xf32> to vector<64x64xf32>
    %166 = arith.addf %162, %165 : vector<64x64xf32>
    %167 = arith.addf %150, %166 : vector<64x64xf32>
    %c0_111 = arith.constant 0 : index
    %c0_112 = arith.constant 0 : index
    %c0_113 = arith.constant 0 : index
    %168 = vector.load %arg14[%c0_111, %c0_112, %c0_113] : memref<3x1x64xf32, #tpu.memory_space<vmem>>, vector<1x1x64xf32>
    %169 = vector.shape_cast %168 : vector<1x1x64xf32> to vector<1x64xf32>
    %c0_114 = arith.constant 0 : index
    %c0_115 = arith.constant 0 : index
    %c0_116 = arith.constant 0 : index
    %170 = vector.load %arg15[%c0_114, %c0_115, %c0_116] : memref<3x1x64xf32, #tpu.memory_space<vmem>>, vector<1x1x64xf32>
    %171 = vector.shape_cast %170 : vector<1x1x64xf32> to vector<1x64xf32>
    %cst_117 = arith.constant dense<0.000000e+00> : vector<64xf32>
    %172 = vector.multi_reduction <add>, %167, %cst_117 [1] : vector<64x64xf32> to vector<64xf32>
    %173 = vector.shape_cast %172 : vector<64xf32> to vector<64x1xf32>
    %cst_118 = arith.constant 6.400000e+01 : f32
    %174 = vector.broadcast %cst_118 : f32 to vector<64x1xf32>
    %175 = arith.divf %173, %174 : vector<64x1xf32>
    %176 = vector.broadcast %175 : vector<64x1xf32> to vector<64x64xf32>
    %177 = arith.subf %167, %176 : vector<64x64xf32>
    %178 = arith.mulf %177, %177 : vector<64x64xf32>
    %cst_119 = arith.constant dense<0.000000e+00> : vector<64xf32>
    %179 = vector.multi_reduction <add>, %178, %cst_119 [1] : vector<64x64xf32> to vector<64xf32>
    %180 = vector.shape_cast %179 : vector<64xf32> to vector<64x1xf32>
    %cst_120 = arith.constant 6.400000e+01 : f32
    %181 = vector.broadcast %cst_120 : f32 to vector<64x1xf32>
    %182 = arith.divf %180, %181 : vector<64x1xf32>
    %183 = vector.broadcast %175 : vector<64x1xf32> to vector<64x64xf32>
    %184 = arith.subf %167, %183 : vector<64x64xf32>
    %cst_121 = arith.constant 9.99999974E-6 : f32
    %185 = vector.broadcast %cst_121 : f32 to vector<64x1xf32>
    %186 = arith.addf %182, %185 : vector<64x1xf32>
    %187 = math.rsqrt %186 : vector<64x1xf32>
    %188 = vector.broadcast %187 : vector<64x1xf32> to vector<64x64xf32>
    %189 = arith.mulf %184, %188 : vector<64x64xf32>
    %190 = vector.broadcast %169 : vector<1x64xf32> to vector<64x64xf32>
    %191 = arith.mulf %189, %190 : vector<64x64xf32>
    %192 = vector.broadcast %171 : vector<1x64xf32> to vector<64x64xf32>
    %193 = arith.addf %191, %192 : vector<64x64xf32>
    %c0_122 = arith.constant 0 : index
    %c0_123 = arith.constant 0 : index
    %194 = vector.load %arg20[%c0_122, %c0_123] : memref<64x64xf32, #tpu.memory_space<vmem>>, vector<64x64xf32>
    tpu.vector_store %arg20[%c0_122, %c0_123], %193 {strides = array<i32>} : memref<64x64xf32, #tpu.memory_space<vmem>>, vector<64x64xf32>,
    %c0_124 = arith.constant 0 : index
    %c0_125 = arith.constant 0 : index
    %195 = vector.load %arg20[%c0_124, %c0_125] : memref<64x64xf32, #tpu.memory_space<vmem>>, vector<64x64xf32>
    %c1_126 = arith.constant 1 : index
    %c0_127 = arith.constant 0 : index
    %c0_128 = arith.constant 0 : index
    %196 = vector.load %arg4[%c1_126, %c0_127, %c0_128] : memref<3x64x192xf32, #tpu.memory_space<vmem>>, vector<1x64x192xf32>
    %197 = vector.shape_cast %196 : vector<1x64x192xf32> to vector<64x192xf32>
    %cst_129 = arith.constant dense<0.000000e+00> : vector<64x192xf32>
    %198 = tpu.matmul %195, %197, %cst_129 {dimension_numbers = #tpu.dot_dimension_numbers<[1], [0], [0], [1], [0, 0, 1, 1], [], []>} : vector<64x64xf32>, vector<64x192xf32>, vector<64x192xf32> -> vector<64x192xf32>
    %c1_130 = arith.constant 1 : index
    %c0_131 = arith.constant 0 : index
    %c0_132 = arith.constant 0 : index
    %199 = vector.load %arg5[%c1_130, %c0_131, %c0_132] : memref<3x1x192xf32, #tpu.memory_space<vmem>>, vector<1x1x192xf32>
    %200 = vector.shape_cast %199 : vector<1x1x192xf32> to vector<1x192xf32>
    %201 = vector.broadcast %200 : vector<1x192xf32> to vector<64x192xf32>
    %202 = arith.addf %198, %201 : vector<64x192xf32>
    %c0_133 = arith.constant 0 : index
    %c0_134 = arith.constant 0 : index
    %203 = vector.load %arg21[%c0_133, %c0_134] : memref<64x192xf32, #tpu.memory_space<vmem>>, vector<64x192xf32>
    tpu.vector_store %arg21[%c0_133, %c0_134], %202 {strides = array<i32>} : memref<64x192xf32, #tpu.memory_space<vmem>>, vector<64x192xf32>,
    %cst_135 = arith.constant 0.000000e+00 : f32
    %204 = vector.broadcast %cst_135 : f32 to vector<64x64xf32>
    %c0_136 = arith.constant 0 : index
    %c0_137 = arith.constant 0 : index
    %205 = vector.load %arg21[%c0_136, %c0_137] : memref<64x192xf32, #tpu.memory_space<vmem>>, vector<64x16xf32>
    %c0_138 = arith.constant 0 : index
    %c64_139 = arith.constant 64 : index
    %206 = vector.load %arg21[%c0_138, %c64_139] : memref<64x192xf32, #tpu.memory_space<vmem>>, vector<64x16xf32>
    %c0_140 = arith.constant 0 : index
    %c128_141 = arith.constant 128 : index
    %207 = vector.load %arg21[%c0_140, %c128_141] : memref<64x192xf32, #tpu.memory_space<vmem>>, vector<64x16xf32>
    %cst_142 = arith.constant dense<0.000000e+00> : vector<64x64xf32>
    %208 = tpu.matmul %205, %206, %cst_142 {dimension_numbers = #tpu.dot_dimension_numbers<[1], [1], [0], [0], [0, 0, 1, 0], [], []>} : vector<64x16xf32>, vector<64x16xf32>, vector<64x64xf32> -> vector<64x64xf32>
    %c0_143 = arith.constant 0 : index
    %c0_144 = arith.constant 0 : index
    %209 = vector.load %arg22[%c0_143, %c0_144] : memref<64x64xf32, #tpu.memory_space<vmem>>, vector<64x64xf32>
    %210 = arith.addf %208, %209 : vector<64x64xf32>
    %cst_145 = arith.constant dense<0xFF800000> : vector<64xf32>
    %211 = vector.multi_reduction <maximumf>, %210, %cst_145 [1] : vector<64x64xf32> to vector<64xf32>
    %212 = vector.shape_cast %211 : vector<64xf32> to vector<64x1xf32>
    %213 = vector.broadcast %212 : vector<64x1xf32> to vector<64x64xf32>
    %214 = arith.subf %210, %213 : vector<64x64xf32>
    %215 = math.exp %214 : vector<64x64xf32>
    %cst_146 = arith.constant dense<0.000000e+00> : vector<64xf32>
    %216 = vector.multi_reduction <add>, %215, %cst_146 [1] : vector<64x64xf32> to vector<64xf32>
    %217 = vector.shape_cast %216 : vector<64xf32> to vector<64x1xf32>
    %218 = tpu.reciprocal %217 {approx = true} : vector<64x1xf32> -> vector<64x1xf32>
    %219 = vector.broadcast %218 : vector<64x1xf32> to vector<64x64xf32>
    %220 = arith.mulf %215, %219 : vector<64x64xf32>
    %c1_147 = arith.constant 1 : index
    %c0_148 = arith.constant 0 : index
    %c0_149 = arith.constant 0 : index
    %c0_150 = arith.constant 0 : index
    %221 = vector.load %arg6[%c1_147, %c0_148, %c0_149, %c0_150] : memref<3x4x16x64xf32, #tpu.memory_space<vmem>>, vector<1x1x16x64xf32>
    %222 = vector.shape_cast %221 : vector<1x1x16x64xf32> to vector<16x64xf32>
    %cst_151 = arith.constant dense<0.000000e+00> : vector<64x64xf32>
    %223 = tpu.matmul %207, %222, %cst_151 {dimension_numbers = #tpu.dot_dimension_numbers<[1], [0], [0], [1], [0, 0, 1, 1], [], []>} : vector<64x16xf32>, vector<16x64xf32>, vector<64x64xf32> -> vector<64x64xf32>
    %cst_152 = arith.constant dense<0.000000e+00> : vector<64x64xf32>
    %224 = tpu.matmul %220, %223, %cst_152 {dimension_numbers = #tpu.dot_dimension_numbers<[1], [0], [0], [1], [0, 0, 1, 1], [], []>} : vector<64x64xf32>, vector<64x64xf32>, vector<64x64xf32> -> vector<64x64xf32>
    %225 = arith.addf %204, %224 : vector<64x64xf32>
    %c0_153 = arith.constant 0 : index
    %c16_154 = arith.constant 16 : index
    %226 = vector.load %arg21[%c0_153, %c16_154] : memref<64x192xf32, #tpu.memory_space<vmem>>, vector<64x16xf32>
    %c0_155 = arith.constant 0 : index
    %c80_156 = arith.constant 80 : index
    %227 = vector.load %arg21[%c0_155, %c80_156] : memref<64x192xf32, #tpu.memory_space<vmem>>, vector<64x16xf32>
    %c0_157 = arith.constant 0 : index
    %c144_158 = arith.constant 144 : index
    %228 = vector.load %arg21[%c0_157, %c144_158] : memref<64x192xf32, #tpu.memory_space<vmem>>, vector<64x16xf32>
    %cst_159 = arith.constant dense<0.000000e+00> : vector<64x64xf32>
    %229 = tpu.matmul %226, %227, %cst_159 {dimension_numbers = #tpu.dot_dimension_numbers<[1], [1], [0], [0], [0, 0, 1, 0], [], []>} : vector<64x16xf32>, vector<64x16xf32>, vector<64x64xf32> -> vector<64x64xf32>
    %c0_160 = arith.constant 0 : index
    %c0_161 = arith.constant 0 : index
    %230 = vector.load %arg22[%c0_160, %c0_161] : memref<64x64xf32, #tpu.memory_space<vmem>>, vector<64x64xf32>
    %231 = arith.addf %229, %230 : vector<64x64xf32>
    %cst_162 = arith.constant dense<0xFF800000> : vector<64xf32>
    %232 = vector.multi_reduction <maximumf>, %231, %cst_162 [1] : vector<64x64xf32> to vector<64xf32>
    %233 = vector.shape_cast %232 : vector<64xf32> to vector<64x1xf32>
    %234 = vector.broadcast %233 : vector<64x1xf32> to vector<64x64xf32>
    %235 = arith.subf %231, %234 : vector<64x64xf32>
    %236 = math.exp %235 : vector<64x64xf32>
    %cst_163 = arith.constant dense<0.000000e+00> : vector<64xf32>
    %237 = vector.multi_reduction <add>, %236, %cst_163 [1] : vector<64x64xf32> to vector<64xf32>
    %238 = vector.shape_cast %237 : vector<64xf32> to vector<64x1xf32>
    %239 = tpu.reciprocal %238 {approx = true} : vector<64x1xf32> -> vector<64x1xf32>
    %240 = vector.broadcast %239 : vector<64x1xf32> to vector<64x64xf32>
    %241 = arith.mulf %236, %240 : vector<64x64xf32>
    %c1_164 = arith.constant 1 : index
    %c1_165 = arith.constant 1 : index
    %c0_166 = arith.constant 0 : index
    %c0_167 = arith.constant 0 : index
    %242 = vector.load %arg6[%c1_164, %c1_165, %c0_166, %c0_167] : memref<3x4x16x64xf32, #tpu.memory_space<vmem>>, vector<1x1x16x64xf32>
    %243 = vector.shape_cast %242 : vector<1x1x16x64xf32> to vector<16x64xf32>
    %cst_168 = arith.constant dense<0.000000e+00> : vector<64x64xf32>
    %244 = tpu.matmul %228, %243, %cst_168 {dimension_numbers = #tpu.dot_dimension_numbers<[1], [0], [0], [1], [0, 0, 1, 1], [], []>} : vector<64x16xf32>, vector<16x64xf32>, vector<64x64xf32> -> vector<64x64xf32>
    %cst_169 = arith.constant dense<0.000000e+00> : vector<64x64xf32>
    %245 = tpu.matmul %241, %244, %cst_169 {dimension_numbers = #tpu.dot_dimension_numbers<[1], [0], [0], [1], [0, 0, 1, 1], [], []>} : vector<64x64xf32>, vector<64x64xf32>, vector<64x64xf32> -> vector<64x64xf32>
    %246 = arith.addf %225, %245 : vector<64x64xf32>
    %c0_170 = arith.constant 0 : index
    %c32_171 = arith.constant 32 : index
    %247 = vector.load %arg21[%c0_170, %c32_171] : memref<64x192xf32, #tpu.memory_space<vmem>>, vector<64x16xf32>
    %c0_172 = arith.constant 0 : index
    %c96_173 = arith.constant 96 : index
    %248 = vector.load %arg21[%c0_172, %c96_173] : memref<64x192xf32, #tpu.memory_space<vmem>>, vector<64x16xf32>
    %c0_174 = arith.constant 0 : index
    %c160_175 = arith.constant 160 : index
    %249 = vector.load %arg21[%c0_174, %c160_175] : memref<64x192xf32, #tpu.memory_space<vmem>>, vector<64x16xf32>
    %cst_176 = arith.constant dense<0.000000e+00> : vector<64x64xf32>
    %250 = tpu.matmul %247, %248, %cst_176 {dimension_numbers = #tpu.dot_dimension_numbers<[1], [1], [0], [0], [0, 0, 1, 0], [], []>} : vector<64x16xf32>, vector<64x16xf32>, vector<64x64xf32> -> vector<64x64xf32>
    %c0_177 = arith.constant 0 : index
    %c0_178 = arith.constant 0 : index
    %251 = vector.load %arg22[%c0_177, %c0_178] : memref<64x64xf32, #tpu.memory_space<vmem>>, vector<64x64xf32>
    %252 = arith.addf %250, %251 : vector<64x64xf32>
    %cst_179 = arith.constant dense<0xFF800000> : vector<64xf32>
    %253 = vector.multi_reduction <maximumf>, %252, %cst_179 [1] : vector<64x64xf32> to vector<64xf32>
    %254 = vector.shape_cast %253 : vector<64xf32> to vector<64x1xf32>
    %255 = vector.broadcast %254 : vector<64x1xf32> to vector<64x64xf32>
    %256 = arith.subf %252, %255 : vector<64x64xf32>
    %257 = math.exp %256 : vector<64x64xf32>
    %cst_180 = arith.constant dense<0.000000e+00> : vector<64xf32>
    %258 = vector.multi_reduction <add>, %257, %cst_180 [1] : vector<64x64xf32> to vector<64xf32>
    %259 = vector.shape_cast %258 : vector<64xf32> to vector<64x1xf32>
    %260 = tpu.reciprocal %259 {approx = true} : vector<64x1xf32> -> vector<64x1xf32>
    %261 = vector.broadcast %260 : vector<64x1xf32> to vector<64x64xf32>
    %262 = arith.mulf %257, %261 : vector<64x64xf32>
    %c1_181 = arith.constant 1 : index
    %c2_182 = arith.constant 2 : index
    %c0_183 = arith.constant 0 : index
    %c0_184 = arith.constant 0 : index
    %263 = vector.load %arg6[%c1_181, %c2_182, %c0_183, %c0_184] : memref<3x4x16x64xf32, #tpu.memory_space<vmem>>, vector<1x1x16x64xf32>
    %264 = vector.shape_cast %263 : vector<1x1x16x64xf32> to vector<16x64xf32>
    %cst_185 = arith.constant dense<0.000000e+00> : vector<64x64xf32>
    %265 = tpu.matmul %249, %264, %cst_185 {dimension_numbers = #tpu.dot_dimension_numbers<[1], [0], [0], [1], [0, 0, 1, 1], [], []>} : vector<64x16xf32>, vector<16x64xf32>, vector<64x64xf32> -> vector<64x64xf32>
    %cst_186 = arith.constant dense<0.000000e+00> : vector<64x64xf32>
    %266 = tpu.matmul %262, %265, %cst_186 {dimension_numbers = #tpu.dot_dimension_numbers<[1], [0], [0], [1], [0, 0, 1, 1], [], []>} : vector<64x64xf32>, vector<64x64xf32>, vector<64x64xf32> -> vector<64x64xf32>
    %267 = arith.addf %246, %266 : vector<64x64xf32>
    %c0_187 = arith.constant 0 : index
    %c48_188 = arith.constant 48 : index
    %268 = vector.load %arg21[%c0_187, %c48_188] : memref<64x192xf32, #tpu.memory_space<vmem>>, vector<64x16xf32>
    %c0_189 = arith.constant 0 : index
    %c112_190 = arith.constant 112 : index
    %269 = vector.load %arg21[%c0_189, %c112_190] : memref<64x192xf32, #tpu.memory_space<vmem>>, vector<64x16xf32>
    %c0_191 = arith.constant 0 : index
    %c176_192 = arith.constant 176 : index
    %270 = vector.load %arg21[%c0_191, %c176_192] : memref<64x192xf32, #tpu.memory_space<vmem>>, vector<64x16xf32>
    %cst_193 = arith.constant dense<0.000000e+00> : vector<64x64xf32>
    %271 = tpu.matmul %268, %269, %cst_193 {dimension_numbers = #tpu.dot_dimension_numbers<[1], [1], [0], [0], [0, 0, 1, 0], [], []>} : vector<64x16xf32>, vector<64x16xf32>, vector<64x64xf32> -> vector<64x64xf32>
    %c0_194 = arith.constant 0 : index
    %c0_195 = arith.constant 0 : index
    %272 = vector.load %arg22[%c0_194, %c0_195] : memref<64x64xf32, #tpu.memory_space<vmem>>, vector<64x64xf32>
    %273 = arith.addf %271, %272 : vector<64x64xf32>
    %cst_196 = arith.constant dense<0xFF800000> : vector<64xf32>
    %274 = vector.multi_reduction <maximumf>, %273, %cst_196 [1] : vector<64x64xf32> to vector<64xf32>
    %275 = vector.shape_cast %274 : vector<64xf32> to vector<64x1xf32>
    %276 = vector.broadcast %275 : vector<64x1xf32> to vector<64x64xf32>
    %277 = arith.subf %273, %276 : vector<64x64xf32>
    %278 = math.exp %277 : vector<64x64xf32>
    %cst_197 = arith.constant dense<0.000000e+00> : vector<64xf32>
    %279 = vector.multi_reduction <add>, %278, %cst_197 [1] : vector<64x64xf32> to vector<64xf32>
    %280 = vector.shape_cast %279 : vector<64xf32> to vector<64x1xf32>
    %281 = tpu.reciprocal %280 {approx = true} : vector<64x1xf32> -> vector<64x1xf32>
    %282 = vector.broadcast %281 : vector<64x1xf32> to vector<64x64xf32>
    %283 = arith.mulf %278, %282 : vector<64x64xf32>
    %c1_198 = arith.constant 1 : index
    %c3_199 = arith.constant 3 : index
    %c0_200 = arith.constant 0 : index
    %c0_201 = arith.constant 0 : index
    %284 = vector.load %arg6[%c1_198, %c3_199, %c0_200, %c0_201] : memref<3x4x16x64xf32, #tpu.memory_space<vmem>>, vector<1x1x16x64xf32>
    %285 = vector.shape_cast %284 : vector<1x1x16x64xf32> to vector<16x64xf32>
    %cst_202 = arith.constant dense<0.000000e+00> : vector<64x64xf32>
    %286 = tpu.matmul %270, %285, %cst_202 {dimension_numbers = #tpu.dot_dimension_numbers<[1], [0], [0], [1], [0, 0, 1, 1], [], []>} : vector<64x16xf32>, vector<16x64xf32>, vector<64x64xf32> -> vector<64x64xf32>
    %cst_203 = arith.constant dense<0.000000e+00> : vector<64x64xf32>
    %287 = tpu.matmul %283, %286, %cst_203 {dimension_numbers = #tpu.dot_dimension_numbers<[1], [0], [0], [1], [0, 0, 1, 1], [], []>} : vector<64x64xf32>, vector<64x64xf32>, vector<64x64xf32> -> vector<64x64xf32>
    %288 = arith.addf %267, %287 : vector<64x64xf32>
    %c1_204 = arith.constant 1 : index
    %c0_205 = arith.constant 0 : index
    %c0_206 = arith.constant 0 : index
    %289 = vector.load %arg7[%c1_204, %c0_205, %c0_206] : memref<3x1x64xf32, #tpu.memory_space<vmem>>, vector<1x1x64xf32>
    %290 = vector.shape_cast %289 : vector<1x1x64xf32> to vector<1x64xf32>
    %291 = vector.broadcast %290 : vector<1x64xf32> to vector<64x64xf32>
    %292 = arith.addf %288, %291 : vector<64x64xf32>
    %293 = arith.addf %195, %292 : vector<64x64xf32>
    %c1_207 = arith.constant 1 : index
    %c0_208 = arith.constant 0 : index
    %c0_209 = arith.constant 0 : index
    %294 = vector.load %arg12[%c1_207, %c0_208, %c0_209] : memref<3x1x64xf32, #tpu.memory_space<vmem>>, vector<1x1x64xf32>
    %295 = vector.shape_cast %294 : vector<1x1x64xf32> to vector<1x64xf32>
    %c1_210 = arith.constant 1 : index
    %c0_211 = arith.constant 0 : index
    %c0_212 = arith.constant 0 : index
    %296 = vector.load %arg13[%c1_210, %c0_211, %c0_212] : memref<3x1x64xf32, #tpu.memory_space<vmem>>, vector<1x1x64xf32>
    %297 = vector.shape_cast %296 : vector<1x1x64xf32> to vector<1x64xf32>
    %cst_213 = arith.constant dense<0.000000e+00> : vector<64xf32>
    %298 = vector.multi_reduction <add>, %293, %cst_213 [1] : vector<64x64xf32> to vector<64xf32>
    %299 = vector.shape_cast %298 : vector<64xf32> to vector<64x1xf32>
    %cst_214 = arith.constant 6.400000e+01 : f32
    %300 = vector.broadcast %cst_214 : f32 to vector<64x1xf32>
    %301 = arith.divf %299, %300 : vector<64x1xf32>
    %302 = vector.broadcast %301 : vector<64x1xf32> to vector<64x64xf32>
    %303 = arith.subf %293, %302 : vector<64x64xf32>
    %304 = arith.mulf %303, %303 : vector<64x64xf32>
    %cst_215 = arith.constant dense<0.000000e+00> : vector<64xf32>
    %305 = vector.multi_reduction <add>, %304, %cst_215 [1] : vector<64x64xf32> to vector<64xf32>
    %306 = vector.shape_cast %305 : vector<64xf32> to vector<64x1xf32>
    %cst_216 = arith.constant 6.400000e+01 : f32
    %307 = vector.broadcast %cst_216 : f32 to vector<64x1xf32>
    %308 = arith.divf %306, %307 : vector<64x1xf32>
    %309 = vector.broadcast %301 : vector<64x1xf32> to vector<64x64xf32>
    %310 = arith.subf %293, %309 : vector<64x64xf32>
    %cst_217 = arith.constant 9.99999974E-6 : f32
    %311 = vector.broadcast %cst_217 : f32 to vector<64x1xf32>
    %312 = arith.addf %308, %311 : vector<64x1xf32>
    %313 = math.rsqrt %312 : vector<64x1xf32>
    %314 = vector.broadcast %313 : vector<64x1xf32> to vector<64x64xf32>
    %315 = arith.mulf %310, %314 : vector<64x64xf32>
    %316 = vector.broadcast %295 : vector<1x64xf32> to vector<64x64xf32>
    %317 = arith.mulf %315, %316 : vector<64x64xf32>
    %318 = vector.broadcast %297 : vector<1x64xf32> to vector<64x64xf32>
    %319 = arith.addf %317, %318 : vector<64x64xf32>
    %c1_218 = arith.constant 1 : index
    %c0_219 = arith.constant 0 : index
    %c0_220 = arith.constant 0 : index
    %320 = vector.load %arg8[%c1_218, %c0_219, %c0_220] : memref<3x64x128xf32, #tpu.memory_space<vmem>>, vector<1x64x128xf32>
    %321 = vector.shape_cast %320 : vector<1x64x128xf32> to vector<64x128xf32>
    %cst_221 = arith.constant dense<0.000000e+00> : vector<64x128xf32>
    %322 = tpu.matmul %319, %321, %cst_221 {dimension_numbers = #tpu.dot_dimension_numbers<[1], [0], [0], [1], [0, 0, 1, 1], [], []>} : vector<64x64xf32>, vector<64x128xf32>, vector<64x128xf32> -> vector<64x128xf32>
    %c1_222 = arith.constant 1 : index
    %c0_223 = arith.constant 0 : index
    %c0_224 = arith.constant 0 : index
    %323 = vector.load %arg9[%c1_222, %c0_223, %c0_224] : memref<3x1x128xf32, #tpu.memory_space<vmem>>, vector<1x1x128xf32>
    %324 = vector.shape_cast %323 : vector<1x1x128xf32> to vector<1x128xf32>
    %325 = vector.broadcast %324 : vector<1x128xf32> to vector<64x128xf32>
    %326 = arith.addf %322, %325 : vector<64x128xf32>
    %cst_225 = arith.constant 0.000000e+00 : f32
    %327 = vector.broadcast %cst_225 : f32 to vector<64x128xf32>
    %328 = arith.maximumf %326, %327 : vector<64x128xf32>
    %c1_226 = arith.constant 1 : index
    %c0_227 = arith.constant 0 : index
    %c0_228 = arith.constant 0 : index
    %329 = vector.load %arg10[%c1_226, %c0_227, %c0_228] : memref<3x128x64xf32, #tpu.memory_space<vmem>>, vector<1x128x64xf32>
    %330 = vector.shape_cast %329 : vector<1x128x64xf32> to vector<128x64xf32>
    %cst_229 = arith.constant dense<0.000000e+00> : vector<64x64xf32>
    %331 = tpu.matmul %328, %330, %cst_229 {dimension_numbers = #tpu.dot_dimension_numbers<[1], [0], [0], [1], [0, 0, 1, 1], [], []>} : vector<64x128xf32>, vector<128x64xf32>, vector<64x64xf32> -> vector<64x64xf32>
    %c1_230 = arith.constant 1 : index
    %c0_231 = arith.constant 0 : index
    %c0_232 = arith.constant 0 : index
    %332 = vector.load %arg11[%c1_230, %c0_231, %c0_232] : memref<3x1x64xf32, #tpu.memory_space<vmem>>, vector<1x1x64xf32>
    %333 = vector.shape_cast %332 : vector<1x1x64xf32> to vector<1x64xf32>
    %334 = vector.broadcast %333 : vector<1x64xf32> to vector<64x64xf32>
    %335 = arith.addf %331, %334 : vector<64x64xf32>
    %336 = arith.addf %319, %335 : vector<64x64xf32>
    %c1_233 = arith.constant 1 : index
    %c0_234 = arith.constant 0 : index
    %c0_235 = arith.constant 0 : index
    %337 = vector.load %arg14[%c1_233, %c0_234, %c0_235] : memref<3x1x64xf32, #tpu.memory_space<vmem>>, vector<1x1x64xf32>
    %338 = vector.shape_cast %337 : vector<1x1x64xf32> to vector<1x64xf32>
    %c1_236 = arith.constant 1 : index
    %c0_237 = arith.constant 0 : index
    %c0_238 = arith.constant 0 : index
    %339 = vector.load %arg15[%c1_236, %c0_237, %c0_238] : memref<3x1x64xf32, #tpu.memory_space<vmem>>, vector<1x1x64xf32>
    %340 = vector.shape_cast %339 : vector<1x1x64xf32> to vector<1x64xf32>
    %cst_239 = arith.constant dense<0.000000e+00> : vector<64xf32>
    %341 = vector.multi_reduction <add>, %336, %cst_239 [1] : vector<64x64xf32> to vector<64xf32>
    %342 = vector.shape_cast %341 : vector<64xf32> to vector<64x1xf32>
    %cst_240 = arith.constant 6.400000e+01 : f32
    %343 = vector.broadcast %cst_240 : f32 to vector<64x1xf32>
    %344 = arith.divf %342, %343 : vector<64x1xf32>
    %345 = vector.broadcast %344 : vector<64x1xf32> to vector<64x64xf32>
    %346 = arith.subf %336, %345 : vector<64x64xf32>
    %347 = arith.mulf %346, %346 : vector<64x64xf32>
    %cst_241 = arith.constant dense<0.000000e+00> : vector<64xf32>
    %348 = vector.multi_reduction <add>, %347, %cst_241 [1] : vector<64x64xf32> to vector<64xf32>
    %349 = vector.shape_cast %348 : vector<64xf32> to vector<64x1xf32>
    %cst_242 = arith.constant 6.400000e+01 : f32
    %350 = vector.broadcast %cst_242 : f32 to vector<64x1xf32>
    %351 = arith.divf %349, %350 : vector<64x1xf32>
    %352 = vector.broadcast %344 : vector<64x1xf32> to vector<64x64xf32>
    %353 = arith.subf %336, %352 : vector<64x64xf32>
    %cst_243 = arith.constant 9.99999974E-6 : f32
    %354 = vector.broadcast %cst_243 : f32 to vector<64x1xf32>
    %355 = arith.addf %351, %354 : vector<64x1xf32>
    %356 = math.rsqrt %355 : vector<64x1xf32>
    %357 = vector.broadcast %356 : vector<64x1xf32> to vector<64x64xf32>
    %358 = arith.mulf %353, %357 : vector<64x64xf32>
    %359 = vector.broadcast %338 : vector<1x64xf32> to vector<64x64xf32>
    %360 = arith.mulf %358, %359 : vector<64x64xf32>
    %361 = vector.broadcast %340 : vector<1x64xf32> to vector<64x64xf32>
    %362 = arith.addf %360, %361 : vector<64x64xf32>
    %c0_244 = arith.constant 0 : index
    %c0_245 = arith.constant 0 : index
    %363 = vector.load %arg20[%c0_244, %c0_245] : memref<64x64xf32, #tpu.memory_space<vmem>>, vector<64x64xf32>
    tpu.vector_store %arg20[%c0_244, %c0_245], %362 {strides = array<i32>} : memref<64x64xf32, #tpu.memory_space<vmem>>, vector<64x64xf32>,
    %c0_246 = arith.constant 0 : index
    %c0_247 = arith.constant 0 : index
    %364 = vector.load %arg20[%c0_246, %c0_247] : memref<64x64xf32, #tpu.memory_space<vmem>>, vector<64x64xf32>
    %c2_248 = arith.constant 2 : index
    %c0_249 = arith.constant 0 : index
    %c0_250 = arith.constant 0 : index
    %365 = vector.load %arg4[%c2_248, %c0_249, %c0_250] : memref<3x64x192xf32, #tpu.memory_space<vmem>>, vector<1x64x192xf32>
    %366 = vector.shape_cast %365 : vector<1x64x192xf32> to vector<64x192xf32>
    %cst_251 = arith.constant dense<0.000000e+00> : vector<64x192xf32>
    %367 = tpu.matmul %364, %366, %cst_251 {dimension_numbers = #tpu.dot_dimension_numbers<[1], [0], [0], [1], [0, 0, 1, 1], [], []>} : vector<64x64xf32>, vector<64x192xf32>, vector<64x192xf32> -> vector<64x192xf32>
    %c2_252 = arith.constant 2 : index
    %c0_253 = arith.constant 0 : index
    %c0_254 = arith.constant 0 : index
    %368 = vector.load %arg5[%c2_252, %c0_253, %c0_254] : memref<3x1x192xf32, #tpu.memory_space<vmem>>, vector<1x1x192xf32>
    %369 = vector.shape_cast %368 : vector<1x1x192xf32> to vector<1x192xf32>
    %370 = vector.broadcast %369 : vector<1x192xf32> to vector<64x192xf32>
    %371 = arith.addf %367, %370 : vector<64x192xf32>
    %c0_255 = arith.constant 0 : index
    %c0_256 = arith.constant 0 : index
    %372 = vector.load %arg21[%c0_255, %c0_256] : memref<64x192xf32, #tpu.memory_space<vmem>>, vector<64x192xf32>
    tpu.vector_store %arg21[%c0_255, %c0_256], %371 {strides = array<i32>} : memref<64x192xf32, #tpu.memory_space<vmem>>, vector<64x192xf32>,
    %cst_257 = arith.constant 0.000000e+00 : f32
    %373 = vector.broadcast %cst_257 : f32 to vector<64x64xf32>
    %c0_258 = arith.constant 0 : index
    %c0_259 = arith.constant 0 : index
    %374 = vector.load %arg21[%c0_258, %c0_259] : memref<64x192xf32, #tpu.memory_space<vmem>>, vector<64x16xf32>
    %c0_260 = arith.constant 0 : index
    %c64_261 = arith.constant 64 : index
    %375 = vector.load %arg21[%c0_260, %c64_261] : memref<64x192xf32, #tpu.memory_space<vmem>>, vector<64x16xf32>
    %c0_262 = arith.constant 0 : index
    %c128_263 = arith.constant 128 : index
    %376 = vector.load %arg21[%c0_262, %c128_263] : memref<64x192xf32, #tpu.memory_space<vmem>>, vector<64x16xf32>
    %cst_264 = arith.constant dense<0.000000e+00> : vector<64x64xf32>
    %377 = tpu.matmul %374, %375, %cst_264 {dimension_numbers = #tpu.dot_dimension_numbers<[1], [1], [0], [0], [0, 0, 1, 0], [], []>} : vector<64x16xf32>, vector<64x16xf32>, vector<64x64xf32> -> vector<64x64xf32>
    %c0_265 = arith.constant 0 : index
    %c0_266 = arith.constant 0 : index
    %378 = vector.load %arg22[%c0_265, %c0_266] : memref<64x64xf32, #tpu.memory_space<vmem>>, vector<64x64xf32>
    %379 = arith.addf %377, %378 : vector<64x64xf32>
    %cst_267 = arith.constant dense<0xFF800000> : vector<64xf32>
    %380 = vector.multi_reduction <maximumf>, %379, %cst_267 [1] : vector<64x64xf32> to vector<64xf32>
    %381 = vector.shape_cast %380 : vector<64xf32> to vector<64x1xf32>
    %382 = vector.broadcast %381 : vector<64x1xf32> to vector<64x64xf32>
    %383 = arith.subf %379, %382 : vector<64x64xf32>
    %384 = math.exp %383 : vector<64x64xf32>
    %cst_268 = arith.constant dense<0.000000e+00> : vector<64xf32>
    %385 = vector.multi_reduction <add>, %384, %cst_268 [1] : vector<64x64xf32> to vector<64xf32>
    %386 = vector.shape_cast %385 : vector<64xf32> to vector<64x1xf32>
    %387 = tpu.reciprocal %386 {approx = true} : vector<64x1xf32> -> vector<64x1xf32>
    %388 = vector.broadcast %387 : vector<64x1xf32> to vector<64x64xf32>
    %389 = arith.mulf %384, %388 : vector<64x64xf32>
    %c2_269 = arith.constant 2 : index
    %c0_270 = arith.constant 0 : index
    %c0_271 = arith.constant 0 : index
    %c0_272 = arith.constant 0 : index
    %390 = vector.load %arg6[%c2_269, %c0_270, %c0_271, %c0_272] : memref<3x4x16x64xf32, #tpu.memory_space<vmem>>, vector<1x1x16x64xf32>
    %391 = vector.shape_cast %390 : vector<1x1x16x64xf32> to vector<16x64xf32>
    %cst_273 = arith.constant dense<0.000000e+00> : vector<64x64xf32>
    %392 = tpu.matmul %376, %391, %cst_273 {dimension_numbers = #tpu.dot_dimension_numbers<[1], [0], [0], [1], [0, 0, 1, 1], [], []>} : vector<64x16xf32>, vector<16x64xf32>, vector<64x64xf32> -> vector<64x64xf32>
    %cst_274 = arith.constant dense<0.000000e+00> : vector<64x64xf32>
    %393 = tpu.matmul %389, %392, %cst_274 {dimension_numbers = #tpu.dot_dimension_numbers<[1], [0], [0], [1], [0, 0, 1, 1], [], []>} : vector<64x64xf32>, vector<64x64xf32>, vector<64x64xf32> -> vector<64x64xf32>
    %394 = arith.addf %373, %393 : vector<64x64xf32>
    %c0_275 = arith.constant 0 : index
    %c16_276 = arith.constant 16 : index
    %395 = vector.load %arg21[%c0_275, %c16_276] : memref<64x192xf32, #tpu.memory_space<vmem>>, vector<64x16xf32>
    %c0_277 = arith.constant 0 : index
    %c80_278 = arith.constant 80 : index
    %396 = vector.load %arg21[%c0_277, %c80_278] : memref<64x192xf32, #tpu.memory_space<vmem>>, vector<64x16xf32>
    %c0_279 = arith.constant 0 : index
    %c144_280 = arith.constant 144 : index
    %397 = vector.load %arg21[%c0_279, %c144_280] : memref<64x192xf32, #tpu.memory_space<vmem>>, vector<64x16xf32>
    %cst_281 = arith.constant dense<0.000000e+00> : vector<64x64xf32>
    %398 = tpu.matmul %395, %396, %cst_281 {dimension_numbers = #tpu.dot_dimension_numbers<[1], [1], [0], [0], [0, 0, 1, 0], [], []>} : vector<64x16xf32>, vector<64x16xf32>, vector<64x64xf32> -> vector<64x64xf32>
    %c0_282 = arith.constant 0 : index
    %c0_283 = arith.constant 0 : index
    %399 = vector.load %arg22[%c0_282, %c0_283] : memref<64x64xf32, #tpu.memory_space<vmem>>, vector<64x64xf32>
    %400 = arith.addf %398, %399 : vector<64x64xf32>
    %cst_284 = arith.constant dense<0xFF800000> : vector<64xf32>
    %401 = vector.multi_reduction <maximumf>, %400, %cst_284 [1] : vector<64x64xf32> to vector<64xf32>
    %402 = vector.shape_cast %401 : vector<64xf32> to vector<64x1xf32>
    %403 = vector.broadcast %402 : vector<64x1xf32> to vector<64x64xf32>
    %404 = arith.subf %400, %403 : vector<64x64xf32>
    %405 = math.exp %404 : vector<64x64xf32>
    %cst_285 = arith.constant dense<0.000000e+00> : vector<64xf32>
    %406 = vector.multi_reduction <add>, %405, %cst_285 [1] : vector<64x64xf32> to vector<64xf32>
    %407 = vector.shape_cast %406 : vector<64xf32> to vector<64x1xf32>
    %408 = tpu.reciprocal %407 {approx = true} : vector<64x1xf32> -> vector<64x1xf32>
    %409 = vector.broadcast %408 : vector<64x1xf32> to vector<64x64xf32>
    %410 = arith.mulf %405, %409 : vector<64x64xf32>
    %c2_286 = arith.constant 2 : index
    %c1_287 = arith.constant 1 : index
    %c0_288 = arith.constant 0 : index
    %c0_289 = arith.constant 0 : index
    %411 = vector.load %arg6[%c2_286, %c1_287, %c0_288, %c0_289] : memref<3x4x16x64xf32, #tpu.memory_space<vmem>>, vector<1x1x16x64xf32>
    %412 = vector.shape_cast %411 : vector<1x1x16x64xf32> to vector<16x64xf32>
    %cst_290 = arith.constant dense<0.000000e+00> : vector<64x64xf32>
    %413 = tpu.matmul %397, %412, %cst_290 {dimension_numbers = #tpu.dot_dimension_numbers<[1], [0], [0], [1], [0, 0, 1, 1], [], []>} : vector<64x16xf32>, vector<16x64xf32>, vector<64x64xf32> -> vector<64x64xf32>
    %cst_291 = arith.constant dense<0.000000e+00> : vector<64x64xf32>
    %414 = tpu.matmul %410, %413, %cst_291 {dimension_numbers = #tpu.dot_dimension_numbers<[1], [0], [0], [1], [0, 0, 1, 1], [], []>} : vector<64x64xf32>, vector<64x64xf32>, vector<64x64xf32> -> vector<64x64xf32>
    %415 = arith.addf %394, %414 : vector<64x64xf32>
    %c0_292 = arith.constant 0 : index
    %c32_293 = arith.constant 32 : index
    %416 = vector.load %arg21[%c0_292, %c32_293] : memref<64x192xf32, #tpu.memory_space<vmem>>, vector<64x16xf32>
    %c0_294 = arith.constant 0 : index
    %c96_295 = arith.constant 96 : index
    %417 = vector.load %arg21[%c0_294, %c96_295] : memref<64x192xf32, #tpu.memory_space<vmem>>, vector<64x16xf32>
    %c0_296 = arith.constant 0 : index
    %c160_297 = arith.constant 160 : index
    %418 = vector.load %arg21[%c0_296, %c160_297] : memref<64x192xf32, #tpu.memory_space<vmem>>, vector<64x16xf32>
    %cst_298 = arith.constant dense<0.000000e+00> : vector<64x64xf32>
    %419 = tpu.matmul %416, %417, %cst_298 {dimension_numbers = #tpu.dot_dimension_numbers<[1], [1], [0], [0], [0, 0, 1, 0], [], []>} : vector<64x16xf32>, vector<64x16xf32>, vector<64x64xf32> -> vector<64x64xf32>
    %c0_299 = arith.constant 0 : index
    %c0_300 = arith.constant 0 : index
    %420 = vector.load %arg22[%c0_299, %c0_300] : memref<64x64xf32, #tpu.memory_space<vmem>>, vector<64x64xf32>
    %421 = arith.addf %419, %420 : vector<64x64xf32>
    %cst_301 = arith.constant dense<0xFF800000> : vector<64xf32>
    %422 = vector.multi_reduction <maximumf>, %421, %cst_301 [1] : vector<64x64xf32> to vector<64xf32>
    %423 = vector.shape_cast %422 : vector<64xf32> to vector<64x1xf32>
    %424 = vector.broadcast %423 : vector<64x1xf32> to vector<64x64xf32>
    %425 = arith.subf %421, %424 : vector<64x64xf32>
    %426 = math.exp %425 : vector<64x64xf32>
    %cst_302 = arith.constant dense<0.000000e+00> : vector<64xf32>
    %427 = vector.multi_reduction <add>, %426, %cst_302 [1] : vector<64x64xf32> to vector<64xf32>
    %428 = vector.shape_cast %427 : vector<64xf32> to vector<64x1xf32>
    %429 = tpu.reciprocal %428 {approx = true} : vector<64x1xf32> -> vector<64x1xf32>
    %430 = vector.broadcast %429 : vector<64x1xf32> to vector<64x64xf32>
    %431 = arith.mulf %426, %430 : vector<64x64xf32>
    %c2_303 = arith.constant 2 : index
    %c2_304 = arith.constant 2 : index
    %c0_305 = arith.constant 0 : index
    %c0_306 = arith.constant 0 : index
    %432 = vector.load %arg6[%c2_303, %c2_304, %c0_305, %c0_306] : memref<3x4x16x64xf32, #tpu.memory_space<vmem>>, vector<1x1x16x64xf32>
    %433 = vector.shape_cast %432 : vector<1x1x16x64xf32> to vector<16x64xf32>
    %cst_307 = arith.constant dense<0.000000e+00> : vector<64x64xf32>
    %434 = tpu.matmul %418, %433, %cst_307 {dimension_numbers = #tpu.dot_dimension_numbers<[1], [0], [0], [1], [0, 0, 1, 1], [], []>} : vector<64x16xf32>, vector<16x64xf32>, vector<64x64xf32> -> vector<64x64xf32>
    %cst_308 = arith.constant dense<0.000000e+00> : vector<64x64xf32>
    %435 = tpu.matmul %431, %434, %cst_308 {dimension_numbers = #tpu.dot_dimension_numbers<[1], [0], [0], [1], [0, 0, 1, 1], [], []>} : vector<64x64xf32>, vector<64x64xf32>, vector<64x64xf32> -> vector<64x64xf32>
    %436 = arith.addf %415, %435 : vector<64x64xf32>
    %c0_309 = arith.constant 0 : index
    %c48_310 = arith.constant 48 : index
    %437 = vector.load %arg21[%c0_309, %c48_310] : memref<64x192xf32, #tpu.memory_space<vmem>>, vector<64x16xf32>
    %c0_311 = arith.constant 0 : index
    %c112_312 = arith.constant 112 : index
    %438 = vector.load %arg21[%c0_311, %c112_312] : memref<64x192xf32, #tpu.memory_space<vmem>>, vector<64x16xf32>
    %c0_313 = arith.constant 0 : index
    %c176_314 = arith.constant 176 : index
    %439 = vector.load %arg21[%c0_313, %c176_314] : memref<64x192xf32, #tpu.memory_space<vmem>>, vector<64x16xf32>
    %cst_315 = arith.constant dense<0.000000e+00> : vector<64x64xf32>
    %440 = tpu.matmul %437, %438, %cst_315 {dimension_numbers = #tpu.dot_dimension_numbers<[1], [1], [0], [0], [0, 0, 1, 0], [], []>} : vector<64x16xf32>, vector<64x16xf32>, vector<64x64xf32> -> vector<64x64xf32>
    %c0_316 = arith.constant 0 : index
    %c0_317 = arith.constant 0 : index
    %441 = vector.load %arg22[%c0_316, %c0_317] : memref<64x64xf32, #tpu.memory_space<vmem>>, vector<64x64xf32>
    %442 = arith.addf %440, %441 : vector<64x64xf32>
    %cst_318 = arith.constant dense<0xFF800000> : vector<64xf32>
    %443 = vector.multi_reduction <maximumf>, %442, %cst_318 [1] : vector<64x64xf32> to vector<64xf32>
    %444 = vector.shape_cast %443 : vector<64xf32> to vector<64x1xf32>
    %445 = vector.broadcast %444 : vector<64x1xf32> to vector<64x64xf32>
    %446 = arith.subf %442, %445 : vector<64x64xf32>
    %447 = math.exp %446 : vector<64x64xf32>
    %cst_319 = arith.constant dense<0.000000e+00> : vector<64xf32>
    %448 = vector.multi_reduction <add>, %447, %cst_319 [1] : vector<64x64xf32> to vector<64xf32>
    %449 = vector.shape_cast %448 : vector<64xf32> to vector<64x1xf32>
    %450 = tpu.reciprocal %449 {approx = true} : vector<64x1xf32> -> vector<64x1xf32>
    %451 = vector.broadcast %450 : vector<64x1xf32> to vector<64x64xf32>
    %452 = arith.mulf %447, %451 : vector<64x64xf32>
    %c2_320 = arith.constant 2 : index
    %c3_321 = arith.constant 3 : index
    %c0_322 = arith.constant 0 : index
    %c0_323 = arith.constant 0 : index
    %453 = vector.load %arg6[%c2_320, %c3_321, %c0_322, %c0_323] : memref<3x4x16x64xf32, #tpu.memory_space<vmem>>, vector<1x1x16x64xf32>
    %454 = vector.shape_cast %453 : vector<1x1x16x64xf32> to vector<16x64xf32>
    %cst_324 = arith.constant dense<0.000000e+00> : vector<64x64xf32>
    %455 = tpu.matmul %439, %454, %cst_324 {dimension_numbers = #tpu.dot_dimension_numbers<[1], [0], [0], [1], [0, 0, 1, 1], [], []>} : vector<64x16xf32>, vector<16x64xf32>, vector<64x64xf32> -> vector<64x64xf32>
    %cst_325 = arith.constant dense<0.000000e+00> : vector<64x64xf32>
    %456 = tpu.matmul %452, %455, %cst_325 {dimension_numbers = #tpu.dot_dimension_numbers<[1], [0], [0], [1], [0, 0, 1, 1], [], []>} : vector<64x64xf32>, vector<64x64xf32>, vector<64x64xf32> -> vector<64x64xf32>
    %457 = arith.addf %436, %456 : vector<64x64xf32>
    %c2_326 = arith.constant 2 : index
    %c0_327 = arith.constant 0 : index
    %c0_328 = arith.constant 0 : index
    %458 = vector.load %arg7[%c2_326, %c0_327, %c0_328] : memref<3x1x64xf32, #tpu.memory_space<vmem>>, vector<1x1x64xf32>
    %459 = vector.shape_cast %458 : vector<1x1x64xf32> to vector<1x64xf32>
    %460 = vector.broadcast %459 : vector<1x64xf32> to vector<64x64xf32>
    %461 = arith.addf %457, %460 : vector<64x64xf32>
    %462 = arith.addf %364, %461 : vector<64x64xf32>
    %c2_329 = arith.constant 2 : index
    %c0_330 = arith.constant 0 : index
    %c0_331 = arith.constant 0 : index
    %463 = vector.load %arg12[%c2_329, %c0_330, %c0_331] : memref<3x1x64xf32, #tpu.memory_space<vmem>>, vector<1x1x64xf32>
    %464 = vector.shape_cast %463 : vector<1x1x64xf32> to vector<1x64xf32>
    %c2_332 = arith.constant 2 : index
    %c0_333 = arith.constant 0 : index
    %c0_334 = arith.constant 0 : index
    %465 = vector.load %arg13[%c2_332, %c0_333, %c0_334] : memref<3x1x64xf32, #tpu.memory_space<vmem>>, vector<1x1x64xf32>
    %466 = vector.shape_cast %465 : vector<1x1x64xf32> to vector<1x64xf32>
    %cst_335 = arith.constant dense<0.000000e+00> : vector<64xf32>
    %467 = vector.multi_reduction <add>, %462, %cst_335 [1] : vector<64x64xf32> to vector<64xf32>
    %468 = vector.shape_cast %467 : vector<64xf32> to vector<64x1xf32>
    %cst_336 = arith.constant 6.400000e+01 : f32
    %469 = vector.broadcast %cst_336 : f32 to vector<64x1xf32>
    %470 = arith.divf %468, %469 : vector<64x1xf32>
    %471 = vector.broadcast %470 : vector<64x1xf32> to vector<64x64xf32>
    %472 = arith.subf %462, %471 : vector<64x64xf32>
    %473 = arith.mulf %472, %472 : vector<64x64xf32>
    %cst_337 = arith.constant dense<0.000000e+00> : vector<64xf32>
    %474 = vector.multi_reduction <add>, %473, %cst_337 [1] : vector<64x64xf32> to vector<64xf32>
    %475 = vector.shape_cast %474 : vector<64xf32> to vector<64x1xf32>
    %cst_338 = arith.constant 6.400000e+01 : f32
    %476 = vector.broadcast %cst_338 : f32 to vector<64x1xf32>
    %477 = arith.divf %475, %476 : vector<64x1xf32>
    %478 = vector.broadcast %470 : vector<64x1xf32> to vector<64x64xf32>
    %479 = arith.subf %462, %478 : vector<64x64xf32>
    %cst_339 = arith.constant 9.99999974E-6 : f32
    %480 = vector.broadcast %cst_339 : f32 to vector<64x1xf32>
    %481 = arith.addf %477, %480 : vector<64x1xf32>
    %482 = math.rsqrt %481 : vector<64x1xf32>
    %483 = vector.broadcast %482 : vector<64x1xf32> to vector<64x64xf32>
    %484 = arith.mulf %479, %483 : vector<64x64xf32>
    %485 = vector.broadcast %464 : vector<1x64xf32> to vector<64x64xf32>
    %486 = arith.mulf %484, %485 : vector<64x64xf32>
    %487 = vector.broadcast %466 : vector<1x64xf32> to vector<64x64xf32>
    %488 = arith.addf %486, %487 : vector<64x64xf32>
    %c2_340 = arith.constant 2 : index
    %c0_341 = arith.constant 0 : index
    %c0_342 = arith.constant 0 : index
    %489 = vector.load %arg8[%c2_340, %c0_341, %c0_342] : memref<3x64x128xf32, #tpu.memory_space<vmem>>, vector<1x64x128xf32>
    %490 = vector.shape_cast %489 : vector<1x64x128xf32> to vector<64x128xf32>
    %cst_343 = arith.constant dense<0.000000e+00> : vector<64x128xf32>
    %491 = tpu.matmul %488, %490, %cst_343 {dimension_numbers = #tpu.dot_dimension_numbers<[1], [0], [0], [1], [0, 0, 1, 1], [], []>} : vector<64x64xf32>, vector<64x128xf32>, vector<64x128xf32> -> vector<64x128xf32>
    %c2_344 = arith.constant 2 : index
    %c0_345 = arith.constant 0 : index
    %c0_346 = arith.constant 0 : index
    %492 = vector.load %arg9[%c2_344, %c0_345, %c0_346] : memref<3x1x128xf32, #tpu.memory_space<vmem>>, vector<1x1x128xf32>
    %493 = vector.shape_cast %492 : vector<1x1x128xf32> to vector<1x128xf32>
    %494 = vector.broadcast %493 : vector<1x128xf32> to vector<64x128xf32>
    %495 = arith.addf %491, %494 : vector<64x128xf32>
    %cst_347 = arith.constant 0.000000e+00 : f32
    %496 = vector.broadcast %cst_347 : f32 to vector<64x128xf32>
    %497 = arith.maximumf %495, %496 : vector<64x128xf32>
    %c2_348 = arith.constant 2 : index
    %c0_349 = arith.constant 0 : index
    %c0_350 = arith.constant 0 : index
    %498 = vector.load %arg10[%c2_348, %c0_349, %c0_350] : memref<3x128x64xf32, #tpu.memory_space<vmem>>, vector<1x128x64xf32>
    %499 = vector.shape_cast %498 : vector<1x128x64xf32> to vector<128x64xf32>
    %cst_351 = arith.constant dense<0.000000e+00> : vector<64x64xf32>
    %500 = tpu.matmul %497, %499, %cst_351 {dimension_numbers = #tpu.dot_dimension_numbers<[1], [0], [0], [1], [0, 0, 1, 1], [], []>} : vector<64x128xf32>, vector<128x64xf32>, vector<64x64xf32> -> vector<64x64xf32>
    %c2_352 = arith.constant 2 : index
    %c0_353 = arith.constant 0 : index
    %c0_354 = arith.constant 0 : index
    %501 = vector.load %arg11[%c2_352, %c0_353, %c0_354] : memref<3x1x64xf32, #tpu.memory_space<vmem>>, vector<1x1x64xf32>
    %502 = vector.shape_cast %501 : vector<1x1x64xf32> to vector<1x64xf32>
    %503 = vector.broadcast %502 : vector<1x64xf32> to vector<64x64xf32>
    %504 = arith.addf %500, %503 : vector<64x64xf32>
    %505 = arith.addf %488, %504 : vector<64x64xf32>
    %c2_355 = arith.constant 2 : index
    %c0_356 = arith.constant 0 : index
    %c0_357 = arith.constant 0 : index
    %506 = vector.load %arg14[%c2_355, %c0_356, %c0_357] : memref<3x1x64xf32, #tpu.memory_space<vmem>>, vector<1x1x64xf32>
    %507 = vector.shape_cast %506 : vector<1x1x64xf32> to vector<1x64xf32>
    %c2_358 = arith.constant 2 : index
    %c0_359 = arith.constant 0 : index
    %c0_360 = arith.constant 0 : index
    %508 = vector.load %arg15[%c2_358, %c0_359, %c0_360] : memref<3x1x64xf32, #tpu.memory_space<vmem>>, vector<1x1x64xf32>
    %509 = vector.shape_cast %508 : vector<1x1x64xf32> to vector<1x64xf32>
    %cst_361 = arith.constant dense<0.000000e+00> : vector<64xf32>
    %510 = vector.multi_reduction <add>, %505, %cst_361 [1] : vector<64x64xf32> to vector<64xf32>
    %511 = vector.shape_cast %510 : vector<64xf32> to vector<64x1xf32>
    %cst_362 = arith.constant 6.400000e+01 : f32
    %512 = vector.broadcast %cst_362 : f32 to vector<64x1xf32>
    %513 = arith.divf %511, %512 : vector<64x1xf32>
    %514 = vector.broadcast %513 : vector<64x1xf32> to vector<64x64xf32>
    %515 = arith.subf %505, %514 : vector<64x64xf32>
    %516 = arith.mulf %515, %515 : vector<64x64xf32>
    %cst_363 = arith.constant dense<0.000000e+00> : vector<64xf32>
    %517 = vector.multi_reduction <add>, %516, %cst_363 [1] : vector<64x64xf32> to vector<64xf32>
    %518 = vector.shape_cast %517 : vector<64xf32> to vector<64x1xf32>
    %cst_364 = arith.constant 6.400000e+01 : f32
    %519 = vector.broadcast %cst_364 : f32 to vector<64x1xf32>
    %520 = arith.divf %518, %519 : vector<64x1xf32>
    %521 = vector.broadcast %513 : vector<64x1xf32> to vector<64x64xf32>
    %522 = arith.subf %505, %521 : vector<64x64xf32>
    %cst_365 = arith.constant 9.99999974E-6 : f32
    %523 = vector.broadcast %cst_365 : f32 to vector<64x1xf32>
    %524 = arith.addf %520, %523 : vector<64x1xf32>
    %525 = math.rsqrt %524 : vector<64x1xf32>
    %526 = vector.broadcast %525 : vector<64x1xf32> to vector<64x64xf32>
    %527 = arith.mulf %522, %526 : vector<64x64xf32>
    %528 = vector.broadcast %507 : vector<1x64xf32> to vector<64x64xf32>
    %529 = arith.mulf %527, %528 : vector<64x64xf32>
    %530 = vector.broadcast %509 : vector<1x64xf32> to vector<64x64xf32>
    %531 = arith.addf %529, %530 : vector<64x64xf32>
    %c0_366 = arith.constant 0 : index
    %c0_367 = arith.constant 0 : index
    %532 = vector.load %arg20[%c0_366, %c0_367] : memref<64x64xf32, #tpu.memory_space<vmem>>, vector<64x64xf32>
    tpu.vector_store %arg20[%c0_366, %c0_367], %531 {strides = array<i32>} : memref<64x64xf32, #tpu.memory_space<vmem>>, vector<64x64xf32>,
    %c0_368 = arith.constant 0 : index
    %c0_369 = arith.constant 0 : index
    %533 = vector.load %arg16[%c0_368, %c0_369] : memref<4x64xf32, #tpu.memory_space<vmem>>, vector<4x64xf32>
    %c0_370 = arith.constant 0 : index
    %c0_371 = arith.constant 0 : index
    %534 = vector.load %arg20[%c0_370, %c0_371] : memref<64x64xf32, #tpu.memory_space<vmem>>, vector<64x64xf32>
    %cst_372 = arith.constant dense<0.000000e+00> : vector<4x64xf32>
    %535 = tpu.matmul %533, %534, %cst_372 {dimension_numbers = #tpu.dot_dimension_numbers<[1], [0], [0], [1], [0, 0, 1, 1], [], []>} : vector<4x64xf32>, vector<64x64xf32>, vector<4x64xf32> -> vector<4x64xf32>
    %c0_373 = arith.constant 0 : index
    %c0_374 = arith.constant 0 : index
    %536 = vector.load %arg17[%c0_373, %c0_374] : memref<64x12xf32, #tpu.memory_space<vmem>>, vector<64x12xf32>
    %cst_375 = arith.constant dense<0.000000e+00> : vector<4x12xf32>
    %537 = tpu.matmul %535, %536, %cst_375 {dimension_numbers = #tpu.dot_dimension_numbers<[1], [0], [0], [1], [0, 0, 1, 1], [], []>} : vector<4x64xf32>, vector<64x12xf32>, vector<4x12xf32> -> vector<4x12xf32>
    %c0_376 = arith.constant 0 : index
    %c0_377 = arith.constant 0 : index
    %538 = vector.load %arg18[%c0_376, %c0_377] : memref<1x12xf32, #tpu.memory_space<vmem>>, vector<1x12xf32>
    %539 = vector.broadcast %538 : vector<1x12xf32> to vector<4x12xf32>
    %540 = arith.addf %537, %539 : vector<4x12xf32>
    %c0_378 = arith.constant 0 : index
    %c0_379 = arith.constant 0 : index
    %c0_380 = arith.constant 0 : index
    %541 = vector.load %arg19[%c0_378, %c0_379, %c0_380] : memref<1x4x12xf32, #tpu.memory_space<vmem>>, vector<1x4x12xf32>
    %542 = vector.shape_cast %541 : vector<1x4x12xf32> to vector<4x12xf32>
    %543 = vector.shape_cast %540 : vector<4x12xf32> to vector<1x4x12xf32>
    tpu.vector_store %arg19[%c0_378, %c0_379, %c0_380], %543 {strides = array<i32>} : memref<1x4x12xf32, #tpu.memory_space<vmem>>, vector<1x4x12xf32>,
    return
  }
  func.func @transform_0(%arg0: i32) -> (i32, i32, i32) {
    %c0_i32 = arith.constant 0 : i32
    %c0_i32_0 = arith.constant 0 : i32
    %c0_i32_1 = arith.constant 0 : i32
    return %arg0, %c0_i32, %c0_i32_0 : i32, i32, i32
  }
  func.func @transform_1(%arg0: i32) -> (i32, i32) {
    %c0_i32 = arith.constant 0 : i32
    %c0_i32_0 = arith.constant 0 : i32
    %c0_i32_1 = arith.constant 0 : i32
    return %c0_i32, %c0_i32_0 : i32, i32
  }
  func.func @transform_2(%arg0: i32) -> (i32, i32) {
    %c0_i32 = arith.constant 0 : i32
    %c0_i32_0 = arith.constant 0 : i32
    %c0_i32_1 = arith.constant 0 : i32
    return %c0_i32, %c0_i32_0 : i32, i32
  }
  func.func @transform_3(%arg0: i32) -> (i32, i32, i32) {
    %c0_i32 = arith.constant 0 : i32
    %c0_i32_0 = arith.constant 0 : i32
    %c0_i32_1 = arith.constant 0 : i32
    %c0_i32_2 = arith.constant 0 : i32
    return %c0_i32, %c0_i32_0, %c0_i32_1 : i32, i32, i32
  }
  func.func @transform_4(%arg0: i32) -> (i32, i32, i32) {
    %c0_i32 = arith.constant 0 : i32
    %c0_i32_0 = arith.constant 0 : i32
    %c0_i32_1 = arith.constant 0 : i32
    %c0_i32_2 = arith.constant 0 : i32
    return %c0_i32, %c0_i32_0, %c0_i32_1 : i32, i32, i32
  }
  func.func @transform_5(%arg0: i32) -> (i32, i32, i32, i32) {
    %c0_i32 = arith.constant 0 : i32
    %c0_i32_0 = arith.constant 0 : i32
    %c0_i32_1 = arith.constant 0 : i32
    %c0_i32_2 = arith.constant 0 : i32
    %c0_i32_3 = arith.constant 0 : i32
    return %c0_i32, %c0_i32_0, %c0_i32_1, %c0_i32_2 : i32, i32, i32, i32
  }
  func.func @transform_6(%arg0: i32) -> (i32, i32, i32) {
    %c0_i32 = arith.constant 0 : i32
    %c0_i32_0 = arith.constant 0 : i32
    %c0_i32_1 = arith.constant 0 : i32
    %c0_i32_2 = arith.constant 0 : i32
    return %c0_i32, %c0_i32_0, %c0_i32_1 : i32, i32, i32
  }
  func.func @transform_7(%arg0: i32) -> (i32, i32, i32) {
    %c0_i32 = arith.constant 0 : i32
    %c0_i32_0 = arith.constant 0 : i32
    %c0_i32_1 = arith.constant 0 : i32
    %c0_i32_2 = arith.constant 0 : i32
    return %c0_i32, %c0_i32_0, %c0_i32_1 : i32, i32, i32
  }
  func.func @transform_8(%arg0: i32) -> (i32, i32, i32) {
    %c0_i32 = arith.constant 0 : i32
    %c0_i32_0 = arith.constant 0 : i32
    %c0_i32_1 = arith.constant 0 : i32
    %c0_i32_2 = arith.constant 0 : i32
    return %c0_i32, %c0_i32_0, %c0_i32_1 : i32, i32, i32
  }
  func.func @transform_9(%arg0: i32) -> (i32, i32, i32) {
    %c0_i32 = arith.constant 0 : i32
    %c0_i32_0 = arith.constant 0 : i32
    %c0_i32_1 = arith.constant 0 : i32
    %c0_i32_2 = arith.constant 0 : i32
    return %c0_i32, %c0_i32_0, %c0_i32_1 : i32, i32, i32
  }
  func.func @transform_10(%arg0: i32) -> (i32, i32, i32) {
    %c0_i32 = arith.constant 0 : i32
    %c0_i32_0 = arith.constant 0 : i32
    %c0_i32_1 = arith.constant 0 : i32
    %c0_i32_2 = arith.constant 0 : i32
    return %c0_i32, %c0_i32_0, %c0_i32_1 : i32, i32, i32
  }
  func.func @transform_11(%arg0: i32) -> (i32, i32, i32) {
    %c0_i32 = arith.constant 0 : i32
    %c0_i32_0 = arith.constant 0 : i32
    %c0_i32_1 = arith.constant 0 : i32
    %c0_i32_2 = arith.constant 0 : i32
    return %c0_i32, %c0_i32_0, %c0_i32_1 : i32, i32, i32
  }
  func.func @transform_12(%arg0: i32) -> (i32, i32, i32) {
    %c0_i32 = arith.constant 0 : i32
    %c0_i32_0 = arith.constant 0 : i32
    %c0_i32_1 = arith.constant 0 : i32
    %c0_i32_2 = arith.constant 0 : i32
    return %c0_i32, %c0_i32_0, %c0_i32_1 : i32, i32, i32
  }
  func.func @transform_13(%arg0: i32) -> (i32, i32, i32) {
    %c0_i32 = arith.constant 0 : i32
    %c0_i32_0 = arith.constant 0 : i32
    %c0_i32_1 = arith.constant 0 : i32
    %c0_i32_2 = arith.constant 0 : i32
    return %c0_i32, %c0_i32_0, %c0_i32_1 : i32, i32, i32
  }
  func.func @transform_14(%arg0: i32) -> (i32, i32, i32) {
    %c0_i32 = arith.constant 0 : i32
    %c0_i32_0 = arith.constant 0 : i32
    %c0_i32_1 = arith.constant 0 : i32
    %c0_i32_2 = arith.constant 0 : i32
    return %c0_i32, %c0_i32_0, %c0_i32_1 : i32, i32, i32
  }
  func.func @transform_15(%arg0: i32) -> (i32, i32) {
    %c0_i32 = arith.constant 0 : i32
    %c0_i32_0 = arith.constant 0 : i32
    %c0_i32_1 = arith.constant 0 : i32
    return %c0_i32, %c0_i32_0 : i32, i32
  }
  func.func @transform_16(%arg0: i32) -> (i32, i32) {
    %c0_i32 = arith.constant 0 : i32
    %c0_i32_0 = arith.constant 0 : i32
    %c0_i32_1 = arith.constant 0 : i32
    return %c0_i32, %c0_i32_0 : i32, i32
  }
  func.func @transform_17(%arg0: i32) -> (i32, i32) {
    %c0_i32 = arith.constant 0 : i32
    %c0_i32_0 = arith.constant 0 : i32
    %c0_i32_1 = arith.constant 0 : i32
    return %c0_i32, %c0_i32_0 : i32, i32
  }
  func.func @transform_18(%arg0: i32) -> (i32, i32, i32) {
    %c0_i32 = arith.constant 0 : i32
    %c0_i32_0 = arith.constant 0 : i32
    %c0_i32_1 = arith.constant 0 : i32
    return %arg0, %c0_i32, %c0_i32_0 : i32, i32, i32
  }
}

</mosaic_0001>

<llo_original>
// kernel: transformer_time_model.1
$region0: #{transformer_time_model.1}
  #allocation0 [shape = 'u32[]', space=smem, size = 0x4, offset = 0x4, fixed_abs, tag = 'smem constant byte address 0x4 - core index']
  #allocation1 [shape = 'u32[72,128]{1,0:T(1,128)}', space=vmem, size = 0x9000, scoped, tag = 'internal scratch']
  #allocation2 [shape = 'f32[64,64]{1,0:T(8,128)}', space=vmem, size = 0x8000, scoped, tag = 'scratch operand']
  #allocation3 [shape = 'f32[64,192]{1,0:T(8,128)}', space=vmem, size = 0x10000, scoped, tag = 'scratch operand']
  #allocation4 [shape = 'f32[64,64]{1,0:T(8,128)}', space=vmem, size = 0x8000, scoped, tag = 'scratch operand']
  %s0 = inlined_call_operand.vmem [shape: f32[2,64,128], index: 0, kind: input, shape index: {}]
  %s1 = inlined_call_operand.vmem [shape: f32[64,64], index: 1, kind: input, shape index: {}]
  %s2 = inlined_call_operand.vmem [shape: f32[128,64], index: 2, kind: input, shape index: {}]
  %s3 = inlined_call_operand.vmem [shape: f32[3,64,192], index: 3, kind: input, shape index: {}]
  %s4 = inlined_call_operand.vmem [shape: f32[3,1,192], index: 4, kind: input, shape index: {}]
  %s5 = inlined_call_operand.vmem [shape: f32[3,4,16,64], index: 5, kind: input, shape index: {}]
  %s6 = inlined_call_operand.vmem [shape: f32[3,1,64], index: 6, kind: input, shape index: {}]
  %s7 = inlined_call_operand.vmem [shape: f32[3,64,128], index: 7, kind: input, shape index: {}]
  %s8 = inlined_call_operand.vmem [shape: f32[3,1,128], index: 8, kind: input, shape index: {}]
  %s9 = inlined_call_operand.vmem [shape: f32[3,128,64], index: 9, kind: input, shape index: {}]
  %s10 = inlined_call_operand.vmem [shape: f32[3,1,64], index: 10, kind: input, shape index: {}]
  %s11 = inlined_call_operand.vmem [shape: f32[3,1,64], index: 11, kind: input, shape index: {}]
  %s12 = inlined_call_operand.vmem [shape: f32[3,1,64], index: 12, kind: input, shape index: {}]
  %s13 = inlined_call_operand.vmem [shape: f32[3,1,64], index: 13, kind: input, shape index: {}]
  %s14 = inlined_call_operand.vmem [shape: f32[3,1,64], index: 14, kind: input, shape index: {}]
  %s15 = inlined_call_operand.vmem [shape: f32[4,64], index: 15, kind: input, shape index: {}]
  %s16 = inlined_call_operand.vmem [shape: f32[64,12], index: 16, kind: input, shape index: {}]
  %s17 = inlined_call_operand.vmem [shape: f32[1,12], index: 17, kind: input, shape index: {}]
  %s18 = inlined_call_operand.hbm [shape: f32[2,4,12], index: 18, kind: output, shape index: {}]
  %s19 = sld [smem:[#allocation0]]
  $region105: #{transformer_time_model.1} parent=0
    _
  %s21 = ssub.s32 1, %s19
  %s22 = scalar_select 0, %s21, %s19
  $region1: #{transformer_time_model.1} parent=0
    #allocation5 [shape = 'u8[4096]{0}', space=vmem, size = 0x1000, scoped, tag = 'output window, operand 0']
    #allocation6 [shape = 's32[2]{0}', space=sflag, size = 0x8, scoped, tag = 'scoped memory for transformer_time_model.1']
    %23 = vsyncpa [#allocation6], 0
    %s24 = scalar_lea.sflag [#allocation6], 1
    %25 = vsyncpa %s24, 0
    loop: start=0, step=1, limit=4
    $region2: #{transformer_time_model.1} parent=1 // loop_pre_header
      _
    $region3: #{transformer_time_model.1} parent=1 // loop_header
      %s27 = sphi 0, %s31
      %p28 = scmp.ge.s32.totalorder %s27, 4
      %s37 = sphi 0, %s39
      %s40 = sphi 0, %s37
      %s41 = sphi 0, %s40
      %s57 = sphi 0, %s41
      %s61 = sphi 0, %s61
      %s63 = sphi 0, %s61
      %s64 = sphi 0, %s63
      %s78 = sphi 0, %s64
      %s82 = sphi 0, %s82
      %s84 = sphi 0, %s82
      %s85 = sphi 0, %s84
      %s99 = sphi 0, %s85
      %s103 = sphi 0, %s103
      %s105 = sphi 0, %s103
      %s106 = sphi 0, %s105
      %s120 = sphi 0, %s106
      %s124 = sphi 0, %s124
      %s126 = sphi 0, %s124
      %s127 = sphi 0, %s126
      %s141 = sphi 0, %s127
      %s145 = sphi 0, %s145
      %s147 = sphi 0, %s145
      %s148 = sphi 0, %s147
      %s162 = sphi 0, %s148
      %s166 = sphi 0, %s166
      %s168 = sphi 0, %s166
      %s169 = sphi 0, %s168
      %s183 = sphi 0, %s169
      %s187 = sphi 0, %s187
      %s189 = sphi 0, %s187
      %s190 = sphi 0, %s189
      %s204 = sphi 0, %s190
      %s208 = sphi 0, %s208
      %s210 = sphi 0, %s208
      %s211 = sphi 0, %s210
      %s225 = sphi 0, %s211
      %s229 = sphi 0, %s229
      %s231 = sphi 0, %s229
      %s232 = sphi 0, %s231
      %s246 = sphi 0, %s232
      %s250 = sphi 0, %s250
      %s252 = sphi 0, %s250
      %s253 = sphi 0, %s252
      %s267 = sphi 0, %s253
      %s271 = sphi 0, %s271
      %s273 = sphi 0, %s271
      %s274 = sphi 0, %s273
      %s288 = sphi 0, %s274
      %s292 = sphi 0, %s292
      %s294 = sphi 0, %s292
      %s295 = sphi 0, %s294
      %s309 = sphi 0, %s295
      %s313 = sphi 0, %s313
      %s315 = sphi 0, %s313
      %s316 = sphi 0, %s315
      %s330 = sphi 0, %s316
      %s334 = sphi 0, %s334
      %s336 = sphi 0, %s334
      %s337 = sphi 0, %s336
      %s351 = sphi 0, %s337
      %s355 = sphi 0, %s355
      %s357 = sphi 0, %s355
      %s358 = sphi 0, %s357
      %s372 = sphi 0, %s358
      %s376 = sphi 0, %s376
      %s378 = sphi 0, %s376
      %s379 = sphi 0, %s378
      %s393 = sphi 0, %s379
      %s397 = sphi 0, %s397
      %s399 = sphi 0, %s397
      %s400 = sphi 0, %s399
      %s414 = sphi 0, %s400
      %s420 = sphi 0, %s422
      %s423 = sphi 0, %s420
      %s424 = sphi 0, %s423
      %s440 = sphi 0, %s424
    $region4: #{transformer_time_model.1} parent=1 // loop_header_branch
      %30 = sbr.rel (%p28) target = $region8
    $region5: #{transformer_time_model.1} parent=1 // loop_body
      %s32 = ssub.s32 %s27, 1
      %s33 = ssub.s32 %s27, 2
      %s34 = sadd.s32 %s27, 1
      %s35 = ssub.s32 %s27, %s34
      %p36 = scmp.eq.s32.totalorder %s35, 0
      %s38 = sadd.s32 %s37, 1
      %s39 = scalar_select %p36, %s37, %s38
      %p42 = pneg %p36
      %p43 = scmp.eq.s32.totalorder %s27, 1
      %p44 = por %p42, %p43
      %p45 = scmp.ne.s32.totalorder %s37, %s40
      %p46 = scmp.eq.s32.totalorder %s27, 0
      %p47 = por %p45, %p46
      %p48 = scmp.ne.s32.totalorder %s37, %s40
      %p49 = scmp.eq.s32.totalorder %s32, 1
      %p50 = por %p48, %p49
      %p51 = scmp.ne.s32.totalorder %s40, %s41
      %p52 = scmp.eq.s32.totalorder %s32, 0
      %p53 = por %p51, %p52
      %p54 = scmp.ne.s32.totalorder %s40, %s41
      %p55 = scmp.eq.s32.totalorder %s33, 1
      %p56 = por %p54, %p55
      %p58 = scmp.ne.s32.totalorder %s41, %s57
      %p59 = scmp.eq.s32.totalorder %s33, 0
      %p60 = por %p58, %p59
      %s62 = sadd.s32 %s61, 1
      %p65 = scmp.eq.s32.totalorder %s27, 1
      %p66 = scmp.ne.s32.totalorder %s61, %s63
      %p67 = scmp.eq.s32.totalorder %s27, 0
      %p68 = por %p66, %p67
      %p69 = scmp.ne.s32.totalorder %s61, %s63
      %p70 = scmp.eq.s32.totalorder %s32, 1
      %p71 = por %p69, %p70
      %p72 = scmp.ne.s32.totalorder %s63, %s64
      %p73 = scmp.eq.s32.totalorder %s32, 0
      %p74 = por %p72, %p73
      %p75 = scmp.ne.s32.totalorder %s63, %s64
      %p76 = scmp.eq.s32.totalorder %s33, 1
      %p77 = por %p75, %p76
      %p79 = scmp.ne.s32.totalorder %s64, %s78
      %p80 = scmp.eq.s32.totalorder %s33, 0
      %p81 = por %p79, %p80
      %s83 = sadd.s32 %s82, 1
      %p86 = scmp.eq.s32.totalorder %s27, 1
      %p87 = scmp.ne.s32.totalorder %s82, %s84
      %p88 = scmp.eq.s32.totalorder %s27, 0
      %p89 = por %p87, %p88
      %p90 = scmp.ne.s32.totalorder %s82, %s84
      %p91 = scmp.eq.s32.totalorder %s32, 1
      %p92 = por %p90, %p91
      %p93 = scmp.ne.s32.totalorder %s84, %s85
      %p94 = scmp.eq.s32.totalorder %s32, 0
      %p95 = por %p93, %p94
      %p96 = scmp.ne.s32.totalorder %s84, %s85
      %p97 = scmp.eq.s32.totalorder %s33, 1
      %p98 = por %p96, %p97
      %p100 = scmp.ne.s32.totalorder %s85, %s99
      %p101 = scmp.eq.s32.totalorder %s33, 0
      %p102 = por %p100, %p101
      %s104 = sadd.s32 %s103, 1
      %p107 = scmp.eq.s32.totalorder %s27, 1
      %p108 = scmp.ne.s32.totalorder %s103, %s105
      %p109 = scmp.eq.s32.totalorder %s27, 0
      %p110 = por %p108, %p109
      %p111 = scmp.ne.s32.totalorder %s103, %s105
      %p112 = scmp.eq.s32.totalorder %s32, 1
      %p113 = por %p111, %p112
      %p114 = scmp.ne.s32.totalorder %s105, %s106
      %p115 = scmp.eq.s32.totalorder %s32, 0
      %p116 = por %p114, %p115
      %p117 = scmp.ne.s32.totalorder %s105, %s106
      %p118 = scmp.eq.s32.totalorder %s33, 1
      %p119 = por %p117, %p118
      %p121 = scmp.ne.s32.totalorder %s106, %s120
      %p122 = scmp.eq.s32.totalorder %s33, 0
      %p123 = por %p121, %p122
      %s125 = sadd.s32 %s124, 1
      %p128 = scmp.eq.s32.totalorder %s27, 1
      %p129 = scmp.ne.s32.totalorder %s124, %s126
      %p130 = scmp.eq.s32.totalorder %s27, 0
      %p131 = por %p129, %p130
      %p132 = scmp.ne.s32.totalorder %s124, %s126
      %p133 = scmp.eq.s32.totalorder %s32, 1
      %p134 = por %p132, %p133
      %p135 = scmp.ne.s32.totalorder %s126, %s127
      %p136 = scmp.eq.s32.totalorder %s32, 0
      %p137 = por %p135, %p136
      %p138 = scmp.ne.s32.totalorder %s126, %s127
      %p139 = scmp.eq.s32.totalorder %s33, 1
      %p140 = por %p138, %p139
      %p142 = scmp.ne.s32.totalorder %s127, %s141
      %p143 = scmp.eq.s32.totalorder %s33, 0
      %p144 = por %p142, %p143
      %s146 = sadd.s32 %s145, 1
      %p149 = scmp.eq.s32.totalorder %s27, 1
      %p150 = scmp.ne.s32.totalorder %s145, %s147
      %p151 = scmp.eq.s32.totalorder %s27, 0
      %p152 = por %p150, %p151
      %p153 = scmp.ne.s32.totalorder %s145, %s147
      %p154 = scmp.eq.s32.totalorder %s32, 1
      %p155 = por %p153, %p154
      %p156 = scmp.ne.s32.totalorder %s147, %s148
      %p157 = scmp.eq.s32.totalorder %s32, 0
      %p158 = por %p156, %p157
      %p159 = scmp.ne.s32.totalorder %s147, %s148
      %p160 = scmp.eq.s32.totalorder %s33, 1
      %p161 = por %p159, %p160
      %p163 = scmp.ne.s32.totalorder %s148, %s162
      %p164 = scmp.eq.s32.totalorder %s33, 0
      %p165 = por %p163, %p164
      %s167 = sadd.s32 %s166, 1
      %p170 = scmp.eq.s32.totalorder %s27, 1
      %p171 = scmp.ne.s32.totalorder %s166, %s168
      %p172 = scmp.eq.s32.totalorder %s27, 0
      %p173 = por %p171, %p172
      %p174 = scmp.ne.s32.totalorder %s166, %s168
      %p175 = scmp.eq.s32.totalorder %s32, 1
      %p176 = por %p174, %p175
      %p177 = scmp.ne.s32.totalorder %s168, %s169
      %p178 = scmp.eq.s32.totalorder %s32, 0
      %p179 = por %p177, %p178
      %p180 = scmp.ne.s32.totalorder %s168, %s169
      %p181 = scmp.eq.s32.totalorder %s33, 1
      %p182 = por %p180, %p181
      %p184 = scmp.ne.s32.totalorder %s169, %s183
      %p185 = scmp.eq.s32.totalorder %s33, 0
      %p186 = por %p184, %p185
      %s188 = sadd.s32 %s187, 1
      %p191 = scmp.eq.s32.totalorder %s27, 1
      %p192 = scmp.ne.s32.totalorder %s187, %s189
      %p193 = scmp.eq.s32.totalorder %s27, 0
      %p194 = por %p192, %p193
      %p195 = scmp.ne.s32.totalorder %s187, %s189
      %p196 = scmp.eq.s32.totalorder %s32, 1
      %p197 = por %p195, %p196
      %p198 = scmp.ne.s32.totalorder %s189, %s190
      %p199 = scmp.eq.s32.totalorder %s32, 0
      %p200 = por %p198, %p199
      %p201 = scmp.ne.s32.totalorder %s189, %s190
      %p202 = scmp.eq.s32.totalorder %s33, 1
      %p203 = por %p201, %p202
      %p205 = scmp.ne.s32.totalorder %s190, %s204
      %p206 = scmp.eq.s32.totalorder %s33, 0
      %p207 = por %p205, %p206
      %s209 = sadd.s32 %s208, 1
      %p212 = scmp.eq.s32.totalorder %s27, 1
      %p213 = scmp.ne.s32.totalorder %s208, %s210
      %p214 = scmp.eq.s32.totalorder %s27, 0
      %p215 = por %p213, %p214
      %p216 = scmp.ne.s32.totalorder %s208, %s210
      %p217 = scmp.eq.s32.totalorder %s32, 1
      %p218 = por %p216, %p217
      %p219 = scmp.ne.s32.totalorder %s210, %s211
      %p220 = scmp.eq.s32.totalorder %s32, 0
      %p221 = por %p219, %p220
      %p222 = scmp.ne.s32.totalorder %s210, %s211
      %p223 = scmp.eq.s32.totalorder %s33, 1
      %p224 = por %p222, %p223
      %p226 = scmp.ne.s32.totalorder %s211, %s225
      %p227 = scmp.eq.s32.totalorder %s33, 0
      %p228 = por %p226, %p227
      %s230 = sadd.s32 %s229, 1
      %p233 = scmp.eq.s32.totalorder %s27, 1
      %p234 = scmp.ne.s32.totalorder %s229, %s231
      %p235 = scmp.eq.s32.totalorder %s27, 0
      %p236 = por %p234, %p235
      %p237 = scmp.ne.s32.totalorder %s229, %s231
      %p238 = scmp.eq.s32.totalorder %s32, 1
      %p239 = por %p237, %p238
      %p240 = scmp.ne.s32.totalorder %s231, %s232
      %p241 = scmp.eq.s32.totalorder %s32, 0
      %p242 = por %p240, %p241
      %p243 = scmp.ne.s32.totalorder %s231, %s232
      %p244 = scmp.eq.s32.totalorder %s33, 1
      %p245 = por %p243, %p244
      %p247 = scmp.ne.s32.totalorder %s232, %s246
      %p248 = scmp.eq.s32.totalorder %s33, 0
      %p249 = por %p247, %p248
      %s251 = sadd.s32 %s250, 1
      %p254 = scmp.eq.s32.totalorder %s27, 1
      %p255 = scmp.ne.s32.totalorder %s250, %s252
      %p256 = scmp.eq.s32.totalorder %s27, 0
      %p257 = por %p255, %p256
      %p258 = scmp.ne.s32.totalorder %s250, %s252
      %p259 = scmp.eq.s32.totalorder %s32, 1
      %p260 = por %p258, %p259
      %p261 = scmp.ne.s32.totalorder %s252, %s253
      %p262 = scmp.eq.s32.totalorder %s32, 0
      %p263 = por %p261, %p262
      %p264 = scmp.ne.s32.totalorder %s252, %s253
      %p265 = scmp.eq.s32.totalorder %s33, 1
      %p266 = por %p264, %p265
      %p268 = scmp.ne.s32.totalorder %s253, %s267
      %p269 = scmp.eq.s32.totalorder %s33, 0
      %p270 = por %p268, %p269
      %s272 = sadd.s32 %s271, 1
      %p275 = scmp.eq.s32.totalorder %s27, 1
      %p276 = scmp.ne.s32.totalorder %s271, %s273
      %p277 = scmp.eq.s32.totalorder %s27, 0
      %p278 = por %p276, %p277
      %p279 = scmp.ne.s32.totalorder %s271, %s273
      %p280 = scmp.eq.s32.totalorder %s32, 1
      %p281 = por %p279, %p280
      %p282 = scmp.ne.s32.totalorder %s273, %s274
      %p283 = scmp.eq.s32.totalorder %s32, 0
      %p284 = por %p282, %p283
      %p285 = scmp.ne.s32.totalorder %s273, %s274
      %p286 = scmp.eq.s32.totalorder %s33, 1
      %p287 = por %p285, %p286
      %p289 = scmp.ne.s32.totalorder %s274, %s288
      %p290 = scmp.eq.s32.totalorder %s33, 0
      %p291 = por %p289, %p290
      %s293 = sadd.s32 %s292, 1
      %p296 = scmp.eq.s32.totalorder %s27, 1
      %p297 = scmp.ne.s32.totalorder %s292, %s294
      %p298 = scmp.eq.s32.totalorder %s27, 0
      %p299 = por %p297, %p298
      %p300 = scmp.ne.s32.totalorder %s292, %s294
      %p301 = scmp.eq.s32.totalorder %s32, 1
      %p302 = por %p300, %p301
      %p303 = scmp.ne.s32.totalorder %s294, %s295
      %p304 = scmp.eq.s32.totalorder %s32, 0
      %p305 = por %p303, %p304
      %p306 = scmp.ne.s32.totalorder %s294, %s295
      %p307 = scmp.eq.s32.totalorder %s33, 1
      %p308 = por %p306, %p307
      %p310 = scmp.ne.s32.totalorder %s295, %s309
      %p311 = scmp.eq.s32.totalorder %s33, 0
      %p312 = por %p310, %p311
      %s314 = sadd.s32 %s313, 1
      %p317 = scmp.eq.s32.totalorder %s27, 1
      %p318 = scmp.ne.s32.totalorder %s313, %s315
      %p319 = scmp.eq.s32.totalorder %s27, 0
      %p320 = por %p318, %p319
      %p321 = scmp.ne.s32.totalorder %s313, %s315
      %p322 = scmp.eq.s32.totalorder %s32, 1
      %p323 = por %p321, %p322
      %p324 = scmp.ne.s32.totalorder %s315, %s316
      %p325 = scmp.eq.s32.totalorder %s32, 0
      %p326 = por %p324, %p325
      %p327 = scmp.ne.s32.totalorder %s315, %s316
      %p328 = scmp.eq.s32.totalorder %s33, 1
      %p329 = por %p327, %p328
      %p331 = scmp.ne.s32.totalorder %s316, %s330
      %p332 = scmp.eq.s32.totalorder %s33, 0
      %p333 = por %p331, %p332
      %s335 = sadd.s32 %s334, 1
      %p338 = scmp.eq.s32.totalorder %s27, 1
      %p339 = scmp.ne.s32.totalorder %s334, %s336
      %p340 = scmp.eq.s32.totalorder %s27, 0
      %p341 = por %p339, %p340
      %p342 = scmp.ne.s32.totalorder %s334, %s336
      %p343 = scmp.eq.s32.totalorder %s32, 1
      %p344 = por %p342, %p343
      %p345 = scmp.ne.s32.totalorder %s336, %s337
      %p346 = scmp.eq.s32.totalorder %s32, 0
      %p347 = por %p345, %p346
      %p348 = scmp.ne.s32.totalorder %s336, %s337
      %p349 = scmp.eq.s32.totalorder %s33, 1
      %p350 = por %p348, %p349
      %p352 = scmp.ne.s32.totalorder %s337, %s351
      %p353 = scmp.eq.s32.totalorder %s33, 0
      %p354 = por %p352, %p353
      %s356 = sadd.s32 %s355, 1
      %p359 = scmp.eq.s32.totalorder %s27, 1
      %p360 = scmp.ne.s32.totalorder %s355, %s357
      %p361 = scmp.eq.s32.totalorder %s27, 0
      %p362 = por %p360, %p361
      %p363 = scmp.ne.s32.totalorder %s355, %s357
      %p364 = scmp.eq.s32.totalorder %s32, 1
      %p365 = por %p363, %p364
      %p366 = scmp.ne.s32.totalorder %s357, %s358
      %p367 = scmp.eq.s32.totalorder %s32, 0
      %p368 = por %p366, %p367
      %p369 = scmp.ne.s32.totalorder %s357, %s358
      %p370 = scmp.eq.s32.totalorder %s33, 1
      %p371 = por %p369, %p370
      %p373 = scmp.ne.s32.totalorder %s358, %s372
      %p374 = scmp.eq.s32.totalorder %s33, 0
      %p375 = por %p373, %p374
      %s377 = sadd.s32 %s376, 1
      %p380 = scmp.eq.s32.totalorder %s27, 1
      %p381 = scmp.ne.s32.totalorder %s376, %s378
      %p382 = scmp.eq.s32.totalorder %s27, 0
      %p383 = por %p381, %p382
      %p384 = scmp.ne.s32.totalorder %s376, %s378
      %p385 = scmp.eq.s32.totalorder %s32, 1
      %p386 = por %p384, %p385
      %p387 = scmp.ne.s32.totalorder %s378, %s379
      %p388 = scmp.eq.s32.totalorder %s32, 0
      %p389 = por %p387, %p388
      %p390 = scmp.ne.s32.totalorder %s378, %s379
      %p391 = scmp.eq.s32.totalorder %s33, 1
      %p392 = por %p390, %p391
      %p394 = scmp.ne.s32.totalorder %s379, %s393
      %p395 = scmp.eq.s32.totalorder %s33, 0
      %p396 = por %p394, %p395
      %s398 = sadd.s32 %s397, 1
      %p401 = scmp.eq.s32.totalorder %s27, 1
      %p402 = scmp.ne.s32.totalorder %s397, %s399
      %p403 = scmp.eq.s32.totalorder %s27, 0
      %p404 = por %p402, %p403
      %p405 = scmp.ne.s32.totalorder %s397, %s399
      %p406 = scmp.eq.s32.totalorder %s32, 1
      %p407 = por %p405, %p406
      %p408 = scmp.ne.s32.totalorder %s399, %s400
      %p409 = scmp.eq.s32.totalorder %s32, 0
      %p410 = por %p408, %p409
      %p411 = scmp.ne.s32.totalorder %s399, %s400
      %p412 = scmp.eq.s32.totalorder %s33, 1
      %p413 = por %p411, %p412
      %p415 = scmp.ne.s32.totalorder %s400, %s414
      %p416 = scmp.eq.s32.totalorder %s33, 0
      %p417 = por %p415, %p416
      %s418 = ssub.s32 %s27, %s34
      %p419 = scmp.eq.s32.totalorder %s418, 0
      %s421 = sadd.s32 %s420, 1
      %s422 = scalar_select %p419, %s420, %s421
      %p425 = pneg %p419
      %p426 = scmp.eq.s32.totalorder %s27, 1
      %p427 = por %p425, %p426
      %p428 = scmp.ne.s32.totalorder %s420, %s423
      %p429 = scmp.eq.s32.totalorder %s27, 0
      %p430 = por %p428, %p429
      %p431 = scmp.ne.s32.totalorder %s420, %s423
      %p432 = scmp.eq.s32.totalorder %s32, 1
      %p433 = por %p431, %p432
      %p434 = scmp.ne.s32.totalorder %s423, %s424
      %p435 = scmp.eq.s32.totalorder %s32, 0
      %p436 = por %p434, %p435
      %p437 = scmp.ne.s32.totalorder %s423, %s424
      %p438 = scmp.eq.s32.totalorder %s33, 1
      %p439 = por %p437, %p438
      %p441 = scmp.ne.s32.totalorder %s424, %s440
      %p442 = scmp.eq.s32.totalorder %s33, 0
      %p443 = por %p441, %p442
      %p444 = scmp.le.s32.totalorder 1, %s27
      %p445 = scmp.lt.s32.totalorder %s27, 3
      %p446 = pnand %p444, %p445
      %p447 = pneg %p446
      // Predicated region
      $region9: #{transformer_time_model.1} parent=5 // pred_check
        _
      $region10: #{transformer_time_model.1} parent=5 // pred_check_branch
        %449 = sbr.rel (%p446) target = $region12
      $region11: #{transformer_time_model.1} parent=5 // pred_region
        %s450 = ssub.s32 %s27, 1
        // Predicated region
        $region13: #{transformer_time_model.1} parent=11 // pred_check
          %p451 = pneg %p74
        $region14: #{transformer_time_model.1} parent=11 // pred_check_branch
          %453 = sbr.rel (%p451) target = $region16
        $region15: #{transformer_time_model.1} parent=11 // pred_region
          _
        $region16: #{transformer_time_model.1} parent=11 // pred_fallthru
          _
        // Predicated region
        $region17: #{transformer_time_model.1} parent=11 // pred_check
          %p454 = pneg %p95
        $region18: #{transformer_time_model.1} parent=11 // pred_check_branch
          %456 = sbr.rel (%p454) target = $region20
        $region19: #{transformer_time_model.1} parent=11 // pred_region
          _
        $region20: #{transformer_time_model.1} parent=11 // pred_fallthru
          _
        // Predicated region
        $region21: #{transformer_time_model.1} parent=11 // pred_check
          %p457 = pneg %p116
        $region22: #{transformer_time_model.1} parent=11 // pred_check_branch
          %459 = sbr.rel (%p457) target = $region24
        $region23: #{transformer_time_model.1} parent=11 // pred_region
          _
        $region24: #{transformer_time_model.1} parent=11 // pred_fallthru
          _
        // Predicated region
        $region25: #{transformer_time_model.1} parent=11 // pred_check
          %p460 = pneg %p137
        $region26: #{transformer_time_model.1} parent=11 // pred_check_branch
          %462 = sbr.rel (%p460) target = $region28
        $region27: #{transformer_time_model.1} parent=11 // pred_region
          _
        $region28: #{transformer_time_model.1} parent=11 // pred_fallthru
          _
        // Predicated region
        $region29: #{transformer_time_model.1} parent=11 // pred_check
          %p463 = pneg %p158
        $region30: #{transformer_time_model.1} parent=11 // pred_check_branch
          %465 = sbr.rel (%p463) target = $region32
        $region31: #{transformer_time_model.1} parent=11 // pred_region
          _
        $region32: #{transformer_time_model.1} parent=11 // pred_fallthru
          _
        // Predicated region
        $region33: #{transformer_time_model.1} parent=11 // pred_check
          %p466 = pneg %p179
        $region34: #{transformer_time_model.1} parent=11 // pred_check_branch
          %468 = sbr.rel (%p466) target = $region36
        $region35: #{transformer_time_model.1} parent=11 // pred_region
          _
        $region36: #{transformer_time_model.1} parent=11 // pred_fallthru
          _
        // Predicated region
        $region37: #{transformer_time_model.1} parent=11 // pred_check
          %p469 = pneg %p200
        $region38: #{transformer_time_model.1} parent=11 // pred_check_branch
          %471 = sbr.rel (%p469) target = $region40
        $region39: #{transformer_time_model.1} parent=11 // pred_region
          _
        $region40: #{transformer_time_model.1} parent=11 // pred_fallthru
          _
        // Predicated region
        $region41: #{transformer_time_model.1} parent=11 // pred_check
          %p472 = pneg %p221
        $region42: #{transformer_time_model.1} parent=11 // pred_check_branch
          %474 = sbr.rel (%p472) target = $region44
        $region43: #{transformer_time_model.1} parent=11 // pred_region
          _
        $region44: #{transformer_time_model.1} parent=11 // pred_fallthru
          _
        // Predicated region
        $region45: #{transformer_time_model.1} parent=11 // pred_check
          %p475 = pneg %p242
        $region46: #{transformer_time_model.1} parent=11 // pred_check_branch
          %477 = sbr.rel (%p475) target = $region48
        $region47: #{transformer_time_model.1} parent=11 // pred_region
          _
        $region48: #{transformer_time_model.1} parent=11 // pred_fallthru
          _
        // Predicated region
        $region49: #{transformer_time_model.1} parent=11 // pred_check
          %p478 = pneg %p263
        $region50: #{transformer_time_model.1} parent=11 // pred_check_branch
          %480 = sbr.rel (%p478) target = $region52
        $region51: #{transformer_time_model.1} parent=11 // pred_region
          _
        $region52: #{transformer_time_model.1} parent=11 // pred_fallthru
          _
        // Predicated region
        $region53: #{transformer_time_model.1} parent=11 // pred_check
          %p481 = pneg %p284
        $region54: #{transformer_time_model.1} parent=11 // pred_check_branch
          %483 = sbr.rel (%p481) target = $region56
        $region55: #{transformer_time_model.1} parent=11 // pred_region
          _
        $region56: #{transformer_time_model.1} parent=11 // pred_fallthru
          _
        // Predicated region
        $region57: #{transformer_time_model.1} parent=11 // pred_check
          %p484 = pneg %p305
        $region58: #{transformer_time_model.1} parent=11 // pred_check_branch
          %486 = sbr.rel (%p484) target = $region60
        $region59: #{transformer_time_model.1} parent=11 // pred_region
          _
        $region60: #{transformer_time_model.1} parent=11 // pred_fallthru
          _
        // Predicated region
        $region61: #{transformer_time_model.1} parent=11 // pred_check
          %p487 = pneg %p326
        $region62: #{transformer_time_model.1} parent=11 // pred_check_branch
          %489 = sbr.rel (%p487) target = $region64
        $region63: #{transformer_time_model.1} parent=11 // pred_region
          _
        $region64: #{transformer_time_model.1} parent=11 // pred_fallthru
          _
        // Predicated region
        $region65: #{transformer_time_model.1} parent=11 // pred_check
          %p490 = pneg %p347
        $region66: #{transformer_time_model.1} parent=11 // pred_check_branch
          %492 = sbr.rel (%p490) target = $region68
        $region67: #{transformer_time_model.1} parent=11 // pred_region
          _
        $region68: #{transformer_time_model.1} parent=11 // pred_fallthru
          _
        // Predicated region
        $region69: #{transformer_time_model.1} parent=11 // pred_check
          %p493 = pneg %p368
        $region70: #{transformer_time_model.1} parent=11 // pred_check_branch
          %495 = sbr.rel (%p493) target = $region72
        $region71: #{transformer_time_model.1} parent=11 // pred_region
          _
        $region72: #{transformer_time_model.1} parent=11 // pred_fallthru
          _
        // Predicated region
        $region73: #{transformer_time_model.1} parent=11 // pred_check
          %p496 = pneg %p389
        $region74: #{transformer_time_model.1} parent=11 // pred_check_branch
          %498 = sbr.rel (%p496) target = $region76
        $region75: #{transformer_time_model.1} parent=11 // pred_region
          _
        $region76: #{transformer_time_model.1} parent=11 // pred_fallthru
          _
        // Predicated region
        $region77: #{transformer_time_model.1} parent=11 // pred_check
          %p499 = pneg %p410
        $region78: #{transformer_time_model.1} parent=11 // pred_check_branch
          %501 = sbr.rel (%p499) target = $region80
        $region79: #{transformer_time_model.1} parent=11 // pred_region
          _
        $region80: #{transformer_time_model.1} parent=11 // pred_fallthru
          _
      $region12: #{transformer_time_model.1} parent=5 // pred_fallthru
        _
      %p502 = scmp.lt.s32.totalorder %s27, 2
      // Predicated region
      $region81: #{transformer_time_model.1} parent=5 // pred_check
        %p503 = pneg %p502
      $region82: #{transformer_time_model.1} parent=5 // pred_check_branch
        %505 = sbr.rel (%p503) target = $region84
      $region83: #{transformer_time_model.1} parent=5 // pred_region
        // Predicated region
        $region85: #{transformer_time_model.1} parent=83 // pred_check
          %p506 = pneg %p47
        $region86: #{transformer_time_model.1} parent=83 // pred_check_branch
          %508 = sbr.rel (%p506) target = $region88
        $region87: #{transformer_time_model.1} parent=83 // pred_region
          %p509 = scmp.lt.s32.totalorder %s27, 1
          %s510 = scalar_select %p509, %s27, 1
          %s511 = smul.addr %s510, 8
          %s512 = smul.addr %s511, 8
          %s513 = scalar_lea.vmem %s0, %s512
        $region88: #{transformer_time_model.1} parent=83 // pred_fallthru
          _
      $region84: #{transformer_time_model.1} parent=5 // pred_fallthru
        _
      %p514 = scmp.le.s32.totalorder 1, %s27
      %p515 = scmp.lt.s32.totalorder %s27, 3
      %p516 = pnand %p514, %p515
      %p517 = pneg %p516
      // Predicated region
      $region89: #{transformer_time_model.1} parent=5 // pred_check
        _
      $region90: #{transformer_time_model.1} parent=5 // pred_check_branch
        %519 = sbr.rel (%p516) target = $region92
      $region91: #{transformer_time_model.1} parent=5 // pred_region
        %s520 = ssub.s32 %s27, 1
        %p521 = scmp.lt.s32.totalorder %s32, 1
        %s522 = scalar_select %p521, %s32, 1
        %s523 = smul.addr %s522, 8
        %s524 = smul.addr %s523, 8
        %s525 = scalar_lea.vmem %s0, %s524
        %p526 = pneg %p53
        %p527 = pneg %p50
        %p528 = pneg %p74
        %p529 = pneg %p71
        %p530 = pneg %p95
        %p531 = pneg %p92
        %p532 = pneg %p116
        %p533 = pneg %p113
        %p534 = pneg %p137
        %p535 = pneg %p134
        %p536 = pneg %p158
        %p537 = pneg %p155
        %p538 = pneg %p179
        %p539 = pneg %p176
        %p540 = pneg %p200
        %p541 = pneg %p197
        %p542 = pneg %p221
        %p543 = pneg %p218
        %p544 = pneg %p242
        %p545 = pneg %p239
        %p546 = pneg %p263
        %p547 = pneg %p260
        %p548 = pneg %p284
        %p549 = pneg %p281
        %p550 = pneg %p305
        %p551 = pneg %p302
        %p552 = pneg %p326
        %p553 = pneg %p323
        %p554 = pneg %p347
        %p555 = pneg %p344
        %p556 = pneg %p368
        %p557 = pneg %p365
        %p558 = pneg %p389
        %p559 = pneg %p386
        %p560 = pneg %p410
        %p561 = pneg %p407
        %p562 = pneg %p436
        %p563 = pneg %p433
        %s564 = sand.u32 %s423, 1
        %s565 = scalar_lea.sflag [#allocation6], %s564
        %s566 = sand.u32 %s423, 1
        %s567 = smul.addr %s566, 4
        %s568 = scalar_lea.vmem [#allocation5], %s567
        %p569 = scmp.lt.s32.totalorder %s32, 1
        %s570 = scalar_select %p569, %s32, 1
        %s571 = smul.addr %s570, 8
        %s572 = smul.addr %s571, 8
        %s573 = scalar_lea.vmem %s0, %s572
        %v574 = vlaneseq
        %v575 = vshrl.u32 %v574, 7
        %v576 = vadd.s32 %v575, 8
        %v577 = vadd.s32 %v575, 16
        %v578 = vadd.s32 %v575, 24
        %v579 = vadd.s32 %v575, 32
        %v580 = vadd.s32 %v575, 40
        %v581 = vadd.s32 %v575, 48
        %v582 = vadd.s32 %v575, 56
        %v583 = vcvt.s32.f32 %v575
        %v584 = vcvt.s32.f32 %v576
        %v585 = vcvt.s32.f32 %v577
        %v586 = vcvt.s32.f32 %v578
        %v587 = vcvt.s32.f32 %v579
        %v588 = vcvt.s32.f32 %v580
        %v589 = vcvt.s32.f32 %v581
        %v590 = vcvt.s32.f32 %v582
        %v591 = vlaneseq
        %v592 = vand.u32 %v591, 127
        %v593 = vcvt.s32.f32 %v592
        %v594 = vadd.f32 %v583, 0.5
        %v595 = vadd.f32 %v584, 0.5
        %v596 = vadd.f32 %v585, 0.5
        %v597 = vadd.f32 %v586, 0.5
        %v598 = vadd.f32 %v587, 0.5
        %v599 = vadd.f32 %v588, 0.5
        %v600 = vadd.f32 %v589, 0.5
        %v601 = vadd.f32 %v590, 0.5
        %v602 = vmul.f32 %v594, 0.0625
        %v603 = vmul.f32 %v595, 0.0625
        %v604 = vmul.f32 %v596, 0.0625
        %v605 = vmul.f32 %v597, 0.0625
        %v606 = vmul.f32 %v598, 0.0625
        %v607 = vmul.f32 %v599, 0.0625
        %v608 = vmul.f32 %v600, 0.0625
        %v609 = vmul.f32 %v601, 0.0625
        %v610 = vfloor.f32 %v602
        %v611 = vfloor.f32 %v603
        %v612 = vfloor.f32 %v604
        %v613 = vfloor.f32 %v605
        %v614 = vfloor.f32 %v606
        %v615 = vfloor.f32 %v607
        %v616 = vfloor.f32 %v608
        %v617 = vfloor.f32 %v609
        %v618 = vadd.f32 %v593, 0.5
        %v619 = vmul.f32 %v618, 0.0625
        %v620 = vfloor.f32 %v619
        %vm621 = vcmp.eq.f32.partialorder %v610, %v620
        %vm622 = vcmp.eq.f32.partialorder %v611, %v620
        %vm623 = vcmp.eq.f32.partialorder %v612, %v620
        %vm624 = vcmp.eq.f32.partialorder %v613, %v620
        %vm625 = vcmp.eq.f32.partialorder %v614, %v620
        %vm626 = vcmp.eq.f32.partialorder %v615, %v620
        %vm627 = vcmp.eq.f32.partialorder %v616, %v620
        %vm628 = vcmp.eq.f32.partialorder %v617, %v620
        %v629 = vsel %vm621, 0.0, -1e+30
        %v630 = vsel %vm622, 0.0, -1e+30
        %v631 = vsel %vm623, 0.0, -1e+30
        %v632 = vsel %vm624, 0.0, -1e+30
        %v633 = vsel %vm625, 0.0, -1e+30
        %v634 = vsel %vm626, 0.0, -1e+30
        %v635 = vsel %vm627, 0.0, -1e+30
        %v636 = vsel %vm628, 0.0, -1e+30
        %vm637 = vcmask 523264
        %638 = vst.msk [vmem:[#allocation4] sm:$0xff] %vm637, %v629
        %639 = vst.msk [vmem:[#allocation4 + $0x8] sm:$0xff] %vm637, %v630
        %640 = vst.msk [vmem:[#allocation4 + $0x10] sm:$0xff] %vm637, %v631
        %641 = vst.msk [vmem:[#allocation4 + $0x18] sm:$0xff] %vm637, %v632
        %642 = vst.msk [vmem:[#allocation4 + $0x20] sm:$0xff] %vm637, %v633
        %643 = vst.msk [vmem:[#allocation4 + $0x28] sm:$0xff] %vm637, %v634
        %644 = vst.msk [vmem:[#allocation4 + $0x30] sm:$0xff] %vm637, %v635
        %645 = vst.msk [vmem:[#allocation4 + $0x38] sm:$0xff] %vm637, %v636
        %v646 = vld [vmem:[%s573] sm:$0xff]
        %v647 = vld [vmem:[%s573 + $0x8] sm:$0xff]
        %v648 = vld [vmem:[%s573 + $0x10] sm:$0xff]
        %v649 = vld [vmem:[%s573 + $0x18] sm:$0xff]
        %v650 = vld [vmem:[%s573 + $0x20] sm:$0xff]
        %v651 = vld [vmem:[%s573 + $0x28] sm:$0xff]
        %v652 = vld [vmem:[%s573 + $0x30] sm:$0xff]
        %v653 = vld [vmem:[%s573 + $0x38] sm:$0xff]
        %v654 = vld [vmem:[%s2] sm:$0xff]
        %v655 = vld [vmem:[%s2 + $0x8] sm:$0xff]
        %v656 = vld [vmem:[%s2 + $0x10] sm:$0xff]
        %v657 = vld [vmem:[%s2 + $0x18] sm:$0xff]
        %v658 = vld [vmem:[%s2 + $0x20] sm:$0xff]
        %v659 = vld [vmem:[%s2 + $0x28] sm:$0xff]
        %v660 = vld [vmem:[%s2 + $0x30] sm:$0xff]
        %v661 = vld [vmem:[%s2 + $0x38] sm:$0xff]
        %v662 = vld [vmem:[%s2 + $0x40] sm:$0xff]
        %v663 = vld [vmem:[%s2 + $0x48] sm:$0xff]
        %v664 = vld [vmem:[%s2 + $0x50] sm:$0xff]
        %v665 = vld [vmem:[%s2 + $0x58] sm:$0xff]
        %v666 = vld [vmem:[%s2 + $0x60] sm:$0xff]
        %v667 = vld [vmem:[%s2 + $0x68] sm:$0xff]
        %v668 = vld [vmem:[%s2 + $0x70] sm:$0xff]
        %v669 = vld [vmem:[%s2 + $0x78] sm:$0xff]
        %v670 = vld [vmem:[%s1] sm:$0xff]
        %v671 = vld [vmem:[%s1 + $0x8] sm:$0xff]
        %v672 = vld [vmem:[%s1 + $0x10] sm:$0xff]
        %v673 = vld [vmem:[%s1 + $0x18] sm:$0xff]
        %v674 = vld [vmem:[%s1 + $0x20] sm:$0xff]
        %v675 = vld [vmem:[%s1 + $0x28] sm:$0xff]
        %v676 = vld [vmem:[%s1 + $0x30] sm:$0xff]
        %v677 = vld [vmem:[%s1 + $0x38] sm:$0xff]
        %678 = vmatpush.msra.mxu0 %v669
        %679 = vmatpush.msra.mxu0 %v668
        %680 = vmatpush.msra.mxu0 %v667
        %681 = vmatpush.msra.mxu0 %v666
        %682 = vmatpush.msra.mxu0 %v665
        %683 = vmatpush.msra.mxu0 %v664
        %684 = vmatpush.msra.mxu0 %v663
        %685 = vmatpush.msra.mxu0 %v662
        %686 = vmatpush.msra.mxu0 %v661
        %687 = vmatpush.msra.mxu0 %v660
        %688 = vmatpush.msra.mxu0 %v659
        %689 = vmatpush.msra.mxu0 %v658
        %690 = vmatpush.msra.mxu0 %v657
        %691 = vmatpush.msra.mxu0 %v656
        %692 = vmatpush.msra.mxu0 %v655
        %693 = vmatpush.msra.mxu0 %v654
        %694 = vmatmul.f32.gmra.mxu0 %v646
        %v695 = vpop.f32.mrf.mxu0
        %v696 = vadd.f32 %v670, %v695
        %697 = vmatmul.f32.gmra.mxu0 %v647
        %v698 = vpop.f32.mrf.mxu0
        %v699 = vadd.f32 %v671, %v698
        %700 = vmatmul.f32.gmra.mxu0 %v648
        %v701 = vpop.f32.mrf.mxu0
        %v702 = vadd.f32 %v672, %v701
        %703 = vmatmul.f32.gmra.mxu0 %v649
        %v704 = vpop.f32.mrf.mxu0
        %v705 = vadd.f32 %v673, %v704
        %706 = vmatmul.f32.gmra.mxu0 %v650
        %v707 = vpop.f32.mrf.mxu0
        %v708 = vadd.f32 %v674, %v707
        %709 = vmatmul.f32.gmra.mxu0 %v651
        %v710 = vpop.f32.mrf.mxu0
        %v711 = vadd.f32 %v675, %v710
        %712 = vmatmul.f32.gmra.mxu0 %v652
        %v713 = vpop.f32.mrf.mxu0
        %v714 = vadd.f32 %v676, %v713
        %715 = vmatmul.f32.gmra.mxu0 %v653
        %v716 = vpop.f32.mrf.mxu0
        %v717 = vadd.f32 %v677, %v716
        %718 = vdwg.mxu0
        %719 = vst.msk [vmem:[#allocation2] sm:$0xff] %vm637, %v696
        %720 = vst.msk [vmem:[#allocation2 + $0x8] sm:$0xff] %vm637, %v699
        %721 = vst.msk [vmem:[#allocation2 + $0x10] sm:$0xff] %vm637, %v702
        %722 = vst.msk [vmem:[#allocation2 + $0x18] sm:$0xff] %vm637, %v705
        %723 = vst.msk [vmem:[#allocation2 + $0x20] sm:$0xff] %vm637, %v708
        %724 = vst.msk [vmem:[#allocation2 + $0x28] sm:$0xff] %vm637, %v711
        %725 = vst.msk [vmem:[#allocation2 + $0x30] sm:$0xff] %vm637, %v714
        %726 = vst.msk [vmem:[#allocation2 + $0x38] sm:$0xff] %vm637, %v717
        %v727 = vld [vmem:[#allocation2] sm:$0xff]
        %v728 = vld [vmem:[#allocation2 + $0x8] sm:$0xff]
        %v729 = vld [vmem:[#allocation2 + $0x10] sm:$0xff]
        %v730 = vld [vmem:[#allocation2 + $0x18] sm:$0xff]
        %v731 = vld [vmem:[#allocation2 + $0x20] sm:$0xff]
        %v732 = vld [vmem:[#allocation2 + $0x28] sm:$0xff]
        %v733 = vld [vmem:[#allocation2 + $0x30] sm:$0xff]
        %v734 = vld [vmem:[#allocation2 + $0x38] sm:$0xff]
        %v735 = vld [vmem:[%s3] sm:$0xff]
        %v736 = vld [vmem:[%s3 + $0x8] sm:$0xff]
        %v737 = vld [vmem:[%s3 + $0x10] sm:$0xff]
        %v738 = vld [vmem:[%s3 + $0x18] sm:$0xff]
        %v739 = vld [vmem:[%s3 + $0x20] sm:$0xff]
        %v740 = vld [vmem:[%s3 + $0x28] sm:$0xff]
        %v741 = vld [vmem:[%s3 + $0x30] sm:$0xff]
        %v742 = vld [vmem:[%s3 + $0x38] sm:$0xff]
        %v743 = vld [vmem:[%s3 + $0x40] sm:$0xff]
        %v744 = vld [vmem:[%s3 + $0x48] sm:$0xff]
        %v745 = vld [vmem:[%s3 + $0x50] sm:$0xff]
        %v746 = vld [vmem:[%s3 + $0x58] sm:$0xff]
        %v747 = vld [vmem:[%s3 + $0x60] sm:$0xff]
        %v748 = vld [vmem:[%s3 + $0x68] sm:$0xff]
        %v749 = vld [vmem:[%s3 + $0x70] sm:$0xff]
        %v750 = vld [vmem:[%s3 + $0x78] sm:$0xff]
        %v751 = vld [vmem:[%s4] sm:$0x3]
        %v753 = vperm.slane %v751, 0
        %v754 = vperm.slane %v751, 1
        %v758 = vsel %vm637, %v727, 0
        %v761 = vsel %vm637, %v728, 0
        %v764 = vsel %vm637, %v729, 0
        %v767 = vsel %vm637, %v730, 0
        %v770 = vsel %vm637, %v731, 0
        %v773 = vsel %vm637, %v732, 0
        %v776 = vsel %vm637, %v733, 0
        %v779 = vsel %vm637, %v734, 0
        %781 = vmatpush.msra.mxu0 0.0
        %782 = vmatpush.msra.mxu0 0.0
        %783 = vmatpush.msra.mxu0 0.0
        %784 = vmatpush.msra.mxu0 0.0
        %785 = vmatpush.msra.mxu0 0.0
        %786 = vmatpush.msra.mxu0 0.0
        %787 = vmatpush.msra.mxu0 0.0
        %788 = vmatpush.msra.mxu0 0.0
        %789 = vmatpush.msra.mxu0 %v749
        %790 = vmatpush.msra.mxu0 %v747
        %791 = vmatpush.msra.mxu0 %v745
        %792 = vmatpush.msra.mxu0 %v743
        %793 = vmatpush.msra.mxu0 %v741
        %794 = vmatpush.msra.mxu0 %v739
        %795 = vmatpush.msra.mxu0 %v737
        %796 = vmatpush.msra.mxu0 %v735
        %797 = vmatmul.f32.gmra.mxu0 %v758
        %v798 = vpop.f32.mrf.mxu0
        %v799 = vadd.f32 %v753, %v798
        %800 = vmatmul.f32.gmra.mxu0 %v761
        %v801 = vpop.f32.mrf.mxu0
        %v802 = vadd.f32 %v753, %v801
        %803 = vmatmul.f32.gmra.mxu0 %v764
        %v804 = vpop.f32.mrf.mxu0
        %v805 = vadd.f32 %v753, %v804
        %806 = vmatmul.f32.gmra.mxu0 %v767
        %v807 = vpop.f32.mrf.mxu0
        %v808 = vadd.f32 %v753, %v807
        %809 = vmatmul.f32.gmra.mxu0 %v770
        %v810 = vpop.f32.mrf.mxu0
        %v811 = vadd.f32 %v753, %v810
        %812 = vmatmul.f32.gmra.mxu0 %v773
        %v813 = vpop.f32.mrf.mxu0
        %v814 = vadd.f32 %v753, %v813
        %815 = vmatmul.f32.gmra.mxu0 %v776
        %v816 = vpop.f32.mrf.mxu0
        %v817 = vadd.f32 %v753, %v816
        %818 = vmatmul.f32.gmra.mxu0 %v779
        %v819 = vpop.f32.mrf.mxu0
        %v820 = vadd.f32 %v753, %v819
        %821 = vdwg.mxu0
        %822 = vmatpush.msra.mxu0 0.0
        %823 = vmatpush.msra.mxu0 0.0
        %824 = vmatpush.msra.mxu0 0.0
        %825 = vmatpush.msra.mxu0 0.0
        %826 = vmatpush.msra.mxu0 0.0
        %827 = vmatpush.msra.mxu0 0.0
        %828 = vmatpush.msra.mxu0 0.0
        %829 = vmatpush.msra.mxu0 0.0
        %830 = vmatpush.msra.mxu0 %v750
        %831 = vmatpush.msra.mxu0 %v748
        %832 = vmatpush.msra.mxu0 %v746
        %833 = vmatpush.msra.mxu0 %v744
        %834 = vmatpush.msra.mxu0 %v742
        %835 = vmatpush.msra.mxu0 %v740
        %836 = vmatpush.msra.mxu0 %v738
        %837 = vmatpush.msra.mxu0 %v736
        %838 = vmatmul.f32.gmra.mxu0 %v758
        %v839 = vpop.f32.mrf.mxu0
        %v840 = vadd.f32 %v754, %v839
        %841 = vmatmul.f32.gmra.mxu0 %v761
        %v842 = vpop.f32.mrf.mxu0
        %v843 = vadd.f32 %v754, %v842
        %844 = vmatmul.f32.gmra.mxu0 %v764
        %v845 = vpop.f32.mrf.mxu0
        %v846 = vadd.f32 %v754, %v845
        %847 = vmatmul.f32.gmra.mxu0 %v767
        %v848 = vpop.f32.mrf.mxu0
        %v849 = vadd.f32 %v754, %v848
        %850 = vmatmul.f32.gmra.mxu0 %v770
        %v851 = vpop.f32.mrf.mxu0
        %v852 = vadd.f32 %v754, %v851
        %853 = vmatmul.f32.gmra.mxu0 %v773
        %v854 = vpop.f32.mrf.mxu0
        %v855 = vadd.f32 %v754, %v854
        %856 = vmatmul.f32.gmra.mxu0 %v776
        %v857 = vpop.f32.mrf.mxu0
        %v858 = vadd.f32 %v754, %v857
        %859 = vmatmul.f32.gmra.mxu0 %v779
        %v860 = vpop.f32.mrf.mxu0
        %v861 = vadd.f32 %v754, %v860
        %862 = vdwg.mxu0
        %863 = vst [vmem:[#allocation3] sm:$0xff] %v799
        %864 = vst.msk [vmem:[#allocation3 + $0x8] sm:$0xff] %vm637, %v840
        %865 = vst [vmem:[#allocation3 + $0x10] sm:$0xff] %v802
        %866 = vst.msk [vmem:[#allocation3 + $0x18] sm:$0xff] %vm637, %v843
        %867 = vst [vmem:[#allocation3 + $0x20] sm:$0xff] %v805
        %868 = vst.msk [vmem:[#allocation3 + $0x28] sm:$0xff] %vm637, %v846
        %869 = vst [vmem:[#allocation3 + $0x30] sm:$0xff] %v808
        %870 = vst.msk [vmem:[#allocation3 + $0x38] sm:$0xff] %vm637, %v849
        %871 = vst [vmem:[#allocation3 + $0x40] sm:$0xff] %v811
        %872 = vst.msk [vmem:[#allocation3 + $0x48] sm:$0xff] %vm637, %v852
        %873 = vst [vmem:[#allocation3 + $0x50] sm:$0xff] %v814
        %874 = vst.msk [vmem:[#allocation3 + $0x58] sm:$0xff] %vm637, %v855
        %875 = vst [vmem:[#allocation3 + $0x60] sm:$0xff] %v817
        %876 = vst.msk [vmem:[#allocation3 + $0x68] sm:$0xff] %vm637, %v858
        %877 = vst [vmem:[#allocation3 + $0x70] sm:$0xff] %v820
        %878 = vst.msk [vmem:[#allocation3 + $0x78] sm:$0xff] %vm637, %v861
        %v879 = vld [vmem:[#allocation3] sm:$0xff]
        %v880 = vld [vmem:[#allocation3 + $0x10] sm:$0xff]
        %v881 = vld [vmem:[#allocation3 + $0x20] sm:$0xff]
        %v882 = vld [vmem:[#allocation3 + $0x30] sm:$0xff]
        %v883 = vld [vmem:[#allocation3 + $0x40] sm:$0xff]
        %v884 = vld [vmem:[#allocation3 + $0x50] sm:$0xff]
        %v885 = vld [vmem:[#allocation3 + $0x60] sm:$0xff]
        %v886 = vld [vmem:[#allocation3 + $0x70] sm:$0xff]
        %v887 = vld [vmem:[#allocation3 + $0x8] sm:$0xff]
        %v888 = vld [vmem:[#allocation3 + $0x18] sm:$0xff]
        %v889 = vld [vmem:[#allocation3 + $0x28] sm:$0xff]
        %v890 = vld [vmem:[#allocation3 + $0x38] sm:$0xff]
        %v891 = vld [vmem:[#allocation3 + $0x48] sm:$0xff]
        %v892 = vld [vmem:[#allocation3 + $0x58] sm:$0xff]
        %v893 = vld [vmem:[#allocation3 + $0x68] sm:$0xff]
        %v894 = vld [vmem:[#allocation3 + $0x78] sm:$0xff]
        %v895 = vld [vmem:[#allocation4] sm:$0xff]
        %v896 = vld [vmem:[#allocation4 + $0x8] sm:$0xff]
        %v897 = vld [vmem:[#allocation4 + $0x10] sm:$0xff]
        %v898 = vld [vmem:[#allocation4 + $0x18] sm:$0xff]
        %v899 = vld [vmem:[#allocation4 + $0x20] sm:$0xff]
        %v900 = vld [vmem:[#allocation4 + $0x28] sm:$0xff]
        %v901 = vld [vmem:[#allocation4 + $0x30] sm:$0xff]
        %v902 = vld [vmem:[#allocation4 + $0x38] sm:$0xff]
        %911 = vrot.lane.b32.xlu0 %v879, 64
        %v912 = vpop.permute.xlu0 %911
        %913 = vrot.lane.b32.xlu0 %v880, 64
        %v914 = vpop.permute.xlu0 %913
        %915 = vrot.lane.b32.xlu0 %v881, 64
        %v916 = vpop.permute.xlu0 %915
        %917 = vrot.lane.b32.xlu0 %v882, 64
        %v918 = vpop.permute.xlu0 %917
        %919 = vrot.lane.b32.xlu0 %v883, 64
        %v920 = vpop.permute.xlu0 %919
        %921 = vrot.lane.b32.xlu0 %v884, 64
        %v922 = vpop.permute.xlu0 %921
        %923 = vrot.lane.b32.xlu0 %v885, 64
        %v924 = vpop.permute.xlu0 %923
        %925 = vrot.lane.b32.xlu0 %v886, 64
        %v926 = vpop.permute.xlu0 %925
        %vm927 = vcmask 130048
        %v928 = vsel %vm927, %v879, 0
        %v930 = vsel %vm927, %v880, 0
        %v932 = vsel %vm927, %v881, 0
        %v934 = vsel %vm927, %v882, 0
        %v936 = vsel %vm927, %v883, 0
        %v938 = vsel %vm927, %v884, 0
        %v940 = vsel %vm927, %v885, 0
        %v942 = vsel %vm927, %v886, 0
        %v944 = vsel %vm927, %v912, 0
        %v946 = vsel %vm927, %v914, 0
        %v948 = vsel %vm927, %v916, 0
        %v950 = vsel %vm927, %v918, 0
        %v952 = vsel %vm927, %v920, 0
        %v954 = vsel %vm927, %v922, 0
        %v956 = vsel %vm927, %v924, 0
        %v958 = vsel %vm927, %v926, 0
        %960 = vmatpush.xpose.msra.mxu0 0.0
        %961 = vmatpush.xpose.msra.mxu0 0.0
        %962 = vmatpush.xpose.msra.mxu0 0.0
        %963 = vmatpush.xpose.msra.mxu0 0.0
        %964 = vmatpush.xpose.msra.mxu0 0.0
        %965 = vmatpush.xpose.msra.mxu0 0.0
        %966 = vmatpush.xpose.msra.mxu0 0.0
        %967 = vmatpush.xpose.msra.mxu0 0.0
        %968 = vmatpush.xpose.msra.mxu0 %v958
        %969 = vmatpush.xpose.msra.mxu0 %v956
        %970 = vmatpush.xpose.msra.mxu0 %v954
        %971 = vmatpush.xpose.msra.mxu0 %v952
        %972 = vmatpush.xpose.msra.mxu0 %v950
        %973 = vmatpush.xpose.msra.mxu0 %v948
        %974 = vmatpush.xpose.msra.mxu0 %v946
        %975 = vmatpush.xpose.msra.mxu0 %v944
        %976 = vmatmul.f32.gmra.mxu0 %v928
        %v977 = vpop.f32.mrf.mxu0
        %v978 = vadd.f32 %v895, %v977
        %979 = vmatmul.f32.gmra.mxu0 %v930
        %v980 = vpop.f32.mrf.mxu0
        %v981 = vadd.f32 %v896, %v980
        %982 = vmatmul.f32.gmra.mxu0 %v932
        %v983 = vpop.f32.mrf.mxu0
        %v984 = vadd.f32 %v897, %v983
        %985 = vmatmul.f32.gmra.mxu0 %v934
        %v986 = vpop.f32.mrf.mxu0
        %v987 = vadd.f32 %v898, %v986
        %988 = vmatmul.f32.gmra.mxu0 %v936
        %v989 = vpop.f32.mrf.mxu0
        %v990 = vadd.f32 %v899, %v989
        %991 = vmatmul.f32.gmra.mxu0 %v938
        %v992 = vpop.f32.mrf.mxu0
        %v993 = vadd.f32 %v900, %v992
        %994 = vmatmul.f32.gmra.mxu0 %v940
        %v995 = vpop.f32.mrf.mxu0
        %v996 = vadd.f32 %v901, %v995
        %997 = vmatmul.f32.gmra.mxu0 %v942
        %v998 = vpop.f32.mrf.mxu0
        %v999 = vadd.f32 %v902, %v998
        %1000 = vdwg.mxu0
        %v1001 = vsel %vm637, %v978, -inf
        %1002 = vmax.xlane.f32.xlu0 %v1001
        %v1003 = vpop.xlane.xlu0 %1002
        %v1004 = vsel %vm637, %v981, -inf
        %1005 = vmax.xlane.f32.xlu0 %v1004
        %v1006 = vpop.xlane.xlu0 %1005
        %v1007 = vsel %vm637, %v984, -inf
        %1008 = vmax.xlane.f32.xlu0 %v1007
        %v1009 = vpop.xlane.xlu0 %1008
        %v1010 = vsel %vm637, %v987, -inf
        %1011 = vmax.xlane.f32.xlu0 %v1010
        %v1012 = vpop.xlane.xlu0 %1011
        %v1013 = vsel %vm637, %v990, -inf
        %1014 = vmax.xlane.f32.xlu0 %v1013
        %v1015 = vpop.xlane.xlu0 %1014
        %v1016 = vsel %vm637, %v993, -inf
        %1017 = vmax.xlane.f32.xlu0 %v1016
        %v1018 = vpop.xlane.xlu0 %1017
        %v1019 = vsel %vm637, %v996, -inf
        %1020 = vmax.xlane.f32.xlu0 %v1019
        %v1021 = vpop.xlane.xlu0 %1020
        %v1022 = vsel %vm637, %v999, -inf
        %1023 = vmax.xlane.f32.xlu0 %v1022
        %v1024 = vpop.xlane.xlu0 %1023
        %v1025 = vsub.f32 %v978, %v1003
        %v1026 = vsub.f32 %v981, %v1006
        %v1027 = vsub.f32 %v984, %v1009
        %v1028 = vsub.f32 %v987, %v1012
        %v1029 = vsub.f32 %v990, %v1015
        %v1030 = vsub.f32 %v993, %v1018
        %v1031 = vsub.f32 %v996, %v1021
        %v1032 = vsub.f32 %v999, %v1024
        %v1033 = vmul.f32 %v1025, 1.442695
        %v1034 = vpow.pop %v1033
        %v1035 = vmul.f32 %v1026, 1.442695
        %v1036 = vpow.pop %v1035
        %v1037 = vmul.f32 %v1027, 1.442695
        %v1038 = vpow.pop %v1037
        %v1039 = vmul.f32 %v1028, 1.442695
        %v1040 = vpow.pop %v1039
        %v1041 = vmul.f32 %v1029, 1.442695
        %v1042 = vpow.pop %v1041
        %v1043 = vmul.f32 %v1030, 1.442695
        %v1044 = vpow.pop %v1043
        %v1045 = vmul.f32 %v1031, 1.442695
        %v1046 = vpow.pop %v1045
        %v1047 = vmul.f32 %v1032, 1.442695
        %v1048 = vpow.pop %v1047
        %v1049 = vsel %vm637, %v1034, 0.0
        %1050 = vadd.xlane.f32.xlu0 %v1049
        %v1051 = vpop.xlane.xlu0 %1050
        %v1052 = vsel %vm637, %v1036, 0.0
        %1053 = vadd.xlane.f32.xlu0 %v1052
        %v1054 = vpop.xlane.xlu0 %1053
        %v1055 = vsel %vm637, %v1038, 0.0
        %1056 = vadd.xlane.f32.xlu0 %v1055
        %v1057 = vpop.xlane.xlu0 %1056
        %v1058 = vsel %vm637, %v1040, 0.0
        %1059 = vadd.xlane.f32.xlu0 %v1058
        %v1060 = vpop.xlane.xlu0 %1059
        %v1061 = vsel %vm637, %v1042, 0.0
        %1062 = vadd.xlane.f32.xlu0 %v1061
        %v1063 = vpop.xlane.xlu0 %1062
        %v1064 = vsel %vm637, %v1044, 0.0
        %1065 = vadd.xlane.f32.xlu0 %v1064
        %v1066 = vpop.xlane.xlu0 %1065
        %v1067 = vsel %vm637, %v1046, 0.0
        %1068 = vadd.xlane.f32.xlu0 %v1067
        %v1069 = vpop.xlane.xlu0 %1068
        %v1070 = vsel %vm637, %v1048, 0.0
        %1071 = vadd.xlane.f32.xlu0 %v1070
        %v1072 = vpop.xlane.xlu0 %1071
        %v1073 = vrcp.pop %v1051
        %v1074 = vrcp.pop %v1054
        %v1075 = vrcp.pop %v1057
        %v1076 = vrcp.pop %v1060
        %v1077 = vrcp.pop %v1063
        %v1078 = vrcp.pop %v1066
        %v1079 = vrcp.pop %v1069
        %v1080 = vrcp.pop %v1072
        %v1081 = vmul.f32 %v1034, %v1073
        %v1082 = vmul.f32 %v1036, %v1074
        %v1083 = vmul.f32 %v1038, %v1075
        %v1084 = vmul.f32 %v1040, %v1076
        %v1085 = vmul.f32 %v1042, %v1077
        %v1086 = vmul.f32 %v1044, %v1078
        %v1087 = vmul.f32 %v1046, %v1079
        %v1088 = vmul.f32 %v1048, %v1080
        %v1089 = vld [vmem:[%s5] sm:$0xff]
        %v1090 = vld [vmem:[%s5 + $0x8] sm:$0xff]
        %v1092 = vsel %vm927, %v887, 0
        %v1095 = vsel %vm927, %v888, 0
        %v1098 = vsel %vm927, %v889, 0
        %v1101 = vsel %vm927, %v890, 0
        %v1104 = vsel %vm927, %v891, 0
        %v1107 = vsel %vm927, %v892, 0
        %v1110 = vsel %vm927, %v893, 0
        %v1113 = vsel %vm927, %v894, 0
        %1115 = vmatpush.msra.mxu0 0.0
        %1116 = vmatpush.msra.mxu0 0.0
        %1117 = vmatpush.msra.mxu0 0.0
        %1118 = vmatpush.msra.mxu0 0.0
        %1119 = vmatpush.msra.mxu0 0.0
        %1120 = vmatpush.msra.mxu0 0.0
        %1121 = vmatpush.msra.mxu0 0.0
        %1122 = vmatpush.msra.mxu0 0.0
        %1123 = vmatpush.msra.mxu0 0.0
        %1124 = vmatpush.msra.mxu0 0.0
        %1125 = vmatpush.msra.mxu0 0.0
        %1126 = vmatpush.msra.mxu0 0.0
        %1127 = vmatpush.msra.mxu0 0.0
        %1128 = vmatpush.msra.mxu0 0.0
        %1129 = vmatpush.msra.mxu0 %v1090
        %1130 = vmatpush.msra.mxu0 %v1089
        %1131 = vmatmul.f32.gmra.mxu0 %v1092
        %v1132 = vpop.f32.mrf.mxu0
        %v1133 = vadd.f32 0.0, %v1132
        %1134 = vmatmul.f32.gmra.mxu0 %v1095
        %v1135 = vpop.f32.mrf.mxu0
        %v1136 = vadd.f32 0.0, %v1135
        %1137 = vmatmul.f32.gmra.mxu0 %v1098
        %v1138 = vpop.f32.mrf.mxu0
        %v1139 = vadd.f32 0.0, %v1138
        %1140 = vmatmul.f32.gmra.mxu0 %v1101
        %v1141 = vpop.f32.mrf.mxu0
        %v1142 = vadd.f32 0.0, %v1141
        %1143 = vmatmul.f32.gmra.mxu0 %v1104
        %v1144 = vpop.f32.mrf.mxu0
        %v1145 = vadd.f32 0.0, %v1144
        %1146 = vmatmul.f32.gmra.mxu0 %v1107
        %v1147 = vpop.f32.mrf.mxu0
        %v1148 = vadd.f32 0.0, %v1147
        %1149 = vmatmul.f32.gmra.mxu0 %v1110
        %v1150 = vpop.f32.mrf.mxu0
        %v1151 = vadd.f32 0.0, %v1150
        %1152 = vmatmul.f32.gmra.mxu0 %v1113
        %v1153 = vpop.f32.mrf.mxu0
        %v1154 = vadd.f32 0.0, %v1153
        %1155 = vdwg.mxu0
        %1156 = vrot.lane.b32.xlu0 %v879, 112
        %v1157 = vpop.permute.xlu0 %1156
        %1158 = vrot.lane.b32.xlu0 %v880, 112
        %v1159 = vpop.permute.xlu0 %1158
        %1160 = vrot.lane.b32.xlu0 %v881, 112
        %v1161 = vpop.permute.xlu0 %1160
        %1162 = vrot.lane.b32.xlu0 %v882, 112
        %v1163 = vpop.permute.xlu0 %1162
        %1164 = vrot.lane.b32.xlu0 %v883, 112
        %v1165 = vpop.permute.xlu0 %1164
        %1166 = vrot.lane.b32.xlu0 %v884, 112
        %v1167 = vpop.permute.xlu0 %1166
        %1168 = vrot.lane.b32.xlu0 %v885, 112
        %v1169 = vpop.permute.xlu0 %1168
        %1170 = vrot.lane.b32.xlu0 %v886, 112
        %v1171 = vpop.permute.xlu0 %1170
        %1172 = vrot.lane.b32.xlu0 %v879, 48
        %v1173 = vpop.permute.xlu0 %1172
        %1174 = vrot.lane.b32.xlu0 %v880, 48
        %v1175 = vpop.permute.xlu0 %1174
        %1176 = vrot.lane.b32.xlu0 %v881, 48
        %v1177 = vpop.permute.xlu0 %1176
        %1178 = vrot.lane.b32.xlu0 %v882, 48
        %v1179 = vpop.permute.xlu0 %1178
        %1180 = vrot.lane.b32.xlu0 %v883, 48
        %v1181 = vpop.permute.xlu0 %1180
        %1182 = vrot.lane.b32.xlu0 %v884, 48
        %v1183 = vpop.permute.xlu0 %1182
        %1184 = vrot.lane.b32.xlu0 %v885, 48
        %v1185 = vpop.permute.xlu0 %1184
        %1186 = vrot.lane.b32.xlu0 %v886, 48
        %v1187 = vpop.permute.xlu0 %1186
        %v1188 = vsel %vm927, %v1157, 0
        %v1190 = vsel %vm927, %v1159, 0
        %v1192 = vsel %vm927, %v1161, 0
        %v1194 = vsel %vm927, %v1163, 0
        %v1196 = vsel %vm927, %v1165, 0
        %v1198 = vsel %vm927, %v1167, 0
        %v1200 = vsel %vm927, %v1169, 0
        %v1202 = vsel %vm927, %v1171, 0
        %v1204 = vsel %vm927, %v1173, 0
        %v1206 = vsel %vm927, %v1175, 0
        %v1208 = vsel %vm927, %v1177, 0
        %v1210 = vsel %vm927, %v1179, 0
        %v1212 = vsel %vm927, %v1181, 0
        %v1214 = vsel %vm927, %v1183, 0
        %v1216 = vsel %vm927, %v1185, 0
        %v1218 = vsel %vm927, %v1187, 0
        %1220 = vmatpush.xpose.msra.mxu0 0.0
        %1221 = vmatpush.xpose.msra.mxu0 0.0
        %1222 = vmatpush.xpose.msra.mxu0 0.0
        %1223 = vmatpush.xpose.msra.mxu0 0.0
        %1224 = vmatpush.xpose.msra.mxu0 0.0
        %1225 = vmatpush.xpose.msra.mxu0 0.0
        %1226 = vmatpush.xpose.msra.mxu0 0.0
        %1227 = vmatpush.xpose.msra.mxu0 0.0
        %1228 = vmatpush.xpose.msra.mxu0 %v1218
        %1229 = vmatpush.xpose.msra.mxu0 %v1216
        %1230 = vmatpush.xpose.msra.mxu0 %v1214
        %1231 = vmatpush.xpose.msra.mxu0 %v1212
        %1232 = vmatpush.xpose.msra.mxu0 %v1210
        %1233 = vmatpush.xpose.msra.mxu0 %v1208
        %1234 = vmatpush.xpose.msra.mxu0 %v1206
        %1235 = vmatpush.xpose.msra.mxu0 %v1204
        %1236 = vmatmul.f32.gmra.mxu0 %v1188
        %v1237 = vpop.f32.mrf.mxu0
        %v1238 = vadd.f32 %v895, %v1237
        %1239 = vmatmul.f32.gmra.mxu0 %v1190
        %v1240 = vpop.f32.mrf.mxu0
        %v1241 = vadd.f32 %v896, %v1240
        %1242 = vmatmul.f32.gmra.mxu0 %v1192
        %v1243 = vpop.f32.mrf.mxu0
        %v1244 = vadd.f32 %v897, %v1243
        %1245 = vmatmul.f32.gmra.mxu0 %v1194
        %v1246 = vpop.f32.mrf.mxu0
        %v1247 = vadd.f32 %v898, %v1246
        %1248 = vmatmul.f32.gmra.mxu0 %v1196
        %v1249 = vpop.f32.mrf.mxu0
        %v1250 = vadd.f32 %v899, %v1249
        %1251 = vmatmul.f32.gmra.mxu0 %v1198
        %v1252 = vpop.f32.mrf.mxu0
        %v1253 = vadd.f32 %v900, %v1252
        %1254 = vmatmul.f32.gmra.mxu0 %v1200
        %v1255 = vpop.f32.mrf.mxu0
        %v1256 = vadd.f32 %v901, %v1255
        %1257 = vmatmul.f32.gmra.mxu0 %v1202
        %v1258 = vpop.f32.mrf.mxu0
        %v1259 = vadd.f32 %v902, %v1258
        %1260 = vdwg.mxu0
        %v1261 = vsel %vm637, %v1238, -inf
        %1262 = vmax.xlane.f32.xlu0 %v1261
        %v1263 = vpop.xlane.xlu0 %1262
        %v1264 = vsel %vm637, %v1241, -inf
        %1265 = vmax.xlane.f32.xlu0 %v1264
        %v1266 = vpop.xlane.xlu0 %1265
        %v1267 = vsel %vm637, %v1244, -inf
        %1268 = vmax.xlane.f32.xlu0 %v1267
        %v1269 = vpop.xlane.xlu0 %1268
        %v1270 = vsel %vm637, %v1247, -inf
        %1271 = vmax.xlane.f32.xlu0 %v1270
        %v1272 = vpop.xlane.xlu0 %1271
        %v1273 = vsel %vm637, %v1250, -inf
        %1274 = vmax.xlane.f32.xlu0 %v1273
        %v1275 = vpop.xlane.xlu0 %1274
        %v1276 = vsel %vm637, %v1253, -inf
        %1277 = vmax.xlane.f32.xlu0 %v1276
        %v1278 = vpop.xlane.xlu0 %1277
        %v1279 = vsel %vm637, %v1256, -inf
        %1280 = vmax.xlane.f32.xlu0 %v1279
        %v1281 = vpop.xlane.xlu0 %1280
        %v1282 = vsel %vm637, %v1259, -inf
        %1283 = vmax.xlane.f32.xlu0 %v1282
        %v1284 = vpop.xlane.xlu0 %1283
        %v1285 = vsub.f32 %v1238, %v1263
        %v1286 = vsub.f32 %v1241, %v1266
        %v1287 = vsub.f32 %v1244, %v1269
        %v1288 = vsub.f32 %v1247, %v1272
        %v1289 = vsub.f32 %v1250, %v1275
        %v1290 = vsub.f32 %v1253, %v1278
        %v1291 = vsub.f32 %v1256, %v1281
        %v1292 = vsub.f32 %v1259, %v1284
        %v1293 = vmul.f32 %v1285, 1.442695
        %v1294 = vpow.pop %v1293
        %v1295 = vmul.f32 %v1286, 1.442695
        %v1296 = vpow.pop %v1295
        %v1297 = vmul.f32 %v1287, 1.442695
        %v1298 = vpow.pop %v1297
        %v1299 = vmul.f32 %v1288, 1.442695
        %v1300 = vpow.pop %v1299
        %v1301 = vmul.f32 %v1289, 1.442695
        %v1302 = vpow.pop %v1301
        %v1303 = vmul.f32 %v1290, 1.442695
        %v1304 = vpow.pop %v1303
        %v1305 = vmul.f32 %v1291, 1.442695
        %v1306 = vpow.pop %v1305
        %v1307 = vmul.f32 %v1292, 1.442695
        %v1308 = vpow.pop %v1307
        %v1309 = vsel %vm637, %v1294, 0.0
        %1310 = vadd.xlane.f32.xlu0 %v1309
        %v1311 = vpop.xlane.xlu0 %1310
        %v1312 = vsel %vm637, %v1296, 0.0
        %1313 = vadd.xlane.f32.xlu0 %v1312
        %v1314 = vpop.xlane.xlu0 %1313
        %v1315 = vsel %vm637, %v1298, 0.0
        %1316 = vadd.xlane.f32.xlu0 %v1315
        %v1317 = vpop.xlane.xlu0 %1316
        %v1318 = vsel %vm637, %v1300, 0.0
        %1319 = vadd.xlane.f32.xlu0 %v1318
        %v1320 = vpop.xlane.xlu0 %1319
        %v1321 = vsel %vm637, %v1302, 0.0
        %1322 = vadd.xlane.f32.xlu0 %v1321
        %v1323 = vpop.xlane.xlu0 %1322
        %v1324 = vsel %vm637, %v1304, 0.0
        %1325 = vadd.xlane.f32.xlu0 %v1324
        %v1326 = vpop.xlane.xlu0 %1325
        %v1327 = vsel %vm637, %v1306, 0.0
        %1328 = vadd.xlane.f32.xlu0 %v1327
        %v1329 = vpop.xlane.xlu0 %1328
        %v1330 = vsel %vm637, %v1308, 0.0
        %1331 = vadd.xlane.f32.xlu0 %v1330
        %v1332 = vpop.xlane.xlu0 %1331
        %v1333 = vrcp.pop %v1311
        %v1334 = vrcp.pop %v1314
        %v1335 = vrcp.pop %v1317
        %v1336 = vrcp.pop %v1320
        %v1337 = vrcp.pop %v1323
        %v1338 = vrcp.pop %v1326
        %v1339 = vrcp.pop %v1329
        %v1340 = vrcp.pop %v1332
        %v1341 = vmul.f32 %v1294, %v1333
        %v1342 = vmul.f32 %v1296, %v1334
        %v1343 = vmul.f32 %v1298, %v1335
        %v1344 = vmul.f32 %v1300, %v1336
        %v1345 = vmul.f32 %v1302, %v1337
        %v1346 = vmul.f32 %v1304, %v1338
        %v1347 = vmul.f32 %v1306, %v1339
        %v1348 = vmul.f32 %v1308, %v1340
        %s1349 = scalar_lea.vmem %s5, 16
        %v1350 = vld [vmem:[%s1349] sm:$0xff]
        %v1351 = vld [vmem:[%s1349 + $0x8] sm:$0xff]
        %1352 = vrot.lane.b32.xlu0 %v887, 112
        %v1353 = vpop.permute.xlu0 %1352
        %1354 = vrot.lane.b32.xlu0 %v888, 112
        %v1355 = vpop.permute.xlu0 %1354
        %1356 = vrot.lane.b32.xlu0 %v889, 112
        %v1357 = vpop.permute.xlu0 %1356
        %1358 = vrot.lane.b32.xlu0 %v890, 112
        %v1359 = vpop.permute.xlu0 %1358
        %1360 = vrot.lane.b32.xlu0 %v891, 112
        %v1361 = vpop.permute.xlu0 %1360
        %1362 = vrot.lane.b32.xlu0 %v892, 112
        %v1363 = vpop.permute.xlu0 %1362
        %1364 = vrot.lane.b32.xlu0 %v893, 112
        %v1365 = vpop.permute.xlu0 %1364
        %1366 = vrot.lane.b32.xlu0 %v894, 112
        %v1367 = vpop.permute.xlu0 %1366
        %v1368 = vsel %vm927, %v1353, 0
        %v1370 = vsel %vm927, %v1355, 0
        %v1372 = vsel %vm927, %v1357, 0
        %v1374 = vsel %vm927, %v1359, 0
        %v1376 = vsel %vm927, %v1361, 0
        %v1378 = vsel %vm927, %v1363, 0
        %v1380 = vsel %vm927, %v1365, 0
        %v1382 = vsel %vm927, %v1367, 0
        %1384 = vmatpush.msra.mxu0 0.0
        %1385 = vmatpush.msra.mxu0 0.0
        %1386 = vmatpush.msra.mxu0 0.0
        %1387 = vmatpush.msra.mxu0 0.0
        %1388 = vmatpush.msra.mxu0 0.0
        %1389 = vmatpush.msra.mxu0 0.0
        %1390 = vmatpush.msra.mxu0 0.0
        %1391 = vmatpush.msra.mxu0 0.0
        %1392 = vmatpush.msra.mxu0 0.0
        %1393 = vmatpush.msra.mxu0 0.0
        %1394 = vmatpush.msra.mxu0 0.0
        %1395 = vmatpush.msra.mxu0 0.0
        %1396 = vmatpush.msra.mxu0 0.0
        %1397 = vmatpush.msra.mxu0 0.0
        %1398 = vmatpush.msra.mxu0 %v1351
        %1399 = vmatpush.msra.mxu0 %v1350
        %1400 = vmatmul.f32.gmra.mxu0 %v1368
        %v1401 = vpop.f32.mrf.mxu0
        %v1402 = vadd.f32 0.0, %v1401
        %1403 = vmatmul.f32.gmra.mxu0 %v1370
        %v1404 = vpop.f32.mrf.mxu0
        %v1405 = vadd.f32 0.0, %v1404
        %1406 = vmatmul.f32.gmra.mxu0 %v1372
        %v1407 = vpop.f32.mrf.mxu0
        %v1408 = vadd.f32 0.0, %v1407
        %1409 = vmatmul.f32.gmra.mxu0 %v1374
        %v1410 = vpop.f32.mrf.mxu0
        %v1411 = vadd.f32 0.0, %v1410
        %1412 = vmatmul.f32.gmra.mxu0 %v1376
        %v1413 = vpop.f32.mrf.mxu0
        %v1414 = vadd.f32 0.0, %v1413
        %1415 = vmatmul.f32.gmra.mxu0 %v1378
        %v1416 = vpop.f32.mrf.mxu0
        %v1417 = vadd.f32 0.0, %v1416
        %1418 = vmatmul.f32.gmra.mxu0 %v1380
        %v1419 = vpop.f32.mrf.mxu0
        %v1420 = vadd.f32 0.0, %v1419
        %1421 = vmatmul.f32.gmra.mxu0 %v1382
        %v1422 = vpop.f32.mrf.mxu0
        %v1423 = vadd.f32 0.0, %v1422
        %1424 = vdwg.mxu0
        %v1426 = vsel %vm637, %v1341, 0
        %v1429 = vsel %vm637, %v1342, 0
        %v1432 = vsel %vm637, %v1343, 0
        %v1435 = vsel %vm637, %v1344, 0
        %v1438 = vsel %vm637, %v1345, 0
        %v1441 = vsel %vm637, %v1346, 0
        %v1444 = vsel %vm637, %v1347, 0
        %v1447 = vsel %vm637, %v1348, 0
        %1449 = vmatpush.msra.mxu0 0.0
        %1450 = vmatpush.msra.mxu0 0.0
        %1451 = vmatpush.msra.mxu0 0.0
        %1452 = vmatpush.msra.mxu0 0.0
        %1453 = vmatpush.msra.mxu0 0.0
        %1454 = vmatpush.msra.mxu0 0.0
        %1455 = vmatpush.msra.mxu0 0.0
        %1456 = vmatpush.msra.mxu0 0.0
        %1457 = vmatpush.msra.mxu0 %v1423
        %1458 = vmatpush.msra.mxu0 %v1420
        %1459 = vmatpush.msra.mxu0 %v1417
        %1460 = vmatpush.msra.mxu0 %v1414
        %1461 = vmatpush.msra.mxu0 %v1411
        %1462 = vmatpush.msra.mxu0 %v1408
        %1463 = vmatpush.msra.mxu0 %v1405
        %1464 = vmatpush.msra.mxu0 %v1402
        %1465 = vmatmul.f32.gmra.mxu0 %v1426
        %v1466 = vpop.f32.mrf.mxu0
        %v1467 = vadd.f32 0.0, %v1466
        %1468 = vmatmul.f32.gmra.mxu0 %v1429
        %v1469 = vpop.f32.mrf.mxu0
        %v1470 = vadd.f32 0.0, %v1469
        %1471 = vmatmul.f32.gmra.mxu0 %v1432
        %v1472 = vpop.f32.mrf.mxu0
        %v1473 = vadd.f32 0.0, %v1472
        %1474 = vmatmul.f32.gmra.mxu0 %v1435
        %v1475 = vpop.f32.mrf.mxu0
        %v1476 = vadd.f32 0.0, %v1475
        %1477 = vmatmul.f32.gmra.mxu0 %v1438
        %v1478 = vpop.f32.mrf.mxu0
        %v1479 = vadd.f32 0.0, %v1478
        %1480 = vmatmul.f32.gmra.mxu0 %v1441
        %v1481 = vpop.f32.mrf.mxu0
        %v1482 = vadd.f32 0.0, %v1481
        %1483 = vmatmul.f32.gmra.mxu0 %v1444
        %v1484 = vpop.f32.mrf.mxu0
        %v1485 = vadd.f32 0.0, %v1484
        %1486 = vmatmul.f32.gmra.mxu0 %v1447
        %v1487 = vpop.f32.mrf.mxu0
        %v1488 = vadd.f32 0.0, %v1487
        %1489 = vdwg.mxu0
        %v1491 = vsel %vm637, %v1081, 0
        %v1494 = vsel %vm637, %v1082, 0
        %v1497 = vsel %vm637, %v1083, 0
        %v1500 = vsel %vm637, %v1084, 0
        %v1503 = vsel %vm637, %v1085, 0
        %v1506 = vsel %vm637, %v1086, 0
        %v1509 = vsel %vm637, %v1087, 0
        %v1512 = vsel %vm637, %v1088, 0
        %1514 = vmatpush.msra.mxu0 0.0
        %1515 = vmatpush.msra.mxu0 0.0
        %1516 = vmatpush.msra.mxu0 0.0
        %1517 = vmatpush.msra.mxu0 0.0
        %1518 = vmatpush.msra.mxu0 0.0
        %1519 = vmatpush.msra.mxu0 0.0
        %1520 = vmatpush.msra.mxu0 0.0
        %1521 = vmatpush.msra.mxu0 0.0
        %1522 = vmatpush.msra.mxu0 %v1154
        %1523 = vmatpush.msra.mxu0 %v1151
        %1524 = vmatpush.msra.mxu0 %v1148
        %1525 = vmatpush.msra.mxu0 %v1145
        %1526 = vmatpush.msra.mxu0 %v1142
        %1527 = vmatpush.msra.mxu0 %v1139
        %1528 = vmatpush.msra.mxu0 %v1136
        %1529 = vmatpush.msra.mxu0 %v1133
        %1530 = vmatmul.f32.gmra.mxu0 %v1491
        %v1531 = vpop.f32.mrf.mxu0
        %v1532 = vadd.f32 %v1467, %v1531
        %1533 = vmatmul.f32.gmra.mxu0 %v1494
        %v1534 = vpop.f32.mrf.mxu0
        %v1535 = vadd.f32 %v1470, %v1534
        %1536 = vmatmul.f32.gmra.mxu0 %v1497
        %v1537 = vpop.f32.mrf.mxu0
        %v1538 = vadd.f32 %v1473, %v1537
        %1539 = vmatmul.f32.gmra.mxu0 %v1500
        %v1540 = vpop.f32.mrf.mxu0
        %v1541 = vadd.f32 %v1476, %v1540
        %1542 = vmatmul.f32.gmra.mxu0 %v1503
        %v1543 = vpop.f32.mrf.mxu0
        %v1544 = vadd.f32 %v1479, %v1543
        %1545 = vmatmul.f32.gmra.mxu0 %v1506
        %v1546 = vpop.f32.mrf.mxu0
        %v1547 = vadd.f32 %v1482, %v1546
        %1548 = vmatmul.f32.gmra.mxu0 %v1509
        %v1549 = vpop.f32.mrf.mxu0
        %v1550 = vadd.f32 %v1485, %v1549
        %1551 = vmatmul.f32.gmra.mxu0 %v1512
        %v1552 = vpop.f32.mrf.mxu0
        %v1553 = vadd.f32 %v1488, %v1552
        %1554 = vdwg.mxu0
        %1555 = vrot.lane.b32.xlu0 %v879, 96
        %v1556 = vpop.permute.xlu0 %1555
        %1557 = vrot.lane.b32.xlu0 %v880, 96
        %v1558 = vpop.permute.xlu0 %1557
        %1559 = vrot.lane.b32.xlu0 %v881, 96
        %v1560 = vpop.permute.xlu0 %1559
        %1561 = vrot.lane.b32.xlu0 %v882, 96
        %v1562 = vpop.permute.xlu0 %1561
        %1563 = vrot.lane.b32.xlu0 %v883, 96
        %v1564 = vpop.permute.xlu0 %1563
        %1565 = vrot.lane.b32.xlu0 %v884, 96
        %v1566 = vpop.permute.xlu0 %1565
        %1567 = vrot.lane.b32.xlu0 %v885, 96
        %v1568 = vpop.permute.xlu0 %1567
        %1569 = vrot.lane.b32.xlu0 %v886, 96
        %v1570 = vpop.permute.xlu0 %1569
        %1571 = vrot.lane.b32.xlu0 %v879, 32
        %v1572 = vpop.permute.xlu0 %1571
        %1573 = vrot.lane.b32.xlu0 %v880, 32
        %v1574 = vpop.permute.xlu0 %1573
        %1575 = vrot.lane.b32.xlu0 %v881, 32
        %v1576 = vpop.permute.xlu0 %1575
        %1577 = vrot.lane.b32.xlu0 %v882, 32
        %v1578 = vpop.permute.xlu0 %1577
        %1579 = vrot.lane.b32.xlu0 %v883, 32
        %v1580 = vpop.permute.xlu0 %1579
        %1581 = vrot.lane.b32.xlu0 %v884, 32
        %v1582 = vpop.permute.xlu0 %1581
        %1583 = vrot.lane.b32.xlu0 %v885, 32
        %v1584 = vpop.permute.xlu0 %1583
        %1585 = vrot.lane.b32.xlu0 %v886, 32
        %v1586 = vpop.permute.xlu0 %1585
        %v1587 = vsel %vm927, %v1556, 0
        %v1589 = vsel %vm927, %v1558, 0
        %v1591 = vsel %vm927, %v1560, 0
        %v1593 = vsel %vm927, %v1562, 0
        %v1595 = vsel %vm927, %v1564, 0
        %v1597 = vsel %vm927, %v1566, 0
        %v1599 = vsel %vm927, %v1568, 0
        %v1601 = vsel %vm927, %v1570, 0
        %v1603 = vsel %vm927, %v1572, 0
        %v1605 = vsel %vm927, %v1574, 0
        %v1607 = vsel %vm927, %v1576, 0
        %v1609 = vsel %vm927, %v1578, 0
        %v1611 = vsel %vm927, %v1580, 0
        %v1613 = vsel %vm927, %v1582, 0
        %v1615 = vsel %vm927, %v1584, 0
        %v1617 = vsel %vm927, %v1586, 0
        %1619 = vmatpush.xpose.msra.mxu0 0.0
        %1620 = vmatpush.xpose.msra.mxu0 0.0
        %1621 = vmatpush.xpose.msra.mxu0 0.0
        %1622 = vmatpush.xpose.msra.mxu0 0.0
        %1623 = vmatpush.xpose.msra.mxu0 0.0
        %1624 = vmatpush.xpose.msra.mxu0 0.0
        %1625 = vmatpush.xpose.msra.mxu0 0.0
        %1626 = vmatpush.xpose.msra.mxu0 0.0
        %1627 = vmatpush.xpose.msra.mxu0 %v1617
        %1628 = vmatpush.xpose.msra.mxu0 %v1615
        %1629 = vmatpush.xpose.msra.mxu0 %v1613
        %1630 = vmatpush.xpose.msra.mxu0 %v1611
        %1631 = vmatpush.xpose.msra.mxu0 %v1609
        %1632 = vmatpush.xpose.msra.mxu0 %v1607
        %1633 = vmatpush.xpose.msra.mxu0 %v1605
        %1634 = vmatpush.xpose.msra.mxu0 %v1603
        %1635 = vmatmul.f32.gmra.mxu0 %v1587
        %v1636 = vpop.f32.mrf.mxu0
        %v1637 = vadd.f32 %v895, %v1636
        %1638 = vmatmul.f32.gmra.mxu0 %v1589
        %v1639 = vpop.f32.mrf.mxu0
        %v1640 = vadd.f32 %v896, %v1639
        %1641 = vmatmul.f32.gmra.mxu0 %v1591
        %v1642 = vpop.f32.mrf.mxu0
        %v1643 = vadd.f32 %v897, %v1642
        %1644 = vmatmul.f32.gmra.mxu0 %v1593
        %v1645 = vpop.f32.mrf.mxu0
        %v1646 = vadd.f32 %v898, %v1645
        %1647 = vmatmul.f32.gmra.mxu0 %v1595
        %v1648 = vpop.f32.mrf.mxu0
        %v1649 = vadd.f32 %v899, %v1648
        %1650 = vmatmul.f32.gmra.mxu0 %v1597
        %v1651 = vpop.f32.mrf.mxu0
        %v1652 = vadd.f32 %v900, %v1651
        %1653 = vmatmul.f32.gmra.mxu0 %v1599
        %v1654 = vpop.f32.mrf.mxu0
        %v1655 = vadd.f32 %v901, %v1654
        %1656 = vmatmul.f32.gmra.mxu0 %v1601
        %v1657 = vpop.f32.mrf.mxu0
        %v1658 = vadd.f32 %v902, %v1657
        %1659 = vdwg.mxu0
        %v1660 = vsel %vm637, %v1637, -inf
        %1661 = vmax.xlane.f32.xlu0 %v1660
        %v1662 = vpop.xlane.xlu0 %1661
        %v1663 = vsel %vm637, %v1640, -inf
        %1664 = vmax.xlane.f32.xlu0 %v1663
        %v1665 = vpop.xlane.xlu0 %1664
        %v1666 = vsel %vm637, %v1643, -inf
        %1667 = vmax.xlane.f32.xlu0 %v1666
        %v1668 = vpop.xlane.xlu0 %1667
        %v1669 = vsel %vm637, %v1646, -inf
        %1670 = vmax.xlane.f32.xlu0 %v1669
        %v1671 = vpop.xlane.xlu0 %1670
        %v1672 = vsel %vm637, %v1649, -inf
        %1673 = vmax.xlane.f32.xlu0 %v1672
        %v1674 = vpop.xlane.xlu0 %1673
        %v1675 = vsel %vm637, %v1652, -inf
        %1676 = vmax.xlane.f32.xlu0 %v1675
        %v1677 = vpop.xlane.xlu0 %1676
        %v1678 = vsel %vm637, %v1655, -inf
        %1679 = vmax.xlane.f32.xlu0 %v1678
        %v1680 = vpop.xlane.xlu0 %1679
        %v1681 = vsel %vm637, %v1658, -inf
        %1682 = vmax.xlane.f32.xlu0 %v1681
        %v1683 = vpop.xlane.xlu0 %1682
        %v1684 = vsub.f32 %v1637, %v1662
        %v1685 = vsub.f32 %v1640, %v1665
        %v1686 = vsub.f32 %v1643, %v1668
        %v1687 = vsub.f32 %v1646, %v1671
        %v1688 = vsub.f32 %v1649, %v1674
        %v1689 = vsub.f32 %v1652, %v1677
        %v1690 = vsub.f32 %v1655, %v1680
        %v1691 = vsub.f32 %v1658, %v1683
        %v1692 = vmul.f32 %v1684, 1.442695
        %v1693 = vpow.pop %v1692
        %v1694 = vmul.f32 %v1685, 1.442695
        %v1695 = vpow.pop %v1694
        %v1696 = vmul.f32 %v1686, 1.442695
        %v1697 = vpow.pop %v1696
        %v1698 = vmul.f32 %v1687, 1.442695
        %v1699 = vpow.pop %v1698
        %v1700 = vmul.f32 %v1688, 1.442695
        %v1701 = vpow.pop %v1700
        %v1702 = vmul.f32 %v1689, 1.442695
        %v1703 = vpow.pop %v1702
        %v1704 = vmul.f32 %v1690, 1.442695
        %v1705 = vpow.pop %v1704
        %v1706 = vmul.f32 %v1691, 1.442695
        %v1707 = vpow.pop %v1706
        %v1708 = vsel %vm637, %v1693, 0.0
        %1709 = vadd.xlane.f32.xlu0 %v1708
        %v1710 = vpop.xlane.xlu0 %1709
        %v1711 = vsel %vm637, %v1695, 0.0
        %1712 = vadd.xlane.f32.xlu0 %v1711
        %v1713 = vpop.xlane.xlu0 %1712
        %v1714 = vsel %vm637, %v1697, 0.0
        %1715 = vadd.xlane.f32.xlu0 %v1714
        %v1716 = vpop.xlane.xlu0 %1715
        %v1717 = vsel %vm637, %v1699, 0.0
        %1718 = vadd.xlane.f32.xlu0 %v1717
        %v1719 = vpop.xlane.xlu0 %1718
        %v1720 = vsel %vm637, %v1701, 0.0
        %1721 = vadd.xlane.f32.xlu0 %v1720
        %v1722 = vpop.xlane.xlu0 %1721
        %v1723 = vsel %vm637, %v1703, 0.0
        %1724 = vadd.xlane.f32.xlu0 %v1723
        %v1725 = vpop.xlane.xlu0 %1724
        %v1726 = vsel %vm637, %v1705, 0.0
        %1727 = vadd.xlane.f32.xlu0 %v1726
        %v1728 = vpop.xlane.xlu0 %1727
        %v1729 = vsel %vm637, %v1707, 0.0
        %1730 = vadd.xlane.f32.xlu0 %v1729
        %v1731 = vpop.xlane.xlu0 %1730
        %v1732 = vrcp.pop %v1710
        %v1733 = vrcp.pop %v1713
        %v1734 = vrcp.pop %v1716
        %v1735 = vrcp.pop %v1719
        %v1736 = vrcp.pop %v1722
        %v1737 = vrcp.pop %v1725
        %v1738 = vrcp.pop %v1728
        %v1739 = vrcp.pop %v1731
        %v1740 = vmul.f32 %v1693, %v1732
        %v1741 = vmul.f32 %v1695, %v1733
        %v1742 = vmul.f32 %v1697, %v1734
        %v1743 = vmul.f32 %v1699, %v1735
        %v1744 = vmul.f32 %v1701, %v1736
        %v1745 = vmul.f32 %v1703, %v1737
        %v1746 = vmul.f32 %v1705, %v1738
        %v1747 = vmul.f32 %v1707, %v1739
        %s1748 = scalar_lea.vmem %s5, 32
        %v1749 = vld [vmem:[%s1748] sm:$0xff]
        %v1750 = vld [vmem:[%s1748 + $0x8] sm:$0xff]
        %1751 = vrot.lane.b32.xlu0 %v887, 96
        %v1752 = vpop.permute.xlu0 %1751
        %1753 = vrot.lane.b32.xlu0 %v888, 96
        %v1754 = vpop.permute.xlu0 %1753
        %1755 = vrot.lane.b32.xlu0 %v889, 96
        %v1756 = vpop.permute.xlu0 %1755
        %1757 = vrot.lane.b32.xlu0 %v890, 96
        %v1758 = vpop.permute.xlu0 %1757
        %1759 = vrot.lane.b32.xlu0 %v891, 96
        %v1760 = vpop.permute.xlu0 %1759
        %1761 = vrot.lane.b32.xlu0 %v892, 96
        %v1762 = vpop.permute.xlu0 %1761
        %1763 = vrot.lane.b32.xlu0 %v893, 96
        %v1764 = vpop.permute.xlu0 %1763
        %1765 = vrot.lane.b32.xlu0 %v894, 96
        %v1766 = vpop.permute.xlu0 %1765
        %v1767 = vsel %vm927, %v1752, 0
        %v1769 = vsel %vm927, %v1754, 0
        %v1771 = vsel %vm927, %v1756, 0
        %v1773 = vsel %vm927, %v1758, 0
        %v1775 = vsel %vm927, %v1760, 0
        %v1777 = vsel %vm927, %v1762, 0
        %v1779 = vsel %vm927, %v1764, 0
        %v1781 = vsel %vm927, %v1766, 0
        %1783 = vmatpush.msra.mxu0 0.0
        %1784 = vmatpush.msra.mxu0 0.0
        %1785 = vmatpush.msra.mxu0 0.0
        %1786 = vmatpush.msra.mxu0 0.0
        %1787 = vmatpush.msra.mxu0 0.0
        %1788 = vmatpush.msra.mxu0 0.0
        %1789 = vmatpush.msra.mxu0 0.0
        %1790 = vmatpush.msra.mxu0 0.0
        %1791 = vmatpush.msra.mxu0 0.0
        %1792 = vmatpush.msra.mxu0 0.0
        %1793 = vmatpush.msra.mxu0 0.0
        %1794 = vmatpush.msra.mxu0 0.0
        %1795 = vmatpush.msra.mxu0 0.0
        %1796 = vmatpush.msra.mxu0 0.0
        %1797 = vmatpush.msra.mxu0 %v1750
        %1798 = vmatpush.msra.mxu0 %v1749
        %1799 = vmatmul.f32.gmra.mxu0 %v1767
        %v1800 = vpop.f32.mrf.mxu0
        %v1801 = vadd.f32 0.0, %v1800
        %1802 = vmatmul.f32.gmra.mxu0 %v1769
        %v1803 = vpop.f32.mrf.mxu0
        %v1804 = vadd.f32 0.0, %v1803
        %1805 = vmatmul.f32.gmra.mxu0 %v1771
        %v1806 = vpop.f32.mrf.mxu0
        %v1807 = vadd.f32 0.0, %v1806
        %1808 = vmatmul.f32.gmra.mxu0 %v1773
        %v1809 = vpop.f32.mrf.mxu0
        %v1810 = vadd.f32 0.0, %v1809
        %1811 = vmatmul.f32.gmra.mxu0 %v1775
        %v1812 = vpop.f32.mrf.mxu0
        %v1813 = vadd.f32 0.0, %v1812
        %1814 = vmatmul.f32.gmra.mxu0 %v1777
        %v1815 = vpop.f32.mrf.mxu0
        %v1816 = vadd.f32 0.0, %v1815
        %1817 = vmatmul.f32.gmra.mxu0 %v1779
        %v1818 = vpop.f32.mrf.mxu0
        %v1819 = vadd.f32 0.0, %v1818
        %1820 = vmatmul.f32.gmra.mxu0 %v1781
        %v1821 = vpop.f32.mrf.mxu0
        %v1822 = vadd.f32 0.0, %v1821
        %1823 = vdwg.mxu0
        %v1825 = vsel %vm637, %v1740, 0
        %v1828 = vsel %vm637, %v1741, 0
        %v1831 = vsel %vm637, %v1742, 0
        %v1834 = vsel %vm637, %v1743, 0
        %v1837 = vsel %vm637, %v1744, 0
        %v1840 = vsel %vm637, %v1745, 0
        %v1843 = vsel %vm637, %v1746, 0
        %v1846 = vsel %vm637, %v1747, 0
        %1848 = vmatpush.msra.mxu0 0.0
        %1849 = vmatpush.msra.mxu0 0.0
        %1850 = vmatpush.msra.mxu0 0.0
        %1851 = vmatpush.msra.mxu0 0.0
        %1852 = vmatpush.msra.mxu0 0.0
        %1853 = vmatpush.msra.mxu0 0.0
        %1854 = vmatpush.msra.mxu0 0.0
        %1855 = vmatpush.msra.mxu0 0.0
        %1856 = vmatpush.msra.mxu0 %v1822
        %1857 = vmatpush.msra.mxu0 %v1819
        %1858 = vmatpush.msra.mxu0 %v1816
        %1859 = vmatpush.msra.mxu0 %v1813
        %1860 = vmatpush.msra.mxu0 %v1810
        %1861 = vmatpush.msra.mxu0 %v1807
        %1862 = vmatpush.msra.mxu0 %v1804
        %1863 = vmatpush.msra.mxu0 %v1801
        %1864 = vmatmul.f32.gmra.mxu0 %v1825
        %v1865 = vpop.f32.mrf.mxu0
        %v1866 = vadd.f32 0.0, %v1865
        %1867 = vmatmul.f32.gmra.mxu0 %v1828
        %v1868 = vpop.f32.mrf.mxu0
        %v1869 = vadd.f32 0.0, %v1868
        %1870 = vmatmul.f32.gmra.mxu0 %v1831
        %v1871 = vpop.f32.mrf.mxu0
        %v1872 = vadd.f32 0.0, %v1871
        %1873 = vmatmul.f32.gmra.mxu0 %v1834
        %v1874 = vpop.f32.mrf.mxu0
        %v1875 = vadd.f32 0.0, %v1874
        %1876 = vmatmul.f32.gmra.mxu0 %v1837
        %v1877 = vpop.f32.mrf.mxu0
        %v1878 = vadd.f32 0.0, %v1877
        %1879 = vmatmul.f32.gmra.mxu0 %v1840
        %v1880 = vpop.f32.mrf.mxu0
        %v1881 = vadd.f32 0.0, %v1880
        %1882 = vmatmul.f32.gmra.mxu0 %v1843
        %v1883 = vpop.f32.mrf.mxu0
        %v1884 = vadd.f32 0.0, %v1883
        %1885 = vmatmul.f32.gmra.mxu0 %v1846
        %v1886 = vpop.f32.mrf.mxu0
        %v1887 = vadd.f32 0.0, %v1886
        %1888 = vdwg.mxu0
        %v1889 = vadd.f32 %v1532, %v1866
        %v1890 = vadd.f32 %v1535, %v1869
        %v1891 = vadd.f32 %v1538, %v1872
        %v1892 = vadd.f32 %v1541, %v1875
        %v1893 = vadd.f32 %v1544, %v1878
        %v1894 = vadd.f32 %v1547, %v1881
        %v1895 = vadd.f32 %v1550, %v1884
        %v1896 = vadd.f32 %v1553, %v1887
        %1897 = vrot.lane.b32.xlu0 %v879, 80
        %v1898 = vpop.permute.xlu0 %1897
        %1899 = vrot.lane.b32.xlu0 %v880, 80
        %v1900 = vpop.permute.xlu0 %1899
        %1901 = vrot.lane.b32.xlu0 %v881, 80
        %v1902 = vpop.permute.xlu0 %1901
        %1903 = vrot.lane.b32.xlu0 %v882, 80
        %v1904 = vpop.permute.xlu0 %1903
        %1905 = vrot.lane.b32.xlu0 %v883, 80
        %v1906 = vpop.permute.xlu0 %1905
        %1907 = vrot.lane.b32.xlu0 %v884, 80
        %v1908 = vpop.permute.xlu0 %1907
        %1909 = vrot.lane.b32.xlu0 %v885, 80
        %v1910 = vpop.permute.xlu0 %1909
        %1911 = vrot.lane.b32.xlu0 %v886, 80
        %v1912 = vpop.permute.xlu0 %1911
        %1913 = vrot.lane.b32.xlu0 %v879, 16
        %v1914 = vpop.permute.xlu0 %1913
        %1915 = vrot.lane.b32.xlu0 %v880, 16
        %v1916 = vpop.permute.xlu0 %1915
        %1917 = vrot.lane.b32.xlu0 %v881, 16
        %v1918 = vpop.permute.xlu0 %1917
        %1919 = vrot.lane.b32.xlu0 %v882, 16
        %v1920 = vpop.permute.xlu0 %1919
        %1921 = vrot.lane.b32.xlu0 %v883, 16
        %v1922 = vpop.permute.xlu0 %1921
        %1923 = vrot.lane.b32.xlu0 %v884, 16
        %v1924 = vpop.permute.xlu0 %1923
        %1925 = vrot.lane.b32.xlu0 %v885, 16
        %v1926 = vpop.permute.xlu0 %1925
        %1927 = vrot.lane.b32.xlu0 %v886, 16
        %v1928 = vpop.permute.xlu0 %1927
        %v1929 = vsel %vm927, %v1898, 0
        %v1931 = vsel %vm927, %v1900, 0
        %v1933 = vsel %vm927, %v1902, 0
        %v1935 = vsel %vm927, %v1904, 0
        %v1937 = vsel %vm927, %v1906, 0
        %v1939 = vsel %vm927, %v1908, 0
        %v1941 = vsel %vm927, %v1910, 0
        %v1943 = vsel %vm927, %v1912, 0
        %v1945 = vsel %vm927, %v1914, 0
        %v1947 = vsel %vm927, %v1916, 0
        %v1949 = vsel %vm927, %v1918, 0
        %v1951 = vsel %vm927, %v1920, 0
        %v1953 = vsel %vm927, %v1922, 0
        %v1955 = vsel %vm927, %v1924, 0
        %v1957 = vsel %vm927, %v1926, 0
        %v1959 = vsel %vm927, %v1928, 0
        %1961 = vmatpush.xpose.msra.mxu0 0.0
        %1962 = vmatpush.xpose.msra.mxu0 0.0
        %1963 = vmatpush.xpose.msra.mxu0 0.0
        %1964 = vmatpush.xpose.msra.mxu0 0.0
        %1965 = vmatpush.xpose.msra.mxu0 0.0
        %1966 = vmatpush.xpose.msra.mxu0 0.0
        %1967 = vmatpush.xpose.msra.mxu0 0.0
        %1968 = vmatpush.xpose.msra.mxu0 0.0
        %1969 = vmatpush.xpose.msra.mxu0 %v1959
        %1970 = vmatpush.xpose.msra.mxu0 %v1957
        %1971 = vmatpush.xpose.msra.mxu0 %v1955
        %1972 = vmatpush.xpose.msra.mxu0 %v1953
        %1973 = vmatpush.xpose.msra.mxu0 %v1951
        %1974 = vmatpush.xpose.msra.mxu0 %v1949
        %1975 = vmatpush.xpose.msra.mxu0 %v1947
        %1976 = vmatpush.xpose.msra.mxu0 %v1945
        %1977 = vmatmul.f32.gmra.mxu0 %v1929
        %v1978 = vpop.f32.mrf.mxu0
        %v1979 = vadd.f32 %v895, %v1978
        %1980 = vmatmul.f32.gmra.mxu0 %v1931
        %v1981 = vpop.f32.mrf.mxu0
        %v1982 = vadd.f32 %v896, %v1981
        %1983 = vmatmul.f32.gmra.mxu0 %v1933
        %v1984 = vpop.f32.mrf.mxu0
        %v1985 = vadd.f32 %v897, %v1984
        %1986 = vmatmul.f32.gmra.mxu0 %v1935
        %v1987 = vpop.f32.mrf.mxu0
        %v1988 = vadd.f32 %v898, %v1987
        %1989 = vmatmul.f32.gmra.mxu0 %v1937
        %v1990 = vpop.f32.mrf.mxu0
        %v1991 = vadd.f32 %v899, %v1990
        %1992 = vmatmul.f32.gmra.mxu0 %v1939
        %v1993 = vpop.f32.mrf.mxu0
        %v1994 = vadd.f32 %v900, %v1993
        %1995 = vmatmul.f32.gmra.mxu0 %v1941
        %v1996 = vpop.f32.mrf.mxu0
        %v1997 = vadd.f32 %v901, %v1996
        %1998 = vmatmul.f32.gmra.mxu0 %v1943
        %v1999 = vpop.f32.mrf.mxu0
        %v2000 = vadd.f32 %v902, %v1999
        %2001 = vdwg.mxu0
        %v2002 = vsel %vm637, %v1979, -inf
        %2003 = vmax.xlane.f32.xlu0 %v2002
        %v2004 = vpop.xlane.xlu0 %2003
        %v2005 = vsel %vm637, %v1982, -inf
        %2006 = vmax.xlane.f32.xlu0 %v2005
        %v2007 = vpop.xlane.xlu0 %2006
        %v2008 = vsel %vm637, %v1985, -inf
        %2009 = vmax.xlane.f32.xlu0 %v2008
        %v2010 = vpop.xlane.xlu0 %2009
        %v2011 = vsel %vm637, %v1988, -inf
        %2012 = vmax.xlane.f32.xlu0 %v2011
        %v2013 = vpop.xlane.xlu0 %2012
        %v2014 = vsel %vm637, %v1991, -inf
        %2015 = vmax.xlane.f32.xlu0 %v2014
        %v2016 = vpop.xlane.xlu0 %2015
        %v2017 = vsel %vm637, %v1994, -inf
        %2018 = vmax.xlane.f32.xlu0 %v2017
        %v2019 = vpop.xlane.xlu0 %2018
        %v2020 = vsel %vm637, %v1997, -inf
        %2021 = vmax.xlane.f32.xlu0 %v2020
        %v2022 = vpop.xlane.xlu0 %2021
        %v2023 = vsel %vm637, %v2000, -inf
        %2024 = vmax.xlane.f32.xlu0 %v2023
        %v2025 = vpop.xlane.xlu0 %2024
        %v2026 = vsub.f32 %v1979, %v2004
        %v2027 = vsub.f32 %v1982, %v2007
        %v2028 = vsub.f32 %v1985, %v2010
        %v2029 = vsub.f32 %v1988, %v2013
        %v2030 = vsub.f32 %v1991, %v2016
        %v2031 = vsub.f32 %v1994, %v2019
        %v2032 = vsub.f32 %v1997, %v2022
        %v2033 = vsub.f32 %v2000, %v2025
        %v2034 = vmul.f32 %v2026, 1.442695
        %v2035 = vpow.pop %v2034
        %v2036 = vmul.f32 %v2027, 1.442695
        %v2037 = vpow.pop %v2036
        %v2038 = vmul.f32 %v2028, 1.442695
        %v2039 = vpow.pop %v2038
        %v2040 = vmul.f32 %v2029, 1.442695
        %v2041 = vpow.pop %v2040
        %v2042 = vmul.f32 %v2030, 1.442695
        %v2043 = vpow.pop %v2042
        %v2044 = vmul.f32 %v2031, 1.442695
        %v2045 = vpow.pop %v2044
        %v2046 = vmul.f32 %v2032, 1.442695
        %v2047 = vpow.pop %v2046
        %v2048 = vmul.f32 %v2033, 1.442695
        %v2049 = vpow.pop %v2048
        %v2050 = vsel %vm637, %v2035, 0.0
        %2051 = vadd.xlane.f32.xlu0 %v2050
        %v2052 = vpop.xlane.xlu0 %2051
        %v2053 = vsel %vm637, %v2037, 0.0
        %2054 = vadd.xlane.f32.xlu0 %v2053
        %v2055 = vpop.xlane.xlu0 %2054
        %v2056 = vsel %vm637, %v2039, 0.0
        %2057 = vadd.xlane.f32.xlu0 %v2056
        %v2058 = vpop.xlane.xlu0 %2057
        %v2059 = vsel %vm637, %v2041, 0.0
        %2060 = vadd.xlane.f32.xlu0 %v2059
        %v2061 = vpop.xlane.xlu0 %2060
        %v2062 = vsel %vm637, %v2043, 0.0
        %2063 = vadd.xlane.f32.xlu0 %v2062
        %v2064 = vpop.xlane.xlu0 %2063
        %v2065 = vsel %vm637, %v2045, 0.0
        %2066 = vadd.xlane.f32.xlu0 %v2065
        %v2067 = vpop.xlane.xlu0 %2066
        %v2068 = vsel %vm637, %v2047, 0.0
        %2069 = vadd.xlane.f32.xlu0 %v2068
        %v2070 = vpop.xlane.xlu0 %2069
        %v2071 = vsel %vm637, %v2049, 0.0
        %2072 = vadd.xlane.f32.xlu0 %v2071
        %v2073 = vpop.xlane.xlu0 %2072
        %v2074 = vrcp.pop %v2052
        %v2075 = vrcp.pop %v2055
        %v2076 = vrcp.pop %v2058
        %v2077 = vrcp.pop %v2061
        %v2078 = vrcp.pop %v2064
        %v2079 = vrcp.pop %v2067
        %v2080 = vrcp.pop %v2070
        %v2081 = vrcp.pop %v2073
        %v2082 = vmul.f32 %v2035, %v2074
        %v2083 = vmul.f32 %v2037, %v2075
        %v2084 = vmul.f32 %v2039, %v2076
        %v2085 = vmul.f32 %v2041, %v2077
        %v2086 = vmul.f32 %v2043, %v2078
        %v2087 = vmul.f32 %v2045, %v2079
        %v2088 = vmul.f32 %v2047, %v2080
        %v2089 = vmul.f32 %v2049, %v2081
        %s2090 = scalar_lea.vmem %s5, 48
        %v2091 = vld [vmem:[%s2090] sm:$0xff]
        %v2092 = vld [vmem:[%s2090 + $0x8] sm:$0xff]
        %2093 = vrot.lane.b32.xlu0 %v887, 80
        %v2094 = vpop.permute.xlu0 %2093
        %2095 = vrot.lane.b32.xlu0 %v888, 80
        %v2096 = vpop.permute.xlu0 %2095
        %2097 = vrot.lane.b32.xlu0 %v889, 80
        %v2098 = vpop.permute.xlu0 %2097
        %2099 = vrot.lane.b32.xlu0 %v890, 80
        %v2100 = vpop.permute.xlu0 %2099
        %2101 = vrot.lane.b32.xlu0 %v891, 80
        %v2102 = vpop.permute.xlu0 %2101
        %2103 = vrot.lane.b32.xlu0 %v892, 80
        %v2104 = vpop.permute.xlu0 %2103
        %2105 = vrot.lane.b32.xlu0 %v893, 80
        %v2106 = vpop.permute.xlu0 %2105
        %2107 = vrot.lane.b32.xlu0 %v894, 80
        %v2108 = vpop.permute.xlu0 %2107
        %v2109 = vsel %vm927, %v2094, 0
        %v2111 = vsel %vm927, %v2096, 0
        %v2113 = vsel %vm927, %v2098, 0
        %v2115 = vsel %vm927, %v2100, 0
        %v2117 = vsel %vm927, %v2102, 0
        %v2119 = vsel %vm927, %v2104, 0
        %v2121 = vsel %vm927, %v2106, 0
        %v2123 = vsel %vm927, %v2108, 0
        %2125 = vmatpush.msra.mxu0 0.0
        %2126 = vmatpush.msra.mxu0 0.0
        %2127 = vmatpush.msra.mxu0 0.0
        %2128 = vmatpush.msra.mxu0 0.0
        %2129 = vmatpush.msra.mxu0 0.0
        %2130 = vmatpush.msra.mxu0 0.0
        %2131 = vmatpush.msra.mxu0 0.0
        %2132 = vmatpush.msra.mxu0 0.0
        %2133 = vmatpush.msra.mxu0 0.0
        %2134 = vmatpush.msra.mxu0 0.0
        %2135 = vmatpush.msra.mxu0 0.0
        %2136 = vmatpush.msra.mxu0 0.0
        %2137 = vmatpush.msra.mxu0 0.0
        %2138 = vmatpush.msra.mxu0 0.0
        %2139 = vmatpush.msra.mxu0 %v2092
        %2140 = vmatpush.msra.mxu0 %v2091
        %2141 = vmatmul.f32.gmra.mxu0 %v2109
        %v2142 = vpop.f32.mrf.mxu0
        %v2143 = vadd.f32 0.0, %v2142
        %2144 = vmatmul.f32.gmra.mxu0 %v2111
        %v2145 = vpop.f32.mrf.mxu0
        %v2146 = vadd.f32 0.0, %v2145
        %2147 = vmatmul.f32.gmra.mxu0 %v2113
        %v2148 = vpop.f32.mrf.mxu0
        %v2149 = vadd.f32 0.0, %v2148
        %2150 = vmatmul.f32.gmra.mxu0 %v2115
        %v2151 = vpop.f32.mrf.mxu0
        %v2152 = vadd.f32 0.0, %v2151
        %2153 = vmatmul.f32.gmra.mxu0 %v2117
        %v2154 = vpop.f32.mrf.mxu0
        %v2155 = vadd.f32 0.0, %v2154
        %2156 = vmatmul.f32.gmra.mxu0 %v2119
        %v2157 = vpop.f32.mrf.mxu0
        %v2158 = vadd.f32 0.0, %v2157
        %2159 = vmatmul.f32.gmra.mxu0 %v2121
        %v2160 = vpop.f32.mrf.mxu0
        %v2161 = vadd.f32 0.0, %v2160
        %2162 = vmatmul.f32.gmra.mxu0 %v2123
        %v2163 = vpop.f32.mrf.mxu0
        %v2164 = vadd.f32 0.0, %v2163
        %2165 = vdwg.mxu0
        %v2167 = vsel %vm637, %v2082, 0
        %v2170 = vsel %vm637, %v2083, 0
        %v2173 = vsel %vm637, %v2084, 0
        %v2176 = vsel %vm637, %v2085, 0
        %v2179 = vsel %vm637, %v2086, 0
        %v2182 = vsel %vm637, %v2087, 0
        %v2185 = vsel %vm637, %v2088, 0
        %v2188 = vsel %vm637, %v2089, 0
        %2190 = vmatpush.msra.mxu0 0.0
        %2191 = vmatpush.msra.mxu0 0.0
        %2192 = vmatpush.msra.mxu0 0.0
        %2193 = vmatpush.msra.mxu0 0.0
        %2194 = vmatpush.msra.mxu0 0.0
        %2195 = vmatpush.msra.mxu0 0.0
        %2196 = vmatpush.msra.mxu0 0.0
        %2197 = vmatpush.msra.mxu0 0.0
        %2198 = vmatpush.msra.mxu0 %v2164
        %2199 = vmatpush.msra.mxu0 %v2161
        %2200 = vmatpush.msra.mxu0 %v2158
        %2201 = vmatpush.msra.mxu0 %v2155
        %2202 = vmatpush.msra.mxu0 %v2152
        %2203 = vmatpush.msra.mxu0 %v2149
        %2204 = vmatpush.msra.mxu0 %v2146
        %2205 = vmatpush.msra.mxu0 %v2143
        %2206 = vmatmul.f32.gmra.mxu0 %v2167
        %v2207 = vpop.f32.mrf.mxu0
        %v2208 = vadd.f32 0.0, %v2207
        %2209 = vmatmul.f32.gmra.mxu0 %v2170
        %v2210 = vpop.f32.mrf.mxu0
        %v2211 = vadd.f32 0.0, %v2210
        %2212 = vmatmul.f32.gmra.mxu0 %v2173
        %v2213 = vpop.f32.mrf.mxu0
        %v2214 = vadd.f32 0.0, %v2213
        %2215 = vmatmul.f32.gmra.mxu0 %v2176
        %v2216 = vpop.f32.mrf.mxu0
        %v2217 = vadd.f32 0.0, %v2216
        %2218 = vmatmul.f32.gmra.mxu0 %v2179
        %v2219 = vpop.f32.mrf.mxu0
        %v2220 = vadd.f32 0.0, %v2219
        %2221 = vmatmul.f32.gmra.mxu0 %v2182
        %v2222 = vpop.f32.mrf.mxu0
        %v2223 = vadd.f32 0.0, %v2222
        %2224 = vmatmul.f32.gmra.mxu0 %v2185
        %v2225 = vpop.f32.mrf.mxu0
        %v2226 = vadd.f32 0.0, %v2225
        %2227 = vmatmul.f32.gmra.mxu0 %v2188
        %v2228 = vpop.f32.mrf.mxu0
        %v2229 = vadd.f32 0.0, %v2228
        %2230 = vdwg.mxu0
        %v2231 = vadd.f32 %v1889, %v2208
        %v2232 = vadd.f32 %v1890, %v2211
        %v2233 = vadd.f32 %v1891, %v2214
        %v2234 = vadd.f32 %v1892, %v2217
        %v2235 = vadd.f32 %v1893, %v2220
        %v2236 = vadd.f32 %v1894, %v2223
        %v2237 = vadd.f32 %v1895, %v2226
        %v2238 = vadd.f32 %v1896, %v2229
        %v2239 = vld [vmem:[%s6] sm:$0x1]
        %v2241 = vperm.slane %v2239, 0
        %v2243 = vadd.f32 %v2231, %v2241
        %v2244 = vadd.f32 %v2232, %v2241
        %v2245 = vadd.f32 %v2233, %v2241
        %v2246 = vadd.f32 %v2234, %v2241
        %v2247 = vadd.f32 %v2235, %v2241
        %v2248 = vadd.f32 %v2236, %v2241
        %v2249 = vadd.f32 %v2237, %v2241
        %v2250 = vadd.f32 %v2238, %v2241
        %v2251 = vadd.f32 %v727, %v2243
        %v2252 = vadd.f32 %v728, %v2244
        %v2253 = vadd.f32 %v729, %v2245
        %v2254 = vadd.f32 %v730, %v2246
        %v2255 = vadd.f32 %v731, %v2247
        %v2256 = vadd.f32 %v732, %v2248
        %v2257 = vadd.f32 %v733, %v2249
        %v2258 = vadd.f32 %v734, %v2250
        %v2259 = vld [vmem:[%s11] sm:$0x1]
        %v2260 = vld [vmem:[%s12] sm:$0x1]
        %v2261 = vsel %vm637, %v2251, 0.0
        %2262 = vadd.xlane.f32.xlu0 %v2261
        %v2263 = vpop.xlane.xlu0 %2262
        %v2264 = vsel %vm637, %v2252, 0.0
        %2265 = vadd.xlane.f32.xlu0 %v2264
        %v2266 = vpop.xlane.xlu0 %2265
        %v2267 = vsel %vm637, %v2253, 0.0
        %2268 = vadd.xlane.f32.xlu0 %v2267
        %v2269 = vpop.xlane.xlu0 %2268
        %v2270 = vsel %vm637, %v2254, 0.0
        %2271 = vadd.xlane.f32.xlu0 %v2270
        %v2272 = vpop.xlane.xlu0 %2271
        %v2273 = vsel %vm637, %v2255, 0.0
        %2274 = vadd.xlane.f32.xlu0 %v2273
        %v2275 = vpop.xlane.xlu0 %2274
        %v2276 = vsel %vm637, %v2256, 0.0
        %2277 = vadd.xlane.f32.xlu0 %v2276
        %v2278 = vpop.xlane.xlu0 %2277
        %v2279 = vsel %vm637, %v2257, 0.0
        %2280 = vadd.xlane.f32.xlu0 %v2279
        %v2281 = vpop.xlane.xlu0 %2280
        %v2282 = vsel %vm637, %v2258, 0.0
        %2283 = vadd.xlane.f32.xlu0 %v2282
        %v2284 = vpop.xlane.xlu0 %2283
        %v2285 = vrcp.pop 64.0
        %v2286 = vmul.f32 64.0, %v2285
        %v2287 = vsub.f32 1.0, %v2286
        %v2288 = vmul.f32 %v2285, %v2287
        %v2289 = vadd.f32 %v2285, %v2288
        %vm2290 = vweird.f32 %v2285
        %v2291 = vsel %vm2290, %v2285, %v2289
        %v2292 = vmul.f32 %v2263, %v2291
        %v2293 = vmul.f32 %v2266, %v2291
        %v2294 = vmul.f32 %v2269, %v2291
        %v2295 = vmul.f32 %v2272, %v2291
        %v2296 = vmul.f32 %v2275, %v2291
        %v2297 = vmul.f32 %v2278, %v2291
        %v2298 = vmul.f32 %v2281, %v2291
        %v2299 = vmul.f32 %v2284, %v2291
        %v2300 = vsub.f32 %v2251, %v2292
        %v2301 = vsub.f32 %v2252, %v2293
        %v2302 = vsub.f32 %v2253, %v2294
        %v2303 = vsub.f32 %v2254, %v2295
        %v2304 = vsub.f32 %v2255, %v2296
        %v2305 = vsub.f32 %v2256, %v2297
        %v2306 = vsub.f32 %v2257, %v2298
        %v2307 = vsub.f32 %v2258, %v2299
        %v2308 = vmul.f32 %v2300, %v2300
        %v2309 = vmul.f32 %v2301, %v2301
        %v2310 = vmul.f32 %v2302, %v2302
        %v2311 = vmul.f32 %v2303, %v2303
        %v2312 = vmul.f32 %v2304, %v2304
        %v2313 = vmul.f32 %v2305, %v2305
        %v2314 = vmul.f32 %v2306, %v2306
        %v2315 = vmul.f32 %v2307, %v2307
        %v2316 = vsel %vm637, %v2308, 0.0
        %2317 = vadd.xlane.f32.xlu0 %v2316
        %v2318 = vpop.xlane.xlu0 %2317
        %v2319 = vsel %vm637, %v2309, 0.0
        %2320 = vadd.xlane.f32.xlu0 %v2319
        %v2321 = vpop.xlane.xlu0 %2320
        %v2322 = vsel %vm637, %v2310, 0.0
        %2323 = vadd.xlane.f32.xlu0 %v2322
        %v2324 = vpop.xlane.xlu0 %2323
        %v2325 = vsel %vm637, %v2311, 0.0
        %2326 = vadd.xlane.f32.xlu0 %v2325
        %v2327 = vpop.xlane.xlu0 %2326
        %v2328 = vsel %vm637, %v2312, 0.0
        %2329 = vadd.xlane.f32.xlu0 %v2328
        %v2330 = vpop.xlane.xlu0 %2329
        %v2331 = vsel %vm637, %v2313, 0.0
        %2332 = vadd.xlane.f32.xlu0 %v2331
        %v2333 = vpop.xlane.xlu0 %2332
        %v2334 = vsel %vm637, %v2314, 0.0
        %2335 = vadd.xlane.f32.xlu0 %v2334
        %v2336 = vpop.xlane.xlu0 %2335
        %v2337 = vsel %vm637, %v2315, 0.0
        %2338 = vadd.xlane.f32.xlu0 %v2337
        %v2339 = vpop.xlane.xlu0 %2338
        %v2340 = vmul.f32 %v2318, %v2291
        %v2341 = vmul.f32 %v2321, %v2291
        %v2342 = vmul.f32 %v2324, %v2291
        %v2343 = vmul.f32 %v2327, %v2291
        %v2344 = vmul.f32 %v2330, %v2291
        %v2345 = vmul.f32 %v2333, %v2291
        %v2346 = vmul.f32 %v2336, %v2291
        %v2347 = vmul.f32 %v2339, %v2291
        %v2348 = vadd.f32 %v2340, 1e-05
        %v2349 = vadd.f32 %v2341, 1e-05
        %v2350 = vadd.f32 %v2342, 1e-05
        %v2351 = vadd.f32 %v2343, 1e-05
        %v2352 = vadd.f32 %v2344, 1e-05
        %v2353 = vadd.f32 %v2345, 1e-05
        %v2354 = vadd.f32 %v2346, 1e-05
        %v2355 = vadd.f32 %v2347, 1e-05
        %v2356 = vrsqrt.pop %v2348
        %v2357 = vmul.f32 %v2356, %v2348
        %v2358 = vmul.f32 %v2357, %v2356
        %v2359 = vmul.f32 0.5, %v2358
        %v2360 = vsub.f32 1.5, %v2359
        %v2361 = vmul.f32 %v2356, %v2360
        %vm2362 = vweird.f32 %v2348
        %vm2363 = vweird.f32 %v2356
        %vm2364 = vmor %vm2362, %vm2363
        %v2365 = vsel %vm2364, %v2356, %v2361
        %v2366 = vrsqrt.pop %v2349
        %v2367 = vmul.f32 %v2366, %v2349
        %v2368 = vmul.f32 %v2367, %v2366
        %v2369 = vmul.f32 0.5, %v2368
        %v2370 = vsub.f32 1.5, %v2369
        %v2371 = vmul.f32 %v2366, %v2370
        %vm2372 = vweird.f32 %v2349
        %vm2373 = vweird.f32 %v2366
        %vm2374 = vmor %vm2372, %vm2373
        %v2375 = vsel %vm2374, %v2366, %v2371
        %v2376 = vrsqrt.pop %v2350
        %v2377 = vmul.f32 %v2376, %v2350
        %v2378 = vmul.f32 %v2377, %v2376
        %v2379 = vmul.f32 0.5, %v2378
        %v2380 = vsub.f32 1.5, %v2379
        %v2381 = vmul.f32 %v2376, %v2380
        %vm2382 = vweird.f32 %v2350
        %vm2383 = vweird.f32 %v2376
        %vm2384 = vmor %vm2382, %vm2383
        %v2385 = vsel %vm2384, %v2376, %v2381
        %v2386 = vrsqrt.pop %v2351
        %v2387 = vmul.f32 %v2386, %v2351
        %v2388 = vmul.f32 %v2387, %v2386
        %v2389 = vmul.f32 0.5, %v2388
        %v2390 = vsub.f32 1.5, %v2389
        %v2391 = vmul.f32 %v2386, %v2390
        %vm2392 = vweird.f32 %v2351
        %vm2393 = vweird.f32 %v2386
        %vm2394 = vmor %vm2392, %vm2393
        %v2395 = vsel %vm2394, %v2386, %v2391
        %v2396 = vrsqrt.pop %v2352
        %v2397 = vmul.f32 %v2396, %v2352
        %v2398 = vmul.f32 %v2397, %v2396
        %v2399 = vmul.f32 0.5, %v2398
        %v2400 = vsub.f32 1.5, %v2399
        %v2401 = vmul.f32 %v2396, %v2400
        %vm2402 = vweird.f32 %v2352
        %vm2403 = vweird.f32 %v2396
        %vm2404 = vmor %vm2402, %vm2403
        %v2405 = vsel %vm2404, %v2396, %v2401
        %v2406 = vrsqrt.pop %v2353
        %v2407 = vmul.f32 %v2406, %v2353
        %v2408 = vmul.f32 %v2407, %v2406
        %v2409 = vmul.f32 0.5, %v2408
        %v2410 = vsub.f32 1.5, %v2409
        %v2411 = vmul.f32 %v2406, %v2410
        %vm2412 = vweird.f32 %v2353
        %vm2413 = vweird.f32 %v2406
        %vm2414 = vmor %vm2412, %vm2413
        %v2415 = vsel %vm2414, %v2406, %v2411
        %v2416 = vrsqrt.pop %v2354
        %v2417 = vmul.f32 %v2416, %v2354
        %v2418 = vmul.f32 %v2417, %v2416
        %v2419 = vmul.f32 0.5, %v2418
        %v2420 = vsub.f32 1.5, %v2419
        %v2421 = vmul.f32 %v2416, %v2420
        %vm2422 = vweird.f32 %v2354
        %vm2423 = vweird.f32 %v2416
        %vm2424 = vmor %vm2422, %vm2423
        %v2425 = vsel %vm2424, %v2416, %v2421
        %v2426 = vrsqrt.pop %v2355
        %v2427 = vmul.f32 %v2426, %v2355
        %v2428 = vmul.f32 %v2427, %v2426
        %v2429 = vmul.f32 0.5, %v2428
        %v2430 = vsub.f32 1.5, %v2429
        %v2431 = vmul.f32 %v2426, %v2430
        %vm2432 = vweird.f32 %v2355
        %vm2433 = vweird.f32 %v2426
        %vm2434 = vmor %vm2432, %vm2433
        %v2435 = vsel %vm2434, %v2426, %v2431
        %v2436 = vmul.f32 %v2300, %v2365
        %v2437 = vmul.f32 %v2301, %v2375
        %v2438 = vmul.f32 %v2302, %v2385
        %v2439 = vmul.f32 %v2303, %v2395
        %v2440 = vmul.f32 %v2304, %v2405
        %v2441 = vmul.f32 %v2305, %v2415
        %v2442 = vmul.f32 %v2306, %v2425
        %v2443 = vmul.f32 %v2307, %v2435
        %v2445 = vperm.slane %v2259, 0
        %v2447 = vmul.f32 %v2436, %v2445
        %v2448 = vmul.f32 %v2437, %v2445
        %v2449 = vmul.f32 %v2438, %v2445
        %v2450 = vmul.f32 %v2439, %v2445
        %v2451 = vmul.f32 %v2440, %v2445
        %v2452 = vmul.f32 %v2441, %v2445
        %v2453 = vmul.f32 %v2442, %v2445
        %v2454 = vmul.f32 %v2443, %v2445
        %v2456 = vperm.slane %v2260, 0
        %v2458 = vadd.f32 %v2447, %v2456
        %v2459 = vadd.f32 %v2448, %v2456
        %v2460 = vadd.f32 %v2449, %v2456
        %v2461 = vadd.f32 %v2450, %v2456
        %v2462 = vadd.f32 %v2451, %v2456
        %v2463 = vadd.f32 %v2452, %v2456
        %v2464 = vadd.f32 %v2453, %v2456
        %v2465 = vadd.f32 %v2454, %v2456
        %v2466 = vld [vmem:[%s7] sm:$0xff]
        %v2467 = vld [vmem:[%s7 + $0x8] sm:$0xff]
        %v2468 = vld [vmem:[%s7 + $0x10] sm:$0xff]
        %v2469 = vld [vmem:[%s7 + $0x18] sm:$0xff]
        %v2470 = vld [vmem:[%s7 + $0x20] sm:$0xff]
        %v2471 = vld [vmem:[%s7 + $0x28] sm:$0xff]
        %v2472 = vld [vmem:[%s7 + $0x30] sm:$0xff]
        %v2473 = vld [vmem:[%s7 + $0x38] sm:$0xff]
        %v2474 = vld [vmem:[%s8] sm:$0x1]
        %v2476 = vperm.slane %v2474, 0
        %v2479 = vsel %vm637, %v2458, 0
        %v2482 = vsel %vm637, %v2459, 0
        %v2485 = vsel %vm637, %v2460, 0
        %v2488 = vsel %vm637, %v2461, 0
        %v2491 = vsel %vm637, %v2462, 0
        %v2494 = vsel %vm637, %v2463, 0
        %v2497 = vsel %vm637, %v2464, 0
        %v2500 = vsel %vm637, %v2465, 0
        %2502 = vmatpush.msra.mxu0 0.0
        %2503 = vmatpush.msra.mxu0 0.0
        %2504 = vmatpush.msra.mxu0 0.0
        %2505 = vmatpush.msra.mxu0 0.0
        %2506 = vmatpush.msra.mxu0 0.0
        %2507 = vmatpush.msra.mxu0 0.0
        %2508 = vmatpush.msra.mxu0 0.0
        %2509 = vmatpush.msra.mxu0 0.0
        %2510 = vmatpush.msra.mxu0 %v2473
        %2511 = vmatpush.msra.mxu0 %v2472
        %2512 = vmatpush.msra.mxu0 %v2471
        %2513 = vmatpush.msra.mxu0 %v2470
        %2514 = vmatpush.msra.mxu0 %v2469
        %2515 = vmatpush.msra.mxu0 %v2468
        %2516 = vmatpush.msra.mxu0 %v2467
        %2517 = vmatpush.msra.mxu0 %v2466
        %2518 = vmatmul.f32.gmra.mxu0 %v2479
        %v2519 = vpop.f32.mrf.mxu0
        %v2520 = vadd.f32 %v2476, %v2519
        %2521 = vmatmul.f32.gmra.mxu0 %v2482
        %v2522 = vpop.f32.mrf.mxu0
        %v2523 = vadd.f32 %v2476, %v2522
        %2524 = vmatmul.f32.gmra.mxu0 %v2485
        %v2525 = vpop.f32.mrf.mxu0
        %v2526 = vadd.f32 %v2476, %v2525
        %2527 = vmatmul.f32.gmra.mxu0 %v2488
        %v2528 = vpop.f32.mrf.mxu0
        %v2529 = vadd.f32 %v2476, %v2528
        %2530 = vmatmul.f32.gmra.mxu0 %v2491
        %v2531 = vpop.f32.mrf.mxu0
        %v2532 = vadd.f32 %v2476, %v2531
        %2533 = vmatmul.f32.gmra.mxu0 %v2494
        %v2534 = vpop.f32.mrf.mxu0
        %v2535 = vadd.f32 %v2476, %v2534
        %2536 = vmatmul.f32.gmra.mxu0 %v2497
        %v2537 = vpop.f32.mrf.mxu0
        %v2538 = vadd.f32 %v2476, %v2537
        %2539 = vmatmul.f32.gmra.mxu0 %v2500
        %v2540 = vpop.f32.mrf.mxu0
        %v2541 = vadd.f32 %v2476, %v2540
        %2542 = vdwg.mxu0
        %v2543 = vmax.f32 %v2520, 0.0
        %v2544 = vmax.f32 %v2523, 0.0
        %v2545 = vmax.f32 %v2526, 0.0
        %v2546 = vmax.f32 %v2529, 0.0
        %v2547 = vmax.f32 %v2532, 0.0
        %v2548 = vmax.f32 %v2535, 0.0
        %v2549 = vmax.f32 %v2538, 0.0
        %v2550 = vmax.f32 %v2541, 0.0
        %v2551 = vld [vmem:[%s9] sm:$0xff]
        %v2552 = vld [vmem:[%s9 + $0x8] sm:$0xff]
        %v2553 = vld [vmem:[%s9 + $0x10] sm:$0xff]
        %v2554 = vld [vmem:[%s9 + $0x18] sm:$0xff]
        %v2555 = vld [vmem:[%s9 + $0x20] sm:$0xff]
        %v2556 = vld [vmem:[%s9 + $0x28] sm:$0xff]
        %v2557 = vld [vmem:[%s9 + $0x30] sm:$0xff]
        %v2558 = vld [vmem:[%s9 + $0x38] sm:$0xff]
        %v2559 = vld [vmem:[%s9 + $0x40] sm:$0xff]
        %v2560 = vld [vmem:[%s9 + $0x48] sm:$0xff]
        %v2561 = vld [vmem:[%s9 + $0x50] sm:$0xff]
        %v2562 = vld [vmem:[%s9 + $0x58] sm:$0xff]
        %v2563 = vld [vmem:[%s9 + $0x60] sm:$0xff]
        %v2564 = vld [vmem:[%s9 + $0x68] sm:$0xff]
        %v2565 = vld [vmem:[%s9 + $0x70] sm:$0xff]
        %v2566 = vld [vmem:[%s9 + $0x78] sm:$0xff]
        %v2567 = vld [vmem:[%s10] sm:$0x1]
        %v2569 = vperm.slane %v2567, 0
        %2571 = vmatpush.msra.mxu0 %v2566
        %2572 = vmatpush.msra.mxu0 %v2565
        %2573 = vmatpush.msra.mxu0 %v2564
        %2574 = vmatpush.msra.mxu0 %v2563
        %2575 = vmatpush.msra.mxu0 %v2562
        %2576 = vmatpush.msra.mxu0 %v2561
        %2577 = vmatpush.msra.mxu0 %v2560
        %2578 = vmatpush.msra.mxu0 %v2559
        %2579 = vmatpush.msra.mxu0 %v2558
        %2580 = vmatpush.msra.mxu0 %v2557
        %2581 = vmatpush.msra.mxu0 %v2556
        %2582 = vmatpush.msra.mxu0 %v2555
        %2583 = vmatpush.msra.mxu0 %v2554
        %2584 = vmatpush.msra.mxu0 %v2553
        %2585 = vmatpush.msra.mxu0 %v2552
        %2586 = vmatpush.msra.mxu0 %v2551
        %2587 = vmatmul.f32.gmra.mxu0 %v2543
        %v2588 = vpop.f32.mrf.mxu0
        %v2589 = vadd.f32 %v2569, %v2588
        %2590 = vmatmul.f32.gmra.mxu0 %v2544
        %v2591 = vpop.f32.mrf.mxu0
        %v2592 = vadd.f32 %v2569, %v2591
        %2593 = vmatmul.f32.gmra.mxu0 %v2545
        %v2594 = vpop.f32.mrf.mxu0
        %v2595 = vadd.f32 %v2569, %v2594
        %2596 = vmatmul.f32.gmra.mxu0 %v2546
        %v2597 = vpop.f32.mrf.mxu0
        %v2598 = vadd.f32 %v2569, %v2597
        %2599 = vmatmul.f32.gmra.mxu0 %v2547
        %v2600 = vpop.f32.mrf.mxu0
        %v2601 = vadd.f32 %v2569, %v2600
        %2602 = vmatmul.f32.gmra.mxu0 %v2548
        %v2603 = vpop.f32.mrf.mxu0
        %v2604 = vadd.f32 %v2569, %v2603
        %2605 = vmatmul.f32.gmra.mxu0 %v2549
        %v2606 = vpop.f32.mrf.mxu0
        %v2607 = vadd.f32 %v2569, %v2606
        %2608 = vmatmul.f32.gmra.mxu0 %v2550
        %v2609 = vpop.f32.mrf.mxu0
        %v2610 = vadd.f32 %v2569, %v2609
        %2611 = vdwg.mxu0
        %v2612 = vadd.f32 %v2458, %v2589
        %v2613 = vadd.f32 %v2459, %v2592
        %v2614 = vadd.f32 %v2460, %v2595
        %v2615 = vadd.f32 %v2461, %v2598
        %v2616 = vadd.f32 %v2462, %v2601
        %v2617 = vadd.f32 %v2463, %v2604
        %v2618 = vadd.f32 %v2464, %v2607
        %v2619 = vadd.f32 %v2465, %v2610
        %v2620 = vld [vmem:[%s13] sm:$0x1]
        %v2621 = vld [vmem:[%s14] sm:$0x1]
        %v2622 = vsel %vm637, %v2612, 0.0
        %2623 = vadd.xlane.f32.xlu0 %v2622
        %v2624 = vpop.xlane.xlu0 %2623
        %v2625 = vsel %vm637, %v2613, 0.0
        %2626 = vadd.xlane.f32.xlu0 %v2625
        %v2627 = vpop.xlane.xlu0 %2626
        %v2628 = vsel %vm637, %v2614, 0.0
        %2629 = vadd.xlane.f32.xlu0 %v2628
        %v2630 = vpop.xlane.xlu0 %2629
        %v2631 = vsel %vm637, %v2615, 0.0
        %2632 = vadd.xlane.f32.xlu0 %v2631
        %v2633 = vpop.xlane.xlu0 %2632
        %v2634 = vsel %vm637, %v2616, 0.0
        %2635 = vadd.xlane.f32.xlu0 %v2634
        %v2636 = vpop.xlane.xlu0 %2635
        %v2637 = vsel %vm637, %v2617, 0.0
        %2638 = vadd.xlane.f32.xlu0 %v2637
        %v2639 = vpop.xlane.xlu0 %2638
        %v2640 = vsel %vm637, %v2618, 0.0
        %2641 = vadd.xlane.f32.xlu0 %v2640
        %v2642 = vpop.xlane.xlu0 %2641
        %v2643 = vsel %vm637, %v2619, 0.0
        %2644 = vadd.xlane.f32.xlu0 %v2643
        %v2645 = vpop.xlane.xlu0 %2644
        %v2646 = vmul.f32 %v2624, %v2291
        %v2647 = vmul.f32 %v2627, %v2291
        %v2648 = vmul.f32 %v2630, %v2291
        %v2649 = vmul.f32 %v2633, %v2291
        %v2650 = vmul.f32 %v2636, %v2291
        %v2651 = vmul.f32 %v2639, %v2291
        %v2652 = vmul.f32 %v2642, %v2291
        %v2653 = vmul.f32 %v2645, %v2291
        %v2654 = vsub.f32 %v2612, %v2646
        %v2655 = vsub.f32 %v2613, %v2647
        %v2656 = vsub.f32 %v2614, %v2648
        %v2657 = vsub.f32 %v2615, %v2649
        %v2658 = vsub.f32 %v2616, %v2650
        %v2659 = vsub.f32 %v2617, %v2651
        %v2660 = vsub.f32 %v2618, %v2652
        %v2661 = vsub.f32 %v2619, %v2653
        %v2662 = vmul.f32 %v2654, %v2654
        %v2663 = vmul.f32 %v2655, %v2655
        %v2664 = vmul.f32 %v2656, %v2656
        %v2665 = vmul.f32 %v2657, %v2657
        %v2666 = vmul.f32 %v2658, %v2658
        %v2667 = vmul.f32 %v2659, %v2659
        %v2668 = vmul.f32 %v2660, %v2660
        %v2669 = vmul.f32 %v2661, %v2661
        %v2670 = vsel %vm637, %v2662, 0.0
        %2671 = vadd.xlane.f32.xlu0 %v2670
        %v2672 = vpop.xlane.xlu0 %2671
        %v2673 = vsel %vm637, %v2663, 0.0
        %2674 = vadd.xlane.f32.xlu0 %v2673
        %v2675 = vpop.xlane.xlu0 %2674
        %v2676 = vsel %vm637, %v2664, 0.0
        %2677 = vadd.xlane.f32.xlu0 %v2676
        %v2678 = vpop.xlane.xlu0 %2677
        %v2679 = vsel %vm637, %v2665, 0.0
        %2680 = vadd.xlane.f32.xlu0 %v2679
        %v2681 = vpop.xlane.xlu0 %2680
        %v2682 = vsel %vm637, %v2666, 0.0
        %2683 = vadd.xlane.f32.xlu0 %v2682
        %v2684 = vpop.xlane.xlu0 %2683
        %v2685 = vsel %vm637, %v2667, 0.0
        %2686 = vadd.xlane.f32.xlu0 %v2685
        %v2687 = vpop.xlane.xlu0 %2686
        %v2688 = vsel %vm637, %v2668, 0.0
        %2689 = vadd.xlane.f32.xlu0 %v2688
        %v2690 = vpop.xlane.xlu0 %2689
        %v2691 = vsel %vm637, %v2669, 0.0
        %2692 = vadd.xlane.f32.xlu0 %v2691
        %v2693 = vpop.xlane.xlu0 %2692
        %v2694 = vmul.f32 %v2672, %v2291
        %v2695 = vmul.f32 %v2675, %v2291
        %v2696 = vmul.f32 %v2678, %v2291
        %v2697 = vmul.f32 %v2681, %v2291
        %v2698 = vmul.f32 %v2684, %v2291
        %v2699 = vmul.f32 %v2687, %v2291
        %v2700 = vmul.f32 %v2690, %v2291
        %v2701 = vmul.f32 %v2693, %v2291
        %v2702 = vadd.f32 %v2694, 1e-05
        %v2703 = vadd.f32 %v2695, 1e-05
        %v2704 = vadd.f32 %v2696, 1e-05
        %v2705 = vadd.f32 %v2697, 1e-05
        %v2706 = vadd.f32 %v2698, 1e-05
        %v2707 = vadd.f32 %v2699, 1e-05
        %v2708 = vadd.f32 %v2700, 1e-05
        %v2709 = vadd.f32 %v2701, 1e-05
        %v2710 = vrsqrt.pop %v2702
        %v2711 = vmul.f32 %v2710, %v2702
        %v2712 = vmul.f32 %v2711, %v2710
        %v2713 = vmul.f32 0.5, %v2712
        %v2714 = vsub.f32 1.5, %v2713
        %v2715 = vmul.f32 %v2710, %v2714
        %vm2716 = vweird.f32 %v2702
        %vm2717 = vweird.f32 %v2710
        %vm2718 = vmor %vm2716, %vm2717
        %v2719 = vsel %vm2718, %v2710, %v2715
        %v2720 = vrsqrt.pop %v2703
        %v2721 = vmul.f32 %v2720, %v2703
        %v2722 = vmul.f32 %v2721, %v2720
        %v2723 = vmul.f32 0.5, %v2722
        %v2724 = vsub.f32 1.5, %v2723
        %v2725 = vmul.f32 %v2720, %v2724
        %vm2726 = vweird.f32 %v2703
        %vm2727 = vweird.f32 %v2720
        %vm2728 = vmor %vm2726, %vm2727
        %v2729 = vsel %vm2728, %v2720, %v2725
        %v2730 = vrsqrt.pop %v2704
        %v2731 = vmul.f32 %v2730, %v2704
        %v2732 = vmul.f32 %v2731, %v2730
        %v2733 = vmul.f32 0.5, %v2732
        %v2734 = vsub.f32 1.5, %v2733
        %v2735 = vmul.f32 %v2730, %v2734
        %vm2736 = vweird.f32 %v2704
        %vm2737 = vweird.f32 %v2730
        %vm2738 = vmor %vm2736, %vm2737
        %v2739 = vsel %vm2738, %v2730, %v2735
        %v2740 = vrsqrt.pop %v2705
        %v2741 = vmul.f32 %v2740, %v2705
        %v2742 = vmul.f32 %v2741, %v2740
        %v2743 = vmul.f32 0.5, %v2742
        %v2744 = vsub.f32 1.5, %v2743
        %v2745 = vmul.f32 %v2740, %v2744
        %vm2746 = vweird.f32 %v2705
        %vm2747 = vweird.f32 %v2740
        %vm2748 = vmor %vm2746, %vm2747
        %v2749 = vsel %vm2748, %v2740, %v2745
        %v2750 = vrsqrt.pop %v2706
        %v2751 = vmul.f32 %v2750, %v2706
        %v2752 = vmul.f32 %v2751, %v2750
        %v2753 = vmul.f32 0.5, %v2752
        %v2754 = vsub.f32 1.5, %v2753
        %v2755 = vmul.f32 %v2750, %v2754
        %vm2756 = vweird.f32 %v2706
        %vm2757 = vweird.f32 %v2750
        %vm2758 = vmor %vm2756, %vm2757
        %v2759 = vsel %vm2758, %v2750, %v2755
        %v2760 = vrsqrt.pop %v2707
        %v2761 = vmul.f32 %v2760, %v2707
        %v2762 = vmul.f32 %v2761, %v2760
        %v2763 = vmul.f32 0.5, %v2762
        %v2764 = vsub.f32 1.5, %v2763
        %v2765 = vmul.f32 %v2760, %v2764
        %vm2766 = vweird.f32 %v2707
        %vm2767 = vweird.f32 %v2760
        %vm2768 = vmor %vm2766, %vm2767
        %v2769 = vsel %vm2768, %v2760, %v2765
        %v2770 = vrsqrt.pop %v2708
        %v2771 = vmul.f32 %v2770, %v2708
        %v2772 = vmul.f32 %v2771, %v2770
        %v2773 = vmul.f32 0.5, %v2772
        %v2774 = vsub.f32 1.5, %v2773
        %v2775 = vmul.f32 %v2770, %v2774
        %vm2776 = vweird.f32 %v2708
        %vm2777 = vweird.f32 %v2770
        %vm2778 = vmor %vm2776, %vm2777
        %v2779 = vsel %vm2778, %v2770, %v2775
        %v2780 = vrsqrt.pop %v2709
        %v2781 = vmul.f32 %v2780, %v2709
        %v2782 = vmul.f32 %v2781, %v2780
        %v2783 = vmul.f32 0.5, %v2782
        %v2784 = vsub.f32 1.5, %v2783
        %v2785 = vmul.f32 %v2780, %v2784
        %vm2786 = vweird.f32 %v2709
        %vm2787 = vweird.f32 %v2780
        %vm2788 = vmor %vm2786, %vm2787
        %v2789 = vsel %vm2788, %v2780, %v2785
        %v2790 = vmul.f32 %v2654, %v2719
        %v2791 = vmul.f32 %v2655, %v2729
        %v2792 = vmul.f32 %v2656, %v2739
        %v2793 = vmul.f32 %v2657, %v2749
        %v2794 = vmul.f32 %v2658, %v2759
        %v2795 = vmul.f32 %v2659, %v2769
        %v2796 = vmul.f32 %v2660, %v2779
        %v2797 = vmul.f32 %v2661, %v2789
        %v2799 = vperm.slane %v2620, 0
        %v2801 = vmul.f32 %v2790, %v2799
        %v2802 = vmul.f32 %v2791, %v2799
        %v2803 = vmul.f32 %v2792, %v2799
        %v2804 = vmul.f32 %v2793, %v2799
        %v2805 = vmul.f32 %v2794, %v2799
        %v2806 = vmul.f32 %v2795, %v2799
        %v2807 = vmul.f32 %v2796, %v2799
        %v2808 = vmul.f32 %v2797, %v2799
        %v2810 = vperm.slane %v2621, 0
        %v2812 = vadd.f32 %v2801, %v2810
        %v2813 = vadd.f32 %v2802, %v2810
        %v2814 = vadd.f32 %v2803, %v2810
        %v2815 = vadd.f32 %v2804, %v2810
        %v2816 = vadd.f32 %v2805, %v2810
        %v2817 = vadd.f32 %v2806, %v2810
        %v2818 = vadd.f32 %v2807, %v2810
        %v2819 = vadd.f32 %v2808, %v2810
        %2820 = vst.msk [vmem:[#allocation2] sm:$0xff] %vm637, %v2812
        %2821 = vst.msk [vmem:[#allocation2 + $0x8] sm:$0xff] %vm637, %v2813
        %2822 = vst.msk [vmem:[#allocation2 + $0x10] sm:$0xff] %vm637, %v2814
        %2823 = vst.msk [vmem:[#allocation2 + $0x18] sm:$0xff] %vm637, %v2815
        %2824 = vst.msk [vmem:[#allocation2 + $0x20] sm:$0xff] %vm637, %v2816
        %2825 = vst.msk [vmem:[#allocation2 + $0x28] sm:$0xff] %vm637, %v2817
        %2826 = vst.msk [vmem:[#allocation2 + $0x30] sm:$0xff] %vm637, %v2818
        %2827 = vst.msk [vmem:[#allocation2 + $0x38] sm:$0xff] %vm637, %v2819
        %v2828 = vld [vmem:[#allocation2] sm:$0xff]
        %v2829 = vld [vmem:[#allocation2 + $0x8] sm:$0xff]
        %v2830 = vld [vmem:[#allocation2 + $0x10] sm:$0xff]
        %v2831 = vld [vmem:[#allocation2 + $0x18] sm:$0xff]
        %v2832 = vld [vmem:[#allocation2 + $0x20] sm:$0xff]
        %v2833 = vld [vmem:[#allocation2 + $0x28] sm:$0xff]
        %v2834 = vld [vmem:[#allocation2 + $0x30] sm:$0xff]
        %v2835 = vld [vmem:[#allocation2 + $0x38] sm:$0xff]
        %s2836 = scalar_lea.vmem %s3, 128
        %v2837 = vld [vmem:[%s2836] sm:$0xff]
        %v2838 = vld [vmem:[%s2836 + $0x8] sm:$0xff]
        %v2839 = vld [vmem:[%s2836 + $0x10] sm:$0xff]
        %v2840 = vld [vmem:[%s2836 + $0x18] sm:$0xff]
        %v2841 = vld [vmem:[%s2836 + $0x20] sm:$0xff]
        %v2842 = vld [vmem:[%s2836 + $0x28] sm:$0xff]
        %v2843 = vld [vmem:[%s2836 + $0x30] sm:$0xff]
        %v2844 = vld [vmem:[%s2836 + $0x38] sm:$0xff]
        %v2845 = vld [vmem:[%s2836 + $0x40] sm:$0xff]
        %v2846 = vld [vmem:[%s2836 + $0x48] sm:$0xff]
        %v2847 = vld [vmem:[%s2836 + $0x50] sm:$0xff]
        %v2848 = vld [vmem:[%s2836 + $0x58] sm:$0xff]
        %v2849 = vld [vmem:[%s2836 + $0x60] sm:$0xff]
        %v2850 = vld [vmem:[%s2836 + $0x68] sm:$0xff]
        %v2851 = vld [vmem:[%s2836 + $0x70] sm:$0xff]
        %v2852 = vld [vmem:[%s2836 + $0x78] sm:$0xff]
        %s2853 = scalar_lea.vmem %s4, 2
        %v2854 = vld [vmem:[%s2853] sm:$0x3]
        %v2856 = vperm.slane %v2854, 0
        %v2857 = vperm.slane %v2854, 1
        %v2861 = vsel %vm637, %v2828, 0
        %v2864 = vsel %vm637, %v2829, 0
        %v2867 = vsel %vm637, %v2830, 0
        %v2870 = vsel %vm637, %v2831, 0
        %v2873 = vsel %vm637, %v2832, 0
        %v2876 = vsel %vm637, %v2833, 0
        %v2879 = vsel %vm637, %v2834, 0
        %v2882 = vsel %vm637, %v2835, 0
        %2884 = vmatpush.msra.mxu0 0.0
        %2885 = vmatpush.msra.mxu0 0.0
        %2886 = vmatpush.msra.mxu0 0.0
        %2887 = vmatpush.msra.mxu0 0.0
        %2888 = vmatpush.msra.mxu0 0.0
        %2889 = vmatpush.msra.mxu0 0.0
        %2890 = vmatpush.msra.mxu0 0.0
        %2891 = vmatpush.msra.mxu0 0.0
        %2892 = vmatpush.msra.mxu0 %v2851
        %2893 = vmatpush.msra.mxu0 %v2849
        %2894 = vmatpush.msra.mxu0 %v2847
        %2895 = vmatpush.msra.mxu0 %v2845
        %2896 = vmatpush.msra.mxu0 %v2843
        %2897 = vmatpush.msra.mxu0 %v2841
        %2898 = vmatpush.msra.mxu0 %v2839
        %2899 = vmatpush.msra.mxu0 %v2837
        %2900 = vmatmul.f32.gmra.mxu0 %v2861
        %v2901 = vpop.f32.mrf.mxu0
        %v2902 = vadd.f32 %v2856, %v2901
        %2903 = vmatmul.f32.gmra.mxu0 %v2864
        %v2904 = vpop.f32.mrf.mxu0
        %v2905 = vadd.f32 %v2856, %v2904
        %2906 = vmatmul.f32.gmra.mxu0 %v2867
        %v2907 = vpop.f32.mrf.mxu0
        %v2908 = vadd.f32 %v2856, %v2907
        %2909 = vmatmul.f32.gmra.mxu0 %v2870
        %v2910 = vpop.f32.mrf.mxu0
        %v2911 = vadd.f32 %v2856, %v2910
        %2912 = vmatmul.f32.gmra.mxu0 %v2873
        %v2913 = vpop.f32.mrf.mxu0
        %v2914 = vadd.f32 %v2856, %v2913
        %2915 = vmatmul.f32.gmra.mxu0 %v2876
        %v2916 = vpop.f32.mrf.mxu0
        %v2917 = vadd.f32 %v2856, %v2916
        %2918 = vmatmul.f32.gmra.mxu0 %v2879
        %v2919 = vpop.f32.mrf.mxu0
        %v2920 = vadd.f32 %v2856, %v2919
        %2921 = vmatmul.f32.gmra.mxu0 %v2882
        %v2922 = vpop.f32.mrf.mxu0
        %v2923 = vadd.f32 %v2856, %v2922
        %2924 = vdwg.mxu0
        %2925 = vmatpush.msra.mxu0 0.0
        %2926 = vmatpush.msra.mxu0 0.0
        %2927 = vmatpush.msra.mxu0 0.0
        %2928 = vmatpush.msra.mxu0 0.0
        %2929 = vmatpush.msra.mxu0 0.0
        %2930 = vmatpush.msra.mxu0 0.0
        %2931 = vmatpush.msra.mxu0 0.0
        %2932 = vmatpush.msra.mxu0 0.0
        %2933 = vmatpush.msra.mxu0 %v2852
        %2934 = vmatpush.msra.mxu0 %v2850
        %2935 = vmatpush.msra.mxu0 %v2848
        %2936 = vmatpush.msra.mxu0 %v2846
        %2937 = vmatpush.msra.mxu0 %v2844
        %2938 = vmatpush.msra.mxu0 %v2842
        %2939 = vmatpush.msra.mxu0 %v2840
        %2940 = vmatpush.msra.mxu0 %v2838
        %2941 = vmatmul.f32.gmra.mxu0 %v2861
        %v2942 = vpop.f32.mrf.mxu0
        %v2943 = vadd.f32 %v2857, %v2942
        %2944 = vmatmul.f32.gmra.mxu0 %v2864
        %v2945 = vpop.f32.mrf.mxu0
        %v2946 = vadd.f32 %v2857, %v2945
        %2947 = vmatmul.f32.gmra.mxu0 %v2867
        %v2948 = vpop.f32.mrf.mxu0
        %v2949 = vadd.f32 %v2857, %v2948
        %2950 = vmatmul.f32.gmra.mxu0 %v2870
        %v2951 = vpop.f32.mrf.mxu0
        %v2952 = vadd.f32 %v2857, %v2951
        %2953 = vmatmul.f32.gmra.mxu0 %v2873
        %v2954 = vpop.f32.mrf.mxu0
        %v2955 = vadd.f32 %v2857, %v2954
        %2956 = vmatmul.f32.gmra.mxu0 %v2876
        %v2957 = vpop.f32.mrf.mxu0
        %v2958 = vadd.f32 %v2857, %v2957
        %2959 = vmatmul.f32.gmra.mxu0 %v2879
        %v2960 = vpop.f32.mrf.mxu0
        %v2961 = vadd.f32 %v2857, %v2960
        %2962 = vmatmul.f32.gmra.mxu0 %v2882
        %v2963 = vpop.f32.mrf.mxu0
        %v2964 = vadd.f32 %v2857, %v2963
        %2965 = vdwg.mxu0
        %2966 = vst [vmem:[#allocation3] sm:$0xff] %v2902
        %2967 = vst.msk [vmem:[#allocation3 + $0x8] sm:$0xff] %vm637, %v2943
        %2968 = vst [vmem:[#allocation3 + $0x10] sm:$0xff] %v2905
        %2969 = vst.msk [vmem:[#allocation3 + $0x18] sm:$0xff] %vm637, %v2946
        %2970 = vst [vmem:[#allocation3 + $0x20] sm:$0xff] %v2908
        %2971 = vst.msk [vmem:[#allocation3 + $0x28] sm:$0xff] %vm637, %v2949
        %2972 = vst [vmem:[#allocation3 + $0x30] sm:$0xff] %v2911
        %2973 = vst.msk [vmem:[#allocation3 + $0x38] sm:$0xff] %vm637, %v2952
        %2974 = vst [vmem:[#allocation3 + $0x40] sm:$0xff] %v2914
        %2975 = vst.msk [vmem:[#allocation3 + $0x48] sm:$0xff] %vm637, %v2955
        %2976 = vst [vmem:[#allocation3 + $0x50] sm:$0xff] %v2917
        %2977 = vst.msk [vmem:[#allocation3 + $0x58] sm:$0xff] %vm637, %v2958
        %2978 = vst [vmem:[#allocation3 + $0x60] sm:$0xff] %v2920
        %2979 = vst.msk [vmem:[#allocation3 + $0x68] sm:$0xff] %vm637, %v2961
        %2980 = vst [vmem:[#allocation3 + $0x70] sm:$0xff] %v2923
        %2981 = vst.msk [vmem:[#allocation3 + $0x78] sm:$0xff] %vm637, %v2964
        %v2982 = vld [vmem:[#allocation3] sm:$0xff]
        %v2983 = vld [vmem:[#allocation3 + $0x10] sm:$0xff]
        %v2984 = vld [vmem:[#allocation3 + $0x20] sm:$0xff]
        %v2985 = vld [vmem:[#allocation3 + $0x30] sm:$0xff]
        %v2986 = vld [vmem:[#allocation3 + $0x40] sm:$0xff]
        %v2987 = vld [vmem:[#allocation3 + $0x50] sm:$0xff]
        %v2988 = vld [vmem:[#allocation3 + $0x60] sm:$0xff]
        %v2989 = vld [vmem:[#allocation3 + $0x70] sm:$0xff]
        %v2990 = vld [vmem:[#allocation3 + $0x8] sm:$0xff]
        %v2991 = vld [vmem:[#allocation3 + $0x18] sm:$0xff]
        %v2992 = vld [vmem:[#allocation3 + $0x28] sm:$0xff]
        %v2993 = vld [vmem:[#allocation3 + $0x38] sm:$0xff]
        %v2994 = vld [vmem:[#allocation3 + $0x48] sm:$0xff]
        %v2995 = vld [vmem:[#allocation3 + $0x58] sm:$0xff]
        %v2996 = vld [vmem:[#allocation3 + $0x68] sm:$0xff]
        %v2997 = vld [vmem:[#allocation3 + $0x78] sm:$0xff]
        %v2998 = vld [vmem:[#allocation4] sm:$0xff]
        %v2999 = vld [vmem:[#allocation4 + $0x8] sm:$0xff]
        %v3000 = vld [vmem:[#allocation4 + $0x10] sm:$0xff]
        %v3001 = vld [vmem:[#allocation4 + $0x18] sm:$0xff]
        %v3002 = vld [vmem:[#allocation4 + $0x20] sm:$0xff]
        %v3003 = vld [vmem:[#allocation4 + $0x28] sm:$0xff]
        %v3004 = vld [vmem:[#allocation4 + $0x30] sm:$0xff]
        %v3005 = vld [vmem:[#allocation4 + $0x38] sm:$0xff]
        %3014 = vrot.lane.b32.xlu0 %v2982, 64
        %v3015 = vpop.permute.xlu0 %3014
        %3016 = vrot.lane.b32.xlu0 %v2983, 64
        %v3017 = vpop.permute.xlu0 %3016
        %3018 = vrot.lane.b32.xlu0 %v2984, 64
        %v3019 = vpop.permute.xlu0 %3018
        %3020 = vrot.lane.b32.xlu0 %v2985, 64
        %v3021 = vpop.permute.xlu0 %3020
        %3022 = vrot.lane.b32.xlu0 %v2986, 64
        %v3023 = vpop.permute.xlu0 %3022
        %3024 = vrot.lane.b32.xlu0 %v2987, 64
        %v3025 = vpop.permute.xlu0 %3024
        %3026 = vrot.lane.b32.xlu0 %v2988, 64
        %v3027 = vpop.permute.xlu0 %3026
        %3028 = vrot.lane.b32.xlu0 %v2989, 64
        %v3029 = vpop.permute.xlu0 %3028
        %v3030 = vsel %vm927, %v2982, 0
        %v3032 = vsel %vm927, %v2983, 0
        %v3034 = vsel %vm927, %v2984, 0
        %v3036 = vsel %vm927, %v2985, 0
        %v3038 = vsel %vm927, %v2986, 0
        %v3040 = vsel %vm927, %v2987, 0
        %v3042 = vsel %vm927, %v2988, 0
        %v3044 = vsel %vm927, %v2989, 0
        %v3046 = vsel %vm927, %v3015, 0
        %v3048 = vsel %vm927, %v3017, 0
        %v3050 = vsel %vm927, %v3019, 0
        %v3052 = vsel %vm927, %v3021, 0
        %v3054 = vsel %vm927, %v3023, 0
        %v3056 = vsel %vm927, %v3025, 0
        %v3058 = vsel %vm927, %v3027, 0
        %v3060 = vsel %vm927, %v3029, 0
        %3062 = vmatpush.xpose.msra.mxu0 0.0
        %3063 = vmatpush.xpose.msra.mxu0 0.0
        %3064 = vmatpush.xpose.msra.mxu0 0.0
        %3065 = vmatpush.xpose.msra.mxu0 0.0
        %3066 = vmatpush.xpose.msra.mxu0 0.0
        %3067 = vmatpush.xpose.msra.mxu0 0.0
        %3068 = vmatpush.xpose.msra.mxu0 0.0
        %3069 = vmatpush.xpose.msra.mxu0 0.0
        %3070 = vmatpush.xpose.msra.mxu0 %v3060
        %3071 = vmatpush.xpose.msra.mxu0 %v3058
        %3072 = vmatpush.xpose.msra.mxu0 %v3056
        %3073 = vmatpush.xpose.msra.mxu0 %v3054
        %3074 = vmatpush.xpose.msra.mxu0 %v3052
        %3075 = vmatpush.xpose.msra.mxu0 %v3050
        %3076 = vmatpush.xpose.msra.mxu0 %v3048
        %3077 = vmatpush.xpose.msra.mxu0 %v3046
        %3078 = vmatmul.f32.gmra.mxu0 %v3030
        %v3079 = vpop.f32.mrf.mxu0
        %v3080 = vadd.f32 %v2998, %v3079
        %3081 = vmatmul.f32.gmra.mxu0 %v3032
        %v3082 = vpop.f32.mrf.mxu0
        %v3083 = vadd.f32 %v2999, %v3082
        %3084 = vmatmul.f32.gmra.mxu0 %v3034
        %v3085 = vpop.f32.mrf.mxu0
        %v3086 = vadd.f32 %v3000, %v3085
        %3087 = vmatmul.f32.gmra.mxu0 %v3036
        %v3088 = vpop.f32.mrf.mxu0
        %v3089 = vadd.f32 %v3001, %v3088
        %3090 = vmatmul.f32.gmra.mxu0 %v3038
        %v3091 = vpop.f32.mrf.mxu0
        %v3092 = vadd.f32 %v3002, %v3091
        %3093 = vmatmul.f32.gmra.mxu0 %v3040
        %v3094 = vpop.f32.mrf.mxu0
        %v3095 = vadd.f32 %v3003, %v3094
        %3096 = vmatmul.f32.gmra.mxu0 %v3042
        %v3097 = vpop.f32.mrf.mxu0
        %v3098 = vadd.f32 %v3004, %v3097
        %3099 = vmatmul.f32.gmra.mxu0 %v3044
        %v3100 = vpop.f32.mrf.mxu0
        %v3101 = vadd.f32 %v3005, %v3100
        %3102 = vdwg.mxu0
        %v3103 = vsel %vm637, %v3080, -inf
        %3104 = vmax.xlane.f32.xlu0 %v3103
        %v3105 = vpop.xlane.xlu0 %3104
        %v3106 = vsel %vm637, %v3083, -inf
        %3107 = vmax.xlane.f32.xlu0 %v3106
        %v3108 = vpop.xlane.xlu0 %3107
        %v3109 = vsel %vm637, %v3086, -inf
        %3110 = vmax.xlane.f32.xlu0 %v3109
        %v3111 = vpop.xlane.xlu0 %3110
        %v3112 = vsel %vm637, %v3089, -inf
        %3113 = vmax.xlane.f32.xlu0 %v3112
        %v3114 = vpop.xlane.xlu0 %3113
        %v3115 = vsel %vm637, %v3092, -inf
        %3116 = vmax.xlane.f32.xlu0 %v3115
        %v3117 = vpop.xlane.xlu0 %3116
        %v3118 = vsel %vm637, %v3095, -inf
        %3119 = vmax.xlane.f32.xlu0 %v3118
        %v3120 = vpop.xlane.xlu0 %3119
        %v3121 = vsel %vm637, %v3098, -inf
        %3122 = vmax.xlane.f32.xlu0 %v3121
        %v3123 = vpop.xlane.xlu0 %3122
        %v3124 = vsel %vm637, %v3101, -inf
        %3125 = vmax.xlane.f32.xlu0 %v3124
        %v3126 = vpop.xlane.xlu0 %3125
        %v3127 = vsub.f32 %v3080, %v3105
        %v3128 = vsub.f32 %v3083, %v3108
        %v3129 = vsub.f32 %v3086, %v3111
        %v3130 = vsub.f32 %v3089, %v3114
        %v3131 = vsub.f32 %v3092, %v3117
        %v3132 = vsub.f32 %v3095, %v3120
        %v3133 = vsub.f32 %v3098, %v3123
        %v3134 = vsub.f32 %v3101, %v3126
        %v3135 = vmul.f32 %v3127, 1.442695
        %v3136 = vpow.pop %v3135
        %v3137 = vmul.f32 %v3128, 1.442695
        %v3138 = vpow.pop %v3137
        %v3139 = vmul.f32 %v3129, 1.442695
        %v3140 = vpow.pop %v3139
        %v3141 = vmul.f32 %v3130, 1.442695
        %v3142 = vpow.pop %v3141
        %v3143 = vmul.f32 %v3131, 1.442695
        %v3144 = vpow.pop %v3143
        %v3145 = vmul.f32 %v3132, 1.442695
        %v3146 = vpow.pop %v3145
        %v3147 = vmul.f32 %v3133, 1.442695
        %v3148 = vpow.pop %v3147
        %v3149 = vmul.f32 %v3134, 1.442695
        %v3150 = vpow.pop %v3149
        %v3151 = vsel %vm637, %v3136, 0.0
        %3152 = vadd.xlane.f32.xlu0 %v3151
        %v3153 = vpop.xlane.xlu0 %3152
        %v3154 = vsel %vm637, %v3138, 0.0
        %3155 = vadd.xlane.f32.xlu0 %v3154
        %v3156 = vpop.xlane.xlu0 %3155
        %v3157 = vsel %vm637, %v3140, 0.0
        %3158 = vadd.xlane.f32.xlu0 %v3157
        %v3159 = vpop.xlane.xlu0 %3158
        %v3160 = vsel %vm637, %v3142, 0.0
        %3161 = vadd.xlane.f32.xlu0 %v3160
        %v3162 = vpop.xlane.xlu0 %3161
        %v3163 = vsel %vm637, %v3144, 0.0
        %3164 = vadd.xlane.f32.xlu0 %v3163
        %v3165 = vpop.xlane.xlu0 %3164
        %v3166 = vsel %vm637, %v3146, 0.0
        %3167 = vadd.xlane.f32.xlu0 %v3166
        %v3168 = vpop.xlane.xlu0 %3167
        %v3169 = vsel %vm637, %v3148, 0.0
        %3170 = vadd.xlane.f32.xlu0 %v3169
        %v3171 = vpop.xlane.xlu0 %3170
        %v3172 = vsel %vm637, %v3150, 0.0
        %3173 = vadd.xlane.f32.xlu0 %v3172
        %v3174 = vpop.xlane.xlu0 %3173
        %v3175 = vrcp.pop %v3153
        %v3176 = vrcp.pop %v3156
        %v3177 = vrcp.pop %v3159
        %v3178 = vrcp.pop %v3162
        %v3179 = vrcp.pop %v3165
        %v3180 = vrcp.pop %v3168
        %v3181 = vrcp.pop %v3171
        %v3182 = vrcp.pop %v3174
        %v3183 = vmul.f32 %v3136, %v3175
        %v3184 = vmul.f32 %v3138, %v3176
        %v3185 = vmul.f32 %v3140, %v3177
        %v3186 = vmul.f32 %v3142, %v3178
        %v3187 = vmul.f32 %v3144, %v3179
        %v3188 = vmul.f32 %v3146, %v3180
        %v3189 = vmul.f32 %v3148, %v3181
        %v3190 = vmul.f32 %v3150, %v3182
        %s3191 = scalar_lea.vmem %s5, 64
        %v3192 = vld [vmem:[%s3191] sm:$0xff]
        %v3193 = vld [vmem:[%s3191 + $0x8] sm:$0xff]
        %v3195 = vsel %vm927, %v2990, 0
        %v3198 = vsel %vm927, %v2991, 0
        %v3201 = vsel %vm927, %v2992, 0
        %v3204 = vsel %vm927, %v2993, 0
        %v3207 = vsel %vm927, %v2994, 0
        %v3210 = vsel %vm927, %v2995, 0
        %v3213 = vsel %vm927, %v2996, 0
        %v3216 = vsel %vm927, %v2997, 0
        %3218 = vmatpush.msra.mxu0 0.0
        %3219 = vmatpush.msra.mxu0 0.0
        %3220 = vmatpush.msra.mxu0 0.0
        %3221 = vmatpush.msra.mxu0 0.0
        %3222 = vmatpush.msra.mxu0 0.0
        %3223 = vmatpush.msra.mxu0 0.0
        %3224 = vmatpush.msra.mxu0 0.0
        %3225 = vmatpush.msra.mxu0 0.0
        %3226 = vmatpush.msra.mxu0 0.0
        %3227 = vmatpush.msra.mxu0 0.0
        %3228 = vmatpush.msra.mxu0 0.0
        %3229 = vmatpush.msra.mxu0 0.0
        %3230 = vmatpush.msra.mxu0 0.0
        %3231 = vmatpush.msra.mxu0 0.0
        %3232 = vmatpush.msra.mxu0 %v3193
        %3233 = vmatpush.msra.mxu0 %v3192
        %3234 = vmatmul.f32.gmra.mxu0 %v3195
        %v3235 = vpop.f32.mrf.mxu0
        %v3236 = vadd.f32 0.0, %v3235
        %3237 = vmatmul.f32.gmra.mxu0 %v3198
        %v3238 = vpop.f32.mrf.mxu0
        %v3239 = vadd.f32 0.0, %v3238
        %3240 = vmatmul.f32.gmra.mxu0 %v3201
        %v3241 = vpop.f32.mrf.mxu0
        %v3242 = vadd.f32 0.0, %v3241
        %3243 = vmatmul.f32.gmra.mxu0 %v3204
        %v3244 = vpop.f32.mrf.mxu0
        %v3245 = vadd.f32 0.0, %v3244
        %3246 = vmatmul.f32.gmra.mxu0 %v3207
        %v3247 = vpop.f32.mrf.mxu0
        %v3248 = vadd.f32 0.0, %v3247
        %3249 = vmatmul.f32.gmra.mxu0 %v3210
        %v3250 = vpop.f32.mrf.mxu0
        %v3251 = vadd.f32 0.0, %v3250
        %3252 = vmatmul.f32.gmra.mxu0 %v3213
        %v3253 = vpop.f32.mrf.mxu0
        %v3254 = vadd.f32 0.0, %v3253
        %3255 = vmatmul.f32.gmra.mxu0 %v3216
        %v3256 = vpop.f32.mrf.mxu0
        %v3257 = vadd.f32 0.0, %v3256
        %3258 = vdwg.mxu0
        %3259 = vrot.lane.b32.xlu0 %v2982, 112
        %v3260 = vpop.permute.xlu0 %3259
        %3261 = vrot.lane.b32.xlu0 %v2983, 112
        %v3262 = vpop.permute.xlu0 %3261
        %3263 = vrot.lane.b32.xlu0 %v2984, 112
        %v3264 = vpop.permute.xlu0 %3263
        %3265 = vrot.lane.b32.xlu0 %v2985, 112
        %v3266 = vpop.permute.xlu0 %3265
        %3267 = vrot.lane.b32.xlu0 %v2986, 112
        %v3268 = vpop.permute.xlu0 %3267
        %3269 = vrot.lane.b32.xlu0 %v2987, 112
        %v3270 = vpop.permute.xlu0 %3269
        %3271 = vrot.lane.b32.xlu0 %v2988, 112
        %v3272 = vpop.permute.xlu0 %3271
        %3273 = vrot.lane.b32.xlu0 %v2989, 112
        %v3274 = vpop.permute.xlu0 %3273
        %3275 = vrot.lane.b32.xlu0 %v2982, 48
        %v3276 = vpop.permute.xlu0 %3275
        %3277 = vrot.lane.b32.xlu0 %v2983, 48
        %v3278 = vpop.permute.xlu0 %3277
        %3279 = vrot.lane.b32.xlu0 %v2984, 48
        %v3280 = vpop.permute.xlu0 %3279
        %3281 = vrot.lane.b32.xlu0 %v2985, 48
        %v3282 = vpop.permute.xlu0 %3281
        %3283 = vrot.lane.b32.xlu0 %v2986, 48
        %v3284 = vpop.permute.xlu0 %3283
        %3285 = vrot.lane.b32.xlu0 %v2987, 48
        %v3286 = vpop.permute.xlu0 %3285
        %3287 = vrot.lane.b32.xlu0 %v2988, 48
        %v3288 = vpop.permute.xlu0 %3287
        %3289 = vrot.lane.b32.xlu0 %v2989, 48
        %v3290 = vpop.permute.xlu0 %3289
        %v3291 = vsel %vm927, %v3260, 0
        %v3293 = vsel %vm927, %v3262, 0
        %v3295 = vsel %vm927, %v3264, 0
        %v3297 = vsel %vm927, %v3266, 0
        %v3299 = vsel %vm927, %v3268, 0
        %v3301 = vsel %vm927, %v3270, 0
        %v3303 = vsel %vm927, %v3272, 0
        %v3305 = vsel %vm927, %v3274, 0
        %v3307 = vsel %vm927, %v3276, 0
        %v3309 = vsel %vm927, %v3278, 0
        %v3311 = vsel %vm927, %v3280, 0
        %v3313 = vsel %vm927, %v3282, 0
        %v3315 = vsel %vm927, %v3284, 0
        %v3317 = vsel %vm927, %v3286, 0
        %v3319 = vsel %vm927, %v3288, 0
        %v3321 = vsel %vm927, %v3290, 0
        %3323 = vmatpush.xpose.msra.mxu0 0.0
        %3324 = vmatpush.xpose.msra.mxu0 0.0
        %3325 = vmatpush.xpose.msra.mxu0 0.0
        %3326 = vmatpush.xpose.msra.mxu0 0.0
        %3327 = vmatpush.xpose.msra.mxu0 0.0
        %3328 = vmatpush.xpose.msra.mxu0 0.0
        %3329 = vmatpush.xpose.msra.mxu0 0.0
        %3330 = vmatpush.xpose.msra.mxu0 0.0
        %3331 = vmatpush.xpose.msra.mxu0 %v3321
        %3332 = vmatpush.xpose.msra.mxu0 %v3319
        %3333 = vmatpush.xpose.msra.mxu0 %v3317
        %3334 = vmatpush.xpose.msra.mxu0 %v3315
        %3335 = vmatpush.xpose.msra.mxu0 %v3313
        %3336 = vmatpush.xpose.msra.mxu0 %v3311
        %3337 = vmatpush.xpose.msra.mxu0 %v3309
        %3338 = vmatpush.xpose.msra.mxu0 %v3307
        %3339 = vmatmul.f32.gmra.mxu0 %v3291
        %v3340 = vpop.f32.mrf.mxu0
        %v3341 = vadd.f32 %v2998, %v3340
        %3342 = vmatmul.f32.gmra.mxu0 %v3293
        %v3343 = vpop.f32.mrf.mxu0
        %v3344 = vadd.f32 %v2999, %v3343
        %3345 = vmatmul.f32.gmra.mxu0 %v3295
        %v3346 = vpop.f32.mrf.mxu0
        %v3347 = vadd.f32 %v3000, %v3346
        %3348 = vmatmul.f32.gmra.mxu0 %v3297
        %v3349 = vpop.f32.mrf.mxu0
        %v3350 = vadd.f32 %v3001, %v3349
        %3351 = vmatmul.f32.gmra.mxu0 %v3299
        %v3352 = vpop.f32.mrf.mxu0
        %v3353 = vadd.f32 %v3002, %v3352
        %3354 = vmatmul.f32.gmra.mxu0 %v3301
        %v3355 = vpop.f32.mrf.mxu0
        %v3356 = vadd.f32 %v3003, %v3355
        %3357 = vmatmul.f32.gmra.mxu0 %v3303
        %v3358 = vpop.f32.mrf.mxu0
        %v3359 = vadd.f32 %v3004, %v3358
        %3360 = vmatmul.f32.gmra.mxu0 %v3305
        %v3361 = vpop.f32.mrf.mxu0
        %v3362 = vadd.f32 %v3005, %v3361
        %3363 = vdwg.mxu0
        %v3364 = vsel %vm637, %v3341, -inf
        %3365 = vmax.xlane.f32.xlu0 %v3364
        %v3366 = vpop.xlane.xlu0 %3365
        %v3367 = vsel %vm637, %v3344, -inf
        %3368 = vmax.xlane.f32.xlu0 %v3367
        %v3369 = vpop.xlane.xlu0 %3368
        %v3370 = vsel %vm637, %v3347, -inf
        %3371 = vmax.xlane.f32.xlu0 %v3370
        %v3372 = vpop.xlane.xlu0 %3371
        %v3373 = vsel %vm637, %v3350, -inf
        %3374 = vmax.xlane.f32.xlu0 %v3373
        %v3375 = vpop.xlane.xlu0 %3374
        %v3376 = vsel %vm637, %v3353, -inf
        %3377 = vmax.xlane.f32.xlu0 %v3376
        %v3378 = vpop.xlane.xlu0 %3377
        %v3379 = vsel %vm637, %v3356, -inf
        %3380 = vmax.xlane.f32.xlu0 %v3379
        %v3381 = vpop.xlane.xlu0 %3380
        %v3382 = vsel %vm637, %v3359, -inf
        %3383 = vmax.xlane.f32.xlu0 %v3382
        %v3384 = vpop.xlane.xlu0 %3383
        %v3385 = vsel %vm637, %v3362, -inf
        %3386 = vmax.xlane.f32.xlu0 %v3385
        %v3387 = vpop.xlane.xlu0 %3386
        %v3388 = vsub.f32 %v3341, %v3366
        %v3389 = vsub.f32 %v3344, %v3369
        %v3390 = vsub.f32 %v3347, %v3372
        %v3391 = vsub.f32 %v3350, %v3375
        %v3392 = vsub.f32 %v3353, %v3378
        %v3393 = vsub.f32 %v3356, %v3381
        %v3394 = vsub.f32 %v3359, %v3384
        %v3395 = vsub.f32 %v3362, %v3387
        %v3396 = vmul.f32 %v3388, 1.442695
        %v3397 = vpow.pop %v3396
        %v3398 = vmul.f32 %v3389, 1.442695
        %v3399 = vpow.pop %v3398
        %v3400 = vmul.f32 %v3390, 1.442695
        %v3401 = vpow.pop %v3400
        %v3402 = vmul.f32 %v3391, 1.442695
        %v3403 = vpow.pop %v3402
        %v3404 = vmul.f32 %v3392, 1.442695
        %v3405 = vpow.pop %v3404
        %v3406 = vmul.f32 %v3393, 1.442695
        %v3407 = vpow.pop %v3406
        %v3408 = vmul.f32 %v3394, 1.442695
        %v3409 = vpow.pop %v3408
        %v3410 = vmul.f32 %v3395, 1.442695
        %v3411 = vpow.pop %v3410
        %v3412 = vsel %vm637, %v3397, 0.0
        %3413 = vadd.xlane.f32.xlu0 %v3412
        %v3414 = vpop.xlane.xlu0 %3413
        %v3415 = vsel %vm637, %v3399, 0.0
        %3416 = vadd.xlane.f32.xlu0 %v3415
        %v3417 = vpop.xlane.xlu0 %3416
        %v3418 = vsel %vm637, %v3401, 0.0
        %3419 = vadd.xlane.f32.xlu0 %v3418
        %v3420 = vpop.xlane.xlu0 %3419
        %v3421 = vsel %vm637, %v3403, 0.0
        %3422 = vadd.xlane.f32.xlu0 %v3421
        %v3423 = vpop.xlane.xlu0 %3422
        %v3424 = vsel %vm637, %v3405, 0.0
        %3425 = vadd.xlane.f32.xlu0 %v3424
        %v3426 = vpop.xlane.xlu0 %3425
        %v3427 = vsel %vm637, %v3407, 0.0
        %3428 = vadd.xlane.f32.xlu0 %v3427
        %v3429 = vpop.xlane.xlu0 %3428
        %v3430 = vsel %vm637, %v3409, 0.0
        %3431 = vadd.xlane.f32.xlu0 %v3430
        %v3432 = vpop.xlane.xlu0 %3431
        %v3433 = vsel %vm637, %v3411, 0.0
        %3434 = vadd.xlane.f32.xlu0 %v3433
        %v3435 = vpop.xlane.xlu0 %3434
        %v3436 = vrcp.pop %v3414
        %v3437 = vrcp.pop %v3417
        %v3438 = vrcp.pop %v3420
        %v3439 = vrcp.pop %v3423
        %v3440 = vrcp.pop %v3426
        %v3441 = vrcp.pop %v3429
        %v3442 = vrcp.pop %v3432
        %v3443 = vrcp.pop %v3435
        %v3444 = vmul.f32 %v3397, %v3436
        %v3445 = vmul.f32 %v3399, %v3437
        %v3446 = vmul.f32 %v3401, %v3438
        %v3447 = vmul.f32 %v3403, %v3439
        %v3448 = vmul.f32 %v3405, %v3440
        %v3449 = vmul.f32 %v3407, %v3441
        %v3450 = vmul.f32 %v3409, %v3442
        %v3451 = vmul.f32 %v3411, %v3443
        %s3452 = scalar_lea.vmem %s5, 80
        %v3453 = vld [vmem:[%s3452] sm:$0xff]
        %v3454 = vld [vmem:[%s3452 + $0x8] sm:$0xff]
        %3455 = vrot.lane.b32.xlu0 %v2990, 112
        %v3456 = vpop.permute.xlu0 %3455
        %3457 = vrot.lane.b32.xlu0 %v2991, 112
        %v3458 = vpop.permute.xlu0 %3457
        %3459 = vrot.lane.b32.xlu0 %v2992, 112
        %v3460 = vpop.permute.xlu0 %3459
        %3461 = vrot.lane.b32.xlu0 %v2993, 112
        %v3462 = vpop.permute.xlu0 %3461
        %3463 = vrot.lane.b32.xlu0 %v2994, 112
        %v3464 = vpop.permute.xlu0 %3463
        %3465 = vrot.lane.b32.xlu0 %v2995, 112
        %v3466 = vpop.permute.xlu0 %3465
        %3467 = vrot.lane.b32.xlu0 %v2996, 112
        %v3468 = vpop.permute.xlu0 %3467
        %3469 = vrot.lane.b32.xlu0 %v2997, 112
        %v3470 = vpop.permute.xlu0 %3469
        %v3471 = vsel %vm927, %v3456, 0
        %v3473 = vsel %vm927, %v3458, 0
        %v3475 = vsel %vm927, %v3460, 0
        %v3477 = vsel %vm927, %v3462, 0
        %v3479 = vsel %vm927, %v3464, 0
        %v3481 = vsel %vm927, %v3466, 0
        %v3483 = vsel %vm927, %v3468, 0
        %v3485 = vsel %vm927, %v3470, 0
        %3487 = vmatpush.msra.mxu0 0.0
        %3488 = vmatpush.msra.mxu0 0.0
        %3489 = vmatpush.msra.mxu0 0.0
        %3490 = vmatpush.msra.mxu0 0.0
        %3491 = vmatpush.msra.mxu0 0.0
        %3492 = vmatpush.msra.mxu0 0.0
        %3493 = vmatpush.msra.mxu0 0.0
        %3494 = vmatpush.msra.mxu0 0.0
        %3495 = vmatpush.msra.mxu0 0.0
        %3496 = vmatpush.msra.mxu0 0.0
        %3497 = vmatpush.msra.mxu0 0.0
        %3498 = vmatpush.msra.mxu0 0.0
        %3499 = vmatpush.msra.mxu0 0.0
        %3500 = vmatpush.msra.mxu0 0.0
        %3501 = vmatpush.msra.mxu0 %v3454
        %3502 = vmatpush.msra.mxu0 %v3453
        %3503 = vmatmul.f32.gmra.mxu0 %v3471
        %v3504 = vpop.f32.mrf.mxu0
        %v3505 = vadd.f32 0.0, %v3504
        %3506 = vmatmul.f32.gmra.mxu0 %v3473
        %v3507 = vpop.f32.mrf.mxu0
        %v3508 = vadd.f32 0.0, %v3507
        %3509 = vmatmul.f32.gmra.mxu0 %v3475
        %v3510 = vpop.f32.mrf.mxu0
        %v3511 = vadd.f32 0.0, %v3510
        %3512 = vmatmul.f32.gmra.mxu0 %v3477
        %v3513 = vpop.f32.mrf.mxu0
        %v3514 = vadd.f32 0.0, %v3513
        %3515 = vmatmul.f32.gmra.mxu0 %v3479
        %v3516 = vpop.f32.mrf.mxu0
        %v3517 = vadd.f32 0.0, %v3516
        %3518 = vmatmul.f32.gmra.mxu0 %v3481
        %v3519 = vpop.f32.mrf.mxu0
        %v3520 = vadd.f32 0.0, %v3519
        %3521 = vmatmul.f32.gmra.mxu0 %v3483
        %v3522 = vpop.f32.mrf.mxu0
        %v3523 = vadd.f32 0.0, %v3522
        %3524 = vmatmul.f32.gmra.mxu0 %v3485
        %v3525 = vpop.f32.mrf.mxu0
        %v3526 = vadd.f32 0.0, %v3525
        %3527 = vdwg.mxu0
        %v3529 = vsel %vm637, %v3444, 0
        %v3532 = vsel %vm637, %v3445, 0
        %v3535 = vsel %vm637, %v3446, 0
        %v3538 = vsel %vm637, %v3447, 0
        %v3541 = vsel %vm637, %v3448, 0
        %v3544 = vsel %vm637, %v3449, 0
        %v3547 = vsel %vm637, %v3450, 0
        %v3550 = vsel %vm637, %v3451, 0
        %3552 = vmatpush.msra.mxu0 0.0
        %3553 = vmatpush.msra.mxu0 0.0
        %3554 = vmatpush.msra.mxu0 0.0
        %3555 = vmatpush.msra.mxu0 0.0
        %3556 = vmatpush.msra.mxu0 0.0
        %3557 = vmatpush.msra.mxu0 0.0
        %3558 = vmatpush.msra.mxu0 0.0
        %3559 = vmatpush.msra.mxu0 0.0
        %3560 = vmatpush.msra.mxu0 %v3526
        %3561 = vmatpush.msra.mxu0 %v3523
        %3562 = vmatpush.msra.mxu0 %v3520
        %3563 = vmatpush.msra.mxu0 %v3517
        %3564 = vmatpush.msra.mxu0 %v3514
        %3565 = vmatpush.msra.mxu0 %v3511
        %3566 = vmatpush.msra.mxu0 %v3508
        %3567 = vmatpush.msra.mxu0 %v3505
        %3568 = vmatmul.f32.gmra.mxu0 %v3529
        %v3569 = vpop.f32.mrf.mxu0
        %v3570 = vadd.f32 0.0, %v3569
        %3571 = vmatmul.f32.gmra.mxu0 %v3532
        %v3572 = vpop.f32.mrf.mxu0
        %v3573 = vadd.f32 0.0, %v3572
        %3574 = vmatmul.f32.gmra.mxu0 %v3535
        %v3575 = vpop.f32.mrf.mxu0
        %v3576 = vadd.f32 0.0, %v3575
        %3577 = vmatmul.f32.gmra.mxu0 %v3538
        %v3578 = vpop.f32.mrf.mxu0
        %v3579 = vadd.f32 0.0, %v3578
        %3580 = vmatmul.f32.gmra.mxu0 %v3541
        %v3581 = vpop.f32.mrf.mxu0
        %v3582 = vadd.f32 0.0, %v3581
        %3583 = vmatmul.f32.gmra.mxu0 %v3544
        %v3584 = vpop.f32.mrf.mxu0
        %v3585 = vadd.f32 0.0, %v3584
        %3586 = vmatmul.f32.gmra.mxu0 %v3547
        %v3587 = vpop.f32.mrf.mxu0
        %v3588 = vadd.f32 0.0, %v3587
        %3589 = vmatmul.f32.gmra.mxu0 %v3550
        %v3590 = vpop.f32.mrf.mxu0
        %v3591 = vadd.f32 0.0, %v3590
        %3592 = vdwg.mxu0
        %v3594 = vsel %vm637, %v3183, 0
        %v3597 = vsel %vm637, %v3184, 0
        %v3600 = vsel %vm637, %v3185, 0
        %v3603 = vsel %vm637, %v3186, 0
        %v3606 = vsel %vm637, %v3187, 0
        %v3609 = vsel %vm637, %v3188, 0
        %v3612 = vsel %vm637, %v3189, 0
        %v3615 = vsel %vm637, %v3190, 0
        %3617 = vmatpush.msra.mxu0 0.0
        %3618 = vmatpush.msra.mxu0 0.0
        %3619 = vmatpush.msra.mxu0 0.0
        %3620 = vmatpush.msra.mxu0 0.0
        %3621 = vmatpush.msra.mxu0 0.0
        %3622 = vmatpush.msra.mxu0 0.0
        %3623 = vmatpush.msra.mxu0 0.0
        %3624 = vmatpush.msra.mxu0 0.0
        %3625 = vmatpush.msra.mxu0 %v3257
        %3626 = vmatpush.msra.mxu0 %v3254
        %3627 = vmatpush.msra.mxu0 %v3251
        %3628 = vmatpush.msra.mxu0 %v3248
        %3629 = vmatpush.msra.mxu0 %v3245
        %3630 = vmatpush.msra.mxu0 %v3242
        %3631 = vmatpush.msra.mxu0 %v3239
        %3632 = vmatpush.msra.mxu0 %v3236
        %3633 = vmatmul.f32.gmra.mxu0 %v3594
        %v3634 = vpop.f32.mrf.mxu0
        %v3635 = vadd.f32 %v3570, %v3634
        %3636 = vmatmul.f32.gmra.mxu0 %v3597
        %v3637 = vpop.f32.mrf.mxu0
        %v3638 = vadd.f32 %v3573, %v3637
        %3639 = vmatmul.f32.gmra.mxu0 %v3600
        %v3640 = vpop.f32.mrf.mxu0
        %v3641 = vadd.f32 %v3576, %v3640
        %3642 = vmatmul.f32.gmra.mxu0 %v3603
        %v3643 = vpop.f32.mrf.mxu0
        %v3644 = vadd.f32 %v3579, %v3643
        %3645 = vmatmul.f32.gmra.mxu0 %v3606
        %v3646 = vpop.f32.mrf.mxu0
        %v3647 = vadd.f32 %v3582, %v3646
        %3648 = vmatmul.f32.gmra.mxu0 %v3609
        %v3649 = vpop.f32.mrf.mxu0
        %v3650 = vadd.f32 %v3585, %v3649
        %3651 = vmatmul.f32.gmra.mxu0 %v3612
        %v3652 = vpop.f32.mrf.mxu0
        %v3653 = vadd.f32 %v3588, %v3652
        %3654 = vmatmul.f32.gmra.mxu0 %v3615
        %v3655 = vpop.f32.mrf.mxu0
        %v3656 = vadd.f32 %v3591, %v3655
        %3657 = vdwg.mxu0
        %3658 = vrot.lane.b32.xlu0 %v2982, 96
        %v3659 = vpop.permute.xlu0 %3658
        %3660 = vrot.lane.b32.xlu0 %v2983, 96
        %v3661 = vpop.permute.xlu0 %3660
        %3662 = vrot.lane.b32.xlu0 %v2984, 96
        %v3663 = vpop.permute.xlu0 %3662
        %3664 = vrot.lane.b32.xlu0 %v2985, 96
        %v3665 = vpop.permute.xlu0 %3664
        %3666 = vrot.lane.b32.xlu0 %v2986, 96
        %v3667 = vpop.permute.xlu0 %3666
        %3668 = vrot.lane.b32.xlu0 %v2987, 96
        %v3669 = vpop.permute.xlu0 %3668
        %3670 = vrot.lane.b32.xlu0 %v2988, 96
        %v3671 = vpop.permute.xlu0 %3670
        %3672 = vrot.lane.b32.xlu0 %v2989, 96
        %v3673 = vpop.permute.xlu0 %3672
        %3674 = vrot.lane.b32.xlu0 %v2982, 32
        %v3675 = vpop.permute.xlu0 %3674
        %3676 = vrot.lane.b32.xlu0 %v2983, 32
        %v3677 = vpop.permute.xlu0 %3676
        %3678 = vrot.lane.b32.xlu0 %v2984, 32
        %v3679 = vpop.permute.xlu0 %3678
        %3680 = vrot.lane.b32.xlu0 %v2985, 32
        %v3681 = vpop.permute.xlu0 %3680
        %3682 = vrot.lane.b32.xlu0 %v2986, 32
        %v3683 = vpop.permute.xlu0 %3682
        %3684 = vrot.lane.b32.xlu0 %v2987, 32
        %v3685 = vpop.permute.xlu0 %3684
        %3686 = vrot.lane.b32.xlu0 %v2988, 32
        %v3687 = vpop.permute.xlu0 %3686
        %3688 = vrot.lane.b32.xlu0 %v2989, 32
        %v3689 = vpop.permute.xlu0 %3688
        %v3690 = vsel %vm927, %v3659, 0
        %v3692 = vsel %vm927, %v3661, 0
        %v3694 = vsel %vm927, %v3663, 0
        %v3696 = vsel %vm927, %v3665, 0
        %v3698 = vsel %vm927, %v3667, 0
        %v3700 = vsel %vm927, %v3669, 0
        %v3702 = vsel %vm927, %v3671, 0
        %v3704 = vsel %vm927, %v3673, 0
        %v3706 = vsel %vm927, %v3675, 0
        %v3708 = vsel %vm927, %v3677, 0
        %v3710 = vsel %vm927, %v3679, 0
        %v3712 = vsel %vm927, %v3681, 0
        %v3714 = vsel %vm927, %v3683, 0
        %v3716 = vsel %vm927, %v3685, 0
        %v3718 = vsel %vm927, %v3687, 0
        %v3720 = vsel %vm927, %v3689, 0
        %3722 = vmatpush.xpose.msra.mxu0 0.0
        %3723 = vmatpush.xpose.msra.mxu0 0.0
        %3724 = vmatpush.xpose.msra.mxu0 0.0
        %3725 = vmatpush.xpose.msra.mxu0 0.0
        %3726 = vmatpush.xpose.msra.mxu0 0.0
        %3727 = vmatpush.xpose.msra.mxu0 0.0
        %3728 = vmatpush.xpose.msra.mxu0 0.0
        %3729 = vmatpush.xpose.msra.mxu0 0.0
        %3730 = vmatpush.xpose.msra.mxu0 %v3720
        %3731 = vmatpush.xpose.msra.mxu0 %v3718
        %3732 = vmatpush.xpose.msra.mxu0 %v3716
        %3733 = vmatpush.xpose.msra.mxu0 %v3714
        %3734 = vmatpush.xpose.msra.mxu0 %v3712
        %3735 = vmatpush.xpose.msra.mxu0 %v3710
        %3736 = vmatpush.xpose.msra.mxu0 %v3708
        %3737 = vmatpush.xpose.msra.mxu0 %v3706
        %3738 = vmatmul.f32.gmra.mxu0 %v3690
        %v3739 = vpop.f32.mrf.mxu0
        %v3740 = vadd.f32 %v2998, %v3739
        %3741 = vmatmul.f32.gmra.mxu0 %v3692
        %v3742 = vpop.f32.mrf.mxu0
        %v3743 = vadd.f32 %v2999, %v3742
        %3744 = vmatmul.f32.gmra.mxu0 %v3694
        %v3745 = vpop.f32.mrf.mxu0
        %v3746 = vadd.f32 %v3000, %v3745
        %3747 = vmatmul.f32.gmra.mxu0 %v3696
        %v3748 = vpop.f32.mrf.mxu0
        %v3749 = vadd.f32 %v3001, %v3748
        %3750 = vmatmul.f32.gmra.mxu0 %v3698
        %v3751 = vpop.f32.mrf.mxu0
        %v3752 = vadd.f32 %v3002, %v3751
        %3753 = vmatmul.f32.gmra.mxu0 %v3700
        %v3754 = vpop.f32.mrf.mxu0
        %v3755 = vadd.f32 %v3003, %v3754
        %3756 = vmatmul.f32.gmra.mxu0 %v3702
        %v3757 = vpop.f32.mrf.mxu0
        %v3758 = vadd.f32 %v3004, %v3757
        %3759 = vmatmul.f32.gmra.mxu0 %v3704
        %v3760 = vpop.f32.mrf.mxu0
        %v3761 = vadd.f32 %v3005, %v3760
        %3762 = vdwg.mxu0
        %v3763 = vsel %vm637, %v3740, -inf
        %3764 = vmax.xlane.f32.xlu0 %v3763
        %v3765 = vpop.xlane.xlu0 %3764
        %v3766 = vsel %vm637, %v3743, -inf
        %3767 = vmax.xlane.f32.xlu0 %v3766
        %v3768 = vpop.xlane.xlu0 %3767
        %v3769 = vsel %vm637, %v3746, -inf
        %3770 = vmax.xlane.f32.xlu0 %v3769
        %v3771 = vpop.xlane.xlu0 %3770
        %v3772 = vsel %vm637, %v3749, -inf
        %3773 = vmax.xlane.f32.xlu0 %v3772
        %v3774 = vpop.xlane.xlu0 %3773
        %v3775 = vsel %vm637, %v3752, -inf
        %3776 = vmax.xlane.f32.xlu0 %v3775
        %v3777 = vpop.xlane.xlu0 %3776
        %v3778 = vsel %vm637, %v3755, -inf
        %3779 = vmax.xlane.f32.xlu0 %v3778
        %v3780 = vpop.xlane.xlu0 %3779
        %v3781 = vsel %vm637, %v3758, -inf
        %3782 = vmax.xlane.f32.xlu0 %v3781
        %v3783 = vpop.xlane.xlu0 %3782
        %v3784 = vsel %vm637, %v3761, -inf
        %3785 = vmax.xlane.f32.xlu0 %v3784
        %v3786 = vpop.xlane.xlu0 %3785
        %v3787 = vsub.f32 %v3740, %v3765
        %v3788 = vsub.f32 %v3743, %v3768
        %v3789 = vsub.f32 %v3746, %v3771
        %v3790 = vsub.f32 %v3749, %v3774
        %v3791 = vsub.f32 %v3752, %v3777
        %v3792 = vsub.f32 %v3755, %v3780
        %v3793 = vsub.f32 %v3758, %v3783
        %v3794 = vsub.f32 %v3761, %v3786
        %v3795 = vmul.f32 %v3787, 1.442695
        %v3796 = vpow.pop %v3795
        %v3797 = vmul.f32 %v3788, 1.442695
        %v3798 = vpow.pop %v3797
        %v3799 = vmul.f32 %v3789, 1.442695
        %v3800 = vpow.pop %v3799
        %v3801 = vmul.f32 %v3790, 1.442695
        %v3802 = vpow.pop %v3801
        %v3803 = vmul.f32 %v3791, 1.442695
        %v3804 = vpow.pop %v3803
        %v3805 = vmul.f32 %v3792, 1.442695
        %v3806 = vpow.pop %v3805
        %v3807 = vmul.f32 %v3793, 1.442695
        %v3808 = vpow.pop %v3807
        %v3809 = vmul.f32 %v3794, 1.442695
        %v3810 = vpow.pop %v3809
        %v3811 = vsel %vm637, %v3796, 0.0
        %3812 = vadd.xlane.f32.xlu0 %v3811
        %v3813 = vpop.xlane.xlu0 %3812
        %v3814 = vsel %vm637, %v3798, 0.0
        %3815 = vadd.xlane.f32.xlu0 %v3814
        %v3816 = vpop.xlane.xlu0 %3815
        %v3817 = vsel %vm637, %v3800, 0.0
        %3818 = vadd.xlane.f32.xlu0 %v3817
        %v3819 = vpop.xlane.xlu0 %3818
        %v3820 = vsel %vm637, %v3802, 0.0
        %3821 = vadd.xlane.f32.xlu0 %v3820
        %v3822 = vpop.xlane.xlu0 %3821
        %v3823 = vsel %vm637, %v3804, 0.0
        %3824 = vadd.xlane.f32.xlu0 %v3823
        %v3825 = vpop.xlane.xlu0 %3824
        %v3826 = vsel %vm637, %v3806, 0.0
        %3827 = vadd.xlane.f32.xlu0 %v3826
        %v3828 = vpop.xlane.xlu0 %3827
        %v3829 = vsel %vm637, %v3808, 0.0
        %3830 = vadd.xlane.f32.xlu0 %v3829
        %v3831 = vpop.xlane.xlu0 %3830
        %v3832 = vsel %vm637, %v3810, 0.0
        %3833 = vadd.xlane.f32.xlu0 %v3832
        %v3834 = vpop.xlane.xlu0 %3833
        %v3835 = vrcp.pop %v3813
        %v3836 = vrcp.pop %v3816
        %v3837 = vrcp.pop %v3819
        %v3838 = vrcp.pop %v3822
        %v3839 = vrcp.pop %v3825
        %v3840 = vrcp.pop %v3828
        %v3841 = vrcp.pop %v3831
        %v3842 = vrcp.pop %v3834
        %v3843 = vmul.f32 %v3796, %v3835
        %v3844 = vmul.f32 %v3798, %v3836
        %v3845 = vmul.f32 %v3800, %v3837
        %v3846 = vmul.f32 %v3802, %v3838
        %v3847 = vmul.f32 %v3804, %v3839
        %v3848 = vmul.f32 %v3806, %v3840
        %v3849 = vmul.f32 %v3808, %v3841
        %v3850 = vmul.f32 %v3810, %v3842
        %s3851 = scalar_lea.vmem %s5, 96
        %v3852 = vld [vmem:[%s3851] sm:$0xff]
        %v3853 = vld [vmem:[%s3851 + $0x8] sm:$0xff]
        %3854 = vrot.lane.b32.xlu0 %v2990, 96
        %v3855 = vpop.permute.xlu0 %3854
        %3856 = vrot.lane.b32.xlu0 %v2991, 96
        %v3857 = vpop.permute.xlu0 %3856
        %3858 = vrot.lane.b32.xlu0 %v2992, 96
        %v3859 = vpop.permute.xlu0 %3858
        %3860 = vrot.lane.b32.xlu0 %v2993, 96
        %v3861 = vpop.permute.xlu0 %3860
        %3862 = vrot.lane.b32.xlu0 %v2994, 96
        %v3863 = vpop.permute.xlu0 %3862
        %3864 = vrot.lane.b32.xlu0 %v2995, 96
        %v3865 = vpop.permute.xlu0 %3864
        %3866 = vrot.lane.b32.xlu0 %v2996, 96
        %v3867 = vpop.permute.xlu0 %3866
        %3868 = vrot.lane.b32.xlu0 %v2997, 96
        %v3869 = vpop.permute.xlu0 %3868
        %v3870 = vsel %vm927, %v3855, 0
        %v3872 = vsel %vm927, %v3857, 0
        %v3874 = vsel %vm927, %v3859, 0
        %v3876 = vsel %vm927, %v3861, 0
        %v3878 = vsel %vm927, %v3863, 0
        %v3880 = vsel %vm927, %v3865, 0
        %v3882 = vsel %vm927, %v3867, 0
        %v3884 = vsel %vm927, %v3869, 0
        %3886 = vmatpush.msra.mxu0 0.0
        %3887 = vmatpush.msra.mxu0 0.0
        %3888 = vmatpush.msra.mxu0 0.0
        %3889 = vmatpush.msra.mxu0 0.0
        %3890 = vmatpush.msra.mxu0 0.0
        %3891 = vmatpush.msra.mxu0 0.0
        %3892 = vmatpush.msra.mxu0 0.0
        %3893 = vmatpush.msra.mxu0 0.0
        %3894 = vmatpush.msra.mxu0 0.0
        %3895 = vmatpush.msra.mxu0 0.0
        %3896 = vmatpush.msra.mxu0 0.0
        %3897 = vmatpush.msra.mxu0 0.0
        %3898 = vmatpush.msra.mxu0 0.0
        %3899 = vmatpush.msra.mxu0 0.0
        %3900 = vmatpush.msra.mxu0 %v3853
        %3901 = vmatpush.msra.mxu0 %v3852
        %3902 = vmatmul.f32.gmra.mxu0 %v3870
        %v3903 = vpop.f32.mrf.mxu0
        %v3904 = vadd.f32 0.0, %v3903
        %3905 = vmatmul.f32.gmra.mxu0 %v3872
        %v3906 = vpop.f32.mrf.mxu0
        %v3907 = vadd.f32 0.0, %v3906
        %3908 = vmatmul.f32.gmra.mxu0 %v3874
        %v3909 = vpop.f32.mrf.mxu0
        %v3910 = vadd.f32 0.0, %v3909
        %3911 = vmatmul.f32.gmra.mxu0 %v3876
        %v3912 = vpop.f32.mrf.mxu0
        %v3913 = vadd.f32 0.0, %v3912
        %3914 = vmatmul.f32.gmra.mxu0 %v3878
        %v3915 = vpop.f32.mrf.mxu0
        %v3916 = vadd.f32 0.0, %v3915
        %3917 = vmatmul.f32.gmra.mxu0 %v3880
        %v3918 = vpop.f32.mrf.mxu0
        %v3919 = vadd.f32 0.0, %v3918
        %3920 = vmatmul.f32.gmra.mxu0 %v3882
        %v3921 = vpop.f32.mrf.mxu0
        %v3922 = vadd.f32 0.0, %v3921
        %3923 = vmatmul.f32.gmra.mxu0 %v3884
        %v3924 = vpop.f32.mrf.mxu0
        %v3925 = vadd.f32 0.0, %v3924
        %3926 = vdwg.mxu0
        %v3928 = vsel %vm637, %v3843, 0
        %v3931 = vsel %vm637, %v3844, 0
        %v3934 = vsel %vm637, %v3845, 0
        %v3937 = vsel %vm637, %v3846, 0
        %v3940 = vsel %vm637, %v3847, 0
        %v3943 = vsel %vm637, %v3848, 0
        %v3946 = vsel %vm637, %v3849, 0
        %v3949 = vsel %vm637, %v3850, 0
        %3951 = vmatpush.msra.mxu0 0.0
        %3952 = vmatpush.msra.mxu0 0.0
        %3953 = vmatpush.msra.mxu0 0.0
        %3954 = vmatpush.msra.mxu0 0.0
        %3955 = vmatpush.msra.mxu0 0.0
        %3956 = vmatpush.msra.mxu0 0.0
        %3957 = vmatpush.msra.mxu0 0.0
        %3958 = vmatpush.msra.mxu0 0.0
        %3959 = vmatpush.msra.mxu0 %v3925
        %3960 = vmatpush.msra.mxu0 %v3922
        %3961 = vmatpush.msra.mxu0 %v3919
        %3962 = vmatpush.msra.mxu0 %v3916
        %3963 = vmatpush.msra.mxu0 %v3913
        %3964 = vmatpush.msra.mxu0 %v3910
        %3965 = vmatpush.msra.mxu0 %v3907
        %3966 = vmatpush.msra.mxu0 %v3904
        %3967 = vmatmul.f32.gmra.mxu0 %v3928
        %v3968 = vpop.f32.mrf.mxu0
        %v3969 = vadd.f32 0.0, %v3968
        %3970 = vmatmul.f32.gmra.mxu0 %v3931
        %v3971 = vpop.f32.mrf.mxu0
        %v3972 = vadd.f32 0.0, %v3971
        %3973 = vmatmul.f32.gmra.mxu0 %v3934
        %v3974 = vpop.f32.mrf.mxu0
        %v3975 = vadd.f32 0.0, %v3974
        %3976 = vmatmul.f32.gmra.mxu0 %v3937
        %v3977 = vpop.f32.mrf.mxu0
        %v3978 = vadd.f32 0.0, %v3977
        %3979 = vmatmul.f32.gmra.mxu0 %v3940
        %v3980 = vpop.f32.mrf.mxu0
        %v3981 = vadd.f32 0.0, %v3980
        %3982 = vmatmul.f32.gmra.mxu0 %v3943
        %v3983 = vpop.f32.mrf.mxu0
        %v3984 = vadd.f32 0.0, %v3983
        %3985 = vmatmul.f32.gmra.mxu0 %v3946
        %v3986 = vpop.f32.mrf.mxu0
        %v3987 = vadd.f32 0.0, %v3986
        %3988 = vmatmul.f32.gmra.mxu0 %v3949
        %v3989 = vpop.f32.mrf.mxu0
        %v3990 = vadd.f32 0.0, %v3989
        %3991 = vdwg.mxu0
        %v3992 = vadd.f32 %v3635, %v3969
        %v3993 = vadd.f32 %v3638, %v3972
        %v3994 = vadd.f32 %v3641, %v3975
        %v3995 = vadd.f32 %v3644, %v3978
        %v3996 = vadd.f32 %v3647, %v3981
        %v3997 = vadd.f32 %v3650, %v3984
        %v3998 = vadd.f32 %v3653, %v3987
        %v3999 = vadd.f32 %v3656, %v3990
        %4000 = vrot.lane.b32.xlu0 %v2982, 80
        %v4001 = vpop.permute.xlu0 %4000
        %4002 = vrot.lane.b32.xlu0 %v2983, 80
        %v4003 = vpop.permute.xlu0 %4002
        %4004 = vrot.lane.b32.xlu0 %v2984, 80
        %v4005 = vpop.permute.xlu0 %4004
        %4006 = vrot.lane.b32.xlu0 %v2985, 80
        %v4007 = vpop.permute.xlu0 %4006
        %4008 = vrot.lane.b32.xlu0 %v2986, 80
        %v4009 = vpop.permute.xlu0 %4008
        %4010 = vrot.lane.b32.xlu0 %v2987, 80
        %v4011 = vpop.permute.xlu0 %4010
        %4012 = vrot.lane.b32.xlu0 %v2988, 80
        %v4013 = vpop.permute.xlu0 %4012
        %4014 = vrot.lane.b32.xlu0 %v2989, 80
        %v4015 = vpop.permute.xlu0 %4014
        %4016 = vrot.lane.b32.xlu0 %v2982, 16
        %v4017 = vpop.permute.xlu0 %4016
        %4018 = vrot.lane.b32.xlu0 %v2983, 16
        %v4019 = vpop.permute.xlu0 %4018
        %4020 = vrot.lane.b32.xlu0 %v2984, 16
        %v4021 = vpop.permute.xlu0 %4020
        %4022 = vrot.lane.b32.xlu0 %v2985, 16
        %v4023 = vpop.permute.xlu0 %4022
        %4024 = vrot.lane.b32.xlu0 %v2986, 16
        %v4025 = vpop.permute.xlu0 %4024
        %4026 = vrot.lane.b32.xlu0 %v2987, 16
        %v4027 = vpop.permute.xlu0 %4026
        %4028 = vrot.lane.b32.xlu0 %v2988, 16
        %v4029 = vpop.permute.xlu0 %4028
        %4030 = vrot.lane.b32.xlu0 %v2989, 16
        %v4031 = vpop.permute.xlu0 %4030
        %v4032 = vsel %vm927, %v4001, 0
        %v4034 = vsel %vm927, %v4003, 0
        %v4036 = vsel %vm927, %v4005, 0
        %v4038 = vsel %vm927, %v4007, 0
        %v4040 = vsel %vm927, %v4009, 0
        %v4042 = vsel %vm927, %v4011, 0
        %v4044 = vsel %vm927, %v4013, 0
        %v4046 = vsel %vm927, %v4015, 0
        %v4048 = vsel %vm927, %v4017, 0
        %v4050 = vsel %vm927, %v4019, 0
        %v4052 = vsel %vm927, %v4021, 0
        %v4054 = vsel %vm927, %v4023, 0
        %v4056 = vsel %vm927, %v4025, 0
        %v4058 = vsel %vm927, %v4027, 0
        %v4060 = vsel %vm927, %v4029, 0
        %v4062 = vsel %vm927, %v4031, 0
        %4064 = vmatpush.xpose.msra.mxu0 0.0
        %4065 = vmatpush.xpose.msra.mxu0 0.0
        %4066 = vmatpush.xpose.msra.mxu0 0.0
        %4067 = vmatpush.xpose.msra.mxu0 0.0
        %4068 = vmatpush.xpose.msra.mxu0 0.0
        %4069 = vmatpush.xpose.msra.mxu0 0.0
        %4070 = vmatpush.xpose.msra.mxu0 0.0
        %4071 = vmatpush.xpose.msra.mxu0 0.0
        %4072 = vmatpush.xpose.msra.mxu0 %v4062
        %4073 = vmatpush.xpose.msra.mxu0 %v4060
        %4074 = vmatpush.xpose.msra.mxu0 %v4058
        %4075 = vmatpush.xpose.msra.mxu0 %v4056
        %4076 = vmatpush.xpose.msra.mxu0 %v4054
        %4077 = vmatpush.xpose.msra.mxu0 %v4052
        %4078 = vmatpush.xpose.msra.mxu0 %v4050
        %4079 = vmatpush.xpose.msra.mxu0 %v4048
        %4080 = vmatmul.f32.gmra.mxu0 %v4032
        %v4081 = vpop.f32.mrf.mxu0
        %v4082 = vadd.f32 %v2998, %v4081
        %4083 = vmatmul.f32.gmra.mxu0 %v4034
        %v4084 = vpop.f32.mrf.mxu0
        %v4085 = vadd.f32 %v2999, %v4084
        %4086 = vmatmul.f32.gmra.mxu0 %v4036
        %v4087 = vpop.f32.mrf.mxu0
        %v4088 = vadd.f32 %v3000, %v4087
        %4089 = vmatmul.f32.gmra.mxu0 %v4038
        %v4090 = vpop.f32.mrf.mxu0
        %v4091 = vadd.f32 %v3001, %v4090
        %4092 = vmatmul.f32.gmra.mxu0 %v4040
        %v4093 = vpop.f32.mrf.mxu0
        %v4094 = vadd.f32 %v3002, %v4093
        %4095 = vmatmul.f32.gmra.mxu0 %v4042
        %v4096 = vpop.f32.mrf.mxu0
        %v4097 = vadd.f32 %v3003, %v4096
        %4098 = vmatmul.f32.gmra.mxu0 %v4044
        %v4099 = vpop.f32.mrf.mxu0
        %v4100 = vadd.f32 %v3004, %v4099
        %4101 = vmatmul.f32.gmra.mxu0 %v4046
        %v4102 = vpop.f32.mrf.mxu0
        %v4103 = vadd.f32 %v3005, %v4102
        %4104 = vdwg.mxu0
        %v4105 = vsel %vm637, %v4082, -inf
        %4106 = vmax.xlane.f32.xlu0 %v4105
        %v4107 = vpop.xlane.xlu0 %4106
        %v4108 = vsel %vm637, %v4085, -inf
        %4109 = vmax.xlane.f32.xlu0 %v4108
        %v4110 = vpop.xlane.xlu0 %4109
        %v4111 = vsel %vm637, %v4088, -inf
        %4112 = vmax.xlane.f32.xlu0 %v4111
        %v4113 = vpop.xlane.xlu0 %4112
        %v4114 = vsel %vm637, %v4091, -inf
        %4115 = vmax.xlane.f32.xlu0 %v4114
        %v4116 = vpop.xlane.xlu0 %4115
        %v4117 = vsel %vm637, %v4094, -inf
        %4118 = vmax.xlane.f32.xlu0 %v4117
        %v4119 = vpop.xlane.xlu0 %4118
        %v4120 = vsel %vm637, %v4097, -inf
        %4121 = vmax.xlane.f32.xlu0 %v4120
        %v4122 = vpop.xlane.xlu0 %4121
        %v4123 = vsel %vm637, %v4100, -inf
        %4124 = vmax.xlane.f32.xlu0 %v4123
        %v4125 = vpop.xlane.xlu0 %4124
        %v4126 = vsel %vm637, %v4103, -inf
        %4127 = vmax.xlane.f32.xlu0 %v4126
        %v4128 = vpop.xlane.xlu0 %4127
        %v4129 = vsub.f32 %v4082, %v4107
        %v4130 = vsub.f32 %v4085, %v4110
        %v4131 = vsub.f32 %v4088, %v4113
        %v4132 = vsub.f32 %v4091, %v4116
        %v4133 = vsub.f32 %v4094, %v4119
        %v4134 = vsub.f32 %v4097, %v4122
        %v4135 = vsub.f32 %v4100, %v4125
        %v4136 = vsub.f32 %v4103, %v4128
        %v4137 = vmul.f32 %v4129, 1.442695
        %v4138 = vpow.pop %v4137
        %v4139 = vmul.f32 %v4130, 1.442695
        %v4140 = vpow.pop %v4139
        %v4141 = vmul.f32 %v4131, 1.442695
        %v4142 = vpow.pop %v4141
        %v4143 = vmul.f32 %v4132, 1.442695
        %v4144 = vpow.pop %v4143
        %v4145 = vmul.f32 %v4133, 1.442695
        %v4146 = vpow.pop %v4145
        %v4147 = vmul.f32 %v4134, 1.442695
        %v4148 = vpow.pop %v4147
        %v4149 = vmul.f32 %v4135, 1.442695
        %v4150 = vpow.pop %v4149
        %v4151 = vmul.f32 %v4136, 1.442695
        %v4152 = vpow.pop %v4151
        %v4153 = vsel %vm637, %v4138, 0.0
        %4154 = vadd.xlane.f32.xlu0 %v4153
        %v4155 = vpop.xlane.xlu0 %4154
        %v4156 = vsel %vm637, %v4140, 0.0
        %4157 = vadd.xlane.f32.xlu0 %v4156
        %v4158 = vpop.xlane.xlu0 %4157
        %v4159 = vsel %vm637, %v4142, 0.0
        %4160 = vadd.xlane.f32.xlu0 %v4159
        %v4161 = vpop.xlane.xlu0 %4160
        %v4162 = vsel %vm637, %v4144, 0.0
        %4163 = vadd.xlane.f32.xlu0 %v4162
        %v4164 = vpop.xlane.xlu0 %4163
        %v4165 = vsel %vm637, %v4146, 0.0
        %4166 = vadd.xlane.f32.xlu0 %v4165
        %v4167 = vpop.xlane.xlu0 %4166
        %v4168 = vsel %vm637, %v4148, 0.0
        %4169 = vadd.xlane.f32.xlu0 %v4168
        %v4170 = vpop.xlane.xlu0 %4169
        %v4171 = vsel %vm637, %v4150, 0.0
        %4172 = vadd.xlane.f32.xlu0 %v4171
        %v4173 = vpop.xlane.xlu0 %4172
        %v4174 = vsel %vm637, %v4152, 0.0
        %4175 = vadd.xlane.f32.xlu0 %v4174
        %v4176 = vpop.xlane.xlu0 %4175
        %v4177 = vrcp.pop %v4155
        %v4178 = vrcp.pop %v4158
        %v4179 = vrcp.pop %v4161
        %v4180 = vrcp.pop %v4164
        %v4181 = vrcp.pop %v4167
        %v4182 = vrcp.pop %v4170
        %v4183 = vrcp.pop %v4173
        %v4184 = vrcp.pop %v4176
        %v4185 = vmul.f32 %v4138, %v4177
        %v4186 = vmul.f32 %v4140, %v4178
        %v4187 = vmul.f32 %v4142, %v4179
        %v4188 = vmul.f32 %v4144, %v4180
        %v4189 = vmul.f32 %v4146, %v4181
        %v4190 = vmul.f32 %v4148, %v4182
        %v4191 = vmul.f32 %v4150, %v4183
        %v4192 = vmul.f32 %v4152, %v4184
        %s4193 = scalar_lea.vmem %s5, 112
        %v4194 = vld [vmem:[%s4193] sm:$0xff]
        %v4195 = vld [vmem:[%s4193 + $0x8] sm:$0xff]
        %4196 = vrot.lane.b32.xlu0 %v2990, 80
        %v4197 = vpop.permute.xlu0 %4196
        %4198 = vrot.lane.b32.xlu0 %v2991, 80
        %v4199 = vpop.permute.xlu0 %4198
        %4200 = vrot.lane.b32.xlu0 %v2992, 80
        %v4201 = vpop.permute.xlu0 %4200
        %4202 = vrot.lane.b32.xlu0 %v2993, 80
        %v4203 = vpop.permute.xlu0 %4202
        %4204 = vrot.lane.b32.xlu0 %v2994, 80
        %v4205 = vpop.permute.xlu0 %4204
        %4206 = vrot.lane.b32.xlu0 %v2995, 80
        %v4207 = vpop.permute.xlu0 %4206
        %4208 = vrot.lane.b32.xlu0 %v2996, 80
        %v4209 = vpop.permute.xlu0 %4208
        %4210 = vrot.lane.b32.xlu0 %v2997, 80
        %v4211 = vpop.permute.xlu0 %4210
        %v4212 = vsel %vm927, %v4197, 0
        %v4214 = vsel %vm927, %v4199, 0
        %v4216 = vsel %vm927, %v4201, 0
        %v4218 = vsel %vm927, %v4203, 0
        %v4220 = vsel %vm927, %v4205, 0
        %v4222 = vsel %vm927, %v4207, 0
        %v4224 = vsel %vm927, %v4209, 0
        %v4226 = vsel %vm927, %v4211, 0
        %4228 = vmatpush.msra.mxu0 0.0
        %4229 = vmatpush.msra.mxu0 0.0
        %4230 = vmatpush.msra.mxu0 0.0
        %4231 = vmatpush.msra.mxu0 0.0
        %4232 = vmatpush.msra.mxu0 0.0
        %4233 = vmatpush.msra.mxu0 0.0
        %4234 = vmatpush.msra.mxu0 0.0
        %4235 = vmatpush.msra.mxu0 0.0
        %4236 = vmatpush.msra.mxu0 0.0
        %4237 = vmatpush.msra.mxu0 0.0
        %4238 = vmatpush.msra.mxu0 0.0
        %4239 = vmatpush.msra.mxu0 0.0
        %4240 = vmatpush.msra.mxu0 0.0
        %4241 = vmatpush.msra.mxu0 0.0
        %4242 = vmatpush.msra.mxu0 %v4195
        %4243 = vmatpush.msra.mxu0 %v4194
        %4244 = vmatmul.f32.gmra.mxu0 %v4212
        %v4245 = vpop.f32.mrf.mxu0
        %v4246 = vadd.f32 0.0, %v4245
        %4247 = vmatmul.f32.gmra.mxu0 %v4214
        %v4248 = vpop.f32.mrf.mxu0
        %v4249 = vadd.f32 0.0, %v4248
        %4250 = vmatmul.f32.gmra.mxu0 %v4216
        %v4251 = vpop.f32.mrf.mxu0
        %v4252 = vadd.f32 0.0, %v4251
        %4253 = vmatmul.f32.gmra.mxu0 %v4218
        %v4254 = vpop.f32.mrf.mxu0
        %v4255 = vadd.f32 0.0, %v4254
        %4256 = vmatmul.f32.gmra.mxu0 %v4220
        %v4257 = vpop.f32.mrf.mxu0
        %v4258 = vadd.f32 0.0, %v4257
        %4259 = vmatmul.f32.gmra.mxu0 %v4222
        %v4260 = vpop.f32.mrf.mxu0
        %v4261 = vadd.f32 0.0, %v4260
        %4262 = vmatmul.f32.gmra.mxu0 %v4224
        %v4263 = vpop.f32.mrf.mxu0
        %v4264 = vadd.f32 0.0, %v4263
        %4265 = vmatmul.f32.gmra.mxu0 %v4226
        %v4266 = vpop.f32.mrf.mxu0
        %v4267 = vadd.f32 0.0, %v4266
        %4268 = vdwg.mxu0
        %v4270 = vsel %vm637, %v4185, 0
        %v4273 = vsel %vm637, %v4186, 0
        %v4276 = vsel %vm637, %v4187, 0
        %v4279 = vsel %vm637, %v4188, 0
        %v4282 = vsel %vm637, %v4189, 0
        %v4285 = vsel %vm637, %v4190, 0
        %v4288 = vsel %vm637, %v4191, 0
        %v4291 = vsel %vm637, %v4192, 0
        %4293 = vmatpush.msra.mxu0 0.0
        %4294 = vmatpush.msra.mxu0 0.0
        %4295 = vmatpush.msra.mxu0 0.0
        %4296 = vmatpush.msra.mxu0 0.0
        %4297 = vmatpush.msra.mxu0 0.0
        %4298 = vmatpush.msra.mxu0 0.0
        %4299 = vmatpush.msra.mxu0 0.0
        %4300 = vmatpush.msra.mxu0 0.0
        %4301 = vmatpush.msra.mxu0 %v4267
        %4302 = vmatpush.msra.mxu0 %v4264
        %4303 = vmatpush.msra.mxu0 %v4261
        %4304 = vmatpush.msra.mxu0 %v4258
        %4305 = vmatpush.msra.mxu0 %v4255
        %4306 = vmatpush.msra.mxu0 %v4252
        %4307 = vmatpush.msra.mxu0 %v4249
        %4308 = vmatpush.msra.mxu0 %v4246
        %4309 = vmatmul.f32.gmra.mxu0 %v4270
        %v4310 = vpop.f32.mrf.mxu0
        %v4311 = vadd.f32 0.0, %v4310
        %4312 = vmatmul.f32.gmra.mxu0 %v4273
        %v4313 = vpop.f32.mrf.mxu0
        %v4314 = vadd.f32 0.0, %v4313
        %4315 = vmatmul.f32.gmra.mxu0 %v4276
        %v4316 = vpop.f32.mrf.mxu0
        %v4317 = vadd.f32 0.0, %v4316
        %4318 = vmatmul.f32.gmra.mxu0 %v4279
        %v4319 = vpop.f32.mrf.mxu0
        %v4320 = vadd.f32 0.0, %v4319
        %4321 = vmatmul.f32.gmra.mxu0 %v4282
        %v4322 = vpop.f32.mrf.mxu0
        %v4323 = vadd.f32 0.0, %v4322
        %4324 = vmatmul.f32.gmra.mxu0 %v4285
        %v4325 = vpop.f32.mrf.mxu0
        %v4326 = vadd.f32 0.0, %v4325
        %4327 = vmatmul.f32.gmra.mxu0 %v4288
        %v4328 = vpop.f32.mrf.mxu0
        %v4329 = vadd.f32 0.0, %v4328
        %4330 = vmatmul.f32.gmra.mxu0 %v4291
        %v4331 = vpop.f32.mrf.mxu0
        %v4332 = vadd.f32 0.0, %v4331
        %4333 = vdwg.mxu0
        %v4334 = vadd.f32 %v3992, %v4311
        %v4335 = vadd.f32 %v3993, %v4314
        %v4336 = vadd.f32 %v3994, %v4317
        %v4337 = vadd.f32 %v3995, %v4320
        %v4338 = vadd.f32 %v3996, %v4323
        %v4339 = vadd.f32 %v3997, %v4326
        %v4340 = vadd.f32 %v3998, %v4329
        %v4341 = vadd.f32 %v3999, %v4332
        %s4342 = scalar_lea.vmem %s6, 1
        %v4343 = vld [vmem:[%s4342] sm:$0x1]
        %v4345 = vperm.slane %v4343, 0
        %v4347 = vadd.f32 %v4334, %v4345
        %v4348 = vadd.f32 %v4335, %v4345
        %v4349 = vadd.f32 %v4336, %v4345
        %v4350 = vadd.f32 %v4337, %v4345
        %v4351 = vadd.f32 %v4338, %v4345
        %v4352 = vadd.f32 %v4339, %v4345
        %v4353 = vadd.f32 %v4340, %v4345
        %v4354 = vadd.f32 %v4341, %v4345
        %v4355 = vadd.f32 %v2828, %v4347
        %v4356 = vadd.f32 %v2829, %v4348
        %v4357 = vadd.f32 %v2830, %v4349
        %v4358 = vadd.f32 %v2831, %v4350
        %v4359 = vadd.f32 %v2832, %v4351
        %v4360 = vadd.f32 %v2833, %v4352
        %v4361 = vadd.f32 %v2834, %v4353
        %v4362 = vadd.f32 %v2835, %v4354
        %s4363 = scalar_lea.vmem %s11, 1
        %v4364 = vld [vmem:[%s4363] sm:$0x1]
        %s4365 = scalar_lea.vmem %s12, 1
        %v4366 = vld [vmem:[%s4365] sm:$0x1]
        %v4367 = vsel %vm637, %v4355, 0.0
        %4368 = vadd.xlane.f32.xlu0 %v4367
        %v4369 = vpop.xlane.xlu0 %4368
        %v4370 = vsel %vm637, %v4356, 0.0
        %4371 = vadd.xlane.f32.xlu0 %v4370
        %v4372 = vpop.xlane.xlu0 %4371
        %v4373 = vsel %vm637, %v4357, 0.0
        %4374 = vadd.xlane.f32.xlu0 %v4373
        %v4375 = vpop.xlane.xlu0 %4374
        %v4376 = vsel %vm637, %v4358, 0.0
        %4377 = vadd.xlane.f32.xlu0 %v4376
        %v4378 = vpop.xlane.xlu0 %4377
        %v4379 = vsel %vm637, %v4359, 0.0
        %4380 = vadd.xlane.f32.xlu0 %v4379
        %v4381 = vpop.xlane.xlu0 %4380
        %v4382 = vsel %vm637, %v4360, 0.0
        %4383 = vadd.xlane.f32.xlu0 %v4382
        %v4384 = vpop.xlane.xlu0 %4383
        %v4385 = vsel %vm637, %v4361, 0.0
        %4386 = vadd.xlane.f32.xlu0 %v4385
        %v4387 = vpop.xlane.xlu0 %4386
        %v4388 = vsel %vm637, %v4362, 0.0
        %4389 = vadd.xlane.f32.xlu0 %v4388
        %v4390 = vpop.xlane.xlu0 %4389
        %v4391 = vmul.f32 %v4369, %v2291
        %v4392 = vmul.f32 %v4372, %v2291
        %v4393 = vmul.f32 %v4375, %v2291
        %v4394 = vmul.f32 %v4378, %v2291
        %v4395 = vmul.f32 %v4381, %v2291
        %v4396 = vmul.f32 %v4384, %v2291
        %v4397 = vmul.f32 %v4387, %v2291
        %v4398 = vmul.f32 %v4390, %v2291
        %v4399 = vsub.f32 %v4355, %v4391
        %v4400 = vsub.f32 %v4356, %v4392
        %v4401 = vsub.f32 %v4357, %v4393
        %v4402 = vsub.f32 %v4358, %v4394
        %v4403 = vsub.f32 %v4359, %v4395
        %v4404 = vsub.f32 %v4360, %v4396
        %v4405 = vsub.f32 %v4361, %v4397
        %v4406 = vsub.f32 %v4362, %v4398
        %v4407 = vmul.f32 %v4399, %v4399
        %v4408 = vmul.f32 %v4400, %v4400
        %v4409 = vmul.f32 %v4401, %v4401
        %v4410 = vmul.f32 %v4402, %v4402
        %v4411 = vmul.f32 %v4403, %v4403
        %v4412 = vmul.f32 %v4404, %v4404
        %v4413 = vmul.f32 %v4405, %v4405
        %v4414 = vmul.f32 %v4406, %v4406
        %v4415 = vsel %vm637, %v4407, 0.0
        %4416 = vadd.xlane.f32.xlu0 %v4415
        %v4417 = vpop.xlane.xlu0 %4416
        %v4418 = vsel %vm637, %v4408, 0.0
        %4419 = vadd.xlane.f32.xlu0 %v4418
        %v4420 = vpop.xlane.xlu0 %4419
        %v4421 = vsel %vm637, %v4409, 0.0
        %4422 = vadd.xlane.f32.xlu0 %v4421
        %v4423 = vpop.xlane.xlu0 %4422
        %v4424 = vsel %vm637, %v4410, 0.0
        %4425 = vadd.xlane.f32.xlu0 %v4424
        %v4426 = vpop.xlane.xlu0 %4425
        %v4427 = vsel %vm637, %v4411, 0.0
        %4428 = vadd.xlane.f32.xlu0 %v4427
        %v4429 = vpop.xlane.xlu0 %4428
        %v4430 = vsel %vm637, %v4412, 0.0
        %4431 = vadd.xlane.f32.xlu0 %v4430
        %v4432 = vpop.xlane.xlu0 %4431
        %v4433 = vsel %vm637, %v4413, 0.0
        %4434 = vadd.xlane.f32.xlu0 %v4433
        %v4435 = vpop.xlane.xlu0 %4434
        %v4436 = vsel %vm637, %v4414, 0.0
        %4437 = vadd.xlane.f32.xlu0 %v4436
        %v4438 = vpop.xlane.xlu0 %4437
        %v4439 = vmul.f32 %v4417, %v2291
        %v4440 = vmul.f32 %v4420, %v2291
        %v4441 = vmul.f32 %v4423, %v2291
        %v4442 = vmul.f32 %v4426, %v2291
        %v4443 = vmul.f32 %v4429, %v2291
        %v4444 = vmul.f32 %v4432, %v2291
        %v4445 = vmul.f32 %v4435, %v2291
        %v4446 = vmul.f32 %v4438, %v2291
        %v4447 = vadd.f32 %v4439, 1e-05
        %v4448 = vadd.f32 %v4440, 1e-05
        %v4449 = vadd.f32 %v4441, 1e-05
        %v4450 = vadd.f32 %v4442, 1e-05
        %v4451 = vadd.f32 %v4443, 1e-05
        %v4452 = vadd.f32 %v4444, 1e-05
        %v4453 = vadd.f32 %v4445, 1e-05
        %v4454 = vadd.f32 %v4446, 1e-05
        %v4455 = vrsqrt.pop %v4447
        %v4456 = vmul.f32 %v4455, %v4447
        %v4457 = vmul.f32 %v4456, %v4455
        %v4458 = vmul.f32 0.5, %v4457
        %v4459 = vsub.f32 1.5, %v4458
        %v4460 = vmul.f32 %v4455, %v4459
        %vm4461 = vweird.f32 %v4447
        %vm4462 = vweird.f32 %v4455
        %vm4463 = vmor %vm4461, %vm4462
        %v4464 = vsel %vm4463, %v4455, %v4460
        %v4465 = vrsqrt.pop %v4448
        %v4466 = vmul.f32 %v4465, %v4448
        %v4467 = vmul.f32 %v4466, %v4465
        %v4468 = vmul.f32 0.5, %v4467
        %v4469 = vsub.f32 1.5, %v4468
        %v4470 = vmul.f32 %v4465, %v4469
        %vm4471 = vweird.f32 %v4448
        %vm4472 = vweird.f32 %v4465
        %vm4473 = vmor %vm4471, %vm4472
        %v4474 = vsel %vm4473, %v4465, %v4470
        %v4475 = vrsqrt.pop %v4449
        %v4476 = vmul.f32 %v4475, %v4449
        %v4477 = vmul.f32 %v4476, %v4475
        %v4478 = vmul.f32 0.5, %v4477
        %v4479 = vsub.f32 1.5, %v4478
        %v4480 = vmul.f32 %v4475, %v4479
        %vm4481 = vweird.f32 %v4449
        %vm4482 = vweird.f32 %v4475
        %vm4483 = vmor %vm4481, %vm4482
        %v4484 = vsel %vm4483, %v4475, %v4480
        %v4485 = vrsqrt.pop %v4450
        %v4486 = vmul.f32 %v4485, %v4450
        %v4487 = vmul.f32 %v4486, %v4485
        %v4488 = vmul.f32 0.5, %v4487
        %v4489 = vsub.f32 1.5, %v4488
        %v4490 = vmul.f32 %v4485, %v4489
        %vm4491 = vweird.f32 %v4450
        %vm4492 = vweird.f32 %v4485
        %vm4493 = vmor %vm4491, %vm4492
        %v4494 = vsel %vm4493, %v4485, %v4490
        %v4495 = vrsqrt.pop %v4451
        %v4496 = vmul.f32 %v4495, %v4451
        %v4497 = vmul.f32 %v4496, %v4495
        %v4498 = vmul.f32 0.5, %v4497
        %v4499 = vsub.f32 1.5, %v4498
        %v4500 = vmul.f32 %v4495, %v4499
        %vm4501 = vweird.f32 %v4451
        %vm4502 = vweird.f32 %v4495
        %vm4503 = vmor %vm4501, %vm4502
        %v4504 = vsel %vm4503, %v4495, %v4500
        %v4505 = vrsqrt.pop %v4452
        %v4506 = vmul.f32 %v4505, %v4452
        %v4507 = vmul.f32 %v4506, %v4505
        %v4508 = vmul.f32 0.5, %v4507
        %v4509 = vsub.f32 1.5, %v4508
        %v4510 = vmul.f32 %v4505, %v4509
        %vm4511 = vweird.f32 %v4452
        %vm4512 = vweird.f32 %v4505
        %vm4513 = vmor %vm4511, %vm4512
        %v4514 = vsel %vm4513, %v4505, %v4510
        %v4515 = vrsqrt.pop %v4453
        %v4516 = vmul.f32 %v4515, %v4453
        %v4517 = vmul.f32 %v4516, %v4515
        %v4518 = vmul.f32 0.5, %v4517
        %v4519 = vsub.f32 1.5, %v4518
        %v4520 = vmul.f32 %v4515, %v4519
        %vm4521 = vweird.f32 %v4453
        %vm4522 = vweird.f32 %v4515
        %vm4523 = vmor %vm4521, %vm4522
        %v4524 = vsel %vm4523, %v4515, %v4520
        %v4525 = vrsqrt.pop %v4454
        %v4526 = vmul.f32 %v4525, %v4454
        %v4527 = vmul.f32 %v4526, %v4525
        %v4528 = vmul.f32 0.5, %v4527
        %v4529 = vsub.f32 1.5, %v4528
        %v4530 = vmul.f32 %v4525, %v4529
        %vm4531 = vweird.f32 %v4454
        %vm4532 = vweird.f32 %v4525
        %vm4533 = vmor %vm4531, %vm4532
        %v4534 = vsel %vm4533, %v4525, %v4530
        %v4535 = vmul.f32 %v4399, %v4464
        %v4536 = vmul.f32 %v4400, %v4474
        %v4537 = vmul.f32 %v4401, %v4484
        %v4538 = vmul.f32 %v4402, %v4494
        %v4539 = vmul.f32 %v4403, %v4504
        %v4540 = vmul.f32 %v4404, %v4514
        %v4541 = vmul.f32 %v4405, %v4524
        %v4542 = vmul.f32 %v4406, %v4534
        %v4544 = vperm.slane %v4364, 0
        %v4546 = vmul.f32 %v4535, %v4544
        %v4547 = vmul.f32 %v4536, %v4544
        %v4548 = vmul.f32 %v4537, %v4544
        %v4549 = vmul.f32 %v4538, %v4544
        %v4550 = vmul.f32 %v4539, %v4544
        %v4551 = vmul.f32 %v4540, %v4544
        %v4552 = vmul.f32 %v4541, %v4544
        %v4553 = vmul.f32 %v4542, %v4544
        %v4555 = vperm.slane %v4366, 0
        %v4557 = vadd.f32 %v4546, %v4555
        %v4558 = vadd.f32 %v4547, %v4555
        %v4559 = vadd.f32 %v4548, %v4555
        %v4560 = vadd.f32 %v4549, %v4555
        %v4561 = vadd.f32 %v4550, %v4555
        %v4562 = vadd.f32 %v4551, %v4555
        %v4563 = vadd.f32 %v4552, %v4555
        %v4564 = vadd.f32 %v4553, %v4555
        %s4565 = scalar_lea.vmem %s7, 64
        %v4566 = vld [vmem:[%s4565] sm:$0xff]
        %v4567 = vld [vmem:[%s4565 + $0x8] sm:$0xff]
        %v4568 = vld [vmem:[%s4565 + $0x10] sm:$0xff]
        %v4569 = vld [vmem:[%s4565 + $0x18] sm:$0xff]
        %v4570 = vld [vmem:[%s4565 + $0x20] sm:$0xff]
        %v4571 = vld [vmem:[%s4565 + $0x28] sm:$0xff]
        %v4572 = vld [vmem:[%s4565 + $0x30] sm:$0xff]
        %v4573 = vld [vmem:[%s4565 + $0x38] sm:$0xff]
        %s4574 = scalar_lea.vmem %s8, 1
        %v4575 = vld [vmem:[%s4574] sm:$0x1]
        %v4577 = vperm.slane %v4575, 0
        %v4580 = vsel %vm637, %v4557, 0
        %v4583 = vsel %vm637, %v4558, 0
        %v4586 = vsel %vm637, %v4559, 0
        %v4589 = vsel %vm637, %v4560, 0
        %v4592 = vsel %vm637, %v4561, 0
        %v4595 = vsel %vm637, %v4562, 0
        %v4598 = vsel %vm637, %v4563, 0
        %v4601 = vsel %vm637, %v4564, 0
        %4603 = vmatpush.msra.mxu0 0.0
        %4604 = vmatpush.msra.mxu0 0.0
        %4605 = vmatpush.msra.mxu0 0.0
        %4606 = vmatpush.msra.mxu0 0.0
        %4607 = vmatpush.msra.mxu0 0.0
        %4608 = vmatpush.msra.mxu0 0.0
        %4609 = vmatpush.msra.mxu0 0.0
        %4610 = vmatpush.msra.mxu0 0.0
        %4611 = vmatpush.msra.mxu0 %v4573
        %4612 = vmatpush.msra.mxu0 %v4572
        %4613 = vmatpush.msra.mxu0 %v4571
        %4614 = vmatpush.msra.mxu0 %v4570
        %4615 = vmatpush.msra.mxu0 %v4569
        %4616 = vmatpush.msra.mxu0 %v4568
        %4617 = vmatpush.msra.mxu0 %v4567
        %4618 = vmatpush.msra.mxu0 %v4566
        %4619 = vmatmul.f32.gmra.mxu0 %v4580
        %v4620 = vpop.f32.mrf.mxu0
        %v4621 = vadd.f32 %v4577, %v4620
        %4622 = vmatmul.f32.gmra.mxu0 %v4583
        %v4623 = vpop.f32.mrf.mxu0
        %v4624 = vadd.f32 %v4577, %v4623
        %4625 = vmatmul.f32.gmra.mxu0 %v4586
        %v4626 = vpop.f32.mrf.mxu0
        %v4627 = vadd.f32 %v4577, %v4626
        %4628 = vmatmul.f32.gmra.mxu0 %v4589
        %v4629 = vpop.f32.mrf.mxu0
        %v4630 = vadd.f32 %v4577, %v4629
        %4631 = vmatmul.f32.gmra.mxu0 %v4592
        %v4632 = vpop.f32.mrf.mxu0
        %v4633 = vadd.f32 %v4577, %v4632
        %4634 = vmatmul.f32.gmra.mxu0 %v4595
        %v4635 = vpop.f32.mrf.mxu0
        %v4636 = vadd.f32 %v4577, %v4635
        %4637 = vmatmul.f32.gmra.mxu0 %v4598
        %v4638 = vpop.f32.mrf.mxu0
        %v4639 = vadd.f32 %v4577, %v4638
        %4640 = vmatmul.f32.gmra.mxu0 %v4601
        %v4641 = vpop.f32.mrf.mxu0
        %v4642 = vadd.f32 %v4577, %v4641
        %4643 = vdwg.mxu0
        %v4644 = vmax.f32 %v4621, 0.0
        %v4645 = vmax.f32 %v4624, 0.0
        %v4646 = vmax.f32 %v4627, 0.0
        %v4647 = vmax.f32 %v4630, 0.0
        %v4648 = vmax.f32 %v4633, 0.0
        %v4649 = vmax.f32 %v4636, 0.0
        %v4650 = vmax.f32 %v4639, 0.0
        %v4651 = vmax.f32 %v4642, 0.0
        %s4652 = scalar_lea.vmem %s9, 128
        %v4653 = vld [vmem:[%s4652] sm:$0xff]
        %v4654 = vld [vmem:[%s4652 + $0x8] sm:$0xff]
        %v4655 = vld [vmem:[%s4652 + $0x10] sm:$0xff]
        %v4656 = vld [vmem:[%s4652 + $0x18] sm:$0xff]
        %v4657 = vld [vmem:[%s4652 + $0x20] sm:$0xff]
        %v4658 = vld [vmem:[%s4652 + $0x28] sm:$0xff]
        %v4659 = vld [vmem:[%s4652 + $0x30] sm:$0xff]
        %v4660 = vld [vmem:[%s4652 + $0x38] sm:$0xff]
        %v4661 = vld [vmem:[%s4652 + $0x40] sm:$0xff]
        %v4662 = vld [vmem:[%s4652 + $0x48] sm:$0xff]
        %v4663 = vld [vmem:[%s4652 + $0x50] sm:$0xff]
        %v4664 = vld [vmem:[%s4652 + $0x58] sm:$0xff]
        %v4665 = vld [vmem:[%s4652 + $0x60] sm:$0xff]
        %v4666 = vld [vmem:[%s4652 + $0x68] sm:$0xff]
        %v4667 = vld [vmem:[%s4652 + $0x70] sm:$0xff]
        %v4668 = vld [vmem:[%s4652 + $0x78] sm:$0xff]
        %s4669 = scalar_lea.vmem %s10, 1
        %v4670 = vld [vmem:[%s4669] sm:$0x1]
        %v4672 = vperm.slane %v4670, 0
        %4674 = vmatpush.msra.mxu0 %v4668
        %4675 = vmatpush.msra.mxu0 %v4667
        %4676 = vmatpush.msra.mxu0 %v4666
        %4677 = vmatpush.msra.mxu0 %v4665
        %4678 = vmatpush.msra.mxu0 %v4664
        %4679 = vmatpush.msra.mxu0 %v4663
        %4680 = vmatpush.msra.mxu0 %v4662
        %4681 = vmatpush.msra.mxu0 %v4661
        %4682 = vmatpush.msra.mxu0 %v4660
        %4683 = vmatpush.msra.mxu0 %v4659
        %4684 = vmatpush.msra.mxu0 %v4658
        %4685 = vmatpush.msra.mxu0 %v4657
        %4686 = vmatpush.msra.mxu0 %v4656
        %4687 = vmatpush.msra.mxu0 %v4655
        %4688 = vmatpush.msra.mxu0 %v4654
        %4689 = vmatpush.msra.mxu0 %v4653
        %4690 = vmatmul.f32.gmra.mxu0 %v4644
        %v4691 = vpop.f32.mrf.mxu0
        %v4692 = vadd.f32 %v4672, %v4691
        %4693 = vmatmul.f32.gmra.mxu0 %v4645
        %v4694 = vpop.f32.mrf.mxu0
        %v4695 = vadd.f32 %v4672, %v4694
        %4696 = vmatmul.f32.gmra.mxu0 %v4646
        %v4697 = vpop.f32.mrf.mxu0
        %v4698 = vadd.f32 %v4672, %v4697
        %4699 = vmatmul.f32.gmra.mxu0 %v4647
        %v4700 = vpop.f32.mrf.mxu0
        %v4701 = vadd.f32 %v4672, %v4700
        %4702 = vmatmul.f32.gmra.mxu0 %v4648
        %v4703 = vpop.f32.mrf.mxu0
        %v4704 = vadd.f32 %v4672, %v4703
        %4705 = vmatmul.f32.gmra.mxu0 %v4649
        %v4706 = vpop.f32.mrf.mxu0
        %v4707 = vadd.f32 %v4672, %v4706
        %4708 = vmatmul.f32.gmra.mxu0 %v4650
        %v4709 = vpop.f32.mrf.mxu0
        %v4710 = vadd.f32 %v4672, %v4709
        %4711 = vmatmul.f32.gmra.mxu0 %v4651
        %v4712 = vpop.f32.mrf.mxu0
        %v4713 = vadd.f32 %v4672, %v4712
        %4714 = vdwg.mxu0
        %v4715 = vadd.f32 %v4557, %v4692
        %v4716 = vadd.f32 %v4558, %v4695
        %v4717 = vadd.f32 %v4559, %v4698
        %v4718 = vadd.f32 %v4560, %v4701
        %v4719 = vadd.f32 %v4561, %v4704
        %v4720 = vadd.f32 %v4562, %v4707
        %v4721 = vadd.f32 %v4563, %v4710
        %v4722 = vadd.f32 %v4564, %v4713
        %s4723 = scalar_lea.vmem %s13, 1
        %v4724 = vld [vmem:[%s4723] sm:$0x1]
        %s4725 = scalar_lea.vmem %s14, 1
        %v4726 = vld [vmem:[%s4725] sm:$0x1]
        %v4727 = vsel %vm637, %v4715, 0.0
        %4728 = vadd.xlane.f32.xlu0 %v4727
        %v4729 = vpop.xlane.xlu0 %4728
        %v4730 = vsel %vm637, %v4716, 0.0
        %4731 = vadd.xlane.f32.xlu0 %v4730
        %v4732 = vpop.xlane.xlu0 %4731
        %v4733 = vsel %vm637, %v4717, 0.0
        %4734 = vadd.xlane.f32.xlu0 %v4733
        %v4735 = vpop.xlane.xlu0 %4734
        %v4736 = vsel %vm637, %v4718, 0.0
        %4737 = vadd.xlane.f32.xlu0 %v4736
        %v4738 = vpop.xlane.xlu0 %4737
        %v4739 = vsel %vm637, %v4719, 0.0
        %4740 = vadd.xlane.f32.xlu0 %v4739
        %v4741 = vpop.xlane.xlu0 %4740
        %v4742 = vsel %vm637, %v4720, 0.0
        %4743 = vadd.xlane.f32.xlu0 %v4742
        %v4744 = vpop.xlane.xlu0 %4743
        %v4745 = vsel %vm637, %v4721, 0.0
        %4746 = vadd.xlane.f32.xlu0 %v4745
        %v4747 = vpop.xlane.xlu0 %4746
        %v4748 = vsel %vm637, %v4722, 0.0
        %4749 = vadd.xlane.f32.xlu0 %v4748
        %v4750 = vpop.xlane.xlu0 %4749
        %v4751 = vmul.f32 %v4729, %v2291
        %v4752 = vmul.f32 %v4732, %v2291
        %v4753 = vmul.f32 %v4735, %v2291
        %v4754 = vmul.f32 %v4738, %v2291
        %v4755 = vmul.f32 %v4741, %v2291
        %v4756 = vmul.f32 %v4744, %v2291
        %v4757 = vmul.f32 %v4747, %v2291
        %v4758 = vmul.f32 %v4750, %v2291
        %v4759 = vsub.f32 %v4715, %v4751
        %v4760 = vsub.f32 %v4716, %v4752
        %v4761 = vsub.f32 %v4717, %v4753
        %v4762 = vsub.f32 %v4718, %v4754
        %v4763 = vsub.f32 %v4719, %v4755
        %v4764 = vsub.f32 %v4720, %v4756
        %v4765 = vsub.f32 %v4721, %v4757
        %v4766 = vsub.f32 %v4722, %v4758
        %v4767 = vmul.f32 %v4759, %v4759
        %v4768 = vmul.f32 %v4760, %v4760
        %v4769 = vmul.f32 %v4761, %v4761
        %v4770 = vmul.f32 %v4762, %v4762
        %v4771 = vmul.f32 %v4763, %v4763
        %v4772 = vmul.f32 %v4764, %v4764
        %v4773 = vmul.f32 %v4765, %v4765
        %v4774 = vmul.f32 %v4766, %v4766
        %v4775 = vsel %vm637, %v4767, 0.0
        %4776 = vadd.xlane.f32.xlu0 %v4775
        %v4777 = vpop.xlane.xlu0 %4776
        %v4778 = vsel %vm637, %v4768, 0.0
        %4779 = vadd.xlane.f32.xlu0 %v4778
        %v4780 = vpop.xlane.xlu0 %4779
        %v4781 = vsel %vm637, %v4769, 0.0
        %4782 = vadd.xlane.f32.xlu0 %v4781
        %v4783 = vpop.xlane.xlu0 %4782
        %v4784 = vsel %vm637, %v4770, 0.0
        %4785 = vadd.xlane.f32.xlu0 %v4784
        %v4786 = vpop.xlane.xlu0 %4785
        %v4787 = vsel %vm637, %v4771, 0.0
        %4788 = vadd.xlane.f32.xlu0 %v4787
        %v4789 = vpop.xlane.xlu0 %4788
        %v4790 = vsel %vm637, %v4772, 0.0
        %4791 = vadd.xlane.f32.xlu0 %v4790
        %v4792 = vpop.xlane.xlu0 %4791
        %v4793 = vsel %vm637, %v4773, 0.0
        %4794 = vadd.xlane.f32.xlu0 %v4793
        %v4795 = vpop.xlane.xlu0 %4794
        %v4796 = vsel %vm637, %v4774, 0.0
        %4797 = vadd.xlane.f32.xlu0 %v4796
        %v4798 = vpop.xlane.xlu0 %4797
        %v4799 = vmul.f32 %v4777, %v2291
        %v4800 = vmul.f32 %v4780, %v2291
        %v4801 = vmul.f32 %v4783, %v2291
        %v4802 = vmul.f32 %v4786, %v2291
        %v4803 = vmul.f32 %v4789, %v2291
        %v4804 = vmul.f32 %v4792, %v2291
        %v4805 = vmul.f32 %v4795, %v2291
        %v4806 = vmul.f32 %v4798, %v2291
        %v4807 = vadd.f32 %v4799, 1e-05
        %v4808 = vadd.f32 %v4800, 1e-05
        %v4809 = vadd.f32 %v4801, 1e-05
        %v4810 = vadd.f32 %v4802, 1e-05
        %v4811 = vadd.f32 %v4803, 1e-05
        %v4812 = vadd.f32 %v4804, 1e-05
        %v4813 = vadd.f32 %v4805, 1e-05
        %v4814 = vadd.f32 %v4806, 1e-05
        %v4815 = vrsqrt.pop %v4807
        %v4816 = vmul.f32 %v4815, %v4807
        %v4817 = vmul.f32 %v4816, %v4815
        %v4818 = vmul.f32 0.5, %v4817
        %v4819 = vsub.f32 1.5, %v4818
        %v4820 = vmul.f32 %v4815, %v4819
        %vm4821 = vweird.f32 %v4807
        %vm4822 = vweird.f32 %v4815
        %vm4823 = vmor %vm4821, %vm4822
        %v4824 = vsel %vm4823, %v4815, %v4820
        %v4825 = vrsqrt.pop %v4808
        %v4826 = vmul.f32 %v4825, %v4808
        %v4827 = vmul.f32 %v4826, %v4825
        %v4828 = vmul.f32 0.5, %v4827
        %v4829 = vsub.f32 1.5, %v4828
        %v4830 = vmul.f32 %v4825, %v4829
        %vm4831 = vweird.f32 %v4808
        %vm4832 = vweird.f32 %v4825
        %vm4833 = vmor %vm4831, %vm4832
        %v4834 = vsel %vm4833, %v4825, %v4830
        %v4835 = vrsqrt.pop %v4809
        %v4836 = vmul.f32 %v4835, %v4809
        %v4837 = vmul.f32 %v4836, %v4835
        %v4838 = vmul.f32 0.5, %v4837
        %v4839 = vsub.f32 1.5, %v4838
        %v4840 = vmul.f32 %v4835, %v4839
        %vm4841 = vweird.f32 %v4809
        %vm4842 = vweird.f32 %v4835
        %vm4843 = vmor %vm4841, %vm4842
        %v4844 = vsel %vm4843, %v4835, %v4840
        %v4845 = vrsqrt.pop %v4810
        %v4846 = vmul.f32 %v4845, %v4810
        %v4847 = vmul.f32 %v4846, %v4845
        %v4848 = vmul.f32 0.5, %v4847
        %v4849 = vsub.f32 1.5, %v4848
        %v4850 = vmul.f32 %v4845, %v4849
        %vm4851 = vweird.f32 %v4810
        %vm4852 = vweird.f32 %v4845
        %vm4853 = vmor %vm4851, %vm4852
        %v4854 = vsel %vm4853, %v4845, %v4850
        %v4855 = vrsqrt.pop %v4811
        %v4856 = vmul.f32 %v4855, %v4811
        %v4857 = vmul.f32 %v4856, %v4855
        %v4858 = vmul.f32 0.5, %v4857
        %v4859 = vsub.f32 1.5, %v4858
        %v4860 = vmul.f32 %v4855, %v4859
        %vm4861 = vweird.f32 %v4811
        %vm4862 = vweird.f32 %v4855
        %vm4863 = vmor %vm4861, %vm4862
        %v4864 = vsel %vm4863, %v4855, %v4860
        %v4865 = vrsqrt.pop %v4812
        %v4866 = vmul.f32 %v4865, %v4812
        %v4867 = vmul.f32 %v4866, %v4865
        %v4868 = vmul.f32 0.5, %v4867
        %v4869 = vsub.f32 1.5, %v4868
        %v4870 = vmul.f32 %v4865, %v4869
        %vm4871 = vweird.f32 %v4812
        %vm4872 = vweird.f32 %v4865
        %vm4873 = vmor %vm4871, %vm4872
        %v4874 = vsel %vm4873, %v4865, %v4870
        %v4875 = vrsqrt.pop %v4813
        %v4876 = vmul.f32 %v4875, %v4813
        %v4877 = vmul.f32 %v4876, %v4875
        %v4878 = vmul.f32 0.5, %v4877
        %v4879 = vsub.f32 1.5, %v4878
        %v4880 = vmul.f32 %v4875, %v4879
        %vm4881 = vweird.f32 %v4813
        %vm4882 = vweird.f32 %v4875
        %vm4883 = vmor %vm4881, %vm4882
        %v4884 = vsel %vm4883, %v4875, %v4880
        %v4885 = vrsqrt.pop %v4814
        %v4886 = vmul.f32 %v4885, %v4814
        %v4887 = vmul.f32 %v4886, %v4885
        %v4888 = vmul.f32 0.5, %v4887
        %v4889 = vsub.f32 1.5, %v4888
        %v4890 = vmul.f32 %v4885, %v4889
        %vm4891 = vweird.f32 %v4814
        %vm4892 = vweird.f32 %v4885
        %vm4893 = vmor %vm4891, %vm4892
        %v4894 = vsel %vm4893, %v4885, %v4890
        %v4895 = vmul.f32 %v4759, %v4824
        %v4896 = vmul.f32 %v4760, %v4834
        %v4897 = vmul.f32 %v4761, %v4844
        %v4898 = vmul.f32 %v4762, %v4854
        %v4899 = vmul.f32 %v4763, %v4864
        %v4900 = vmul.f32 %v4764, %v4874
        %v4901 = vmul.f32 %v4765, %v4884
        %v4902 = vmul.f32 %v4766, %v4894
        %v4904 = vperm.slane %v4724, 0
        %v4906 = vmul.f32 %v4895, %v4904
        %v4907 = vmul.f32 %v4896, %v4904
        %v4908 = vmul.f32 %v4897, %v4904
        %v4909 = vmul.f32 %v4898, %v4904
        %v4910 = vmul.f32 %v4899, %v4904
        %v4911 = vmul.f32 %v4900, %v4904
        %v4912 = vmul.f32 %v4901, %v4904
        %v4913 = vmul.f32 %v4902, %v4904
        %v4915 = vperm.slane %v4726, 0
        %v4917 = vadd.f32 %v4906, %v4915
        %v4918 = vadd.f32 %v4907, %v4915
        %v4919 = vadd.f32 %v4908, %v4915
        %v4920 = vadd.f32 %v4909, %v4915
        %v4921 = vadd.f32 %v4910, %v4915
        %v4922 = vadd.f32 %v4911, %v4915
        %v4923 = vadd.f32 %v4912, %v4915
        %v4924 = vadd.f32 %v4913, %v4915
        %4925 = vst.msk [vmem:[#allocation2] sm:$0xff] %vm637, %v4917
        %4926 = vst.msk [vmem:[#allocation2 + $0x8] sm:$0xff] %vm637, %v4918
        %4927 = vst.msk [vmem:[#allocation2 + $0x10] sm:$0xff] %vm637, %v4919
        %4928 = vst.msk [vmem:[#allocation2 + $0x18] sm:$0xff] %vm637, %v4920
        %4929 = vst.msk [vmem:[#allocation2 + $0x20] sm:$0xff] %vm637, %v4921
        %4930 = vst.msk [vmem:[#allocation2 + $0x28] sm:$0xff] %vm637, %v4922
        %4931 = vst.msk [vmem:[#allocation2 + $0x30] sm:$0xff] %vm637, %v4923
        %4932 = vst.msk [vmem:[#allocation2 + $0x38] sm:$0xff] %vm637, %v4924
        %v4933 = vld [vmem:[#allocation2] sm:$0xff]
        %v4934 = vld [vmem:[#allocation2 + $0x8] sm:$0xff]
        %v4935 = vld [vmem:[#allocation2 + $0x10] sm:$0xff]
        %v4936 = vld [vmem:[#allocation2 + $0x18] sm:$0xff]
        %v4937 = vld [vmem:[#allocation2 + $0x20] sm:$0xff]
        %v4938 = vld [vmem:[#allocation2 + $0x28] sm:$0xff]
        %v4939 = vld [vmem:[#allocation2 + $0x30] sm:$0xff]
        %v4940 = vld [vmem:[#allocation2 + $0x38] sm:$0xff]
        %s4941 = scalar_lea.vmem %s3, 256
        %v4942 = vld [vmem:[%s4941] sm:$0xff]
        %v4943 = vld [vmem:[%s4941 + $0x8] sm:$0xff]
        %v4944 = vld [vmem:[%s4941 + $0x10] sm:$0xff]
        %v4945 = vld [vmem:[%s4941 + $0x18] sm:$0xff]
        %v4946 = vld [vmem:[%s4941 + $0x20] sm:$0xff]
        %v4947 = vld [vmem:[%s4941 + $0x28] sm:$0xff]
        %v4948 = vld [vmem:[%s4941 + $0x30] sm:$0xff]
        %v4949 = vld [vmem:[%s4941 + $0x38] sm:$0xff]
        %v4950 = vld [vmem:[%s4941 + $0x40] sm:$0xff]
        %v4951 = vld [vmem:[%s4941 + $0x48] sm:$0xff]
        %v4952 = vld [vmem:[%s4941 + $0x50] sm:$0xff]
        %v4953 = vld [vmem:[%s4941 + $0x58] sm:$0xff]
        %v4954 = vld [vmem:[%s4941 + $0x60] sm:$0xff]
        %v4955 = vld [vmem:[%s4941 + $0x68] sm:$0xff]
        %v4956 = vld [vmem:[%s4941 + $0x70] sm:$0xff]
        %v4957 = vld [vmem:[%s4941 + $0x78] sm:$0xff]
        %s4958 = scalar_lea.vmem %s4, 4
        %v4959 = vld [vmem:[%s4958] sm:$0x3]
        %v4961 = vperm.slane %v4959, 0
        %v4962 = vperm.slane %v4959, 1
        %v4966 = vsel %vm637, %v4933, 0
        %v4969 = vsel %vm637, %v4934, 0
        %v4972 = vsel %vm637, %v4935, 0
        %v4975 = vsel %vm637, %v4936, 0
        %v4978 = vsel %vm637, %v4937, 0
        %v4981 = vsel %vm637, %v4938, 0
        %v4984 = vsel %vm637, %v4939, 0
        %v4987 = vsel %vm637, %v4940, 0
        %4989 = vmatpush.msra.mxu0 0.0
        %4990 = vmatpush.msra.mxu0 0.0
        %4991 = vmatpush.msra.mxu0 0.0
        %4992 = vmatpush.msra.mxu0 0.0
        %4993 = vmatpush.msra.mxu0 0.0
        %4994 = vmatpush.msra.mxu0 0.0
        %4995 = vmatpush.msra.mxu0 0.0
        %4996 = vmatpush.msra.mxu0 0.0
        %4997 = vmatpush.msra.mxu0 %v4956
        %4998 = vmatpush.msra.mxu0 %v4954
        %4999 = vmatpush.msra.mxu0 %v4952
        %5000 = vmatpush.msra.mxu0 %v4950
        %5001 = vmatpush.msra.mxu0 %v4948
        %5002 = vmatpush.msra.mxu0 %v4946
        %5003 = vmatpush.msra.mxu0 %v4944
        %5004 = vmatpush.msra.mxu0 %v4942
        %5005 = vmatmul.f32.gmra.mxu0 %v4966
        %v5006 = vpop.f32.mrf.mxu0
        %v5007 = vadd.f32 %v4961, %v5006
        %5008 = vmatmul.f32.gmra.mxu0 %v4969
        %v5009 = vpop.f32.mrf.mxu0
        %v5010 = vadd.f32 %v4961, %v5009
        %5011 = vmatmul.f32.gmra.mxu0 %v4972
        %v5012 = vpop.f32.mrf.mxu0
        %v5013 = vadd.f32 %v4961, %v5012
        %5014 = vmatmul.f32.gmra.mxu0 %v4975
        %v5015 = vpop.f32.mrf.mxu0
        %v5016 = vadd.f32 %v4961, %v5015
        %5017 = vmatmul.f32.gmra.mxu0 %v4978
        %v5018 = vpop.f32.mrf.mxu0
        %v5019 = vadd.f32 %v4961, %v5018
        %5020 = vmatmul.f32.gmra.mxu0 %v4981
        %v5021 = vpop.f32.mrf.mxu0
        %v5022 = vadd.f32 %v4961, %v5021
        %5023 = vmatmul.f32.gmra.mxu0 %v4984
        %v5024 = vpop.f32.mrf.mxu0
        %v5025 = vadd.f32 %v4961, %v5024
        %5026 = vmatmul.f32.gmra.mxu0 %v4987
        %v5027 = vpop.f32.mrf.mxu0
        %v5028 = vadd.f32 %v4961, %v5027
        %5029 = vdwg.mxu0
        %5030 = vmatpush.msra.mxu0 0.0
        %5031 = vmatpush.msra.mxu0 0.0
        %5032 = vmatpush.msra.mxu0 0.0
        %5033 = vmatpush.msra.mxu0 0.0
        %5034 = vmatpush.msra.mxu0 0.0
        %5035 = vmatpush.msra.mxu0 0.0
        %5036 = vmatpush.msra.mxu0 0.0
        %5037 = vmatpush.msra.mxu0 0.0
        %5038 = vmatpush.msra.mxu0 %v4957
        %5039 = vmatpush.msra.mxu0 %v4955
        %5040 = vmatpush.msra.mxu0 %v4953
        %5041 = vmatpush.msra.mxu0 %v4951
        %5042 = vmatpush.msra.mxu0 %v4949
        %5043 = vmatpush.msra.mxu0 %v4947
        %5044 = vmatpush.msra.mxu0 %v4945
        %5045 = vmatpush.msra.mxu0 %v4943
        %5046 = vmatmul.f32.gmra.mxu0 %v4966
        %v5047 = vpop.f32.mrf.mxu0
        %v5048 = vadd.f32 %v4962, %v5047
        %5049 = vmatmul.f32.gmra.mxu0 %v4969
        %v5050 = vpop.f32.mrf.mxu0
        %v5051 = vadd.f32 %v4962, %v5050
        %5052 = vmatmul.f32.gmra.mxu0 %v4972
        %v5053 = vpop.f32.mrf.mxu0
        %v5054 = vadd.f32 %v4962, %v5053
        %5055 = vmatmul.f32.gmra.mxu0 %v4975
        %v5056 = vpop.f32.mrf.mxu0
        %v5057 = vadd.f32 %v4962, %v5056
        %5058 = vmatmul.f32.gmra.mxu0 %v4978
        %v5059 = vpop.f32.mrf.mxu0
        %v5060 = vadd.f32 %v4962, %v5059
        %5061 = vmatmul.f32.gmra.mxu0 %v4981
        %v5062 = vpop.f32.mrf.mxu0
        %v5063 = vadd.f32 %v4962, %v5062
        %5064 = vmatmul.f32.gmra.mxu0 %v4984
        %v5065 = vpop.f32.mrf.mxu0
        %v5066 = vadd.f32 %v4962, %v5065
        %5067 = vmatmul.f32.gmra.mxu0 %v4987
        %v5068 = vpop.f32.mrf.mxu0
        %v5069 = vadd.f32 %v4962, %v5068
        %5070 = vdwg.mxu0
        %5071 = vst [vmem:[#allocation3] sm:$0xff] %v5007
        %5072 = vst.msk [vmem:[#allocation3 + $0x8] sm:$0xff] %vm637, %v5048
        %5073 = vst [vmem:[#allocation3 + $0x10] sm:$0xff] %v5010
        %5074 = vst.msk [vmem:[#allocation3 + $0x18] sm:$0xff] %vm637, %v5051
        %5075 = vst [vmem:[#allocation3 + $0x20] sm:$0xff] %v5013
        %5076 = vst.msk [vmem:[#allocation3 + $0x28] sm:$0xff] %vm637, %v5054
        %5077 = vst [vmem:[#allocation3 + $0x30] sm:$0xff] %v5016
        %5078 = vst.msk [vmem:[#allocation3 + $0x38] sm:$0xff] %vm637, %v5057
        %5079 = vst [vmem:[#allocation3 + $0x40] sm:$0xff] %v5019
        %5080 = vst.msk [vmem:[#allocation3 + $0x48] sm:$0xff] %vm637, %v5060
        %5081 = vst [vmem:[#allocation3 + $0x50] sm:$0xff] %v5022
        %5082 = vst.msk [vmem:[#allocation3 + $0x58] sm:$0xff] %vm637, %v5063
        %5083 = vst [vmem:[#allocation3 + $0x60] sm:$0xff] %v5025
        %5084 = vst.msk [vmem:[#allocation3 + $0x68] sm:$0xff] %vm637, %v5066
        %5085 = vst [vmem:[#allocation3 + $0x70] sm:$0xff] %v5028
        %5086 = vst.msk [vmem:[#allocation3 + $0x78] sm:$0xff] %vm637, %v5069
        %v5087 = vld [vmem:[#allocation3] sm:$0xff]
        %v5088 = vld [vmem:[#allocation3 + $0x10] sm:$0xff]
        %v5089 = vld [vmem:[#allocation3 + $0x20] sm:$0xff]
        %v5090 = vld [vmem:[#allocation3 + $0x30] sm:$0xff]
        %v5091 = vld [vmem:[#allocation3 + $0x40] sm:$0xff]
        %v5092 = vld [vmem:[#allocation3 + $0x50] sm:$0xff]
        %v5093 = vld [vmem:[#allocation3 + $0x60] sm:$0xff]
        %v5094 = vld [vmem:[#allocation3 + $0x70] sm:$0xff]
        %v5095 = vld [vmem:[#allocation3 + $0x8] sm:$0xff]
        %v5096 = vld [vmem:[#allocation3 + $0x18] sm:$0xff]
        %v5097 = vld [vmem:[#allocation3 + $0x28] sm:$0xff]
        %v5098 = vld [vmem:[#allocation3 + $0x38] sm:$0xff]
        %v5099 = vld [vmem:[#allocation3 + $0x48] sm:$0xff]
        %v5100 = vld [vmem:[#allocation3 + $0x58] sm:$0xff]
        %v5101 = vld [vmem:[#allocation3 + $0x68] sm:$0xff]
        %v5102 = vld [vmem:[#allocation3 + $0x78] sm:$0xff]
        %v5103 = vld [vmem:[#allocation4] sm:$0xff]
        %v5104 = vld [vmem:[#allocation4 + $0x8] sm:$0xff]
        %v5105 = vld [vmem:[#allocation4 + $0x10] sm:$0xff]
        %v5106 = vld [vmem:[#allocation4 + $0x18] sm:$0xff]
        %v5107 = vld [vmem:[#allocation4 + $0x20] sm:$0xff]
        %v5108 = vld [vmem:[#allocation4 + $0x28] sm:$0xff]
        %v5109 = vld [vmem:[#allocation4 + $0x30] sm:$0xff]
        %v5110 = vld [vmem:[#allocation4 + $0x38] sm:$0xff]
        %5119 = vrot.lane.b32.xlu0 %v5087, 64
        %v5120 = vpop.permute.xlu0 %5119
        %5121 = vrot.lane.b32.xlu0 %v5088, 64
        %v5122 = vpop.permute.xlu0 %5121
        %5123 = vrot.lane.b32.xlu0 %v5089, 64
        %v5124 = vpop.permute.xlu0 %5123
        %5125 = vrot.lane.b32.xlu0 %v5090, 64
        %v5126 = vpop.permute.xlu0 %5125
        %5127 = vrot.lane.b32.xlu0 %v5091, 64
        %v5128 = vpop.permute.xlu0 %5127
        %5129 = vrot.lane.b32.xlu0 %v5092, 64
        %v5130 = vpop.permute.xlu0 %5129
        %5131 = vrot.lane.b32.xlu0 %v5093, 64
        %v5132 = vpop.permute.xlu0 %5131
        %5133 = vrot.lane.b32.xlu0 %v5094, 64
        %v5134 = vpop.permute.xlu0 %5133
        %v5135 = vsel %vm927, %v5087, 0
        %v5137 = vsel %vm927, %v5088, 0
        %v5139 = vsel %vm927, %v5089, 0
        %v5141 = vsel %vm927, %v5090, 0
        %v5143 = vsel %vm927, %v5091, 0
        %v5145 = vsel %vm927, %v5092, 0
        %v5147 = vsel %vm927, %v5093, 0
        %v5149 = vsel %vm927, %v5094, 0
        %v5151 = vsel %vm927, %v5120, 0
        %v5153 = vsel %vm927, %v5122, 0
        %v5155 = vsel %vm927, %v5124, 0
        %v5157 = vsel %vm927, %v5126, 0
        %v5159 = vsel %vm927, %v5128, 0
        %v5161 = vsel %vm927, %v5130, 0
        %v5163 = vsel %vm927, %v5132, 0
        %v5165 = vsel %vm927, %v5134, 0
        %5167 = vmatpush.xpose.msra.mxu0 0.0
        %5168 = vmatpush.xpose.msra.mxu0 0.0
        %5169 = vmatpush.xpose.msra.mxu0 0.0
        %5170 = vmatpush.xpose.msra.mxu0 0.0
        %5171 = vmatpush.xpose.msra.mxu0 0.0
        %5172 = vmatpush.xpose.msra.mxu0 0.0
        %5173 = vmatpush.xpose.msra.mxu0 0.0
        %5174 = vmatpush.xpose.msra.mxu0 0.0
        %5175 = vmatpush.xpose.msra.mxu0 %v5165
        %5176 = vmatpush.xpose.msra.mxu0 %v5163
        %5177 = vmatpush.xpose.msra.mxu0 %v5161
        %5178 = vmatpush.xpose.msra.mxu0 %v5159
        %5179 = vmatpush.xpose.msra.mxu0 %v5157
        %5180 = vmatpush.xpose.msra.mxu0 %v5155
        %5181 = vmatpush.xpose.msra.mxu0 %v5153
        %5182 = vmatpush.xpose.msra.mxu0 %v5151
        %5183 = vmatmul.f32.gmra.mxu0 %v5135
        %v5184 = vpop.f32.mrf.mxu0
        %v5185 = vadd.f32 %v5103, %v5184
        %5186 = vmatmul.f32.gmra.mxu0 %v5137
        %v5187 = vpop.f32.mrf.mxu0
        %v5188 = vadd.f32 %v5104, %v5187
        %5189 = vmatmul.f32.gmra.mxu0 %v5139
        %v5190 = vpop.f32.mrf.mxu0
        %v5191 = vadd.f32 %v5105, %v5190
        %5192 = vmatmul.f32.gmra.mxu0 %v5141
        %v5193 = vpop.f32.mrf.mxu0
        %v5194 = vadd.f32 %v5106, %v5193
        %5195 = vmatmul.f32.gmra.mxu0 %v5143
        %v5196 = vpop.f32.mrf.mxu0
        %v5197 = vadd.f32 %v5107, %v5196
        %5198 = vmatmul.f32.gmra.mxu0 %v5145
        %v5199 = vpop.f32.mrf.mxu0
        %v5200 = vadd.f32 %v5108, %v5199
        %5201 = vmatmul.f32.gmra.mxu0 %v5147
        %v5202 = vpop.f32.mrf.mxu0
        %v5203 = vadd.f32 %v5109, %v5202
        %5204 = vmatmul.f32.gmra.mxu0 %v5149
        %v5205 = vpop.f32.mrf.mxu0
        %v5206 = vadd.f32 %v5110, %v5205
        %5207 = vdwg.mxu0
        %v5208 = vsel %vm637, %v5185, -inf
        %5209 = vmax.xlane.f32.xlu0 %v5208
        %v5210 = vpop.xlane.xlu0 %5209
        %v5211 = vsel %vm637, %v5188, -inf
        %5212 = vmax.xlane.f32.xlu0 %v5211
        %v5213 = vpop.xlane.xlu0 %5212
        %v5214 = vsel %vm637, %v5191, -inf
        %5215 = vmax.xlane.f32.xlu0 %v5214
        %v5216 = vpop.xlane.xlu0 %5215
        %v5217 = vsel %vm637, %v5194, -inf
        %5218 = vmax.xlane.f32.xlu0 %v5217
        %v5219 = vpop.xlane.xlu0 %5218
        %v5220 = vsel %vm637, %v5197, -inf
        %5221 = vmax.xlane.f32.xlu0 %v5220
        %v5222 = vpop.xlane.xlu0 %5221
        %v5223 = vsel %vm637, %v5200, -inf
        %5224 = vmax.xlane.f32.xlu0 %v5223
        %v5225 = vpop.xlane.xlu0 %5224
        %v5226 = vsel %vm637, %v5203, -inf
        %5227 = vmax.xlane.f32.xlu0 %v5226
        %v5228 = vpop.xlane.xlu0 %5227
        %v5229 = vsel %vm637, %v5206, -inf
        %5230 = vmax.xlane.f32.xlu0 %v5229
        %v5231 = vpop.xlane.xlu0 %5230
        %v5232 = vsub.f32 %v5185, %v5210
        %v5233 = vsub.f32 %v5188, %v5213
        %v5234 = vsub.f32 %v5191, %v5216
        %v5235 = vsub.f32 %v5194, %v5219
        %v5236 = vsub.f32 %v5197, %v5222
        %v5237 = vsub.f32 %v5200, %v5225
        %v5238 = vsub.f32 %v5203, %v5228
        %v5239 = vsub.f32 %v5206, %v5231
        %v5240 = vmul.f32 %v5232, 1.442695
        %v5241 = vpow.pop %v5240
        %v5242 = vmul.f32 %v5233, 1.442695
        %v5243 = vpow.pop %v5242
        %v5244 = vmul.f32 %v5234, 1.442695
        %v5245 = vpow.pop %v5244
        %v5246 = vmul.f32 %v5235, 1.442695
        %v5247 = vpow.pop %v5246
        %v5248 = vmul.f32 %v5236, 1.442695
        %v5249 = vpow.pop %v5248
        %v5250 = vmul.f32 %v5237, 1.442695
        %v5251 = vpow.pop %v5250
        %v5252 = vmul.f32 %v5238, 1.442695
        %v5253 = vpow.pop %v5252
        %v5254 = vmul.f32 %v5239, 1.442695
        %v5255 = vpow.pop %v5254
        %v5256 = vsel %vm637, %v5241, 0.0
        %5257 = vadd.xlane.f32.xlu0 %v5256
        %v5258 = vpop.xlane.xlu0 %5257
        %v5259 = vsel %vm637, %v5243, 0.0
        %5260 = vadd.xlane.f32.xlu0 %v5259
        %v5261 = vpop.xlane.xlu0 %5260
        %v5262 = vsel %vm637, %v5245, 0.0
        %5263 = vadd.xlane.f32.xlu0 %v5262
        %v5264 = vpop.xlane.xlu0 %5263
        %v5265 = vsel %vm637, %v5247, 0.0
        %5266 = vadd.xlane.f32.xlu0 %v5265
        %v5267 = vpop.xlane.xlu0 %5266
        %v5268 = vsel %vm637, %v5249, 0.0
        %5269 = vadd.xlane.f32.xlu0 %v5268
        %v5270 = vpop.xlane.xlu0 %5269
        %v5271 = vsel %vm637, %v5251, 0.0
        %5272 = vadd.xlane.f32.xlu0 %v5271
        %v5273 = vpop.xlane.xlu0 %5272
        %v5274 = vsel %vm637, %v5253, 0.0
        %5275 = vadd.xlane.f32.xlu0 %v5274
        %v5276 = vpop.xlane.xlu0 %5275
        %v5277 = vsel %vm637, %v5255, 0.0
        %5278 = vadd.xlane.f32.xlu0 %v5277
        %v5279 = vpop.xlane.xlu0 %5278
        %v5280 = vrcp.pop %v5258
        %v5281 = vrcp.pop %v5261
        %v5282 = vrcp.pop %v5264
        %v5283 = vrcp.pop %v5267
        %v5284 = vrcp.pop %v5270
        %v5285 = vrcp.pop %v5273
        %v5286 = vrcp.pop %v5276
        %v5287 = vrcp.pop %v5279
        %v5288 = vmul.f32 %v5241, %v5280
        %v5289 = vmul.f32 %v5243, %v5281
        %v5290 = vmul.f32 %v5245, %v5282
        %v5291 = vmul.f32 %v5247, %v5283
        %v5292 = vmul.f32 %v5249, %v5284
        %v5293 = vmul.f32 %v5251, %v5285
        %v5294 = vmul.f32 %v5253, %v5286
        %v5295 = vmul.f32 %v5255, %v5287
        %s5296 = scalar_lea.vmem %s5, 128
        %v5297 = vld [vmem:[%s5296] sm:$0xff]
        %v5298 = vld [vmem:[%s5296 + $0x8] sm:$0xff]
        %v5300 = vsel %vm927, %v5095, 0
        %v5303 = vsel %vm927, %v5096, 0
        %v5306 = vsel %vm927, %v5097, 0
        %v5309 = vsel %vm927, %v5098, 0
        %v5312 = vsel %vm927, %v5099, 0
        %v5315 = vsel %vm927, %v5100, 0
        %v5318 = vsel %vm927, %v5101, 0
        %v5321 = vsel %vm927, %v5102, 0
        %5323 = vmatpush.msra.mxu0 0.0
        %5324 = vmatpush.msra.mxu0 0.0
        %5325 = vmatpush.msra.mxu0 0.0
        %5326 = vmatpush.msra.mxu0 0.0
        %5327 = vmatpush.msra.mxu0 0.0
        %5328 = vmatpush.msra.mxu0 0.0
        %5329 = vmatpush.msra.mxu0 0.0
        %5330 = vmatpush.msra.mxu0 0.0
        %5331 = vmatpush.msra.mxu0 0.0
        %5332 = vmatpush.msra.mxu0 0.0
        %5333 = vmatpush.msra.mxu0 0.0
        %5334 = vmatpush.msra.mxu0 0.0
        %5335 = vmatpush.msra.mxu0 0.0
        %5336 = vmatpush.msra.mxu0 0.0
        %5337 = vmatpush.msra.mxu0 %v5298
        %5338 = vmatpush.msra.mxu0 %v5297
        %5339 = vmatmul.f32.gmra.mxu0 %v5300
        %v5340 = vpop.f32.mrf.mxu0
        %v5341 = vadd.f32 0.0, %v5340
        %5342 = vmatmul.f32.gmra.mxu0 %v5303
        %v5343 = vpop.f32.mrf.mxu0
        %v5344 = vadd.f32 0.0, %v5343
        %5345 = vmatmul.f32.gmra.mxu0 %v5306
        %v5346 = vpop.f32.mrf.mxu0
        %v5347 = vadd.f32 0.0, %v5346
        %5348 = vmatmul.f32.gmra.mxu0 %v5309
        %v5349 = vpop.f32.mrf.mxu0
        %v5350 = vadd.f32 0.0, %v5349
        %5351 = vmatmul.f32.gmra.mxu0 %v5312
        %v5352 = vpop.f32.mrf.mxu0
        %v5353 = vadd.f32 0.0, %v5352
        %5354 = vmatmul.f32.gmra.mxu0 %v5315
        %v5355 = vpop.f32.mrf.mxu0
        %v5356 = vadd.f32 0.0, %v5355
        %5357 = vmatmul.f32.gmra.mxu0 %v5318
        %v5358 = vpop.f32.mrf.mxu0
        %v5359 = vadd.f32 0.0, %v5358
        %5360 = vmatmul.f32.gmra.mxu0 %v5321
        %v5361 = vpop.f32.mrf.mxu0
        %v5362 = vadd.f32 0.0, %v5361
        %5363 = vdwg.mxu0
        %5364 = vrot.lane.b32.xlu0 %v5087, 112
        %v5365 = vpop.permute.xlu0 %5364
        %5366 = vrot.lane.b32.xlu0 %v5088, 112
        %v5367 = vpop.permute.xlu0 %5366
        %5368 = vrot.lane.b32.xlu0 %v5089, 112
        %v5369 = vpop.permute.xlu0 %5368
        %5370 = vrot.lane.b32.xlu0 %v5090, 112
        %v5371 = vpop.permute.xlu0 %5370
        %5372 = vrot.lane.b32.xlu0 %v5091, 112
        %v5373 = vpop.permute.xlu0 %5372
        %5374 = vrot.lane.b32.xlu0 %v5092, 112
        %v5375 = vpop.permute.xlu0 %5374
        %5376 = vrot.lane.b32.xlu0 %v5093, 112
        %v5377 = vpop.permute.xlu0 %5376
        %5378 = vrot.lane.b32.xlu0 %v5094, 112
        %v5379 = vpop.permute.xlu0 %5378
        %5380 = vrot.lane.b32.xlu0 %v5087, 48
        %v5381 = vpop.permute.xlu0 %5380
        %5382 = vrot.lane.b32.xlu0 %v5088, 48
        %v5383 = vpop.permute.xlu0 %5382
        %5384 = vrot.lane.b32.xlu0 %v5089, 48
        %v5385 = vpop.permute.xlu0 %5384
        %5386 = vrot.lane.b32.xlu0 %v5090, 48
        %v5387 = vpop.permute.xlu0 %5386
        %5388 = vrot.lane.b32.xlu0 %v5091, 48
        %v5389 = vpop.permute.xlu0 %5388
        %5390 = vrot.lane.b32.xlu0 %v5092, 48
        %v5391 = vpop.permute.xlu0 %5390
        %5392 = vrot.lane.b32.xlu0 %v5093, 48
        %v5393 = vpop.permute.xlu0 %5392
        %5394 = vrot.lane.b32.xlu0 %v5094, 48
        %v5395 = vpop.permute.xlu0 %5394
        %v5396 = vsel %vm927, %v5365, 0
        %v5398 = vsel %vm927, %v5367, 0
        %v5400 = vsel %vm927, %v5369, 0
        %v5402 = vsel %vm927, %v5371, 0
        %v5404 = vsel %vm927, %v5373, 0
        %v5406 = vsel %vm927, %v5375, 0
        %v5408 = vsel %vm927, %v5377, 0
        %v5410 = vsel %vm927, %v5379, 0
        %v5412 = vsel %vm927, %v5381, 0
        %v5414 = vsel %vm927, %v5383, 0
        %v5416 = vsel %vm927, %v5385, 0
        %v5418 = vsel %vm927, %v5387, 0
        %v5420 = vsel %vm927, %v5389, 0
        %v5422 = vsel %vm927, %v5391, 0
        %v5424 = vsel %vm927, %v5393, 0
        %v5426 = vsel %vm927, %v5395, 0
        %5428 = vmatpush.xpose.msra.mxu0 0.0
        %5429 = vmatpush.xpose.msra.mxu0 0.0
        %5430 = vmatpush.xpose.msra.mxu0 0.0
        %5431 = vmatpush.xpose.msra.mxu0 0.0
        %5432 = vmatpush.xpose.msra.mxu0 0.0
        %5433 = vmatpush.xpose.msra.mxu0 0.0
        %5434 = vmatpush.xpose.msra.mxu0 0.0
        %5435 = vmatpush.xpose.msra.mxu0 0.0
        %5436 = vmatpush.xpose.msra.mxu0 %v5426
        %5437 = vmatpush.xpose.msra.mxu0 %v5424
        %5438 = vmatpush.xpose.msra.mxu0 %v5422
        %5439 = vmatpush.xpose.msra.mxu0 %v5420
        %5440 = vmatpush.xpose.msra.mxu0 %v5418
        %5441 = vmatpush.xpose.msra.mxu0 %v5416
        %5442 = vmatpush.xpose.msra.mxu0 %v5414
        %5443 = vmatpush.xpose.msra.mxu0 %v5412
        %5444 = vmatmul.f32.gmra.mxu0 %v5396
        %v5445 = vpop.f32.mrf.mxu0
        %v5446 = vadd.f32 %v5103, %v5445
        %5447 = vmatmul.f32.gmra.mxu0 %v5398
        %v5448 = vpop.f32.mrf.mxu0
        %v5449 = vadd.f32 %v5104, %v5448
        %5450 = vmatmul.f32.gmra.mxu0 %v5400
        %v5451 = vpop.f32.mrf.mxu0
        %v5452 = vadd.f32 %v5105, %v5451
        %5453 = vmatmul.f32.gmra.mxu0 %v5402
        %v5454 = vpop.f32.mrf.mxu0
        %v5455 = vadd.f32 %v5106, %v5454
        %5456 = vmatmul.f32.gmra.mxu0 %v5404
        %v5457 = vpop.f32.mrf.mxu0
        %v5458 = vadd.f32 %v5107, %v5457
        %5459 = vmatmul.f32.gmra.mxu0 %v5406
        %v5460 = vpop.f32.mrf.mxu0
        %v5461 = vadd.f32 %v5108, %v5460
        %5462 = vmatmul.f32.gmra.mxu0 %v5408
        %v5463 = vpop.f32.mrf.mxu0
        %v5464 = vadd.f32 %v5109, %v5463
        %5465 = vmatmul.f32.gmra.mxu0 %v5410
        %v5466 = vpop.f32.mrf.mxu0
        %v5467 = vadd.f32 %v5110, %v5466
        %5468 = vdwg.mxu0
        %v5469 = vsel %vm637, %v5446, -inf
        %5470 = vmax.xlane.f32.xlu0 %v5469
        %v5471 = vpop.xlane.xlu0 %5470
        %v5472 = vsel %vm637, %v5449, -inf
        %5473 = vmax.xlane.f32.xlu0 %v5472
        %v5474 = vpop.xlane.xlu0 %5473
        %v5475 = vsel %vm637, %v5452, -inf
        %5476 = vmax.xlane.f32.xlu0 %v5475
        %v5477 = vpop.xlane.xlu0 %5476
        %v5478 = vsel %vm637, %v5455, -inf
        %5479 = vmax.xlane.f32.xlu0 %v5478
        %v5480 = vpop.xlane.xlu0 %5479
        %v5481 = vsel %vm637, %v5458, -inf
        %5482 = vmax.xlane.f32.xlu0 %v5481
        %v5483 = vpop.xlane.xlu0 %5482
        %v5484 = vsel %vm637, %v5461, -inf
        %5485 = vmax.xlane.f32.xlu0 %v5484
        %v5486 = vpop.xlane.xlu0 %5485
        %v5487 = vsel %vm637, %v5464, -inf
        %5488 = vmax.xlane.f32.xlu0 %v5487
        %v5489 = vpop.xlane.xlu0 %5488
        %v5490 = vsel %vm637, %v5467, -inf
        %5491 = vmax.xlane.f32.xlu0 %v5490
        %v5492 = vpop.xlane.xlu0 %5491
        %v5493 = vsub.f32 %v5446, %v5471
        %v5494 = vsub.f32 %v5449, %v5474
        %v5495 = vsub.f32 %v5452, %v5477
        %v5496 = vsub.f32 %v5455, %v5480
        %v5497 = vsub.f32 %v5458, %v5483
        %v5498 = vsub.f32 %v5461, %v5486
        %v5499 = vsub.f32 %v5464, %v5489
        %v5500 = vsub.f32 %v5467, %v5492
        %v5501 = vmul.f32 %v5493, 1.442695
        %v5502 = vpow.pop %v5501
        %v5503 = vmul.f32 %v5494, 1.442695
        %v5504 = vpow.pop %v5503
        %v5505 = vmul.f32 %v5495, 1.442695
        %v5506 = vpow.pop %v5505
        %v5507 = vmul.f32 %v5496, 1.442695
        %v5508 = vpow.pop %v5507
        %v5509 = vmul.f32 %v5497, 1.442695
        %v5510 = vpow.pop %v5509
        %v5511 = vmul.f32 %v5498, 1.442695
        %v5512 = vpow.pop %v5511
        %v5513 = vmul.f32 %v5499, 1.442695
        %v5514 = vpow.pop %v5513
        %v5515 = vmul.f32 %v5500, 1.442695
        %v5516 = vpow.pop %v5515
        %v5517 = vsel %vm637, %v5502, 0.0
        %5518 = vadd.xlane.f32.xlu0 %v5517
        %v5519 = vpop.xlane.xlu0 %5518
        %v5520 = vsel %vm637, %v5504, 0.0
        %5521 = vadd.xlane.f32.xlu0 %v5520
        %v5522 = vpop.xlane.xlu0 %5521
        %v5523 = vsel %vm637, %v5506, 0.0
        %5524 = vadd.xlane.f32.xlu0 %v5523
        %v5525 = vpop.xlane.xlu0 %5524
        %v5526 = vsel %vm637, %v5508, 0.0
        %5527 = vadd.xlane.f32.xlu0 %v5526
        %v5528 = vpop.xlane.xlu0 %5527
        %v5529 = vsel %vm637, %v5510, 0.0
        %5530 = vadd.xlane.f32.xlu0 %v5529
        %v5531 = vpop.xlane.xlu0 %5530
        %v5532 = vsel %vm637, %v5512, 0.0
        %5533 = vadd.xlane.f32.xlu0 %v5532
        %v5534 = vpop.xlane.xlu0 %5533
        %v5535 = vsel %vm637, %v5514, 0.0
        %5536 = vadd.xlane.f32.xlu0 %v5535
        %v5537 = vpop.xlane.xlu0 %5536
        %v5538 = vsel %vm637, %v5516, 0.0
        %5539 = vadd.xlane.f32.xlu0 %v5538
        %v5540 = vpop.xlane.xlu0 %5539
        %v5541 = vrcp.pop %v5519
        %v5542 = vrcp.pop %v5522
        %v5543 = vrcp.pop %v5525
        %v5544 = vrcp.pop %v5528
        %v5545 = vrcp.pop %v5531
        %v5546 = vrcp.pop %v5534
        %v5547 = vrcp.pop %v5537
        %v5548 = vrcp.pop %v5540
        %v5549 = vmul.f32 %v5502, %v5541
        %v5550 = vmul.f32 %v5504, %v5542
        %v5551 = vmul.f32 %v5506, %v5543
        %v5552 = vmul.f32 %v5508, %v5544
        %v5553 = vmul.f32 %v5510, %v5545
        %v5554 = vmul.f32 %v5512, %v5546
        %v5555 = vmul.f32 %v5514, %v5547
        %v5556 = vmul.f32 %v5516, %v5548
        %s5557 = scalar_lea.vmem %s5, 144
        %v5558 = vld [vmem:[%s5557] sm:$0xff]
        %v5559 = vld [vmem:[%s5557 + $0x8] sm:$0xff]
        %5560 = vrot.lane.b32.xlu0 %v5095, 112
        %v5561 = vpop.permute.xlu0 %5560
        %5562 = vrot.lane.b32.xlu0 %v5096, 112
        %v5563 = vpop.permute.xlu0 %5562
        %5564 = vrot.lane.b32.xlu0 %v5097, 112
        %v5565 = vpop.permute.xlu0 %5564
        %5566 = vrot.lane.b32.xlu0 %v5098, 112
        %v5567 = vpop.permute.xlu0 %5566
        %5568 = vrot.lane.b32.xlu0 %v5099, 112
        %v5569 = vpop.permute.xlu0 %5568
        %5570 = vrot.lane.b32.xlu0 %v5100, 112
        %v5571 = vpop.permute.xlu0 %5570
        %5572 = vrot.lane.b32.xlu0 %v5101, 112
        %v5573 = vpop.permute.xlu0 %5572
        %5574 = vrot.lane.b32.xlu0 %v5102, 112
        %v5575 = vpop.permute.xlu0 %5574
        %v5576 = vsel %vm927, %v5561, 0
        %v5578 = vsel %vm927, %v5563, 0
        %v5580 = vsel %vm927, %v5565, 0
        %v5582 = vsel %vm927, %v5567, 0
        %v5584 = vsel %vm927, %v5569, 0
        %v5586 = vsel %vm927, %v5571, 0
        %v5588 = vsel %vm927, %v5573, 0
        %v5590 = vsel %vm927, %v5575, 0
        %5592 = vmatpush.msra.mxu0 0.0
        %5593 = vmatpush.msra.mxu0 0.0
        %5594 = vmatpush.msra.mxu0 0.0
        %5595 = vmatpush.msra.mxu0 0.0
        %5596 = vmatpush.msra.mxu0 0.0
        %5597 = vmatpush.msra.mxu0 0.0
        %5598 = vmatpush.msra.mxu0 0.0
        %5599 = vmatpush.msra.mxu0 0.0
        %5600 = vmatpush.msra.mxu0 0.0
        %5601 = vmatpush.msra.mxu0 0.0
        %5602 = vmatpush.msra.mxu0 0.0
        %5603 = vmatpush.msra.mxu0 0.0
        %5604 = vmatpush.msra.mxu0 0.0
        %5605 = vmatpush.msra.mxu0 0.0
        %5606 = vmatpush.msra.mxu0 %v5559
        %5607 = vmatpush.msra.mxu0 %v5558
        %5608 = vmatmul.f32.gmra.mxu0 %v5576
        %v5609 = vpop.f32.mrf.mxu0
        %v5610 = vadd.f32 0.0, %v5609
        %5611 = vmatmul.f32.gmra.mxu0 %v5578
        %v5612 = vpop.f32.mrf.mxu0
        %v5613 = vadd.f32 0.0, %v5612
        %5614 = vmatmul.f32.gmra.mxu0 %v5580
        %v5615 = vpop.f32.mrf.mxu0
        %v5616 = vadd.f32 0.0, %v5615
        %5617 = vmatmul.f32.gmra.mxu0 %v5582
        %v5618 = vpop.f32.mrf.mxu0
        %v5619 = vadd.f32 0.0, %v5618
        %5620 = vmatmul.f32.gmra.mxu0 %v5584
        %v5621 = vpop.f32.mrf.mxu0
        %v5622 = vadd.f32 0.0, %v5621
        %5623 = vmatmul.f32.gmra.mxu0 %v5586
        %v5624 = vpop.f32.mrf.mxu0
        %v5625 = vadd.f32 0.0, %v5624
        %5626 = vmatmul.f32.gmra.mxu0 %v5588
        %v5627 = vpop.f32.mrf.mxu0
        %v5628 = vadd.f32 0.0, %v5627
        %5629 = vmatmul.f32.gmra.mxu0 %v5590
        %v5630 = vpop.f32.mrf.mxu0
        %v5631 = vadd.f32 0.0, %v5630
        %5632 = vdwg.mxu0
        %v5634 = vsel %vm637, %v5549, 0
        %v5637 = vsel %vm637, %v5550, 0
        %v5640 = vsel %vm637, %v5551, 0
        %v5643 = vsel %vm637, %v5552, 0
        %v5646 = vsel %vm637, %v5553, 0
        %v5649 = vsel %vm637, %v5554, 0
        %v5652 = vsel %vm637, %v5555, 0
        %v5655 = vsel %vm637, %v5556, 0
        %5657 = vmatpush.msra.mxu0 0.0
        %5658 = vmatpush.msra.mxu0 0.0
        %5659 = vmatpush.msra.mxu0 0.0
        %5660 = vmatpush.msra.mxu0 0.0
        %5661 = vmatpush.msra.mxu0 0.0
        %5662 = vmatpush.msra.mxu0 0.0
        %5663 = vmatpush.msra.mxu0 0.0
        %5664 = vmatpush.msra.mxu0 0.0
        %5665 = vmatpush.msra.mxu0 %v5631
        %5666 = vmatpush.msra.mxu0 %v5628
        %5667 = vmatpush.msra.mxu0 %v5625
        %5668 = vmatpush.msra.mxu0 %v5622
        %5669 = vmatpush.msra.mxu0 %v5619
        %5670 = vmatpush.msra.mxu0 %v5616
        %5671 = vmatpush.msra.mxu0 %v5613
        %5672 = vmatpush.msra.mxu0 %v5610
        %5673 = vmatmul.f32.gmra.mxu0 %v5634
        %v5674 = vpop.f32.mrf.mxu0
        %v5675 = vadd.f32 0.0, %v5674
        %5676 = vmatmul.f32.gmra.mxu0 %v5637
        %v5677 = vpop.f32.mrf.mxu0
        %v5678 = vadd.f32 0.0, %v5677
        %5679 = vmatmul.f32.gmra.mxu0 %v5640
        %v5680 = vpop.f32.mrf.mxu0
        %v5681 = vadd.f32 0.0, %v5680
        %5682 = vmatmul.f32.gmra.mxu0 %v5643
        %v5683 = vpop.f32.mrf.mxu0
        %v5684 = vadd.f32 0.0, %v5683
        %5685 = vmatmul.f32.gmra.mxu0 %v5646
        %v5686 = vpop.f32.mrf.mxu0
        %v5687 = vadd.f32 0.0, %v5686
        %5688 = vmatmul.f32.gmra.mxu0 %v5649
        %v5689 = vpop.f32.mrf.mxu0
        %v5690 = vadd.f32 0.0, %v5689
        %5691 = vmatmul.f32.gmra.mxu0 %v5652
        %v5692 = vpop.f32.mrf.mxu0
        %v5693 = vadd.f32 0.0, %v5692
        %5694 = vmatmul.f32.gmra.mxu0 %v5655
        %v5695 = vpop.f32.mrf.mxu0
        %v5696 = vadd.f32 0.0, %v5695
        %5697 = vdwg.mxu0
        %v5699 = vsel %vm637, %v5288, 0
        %v5702 = vsel %vm637, %v5289, 0
        %v5705 = vsel %vm637, %v5290, 0
        %v5708 = vsel %vm637, %v5291, 0
        %v5711 = vsel %vm637, %v5292, 0
        %v5714 = vsel %vm637, %v5293, 0
        %v5717 = vsel %vm637, %v5294, 0
        %v5720 = vsel %vm637, %v5295, 0
        %5722 = vmatpush.msra.mxu0 0.0
        %5723 = vmatpush.msra.mxu0 0.0
        %5724 = vmatpush.msra.mxu0 0.0
        %5725 = vmatpush.msra.mxu0 0.0
        %5726 = vmatpush.msra.mxu0 0.0
        %5727 = vmatpush.msra.mxu0 0.0
        %5728 = vmatpush.msra.mxu0 0.0
        %5729 = vmatpush.msra.mxu0 0.0
        %5730 = vmatpush.msra.mxu0 %v5362
        %5731 = vmatpush.msra.mxu0 %v5359
        %5732 = vmatpush.msra.mxu0 %v5356
        %5733 = vmatpush.msra.mxu0 %v5353
        %5734 = vmatpush.msra.mxu0 %v5350
        %5735 = vmatpush.msra.mxu0 %v5347
        %5736 = vmatpush.msra.mxu0 %v5344
        %5737 = vmatpush.msra.mxu0 %v5341
        %5738 = vmatmul.f32.gmra.mxu0 %v5699
        %v5739 = vpop.f32.mrf.mxu0
        %v5740 = vadd.f32 %v5675, %v5739
        %5741 = vmatmul.f32.gmra.mxu0 %v5702
        %v5742 = vpop.f32.mrf.mxu0
        %v5743 = vadd.f32 %v5678, %v5742
        %5744 = vmatmul.f32.gmra.mxu0 %v5705
        %v5745 = vpop.f32.mrf.mxu0
        %v5746 = vadd.f32 %v5681, %v5745
        %5747 = vmatmul.f32.gmra.mxu0 %v5708
        %v5748 = vpop.f32.mrf.mxu0
        %v5749 = vadd.f32 %v5684, %v5748
        %5750 = vmatmul.f32.gmra.mxu0 %v5711
        %v5751 = vpop.f32.mrf.mxu0
        %v5752 = vadd.f32 %v5687, %v5751
        %5753 = vmatmul.f32.gmra.mxu0 %v5714
        %v5754 = vpop.f32.mrf.mxu0
        %v5755 = vadd.f32 %v5690, %v5754
        %5756 = vmatmul.f32.gmra.mxu0 %v5717
        %v5757 = vpop.f32.mrf.mxu0
        %v5758 = vadd.f32 %v5693, %v5757
        %5759 = vmatmul.f32.gmra.mxu0 %v5720
        %v5760 = vpop.f32.mrf.mxu0
        %v5761 = vadd.f32 %v5696, %v5760
        %5762 = vdwg.mxu0
        %5763 = vrot.lane.b32.xlu0 %v5087, 96
        %v5764 = vpop.permute.xlu0 %5763
        %5765 = vrot.lane.b32.xlu0 %v5088, 96
        %v5766 = vpop.permute.xlu0 %5765
        %5767 = vrot.lane.b32.xlu0 %v5089, 96
        %v5768 = vpop.permute.xlu0 %5767
        %5769 = vrot.lane.b32.xlu0 %v5090, 96
        %v5770 = vpop.permute.xlu0 %5769
        %5771 = vrot.lane.b32.xlu0 %v5091, 96
        %v5772 = vpop.permute.xlu0 %5771
        %5773 = vrot.lane.b32.xlu0 %v5092, 96
        %v5774 = vpop.permute.xlu0 %5773
        %5775 = vrot.lane.b32.xlu0 %v5093, 96
        %v5776 = vpop.permute.xlu0 %5775
        %5777 = vrot.lane.b32.xlu0 %v5094, 96
        %v5778 = vpop.permute.xlu0 %5777
        %5779 = vrot.lane.b32.xlu0 %v5087, 32
        %v5780 = vpop.permute.xlu0 %5779
        %5781 = vrot.lane.b32.xlu0 %v5088, 32
        %v5782 = vpop.permute.xlu0 %5781
        %5783 = vrot.lane.b32.xlu0 %v5089, 32
        %v5784 = vpop.permute.xlu0 %5783
        %5785 = vrot.lane.b32.xlu0 %v5090, 32
        %v5786 = vpop.permute.xlu0 %5785
        %5787 = vrot.lane.b32.xlu0 %v5091, 32
        %v5788 = vpop.permute.xlu0 %5787
        %5789 = vrot.lane.b32.xlu0 %v5092, 32
        %v5790 = vpop.permute.xlu0 %5789
        %5791 = vrot.lane.b32.xlu0 %v5093, 32
        %v5792 = vpop.permute.xlu0 %5791
        %5793 = vrot.lane.b32.xlu0 %v5094, 32
        %v5794 = vpop.permute.xlu0 %5793
        %v5795 = vsel %vm927, %v5764, 0
        %v5797 = vsel %vm927, %v5766, 0
        %v5799 = vsel %vm927, %v5768, 0
        %v5801 = vsel %vm927, %v5770, 0
        %v5803 = vsel %vm927, %v5772, 0
        %v5805 = vsel %vm927, %v5774, 0
        %v5807 = vsel %vm927, %v5776, 0
        %v5809 = vsel %vm927, %v5778, 0
        %v5811 = vsel %vm927, %v5780, 0
        %v5813 = vsel %vm927, %v5782, 0
        %v5815 = vsel %vm927, %v5784, 0
        %v5817 = vsel %vm927, %v5786, 0
        %v5819 = vsel %vm927, %v5788, 0
        %v5821 = vsel %vm927, %v5790, 0
        %v5823 = vsel %vm927, %v5792, 0
        %v5825 = vsel %vm927, %v5794, 0
        %5827 = vmatpush.xpose.msra.mxu0 0.0
        %5828 = vmatpush.xpose.msra.mxu0 0.0
        %5829 = vmatpush.xpose.msra.mxu0 0.0
        %5830 = vmatpush.xpose.msra.mxu0 0.0
        %5831 = vmatpush.xpose.msra.mxu0 0.0
        %5832 = vmatpush.xpose.msra.mxu0 0.0
        %5833 = vmatpush.xpose.msra.mxu0 0.0
        %5834 = vmatpush.xpose.msra.mxu0 0.0
        %5835 = vmatpush.xpose.msra.mxu0 %v5825
        %5836 = vmatpush.xpose.msra.mxu0 %v5823
        %5837 = vmatpush.xpose.msra.mxu0 %v5821
        %5838 = vmatpush.xpose.msra.mxu0 %v5819
        %5839 = vmatpush.xpose.msra.mxu0 %v5817
        %5840 = vmatpush.xpose.msra.mxu0 %v5815
        %5841 = vmatpush.xpose.msra.mxu0 %v5813
        %5842 = vmatpush.xpose.msra.mxu0 %v5811
        %5843 = vmatmul.f32.gmra.mxu0 %v5795
        %v5844 = vpop.f32.mrf.mxu0
        %v5845 = vadd.f32 %v5103, %v5844
        %5846 = vmatmul.f32.gmra.mxu0 %v5797
        %v5847 = vpop.f32.mrf.mxu0
        %v5848 = vadd.f32 %v5104, %v5847
        %5849 = vmatmul.f32.gmra.mxu0 %v5799
        %v5850 = vpop.f32.mrf.mxu0
        %v5851 = vadd.f32 %v5105, %v5850
        %5852 = vmatmul.f32.gmra.mxu0 %v5801
        %v5853 = vpop.f32.mrf.mxu0
        %v5854 = vadd.f32 %v5106, %v5853
        %5855 = vmatmul.f32.gmra.mxu0 %v5803
        %v5856 = vpop.f32.mrf.mxu0
        %v5857 = vadd.f32 %v5107, %v5856
        %5858 = vmatmul.f32.gmra.mxu0 %v5805
        %v5859 = vpop.f32.mrf.mxu0
        %v5860 = vadd.f32 %v5108, %v5859
        %5861 = vmatmul.f32.gmra.mxu0 %v5807
        %v5862 = vpop.f32.mrf.mxu0
        %v5863 = vadd.f32 %v5109, %v5862
        %5864 = vmatmul.f32.gmra.mxu0 %v5809
        %v5865 = vpop.f32.mrf.mxu0
        %v5866 = vadd.f32 %v5110, %v5865
        %5867 = vdwg.mxu0
        %v5868 = vsel %vm637, %v5845, -inf
        %5869 = vmax.xlane.f32.xlu0 %v5868
        %v5870 = vpop.xlane.xlu0 %5869
        %v5871 = vsel %vm637, %v5848, -inf
        %5872 = vmax.xlane.f32.xlu0 %v5871
        %v5873 = vpop.xlane.xlu0 %5872
        %v5874 = vsel %vm637, %v5851, -inf
        %5875 = vmax.xlane.f32.xlu0 %v5874
        %v5876 = vpop.xlane.xlu0 %5875
        %v5877 = vsel %vm637, %v5854, -inf
        %5878 = vmax.xlane.f32.xlu0 %v5877
        %v5879 = vpop.xlane.xlu0 %5878
        %v5880 = vsel %vm637, %v5857, -inf
        %5881 = vmax.xlane.f32.xlu0 %v5880
        %v5882 = vpop.xlane.xlu0 %5881
        %v5883 = vsel %vm637, %v5860, -inf
        %5884 = vmax.xlane.f32.xlu0 %v5883
        %v5885 = vpop.xlane.xlu0 %5884
        %v5886 = vsel %vm637, %v5863, -inf
        %5887 = vmax.xlane.f32.xlu0 %v5886
        %v5888 = vpop.xlane.xlu0 %5887
        %v5889 = vsel %vm637, %v5866, -inf
        %5890 = vmax.xlane.f32.xlu0 %v5889
        %v5891 = vpop.xlane.xlu0 %5890
        %v5892 = vsub.f32 %v5845, %v5870
        %v5893 = vsub.f32 %v5848, %v5873
        %v5894 = vsub.f32 %v5851, %v5876
        %v5895 = vsub.f32 %v5854, %v5879
        %v5896 = vsub.f32 %v5857, %v5882
        %v5897 = vsub.f32 %v5860, %v5885
        %v5898 = vsub.f32 %v5863, %v5888
        %v5899 = vsub.f32 %v5866, %v5891
        %v5900 = vmul.f32 %v5892, 1.442695
        %v5901 = vpow.pop %v5900
        %v5902 = vmul.f32 %v5893, 1.442695
        %v5903 = vpow.pop %v5902
        %v5904 = vmul.f32 %v5894, 1.442695
        %v5905 = vpow.pop %v5904
        %v5906 = vmul.f32 %v5895, 1.442695
        %v5907 = vpow.pop %v5906
        %v5908 = vmul.f32 %v5896, 1.442695
        %v5909 = vpow.pop %v5908
        %v5910 = vmul.f32 %v5897, 1.442695
        %v5911 = vpow.pop %v5910
        %v5912 = vmul.f32 %v5898, 1.442695
        %v5913 = vpow.pop %v5912
        %v5914 = vmul.f32 %v5899, 1.442695
        %v5915 = vpow.pop %v5914
        %v5916 = vsel %vm637, %v5901, 0.0
        %5917 = vadd.xlane.f32.xlu0 %v5916
        %v5918 = vpop.xlane.xlu0 %5917
        %v5919 = vsel %vm637, %v5903, 0.0
        %5920 = vadd.xlane.f32.xlu0 %v5919
        %v5921 = vpop.xlane.xlu0 %5920
        %v5922 = vsel %vm637, %v5905, 0.0
        %5923 = vadd.xlane.f32.xlu0 %v5922
        %v5924 = vpop.xlane.xlu0 %5923
        %v5925 = vsel %vm637, %v5907, 0.0
        %5926 = vadd.xlane.f32.xlu0 %v5925
        %v5927 = vpop.xlane.xlu0 %5926
        %v5928 = vsel %vm637, %v5909, 0.0
        %5929 = vadd.xlane.f32.xlu0 %v5928
        %v5930 = vpop.xlane.xlu0 %5929
        %v5931 = vsel %vm637, %v5911, 0.0
        %5932 = vadd.xlane.f32.xlu0 %v5931
        %v5933 = vpop.xlane.xlu0 %5932
        %v5934 = vsel %vm637, %v5913, 0.0
        %5935 = vadd.xlane.f32.xlu0 %v5934
        %v5936 = vpop.xlane.xlu0 %5935
        %v5937 = vsel %vm637, %v5915, 0.0
        %5938 = vadd.xlane.f32.xlu0 %v5937
        %v5939 = vpop.xlane.xlu0 %5938
        %v5940 = vrcp.pop %v5918
        %v5941 = vrcp.pop %v5921
        %v5942 = vrcp.pop %v5924
        %v5943 = vrcp.pop %v5927
        %v5944 = vrcp.pop %v5930
        %v5945 = vrcp.pop %v5933
        %v5946 = vrcp.pop %v5936
        %v5947 = vrcp.pop %v5939
        %v5948 = vmul.f32 %v5901, %v5940
        %v5949 = vmul.f32 %v5903, %v5941
        %v5950 = vmul.f32 %v5905, %v5942
        %v5951 = vmul.f32 %v5907, %v5943
        %v5952 = vmul.f32 %v5909, %v5944
        %v5953 = vmul.f32 %v5911, %v5945
        %v5954 = vmul.f32 %v5913, %v5946
        %v5955 = vmul.f32 %v5915, %v5947
        %s5956 = scalar_lea.vmem %s5, 160
        %v5957 = vld [vmem:[%s5956] sm:$0xff]
        %v5958 = vld [vmem:[%s5956 + $0x8] sm:$0xff]
        %5959 = vrot.lane.b32.xlu0 %v5095, 96
        %v5960 = vpop.permute.xlu0 %5959
        %5961 = vrot.lane.b32.xlu0 %v5096, 96
        %v5962 = vpop.permute.xlu0 %5961
        %5963 = vrot.lane.b32.xlu0 %v5097, 96
        %v5964 = vpop.permute.xlu0 %5963
        %5965 = vrot.lane.b32.xlu0 %v5098, 96
        %v5966 = vpop.permute.xlu0 %5965
        %5967 = vrot.lane.b32.xlu0 %v5099, 96
        %v5968 = vpop.permute.xlu0 %5967
        %5969 = vrot.lane.b32.xlu0 %v5100, 96
        %v5970 = vpop.permute.xlu0 %5969
        %5971 = vrot.lane.b32.xlu0 %v5101, 96
        %v5972 = vpop.permute.xlu0 %5971
        %5973 = vrot.lane.b32.xlu0 %v5102, 96
        %v5974 = vpop.permute.xlu0 %5973
        %v5975 = vsel %vm927, %v5960, 0
        %v5977 = vsel %vm927, %v5962, 0
        %v5979 = vsel %vm927, %v5964, 0
        %v5981 = vsel %vm927, %v5966, 0
        %v5983 = vsel %vm927, %v5968, 0
        %v5985 = vsel %vm927, %v5970, 0
        %v5987 = vsel %vm927, %v5972, 0
        %v5989 = vsel %vm927, %v5974, 0
        %5991 = vmatpush.msra.mxu0 0.0
        %5992 = vmatpush.msra.mxu0 0.0
        %5993 = vmatpush.msra.mxu0 0.0
        %5994 = vmatpush.msra.mxu0 0.0
        %5995 = vmatpush.msra.mxu0 0.0
        %5996 = vmatpush.msra.mxu0 0.0
        %5997 = vmatpush.msra.mxu0 0.0
        %5998 = vmatpush.msra.mxu0 0.0
        %5999 = vmatpush.msra.mxu0 0.0
        %6000 = vmatpush.msra.mxu0 0.0
        %6001 = vmatpush.msra.mxu0 0.0
        %6002 = vmatpush.msra.mxu0 0.0
        %6003 = vmatpush.msra.mxu0 0.0
        %6004 = vmatpush.msra.mxu0 0.0
        %6005 = vmatpush.msra.mxu0 %v5958
        %6006 = vmatpush.msra.mxu0 %v5957
        %6007 = vmatmul.f32.gmra.mxu0 %v5975
        %v6008 = vpop.f32.mrf.mxu0
        %v6009 = vadd.f32 0.0, %v6008
        %6010 = vmatmul.f32.gmra.mxu0 %v5977
        %v6011 = vpop.f32.mrf.mxu0
        %v6012 = vadd.f32 0.0, %v6011
        %6013 = vmatmul.f32.gmra.mxu0 %v5979
        %v6014 = vpop.f32.mrf.mxu0
        %v6015 = vadd.f32 0.0, %v6014
        %6016 = vmatmul.f32.gmra.mxu0 %v5981
        %v6017 = vpop.f32.mrf.mxu0
        %v6018 = vadd.f32 0.0, %v6017
        %6019 = vmatmul.f32.gmra.mxu0 %v5983
        %v6020 = vpop.f32.mrf.mxu0
        %v6021 = vadd.f32 0.0, %v6020
        %6022 = vmatmul.f32.gmra.mxu0 %v5985
        %v6023 = vpop.f32.mrf.mxu0
        %v6024 = vadd.f32 0.0, %v6023
        %6025 = vmatmul.f32.gmra.mxu0 %v5987
        %v6026 = vpop.f32.mrf.mxu0
        %v6027 = vadd.f32 0.0, %v6026
        %6028 = vmatmul.f32.gmra.mxu0 %v5989
        %v6029 = vpop.f32.mrf.mxu0
        %v6030 = vadd.f32 0.0, %v6029
        %6031 = vdwg.mxu0
        %v6033 = vsel %vm637, %v5948, 0
        %v6036 = vsel %vm637, %v5949, 0
        %v6039 = vsel %vm637, %v5950, 0
        %v6042 = vsel %vm637, %v5951, 0
        %v6045 = vsel %vm637, %v5952, 0
        %v6048 = vsel %vm637, %v5953, 0
        %v6051 = vsel %vm637, %v5954, 0
        %v6054 = vsel %vm637, %v5955, 0
        %6056 = vmatpush.msra.mxu0 0.0
        %6057 = vmatpush.msra.mxu0 0.0
        %6058 = vmatpush.msra.mxu0 0.0
        %6059 = vmatpush.msra.mxu0 0.0
        %6060 = vmatpush.msra.mxu0 0.0
        %6061 = vmatpush.msra.mxu0 0.0
        %6062 = vmatpush.msra.mxu0 0.0
        %6063 = vmatpush.msra.mxu0 0.0
        %6064 = vmatpush.msra.mxu0 %v6030
        %6065 = vmatpush.msra.mxu0 %v6027
        %6066 = vmatpush.msra.mxu0 %v6024
        %6067 = vmatpush.msra.mxu0 %v6021
        %6068 = vmatpush.msra.mxu0 %v6018
        %6069 = vmatpush.msra.mxu0 %v6015
        %6070 = vmatpush.msra.mxu0 %v6012
        %6071 = vmatpush.msra.mxu0 %v6009
        %6072 = vmatmul.f32.gmra.mxu0 %v6033
        %v6073 = vpop.f32.mrf.mxu0
        %v6074 = vadd.f32 0.0, %v6073
        %6075 = vmatmul.f32.gmra.mxu0 %v6036
        %v6076 = vpop.f32.mrf.mxu0
        %v6077 = vadd.f32 0.0, %v6076
        %6078 = vmatmul.f32.gmra.mxu0 %v6039
        %v6079 = vpop.f32.mrf.mxu0
        %v6080 = vadd.f32 0.0, %v6079
        %6081 = vmatmul.f32.gmra.mxu0 %v6042
        %v6082 = vpop.f32.mrf.mxu0
        %v6083 = vadd.f32 0.0, %v6082
        %6084 = vmatmul.f32.gmra.mxu0 %v6045
        %v6085 = vpop.f32.mrf.mxu0
        %v6086 = vadd.f32 0.0, %v6085
        %6087 = vmatmul.f32.gmra.mxu0 %v6048
        %v6088 = vpop.f32.mrf.mxu0
        %v6089 = vadd.f32 0.0, %v6088
        %6090 = vmatmul.f32.gmra.mxu0 %v6051
        %v6091 = vpop.f32.mrf.mxu0
        %v6092 = vadd.f32 0.0, %v6091
        %6093 = vmatmul.f32.gmra.mxu0 %v6054
        %v6094 = vpop.f32.mrf.mxu0
        %v6095 = vadd.f32 0.0, %v6094
        %6096 = vdwg.mxu0
        %v6097 = vadd.f32 %v5740, %v6074
        %v6098 = vadd.f32 %v5743, %v6077
        %v6099 = vadd.f32 %v5746, %v6080
        %v6100 = vadd.f32 %v5749, %v6083
        %v6101 = vadd.f32 %v5752, %v6086
        %v6102 = vadd.f32 %v5755, %v6089
        %v6103 = vadd.f32 %v5758, %v6092
        %v6104 = vadd.f32 %v5761, %v6095
        %6105 = vrot.lane.b32.xlu0 %v5087, 80
        %v6106 = vpop.permute.xlu0 %6105
        %6107 = vrot.lane.b32.xlu0 %v5088, 80
        %v6108 = vpop.permute.xlu0 %6107
        %6109 = vrot.lane.b32.xlu0 %v5089, 80
        %v6110 = vpop.permute.xlu0 %6109
        %6111 = vrot.lane.b32.xlu0 %v5090, 80
        %v6112 = vpop.permute.xlu0 %6111
        %6113 = vrot.lane.b32.xlu0 %v5091, 80
        %v6114 = vpop.permute.xlu0 %6113
        %6115 = vrot.lane.b32.xlu0 %v5092, 80
        %v6116 = vpop.permute.xlu0 %6115
        %6117 = vrot.lane.b32.xlu0 %v5093, 80
        %v6118 = vpop.permute.xlu0 %6117
        %6119 = vrot.lane.b32.xlu0 %v5094, 80
        %v6120 = vpop.permute.xlu0 %6119
        %6121 = vrot.lane.b32.xlu0 %v5087, 16
        %v6122 = vpop.permute.xlu0 %6121
        %6123 = vrot.lane.b32.xlu0 %v5088, 16
        %v6124 = vpop.permute.xlu0 %6123
        %6125 = vrot.lane.b32.xlu0 %v5089, 16
        %v6126 = vpop.permute.xlu0 %6125
        %6127 = vrot.lane.b32.xlu0 %v5090, 16
        %v6128 = vpop.permute.xlu0 %6127
        %6129 = vrot.lane.b32.xlu0 %v5091, 16
        %v6130 = vpop.permute.xlu0 %6129
        %6131 = vrot.lane.b32.xlu0 %v5092, 16
        %v6132 = vpop.permute.xlu0 %6131
        %6133 = vrot.lane.b32.xlu0 %v5093, 16
        %v6134 = vpop.permute.xlu0 %6133
        %6135 = vrot.lane.b32.xlu0 %v5094, 16
        %v6136 = vpop.permute.xlu0 %6135
        %v6137 = vsel %vm927, %v6106, 0
        %v6139 = vsel %vm927, %v6108, 0
        %v6141 = vsel %vm927, %v6110, 0
        %v6143 = vsel %vm927, %v6112, 0
        %v6145 = vsel %vm927, %v6114, 0
        %v6147 = vsel %vm927, %v6116, 0
        %v6149 = vsel %vm927, %v6118, 0
        %v6151 = vsel %vm927, %v6120, 0
        %v6153 = vsel %vm927, %v6122, 0
        %v6155 = vsel %vm927, %v6124, 0
        %v6157 = vsel %vm927, %v6126, 0
        %v6159 = vsel %vm927, %v6128, 0
        %v6161 = vsel %vm927, %v6130, 0
        %v6163 = vsel %vm927, %v6132, 0
        %v6165 = vsel %vm927, %v6134, 0
        %v6167 = vsel %vm927, %v6136, 0
        %6169 = vmatpush.xpose.msra.mxu0 0.0
        %6170 = vmatpush.xpose.msra.mxu0 0.0
        %6171 = vmatpush.xpose.msra.mxu0 0.0
        %6172 = vmatpush.xpose.msra.mxu0 0.0
        %6173 = vmatpush.xpose.msra.mxu0 0.0
        %6174 = vmatpush.xpose.msra.mxu0 0.0
        %6175 = vmatpush.xpose.msra.mxu0 0.0
        %6176 = vmatpush.xpose.msra.mxu0 0.0
        %6177 = vmatpush.xpose.msra.mxu0 %v6167
        %6178 = vmatpush.xpose.msra.mxu0 %v6165
        %6179 = vmatpush.xpose.msra.mxu0 %v6163
        %6180 = vmatpush.xpose.msra.mxu0 %v6161
        %6181 = vmatpush.xpose.msra.mxu0 %v6159
        %6182 = vmatpush.xpose.msra.mxu0 %v6157
        %6183 = vmatpush.xpose.msra.mxu0 %v6155
        %6184 = vmatpush.xpose.msra.mxu0 %v6153
        %6185 = vmatmul.f32.gmra.mxu0 %v6137
        %v6186 = vpop.f32.mrf.mxu0
        %v6187 = vadd.f32 %v5103, %v6186
        %6188 = vmatmul.f32.gmra.mxu0 %v6139
        %v6189 = vpop.f32.mrf.mxu0
        %v6190 = vadd.f32 %v5104, %v6189
        %6191 = vmatmul.f32.gmra.mxu0 %v6141
        %v6192 = vpop.f32.mrf.mxu0
        %v6193 = vadd.f32 %v5105, %v6192
        %6194 = vmatmul.f32.gmra.mxu0 %v6143
        %v6195 = vpop.f32.mrf.mxu0
        %v6196 = vadd.f32 %v5106, %v6195
        %6197 = vmatmul.f32.gmra.mxu0 %v6145
        %v6198 = vpop.f32.mrf.mxu0
        %v6199 = vadd.f32 %v5107, %v6198
        %6200 = vmatmul.f32.gmra.mxu0 %v6147
        %v6201 = vpop.f32.mrf.mxu0
        %v6202 = vadd.f32 %v5108, %v6201
        %6203 = vmatmul.f32.gmra.mxu0 %v6149
        %v6204 = vpop.f32.mrf.mxu0
        %v6205 = vadd.f32 %v5109, %v6204
        %6206 = vmatmul.f32.gmra.mxu0 %v6151
        %v6207 = vpop.f32.mrf.mxu0
        %v6208 = vadd.f32 %v5110, %v6207
        %6209 = vdwg.mxu0
        %v6210 = vsel %vm637, %v6187, -inf
        %6211 = vmax.xlane.f32.xlu0 %v6210
        %v6212 = vpop.xlane.xlu0 %6211
        %v6213 = vsel %vm637, %v6190, -inf
        %6214 = vmax.xlane.f32.xlu0 %v6213
        %v6215 = vpop.xlane.xlu0 %6214
        %v6216 = vsel %vm637, %v6193, -inf
        %6217 = vmax.xlane.f32.xlu0 %v6216
        %v6218 = vpop.xlane.xlu0 %6217
        %v6219 = vsel %vm637, %v6196, -inf
        %6220 = vmax.xlane.f32.xlu0 %v6219
        %v6221 = vpop.xlane.xlu0 %6220
        %v6222 = vsel %vm637, %v6199, -inf
        %6223 = vmax.xlane.f32.xlu0 %v6222
        %v6224 = vpop.xlane.xlu0 %6223
        %v6225 = vsel %vm637, %v6202, -inf
        %6226 = vmax.xlane.f32.xlu0 %v6225
        %v6227 = vpop.xlane.xlu0 %6226
        %v6228 = vsel %vm637, %v6205, -inf
        %6229 = vmax.xlane.f32.xlu0 %v6228
        %v6230 = vpop.xlane.xlu0 %6229
        %v6231 = vsel %vm637, %v6208, -inf
        %6232 = vmax.xlane.f32.xlu0 %v6231
        %v6233 = vpop.xlane.xlu0 %6232
        %v6234 = vsub.f32 %v6187, %v6212
        %v6235 = vsub.f32 %v6190, %v6215
        %v6236 = vsub.f32 %v6193, %v6218
        %v6237 = vsub.f32 %v6196, %v6221
        %v6238 = vsub.f32 %v6199, %v6224
        %v6239 = vsub.f32 %v6202, %v6227
        %v6240 = vsub.f32 %v6205, %v6230
        %v6241 = vsub.f32 %v6208, %v6233
        %v6242 = vmul.f32 %v6234, 1.442695
        %v6243 = vpow.pop %v6242
        %v6244 = vmul.f32 %v6235, 1.442695
        %v6245 = vpow.pop %v6244
        %v6246 = vmul.f32 %v6236, 1.442695
        %v6247 = vpow.pop %v6246
        %v6248 = vmul.f32 %v6237, 1.442695
        %v6249 = vpow.pop %v6248
        %v6250 = vmul.f32 %v6238, 1.442695
        %v6251 = vpow.pop %v6250
        %v6252 = vmul.f32 %v6239, 1.442695
        %v6253 = vpow.pop %v6252
        %v6254 = vmul.f32 %v6240, 1.442695
        %v6255 = vpow.pop %v6254
        %v6256 = vmul.f32 %v6241, 1.442695
        %v6257 = vpow.pop %v6256
        %v6258 = vsel %vm637, %v6243, 0.0
        %6259 = vadd.xlane.f32.xlu0 %v6258
        %v6260 = vpop.xlane.xlu0 %6259
        %v6261 = vsel %vm637, %v6245, 0.0
        %6262 = vadd.xlane.f32.xlu0 %v6261
        %v6263 = vpop.xlane.xlu0 %6262
        %v6264 = vsel %vm637, %v6247, 0.0
        %6265 = vadd.xlane.f32.xlu0 %v6264
        %v6266 = vpop.xlane.xlu0 %6265
        %v6267 = vsel %vm637, %v6249, 0.0
        %6268 = vadd.xlane.f32.xlu0 %v6267
        %v6269 = vpop.xlane.xlu0 %6268
        %v6270 = vsel %vm637, %v6251, 0.0
        %6271 = vadd.xlane.f32.xlu0 %v6270
        %v6272 = vpop.xlane.xlu0 %6271
        %v6273 = vsel %vm637, %v6253, 0.0
        %6274 = vadd.xlane.f32.xlu0 %v6273
        %v6275 = vpop.xlane.xlu0 %6274
        %v6276 = vsel %vm637, %v6255, 0.0
        %6277 = vadd.xlane.f32.xlu0 %v6276
        %v6278 = vpop.xlane.xlu0 %6277
        %v6279 = vsel %vm637, %v6257, 0.0
        %6280 = vadd.xlane.f32.xlu0 %v6279
        %v6281 = vpop.xlane.xlu0 %6280
        %v6282 = vrcp.pop %v6260
        %v6283 = vrcp.pop %v6263
        %v6284 = vrcp.pop %v6266
        %v6285 = vrcp.pop %v6269
        %v6286 = vrcp.pop %v6272
        %v6287 = vrcp.pop %v6275
        %v6288 = vrcp.pop %v6278
        %v6289 = vrcp.pop %v6281
        %v6290 = vmul.f32 %v6243, %v6282
        %v6291 = vmul.f32 %v6245, %v6283
        %v6292 = vmul.f32 %v6247, %v6284
        %v6293 = vmul.f32 %v6249, %v6285
        %v6294 = vmul.f32 %v6251, %v6286
        %v6295 = vmul.f32 %v6253, %v6287
        %v6296 = vmul.f32 %v6255, %v6288
        %v6297 = vmul.f32 %v6257, %v6289
        %s6298 = scalar_lea.vmem %s5, 176
        %v6299 = vld [vmem:[%s6298] sm:$0xff]
        %v6300 = vld [vmem:[%s6298 + $0x8] sm:$0xff]
        %6301 = vrot.lane.b32.xlu0 %v5095, 80
        %v6302 = vpop.permute.xlu0 %6301
        %6303 = vrot.lane.b32.xlu0 %v5096, 80
        %v6304 = vpop.permute.xlu0 %6303
        %6305 = vrot.lane.b32.xlu0 %v5097, 80
        %v6306 = vpop.permute.xlu0 %6305
        %6307 = vrot.lane.b32.xlu0 %v5098, 80
        %v6308 = vpop.permute.xlu0 %6307
        %6309 = vrot.lane.b32.xlu0 %v5099, 80
        %v6310 = vpop.permute.xlu0 %6309
        %6311 = vrot.lane.b32.xlu0 %v5100, 80
        %v6312 = vpop.permute.xlu0 %6311
        %6313 = vrot.lane.b32.xlu0 %v5101, 80
        %v6314 = vpop.permute.xlu0 %6313
        %6315 = vrot.lane.b32.xlu0 %v5102, 80
        %v6316 = vpop.permute.xlu0 %6315
        %v6317 = vsel %vm927, %v6302, 0
        %v6319 = vsel %vm927, %v6304, 0
        %v6321 = vsel %vm927, %v6306, 0
        %v6323 = vsel %vm927, %v6308, 0
        %v6325 = vsel %vm927, %v6310, 0
        %v6327 = vsel %vm927, %v6312, 0
        %v6329 = vsel %vm927, %v6314, 0
        %v6331 = vsel %vm927, %v6316, 0
        %6333 = vmatpush.msra.mxu0 0.0
        %6334 = vmatpush.msra.mxu0 0.0
        %6335 = vmatpush.msra.mxu0 0.0
        %6336 = vmatpush.msra.mxu0 0.0
        %6337 = vmatpush.msra.mxu0 0.0
        %6338 = vmatpush.msra.mxu0 0.0
        %6339 = vmatpush.msra.mxu0 0.0
        %6340 = vmatpush.msra.mxu0 0.0
        %6341 = vmatpush.msra.mxu0 0.0
        %6342 = vmatpush.msra.mxu0 0.0
        %6343 = vmatpush.msra.mxu0 0.0
        %6344 = vmatpush.msra.mxu0 0.0
        %6345 = vmatpush.msra.mxu0 0.0
        %6346 = vmatpush.msra.mxu0 0.0
        %6347 = vmatpush.msra.mxu0 %v6300
        %6348 = vmatpush.msra.mxu0 %v6299
        %6349 = vmatmul.f32.gmra.mxu0 %v6317
        %v6350 = vpop.f32.mrf.mxu0
        %v6351 = vadd.f32 0.0, %v6350
        %6352 = vmatmul.f32.gmra.mxu0 %v6319
        %v6353 = vpop.f32.mrf.mxu0
        %v6354 = vadd.f32 0.0, %v6353
        %6355 = vmatmul.f32.gmra.mxu0 %v6321
        %v6356 = vpop.f32.mrf.mxu0
        %v6357 = vadd.f32 0.0, %v6356
        %6358 = vmatmul.f32.gmra.mxu0 %v6323
        %v6359 = vpop.f32.mrf.mxu0
        %v6360 = vadd.f32 0.0, %v6359
        %6361 = vmatmul.f32.gmra.mxu0 %v6325
        %v6362 = vpop.f32.mrf.mxu0
        %v6363 = vadd.f32 0.0, %v6362
        %6364 = vmatmul.f32.gmra.mxu0 %v6327
        %v6365 = vpop.f32.mrf.mxu0
        %v6366 = vadd.f32 0.0, %v6365
        %6367 = vmatmul.f32.gmra.mxu0 %v6329
        %v6368 = vpop.f32.mrf.mxu0
        %v6369 = vadd.f32 0.0, %v6368
        %6370 = vmatmul.f32.gmra.mxu0 %v6331
        %v6371 = vpop.f32.mrf.mxu0
        %v6372 = vadd.f32 0.0, %v6371
        %6373 = vdwg.mxu0
        %v6375 = vsel %vm637, %v6290, 0
        %v6378 = vsel %vm637, %v6291, 0
        %v6381 = vsel %vm637, %v6292, 0
        %v6384 = vsel %vm637, %v6293, 0
        %v6387 = vsel %vm637, %v6294, 0
        %v6390 = vsel %vm637, %v6295, 0
        %v6393 = vsel %vm637, %v6296, 0
        %v6396 = vsel %vm637, %v6297, 0
        %6398 = vmatpush.msra.mxu0 0.0
        %6399 = vmatpush.msra.mxu0 0.0
        %6400 = vmatpush.msra.mxu0 0.0
        %6401 = vmatpush.msra.mxu0 0.0
        %6402 = vmatpush.msra.mxu0 0.0
        %6403 = vmatpush.msra.mxu0 0.0
        %6404 = vmatpush.msra.mxu0 0.0
        %6405 = vmatpush.msra.mxu0 0.0
        %6406 = vmatpush.msra.mxu0 %v6372
        %6407 = vmatpush.msra.mxu0 %v6369
        %6408 = vmatpush.msra.mxu0 %v6366
        %6409 = vmatpush.msra.mxu0 %v6363
        %6410 = vmatpush.msra.mxu0 %v6360
        %6411 = vmatpush.msra.mxu0 %v6357
        %6412 = vmatpush.msra.mxu0 %v6354
        %6413 = vmatpush.msra.mxu0 %v6351
        %6414 = vmatmul.f32.gmra.mxu0 %v6375
        %v6415 = vpop.f32.mrf.mxu0
        %v6416 = vadd.f32 0.0, %v6415
        %6417 = vmatmul.f32.gmra.mxu0 %v6378
        %v6418 = vpop.f32.mrf.mxu0
        %v6419 = vadd.f32 0.0, %v6418
        %6420 = vmatmul.f32.gmra.mxu0 %v6381
        %v6421 = vpop.f32.mrf.mxu0
        %v6422 = vadd.f32 0.0, %v6421
        %6423 = vmatmul.f32.gmra.mxu0 %v6384
        %v6424 = vpop.f32.mrf.mxu0
        %v6425 = vadd.f32 0.0, %v6424
        %6426 = vmatmul.f32.gmra.mxu0 %v6387
        %v6427 = vpop.f32.mrf.mxu0
        %v6428 = vadd.f32 0.0, %v6427
        %6429 = vmatmul.f32.gmra.mxu0 %v6390
        %v6430 = vpop.f32.mrf.mxu0
        %v6431 = vadd.f32 0.0, %v6430
        %6432 = vmatmul.f32.gmra.mxu0 %v6393
        %v6433 = vpop.f32.mrf.mxu0
        %v6434 = vadd.f32 0.0, %v6433
        %6435 = vmatmul.f32.gmra.mxu0 %v6396
        %v6436 = vpop.f32.mrf.mxu0
        %v6437 = vadd.f32 0.0, %v6436
        %6438 = vdwg.mxu0
        %v6439 = vadd.f32 %v6097, %v6416
        %v6440 = vadd.f32 %v6098, %v6419
        %v6441 = vadd.f32 %v6099, %v6422
        %v6442 = vadd.f32 %v6100, %v6425
        %v6443 = vadd.f32 %v6101, %v6428
        %v6444 = vadd.f32 %v6102, %v6431
        %v6445 = vadd.f32 %v6103, %v6434
        %v6446 = vadd.f32 %v6104, %v6437
        %s6447 = scalar_lea.vmem %s6, 2
        %v6448 = vld [vmem:[%s6447] sm:$0x1]
        %v6450 = vperm.slane %v6448, 0
        %v6452 = vadd.f32 %v6439, %v6450
        %v6453 = vadd.f32 %v6440, %v6450
        %v6454 = vadd.f32 %v6441, %v6450
        %v6455 = vadd.f32 %v6442, %v6450
        %v6456 = vadd.f32 %v6443, %v6450
        %v6457 = vadd.f32 %v6444, %v6450
        %v6458 = vadd.f32 %v6445, %v6450
        %v6459 = vadd.f32 %v6446, %v6450
        %v6460 = vadd.f32 %v4933, %v6452
        %v6461 = vadd.f32 %v4934, %v6453
        %v6462 = vadd.f32 %v4935, %v6454
        %v6463 = vadd.f32 %v4936, %v6455
        %v6464 = vadd.f32 %v4937, %v6456
        %v6465 = vadd.f32 %v4938, %v6457
        %v6466 = vadd.f32 %v4939, %v6458
        %v6467 = vadd.f32 %v4940, %v6459
        %s6468 = scalar_lea.vmem %s11, 2
        %v6469 = vld [vmem:[%s6468] sm:$0x1]
        %s6470 = scalar_lea.vmem %s12, 2
        %v6471 = vld [vmem:[%s6470] sm:$0x1]
        %v6472 = vsel %vm637, %v6460, 0.0
        %6473 = vadd.xlane.f32.xlu0 %v6472
        %v6474 = vpop.xlane.xlu0 %6473
        %v6475 = vsel %vm637, %v6461, 0.0
        %6476 = vadd.xlane.f32.xlu0 %v6475
        %v6477 = vpop.xlane.xlu0 %6476
        %v6478 = vsel %vm637, %v6462, 0.0
        %6479 = vadd.xlane.f32.xlu0 %v6478
        %v6480 = vpop.xlane.xlu0 %6479
        %v6481 = vsel %vm637, %v6463, 0.0
        %6482 = vadd.xlane.f32.xlu0 %v6481
        %v6483 = vpop.xlane.xlu0 %6482
        %v6484 = vsel %vm637, %v6464, 0.0
        %6485 = vadd.xlane.f32.xlu0 %v6484
        %v6486 = vpop.xlane.xlu0 %6485
        %v6487 = vsel %vm637, %v6465, 0.0
        %6488 = vadd.xlane.f32.xlu0 %v6487
        %v6489 = vpop.xlane.xlu0 %6488
        %v6490 = vsel %vm637, %v6466, 0.0
        %6491 = vadd.xlane.f32.xlu0 %v6490
        %v6492 = vpop.xlane.xlu0 %6491
        %v6493 = vsel %vm637, %v6467, 0.0
        %6494 = vadd.xlane.f32.xlu0 %v6493
        %v6495 = vpop.xlane.xlu0 %6494
        %v6496 = vmul.f32 %v6474, %v2291
        %v6497 = vmul.f32 %v6477, %v2291
        %v6498 = vmul.f32 %v6480, %v2291
        %v6499 = vmul.f32 %v6483, %v2291
        %v6500 = vmul.f32 %v6486, %v2291
        %v6501 = vmul.f32 %v6489, %v2291
        %v6502 = vmul.f32 %v6492, %v2291
        %v6503 = vmul.f32 %v6495, %v2291
        %v6504 = vsub.f32 %v6460, %v6496
        %v6505 = vsub.f32 %v6461, %v6497
        %v6506 = vsub.f32 %v6462, %v6498
        %v6507 = vsub.f32 %v6463, %v6499
        %v6508 = vsub.f32 %v6464, %v6500
        %v6509 = vsub.f32 %v6465, %v6501
        %v6510 = vsub.f32 %v6466, %v6502
        %v6511 = vsub.f32 %v6467, %v6503
        %v6512 = vmul.f32 %v6504, %v6504
        %v6513 = vmul.f32 %v6505, %v6505
        %v6514 = vmul.f32 %v6506, %v6506
        %v6515 = vmul.f32 %v6507, %v6507
        %v6516 = vmul.f32 %v6508, %v6508
        %v6517 = vmul.f32 %v6509, %v6509
        %v6518 = vmul.f32 %v6510, %v6510
        %v6519 = vmul.f32 %v6511, %v6511
        %v6520 = vsel %vm637, %v6512, 0.0
        %6521 = vadd.xlane.f32.xlu0 %v6520
        %v6522 = vpop.xlane.xlu0 %6521
        %v6523 = vsel %vm637, %v6513, 0.0
        %6524 = vadd.xlane.f32.xlu0 %v6523
        %v6525 = vpop.xlane.xlu0 %6524
        %v6526 = vsel %vm637, %v6514, 0.0
        %6527 = vadd.xlane.f32.xlu0 %v6526
        %v6528 = vpop.xlane.xlu0 %6527
        %v6529 = vsel %vm637, %v6515, 0.0
        %6530 = vadd.xlane.f32.xlu0 %v6529
        %v6531 = vpop.xlane.xlu0 %6530
        %v6532 = vsel %vm637, %v6516, 0.0
        %6533 = vadd.xlane.f32.xlu0 %v6532
        %v6534 = vpop.xlane.xlu0 %6533
        %v6535 = vsel %vm637, %v6517, 0.0
        %6536 = vadd.xlane.f32.xlu0 %v6535
        %v6537 = vpop.xlane.xlu0 %6536
        %v6538 = vsel %vm637, %v6518, 0.0
        %6539 = vadd.xlane.f32.xlu0 %v6538
        %v6540 = vpop.xlane.xlu0 %6539
        %v6541 = vsel %vm637, %v6519, 0.0
        %6542 = vadd.xlane.f32.xlu0 %v6541
        %v6543 = vpop.xlane.xlu0 %6542
        %v6544 = vmul.f32 %v6522, %v2291
        %v6545 = vmul.f32 %v6525, %v2291
        %v6546 = vmul.f32 %v6528, %v2291
        %v6547 = vmul.f32 %v6531, %v2291
        %v6548 = vmul.f32 %v6534, %v2291
        %v6549 = vmul.f32 %v6537, %v2291
        %v6550 = vmul.f32 %v6540, %v2291
        %v6551 = vmul.f32 %v6543, %v2291
        %v6552 = vadd.f32 %v6544, 1e-05
        %v6553 = vadd.f32 %v6545, 1e-05
        %v6554 = vadd.f32 %v6546, 1e-05
        %v6555 = vadd.f32 %v6547, 1e-05
        %v6556 = vadd.f32 %v6548, 1e-05
        %v6557 = vadd.f32 %v6549, 1e-05
        %v6558 = vadd.f32 %v6550, 1e-05
        %v6559 = vadd.f32 %v6551, 1e-05
        %v6560 = vrsqrt.pop %v6552
        %v6561 = vmul.f32 %v6560, %v6552
        %v6562 = vmul.f32 %v6561, %v6560
        %v6563 = vmul.f32 0.5, %v6562
        %v6564 = vsub.f32 1.5, %v6563
        %v6565 = vmul.f32 %v6560, %v6564
        %vm6566 = vweird.f32 %v6552
        %vm6567 = vweird.f32 %v6560
        %vm6568 = vmor %vm6566, %vm6567
        %v6569 = vsel %vm6568, %v6560, %v6565
        %v6570 = vrsqrt.pop %v6553
        %v6571 = vmul.f32 %v6570, %v6553
        %v6572 = vmul.f32 %v6571, %v6570
        %v6573 = vmul.f32 0.5, %v6572
        %v6574 = vsub.f32 1.5, %v6573
        %v6575 = vmul.f32 %v6570, %v6574
        %vm6576 = vweird.f32 %v6553
        %vm6577 = vweird.f32 %v6570
        %vm6578 = vmor %vm6576, %vm6577
        %v6579 = vsel %vm6578, %v6570, %v6575
        %v6580 = vrsqrt.pop %v6554
        %v6581 = vmul.f32 %v6580, %v6554
        %v6582 = vmul.f32 %v6581, %v6580
        %v6583 = vmul.f32 0.5, %v6582
        %v6584 = vsub.f32 1.5, %v6583
        %v6585 = vmul.f32 %v6580, %v6584
        %vm6586 = vweird.f32 %v6554
        %vm6587 = vweird.f32 %v6580
        %vm6588 = vmor %vm6586, %vm6587
        %v6589 = vsel %vm6588, %v6580, %v6585
        %v6590 = vrsqrt.pop %v6555
        %v6591 = vmul.f32 %v6590, %v6555
        %v6592 = vmul.f32 %v6591, %v6590
        %v6593 = vmul.f32 0.5, %v6592
        %v6594 = vsub.f32 1.5, %v6593
        %v6595 = vmul.f32 %v6590, %v6594
        %vm6596 = vweird.f32 %v6555
        %vm6597 = vweird.f32 %v6590
        %vm6598 = vmor %vm6596, %vm6597
        %v6599 = vsel %vm6598, %v6590, %v6595
        %v6600 = vrsqrt.pop %v6556
        %v6601 = vmul.f32 %v6600, %v6556
        %v6602 = vmul.f32 %v6601, %v6600
        %v6603 = vmul.f32 0.5, %v6602
        %v6604 = vsub.f32 1.5, %v6603
        %v6605 = vmul.f32 %v6600, %v6604
        %vm6606 = vweird.f32 %v6556
        %vm6607 = vweird.f32 %v6600
        %vm6608 = vmor %vm6606, %vm6607
        %v6609 = vsel %vm6608, %v6600, %v6605
        %v6610 = vrsqrt.pop %v6557
        %v6611 = vmul.f32 %v6610, %v6557
        %v6612 = vmul.f32 %v6611, %v6610
        %v6613 = vmul.f32 0.5, %v6612
        %v6614 = vsub.f32 1.5, %v6613
        %v6615 = vmul.f32 %v6610, %v6614
        %vm6616 = vweird.f32 %v6557
        %vm6617 = vweird.f32 %v6610
        %vm6618 = vmor %vm6616, %vm6617
        %v6619 = vsel %vm6618, %v6610, %v6615
        %v6620 = vrsqrt.pop %v6558
        %v6621 = vmul.f32 %v6620, %v6558
        %v6622 = vmul.f32 %v6621, %v6620
        %v6623 = vmul.f32 0.5, %v6622
        %v6624 = vsub.f32 1.5, %v6623
        %v6625 = vmul.f32 %v6620, %v6624
        %vm6626 = vweird.f32 %v6558
        %vm6627 = vweird.f32 %v6620
        %vm6628 = vmor %vm6626, %vm6627
        %v6629 = vsel %vm6628, %v6620, %v6625
        %v6630 = vrsqrt.pop %v6559
        %v6631 = vmul.f32 %v6630, %v6559
        %v6632 = vmul.f32 %v6631, %v6630
        %v6633 = vmul.f32 0.5, %v6632
        %v6634 = vsub.f32 1.5, %v6633
        %v6635 = vmul.f32 %v6630, %v6634
        %vm6636 = vweird.f32 %v6559
        %vm6637 = vweird.f32 %v6630
        %vm6638 = vmor %vm6636, %vm6637
        %v6639 = vsel %vm6638, %v6630, %v6635
        %v6640 = vmul.f32 %v6504, %v6569
        %v6641 = vmul.f32 %v6505, %v6579
        %v6642 = vmul.f32 %v6506, %v6589
        %v6643 = vmul.f32 %v6507, %v6599
        %v6644 = vmul.f32 %v6508, %v6609
        %v6645 = vmul.f32 %v6509, %v6619
        %v6646 = vmul.f32 %v6510, %v6629
        %v6647 = vmul.f32 %v6511, %v6639
        %v6649 = vperm.slane %v6469, 0
        %v6651 = vmul.f32 %v6640, %v6649
        %v6652 = vmul.f32 %v6641, %v6649
        %v6653 = vmul.f32 %v6642, %v6649
        %v6654 = vmul.f32 %v6643, %v6649
        %v6655 = vmul.f32 %v6644, %v6649
        %v6656 = vmul.f32 %v6645, %v6649
        %v6657 = vmul.f32 %v6646, %v6649
        %v6658 = vmul.f32 %v6647, %v6649
        %v6660 = vperm.slane %v6471, 0
        %v6662 = vadd.f32 %v6651, %v6660
        %v6663 = vadd.f32 %v6652, %v6660
        %v6664 = vadd.f32 %v6653, %v6660
        %v6665 = vadd.f32 %v6654, %v6660
        %v6666 = vadd.f32 %v6655, %v6660
        %v6667 = vadd.f32 %v6656, %v6660
        %v6668 = vadd.f32 %v6657, %v6660
        %v6669 = vadd.f32 %v6658, %v6660
        %s6670 = scalar_lea.vmem %s7, 128
        %v6671 = vld [vmem:[%s6670] sm:$0xff]
        %v6672 = vld [vmem:[%s6670 + $0x8] sm:$0xff]
        %v6673 = vld [vmem:[%s6670 + $0x10] sm:$0xff]
        %v6674 = vld [vmem:[%s6670 + $0x18] sm:$0xff]
        %v6675 = vld [vmem:[%s6670 + $0x20] sm:$0xff]
        %v6676 = vld [vmem:[%s6670 + $0x28] sm:$0xff]
        %v6677 = vld [vmem:[%s6670 + $0x30] sm:$0xff]
        %v6678 = vld [vmem:[%s6670 + $0x38] sm:$0xff]
        %s6679 = scalar_lea.vmem %s8, 2
        %v6680 = vld [vmem:[%s6679] sm:$0x1]
        %v6682 = vperm.slane %v6680, 0
        %v6685 = vsel %vm637, %v6662, 0
        %v6688 = vsel %vm637, %v6663, 0
        %v6691 = vsel %vm637, %v6664, 0
        %v6694 = vsel %vm637, %v6665, 0
        %v6697 = vsel %vm637, %v6666, 0
        %v6700 = vsel %vm637, %v6667, 0
        %v6703 = vsel %vm637, %v6668, 0
        %v6706 = vsel %vm637, %v6669, 0
        %6708 = vmatpush.msra.mxu0 0.0
        %6709 = vmatpush.msra.mxu0 0.0
        %6710 = vmatpush.msra.mxu0 0.0
        %6711 = vmatpush.msra.mxu0 0.0
        %6712 = vmatpush.msra.mxu0 0.0
        %6713 = vmatpush.msra.mxu0 0.0
        %6714 = vmatpush.msra.mxu0 0.0
        %6715 = vmatpush.msra.mxu0 0.0
        %6716 = vmatpush.msra.mxu0 %v6678
        %6717 = vmatpush.msra.mxu0 %v6677
        %6718 = vmatpush.msra.mxu0 %v6676
        %6719 = vmatpush.msra.mxu0 %v6675
        %6720 = vmatpush.msra.mxu0 %v6674
        %6721 = vmatpush.msra.mxu0 %v6673
        %6722 = vmatpush.msra.mxu0 %v6672
        %6723 = vmatpush.msra.mxu0 %v6671
        %6724 = vmatmul.f32.gmra.mxu0 %v6685
        %v6725 = vpop.f32.mrf.mxu0
        %v6726 = vadd.f32 %v6682, %v6725
        %6727 = vmatmul.f32.gmra.mxu0 %v6688
        %v6728 = vpop.f32.mrf.mxu0
        %v6729 = vadd.f32 %v6682, %v6728
        %6730 = vmatmul.f32.gmra.mxu0 %v6691
        %v6731 = vpop.f32.mrf.mxu0
        %v6732 = vadd.f32 %v6682, %v6731
        %6733 = vmatmul.f32.gmra.mxu0 %v6694
        %v6734 = vpop.f32.mrf.mxu0
        %v6735 = vadd.f32 %v6682, %v6734
        %6736 = vmatmul.f32.gmra.mxu0 %v6697
        %v6737 = vpop.f32.mrf.mxu0
        %v6738 = vadd.f32 %v6682, %v6737
        %6739 = vmatmul.f32.gmra.mxu0 %v6700
        %v6740 = vpop.f32.mrf.mxu0
        %v6741 = vadd.f32 %v6682, %v6740
        %6742 = vmatmul.f32.gmra.mxu0 %v6703
        %v6743 = vpop.f32.mrf.mxu0
        %v6744 = vadd.f32 %v6682, %v6743
        %6745 = vmatmul.f32.gmra.mxu0 %v6706
        %v6746 = vpop.f32.mrf.mxu0
        %v6747 = vadd.f32 %v6682, %v6746
        %6748 = vdwg.mxu0
        %v6749 = vmax.f32 %v6726, 0.0
        %v6750 = vmax.f32 %v6729, 0.0
        %v6751 = vmax.f32 %v6732, 0.0
        %v6752 = vmax.f32 %v6735, 0.0
        %v6753 = vmax.f32 %v6738, 0.0
        %v6754 = vmax.f32 %v6741, 0.0
        %v6755 = vmax.f32 %v6744, 0.0
        %v6756 = vmax.f32 %v6747, 0.0
        %s6757 = scalar_lea.vmem %s9, 256
        %v6758 = vld [vmem:[%s6757] sm:$0xff]
        %v6759 = vld [vmem:[%s6757 + $0x8] sm:$0xff]
        %v6760 = vld [vmem:[%s6757 + $0x10] sm:$0xff]
        %v6761 = vld [vmem:[%s6757 + $0x18] sm:$0xff]
        %v6762 = vld [vmem:[%s6757 + $0x20] sm:$0xff]
        %v6763 = vld [vmem:[%s6757 + $0x28] sm:$0xff]
        %v6764 = vld [vmem:[%s6757 + $0x30] sm:$0xff]
        %v6765 = vld [vmem:[%s6757 + $0x38] sm:$0xff]
        %v6766 = vld [vmem:[%s6757 + $0x40] sm:$0xff]
        %v6767 = vld [vmem:[%s6757 + $0x48] sm:$0xff]
        %v6768 = vld [vmem:[%s6757 + $0x50] sm:$0xff]
        %v6769 = vld [vmem:[%s6757 + $0x58] sm:$0xff]
        %v6770 = vld [vmem:[%s6757 + $0x60] sm:$0xff]
        %v6771 = vld [vmem:[%s6757 + $0x68] sm:$0xff]
        %v6772 = vld [vmem:[%s6757 + $0x70] sm:$0xff]
        %v6773 = vld [vmem:[%s6757 + $0x78] sm:$0xff]
        %s6774 = scalar_lea.vmem %s10, 2
        %v6775 = vld [vmem:[%s6774] sm:$0x1]
        %v6777 = vperm.slane %v6775, 0
        %6779 = vmatpush.msra.mxu0 %v6773
        %6780 = vmatpush.msra.mxu0 %v6772
        %6781 = vmatpush.msra.mxu0 %v6771
        %6782 = vmatpush.msra.mxu0 %v6770
        %6783 = vmatpush.msra.mxu0 %v6769
        %6784 = vmatpush.msra.mxu0 %v6768
        %6785 = vmatpush.msra.mxu0 %v6767
        %6786 = vmatpush.msra.mxu0 %v6766
        %6787 = vmatpush.msra.mxu0 %v6765
        %6788 = vmatpush.msra.mxu0 %v6764
        %6789 = vmatpush.msra.mxu0 %v6763
        %6790 = vmatpush.msra.mxu0 %v6762
        %6791 = vmatpush.msra.mxu0 %v6761
        %6792 = vmatpush.msra.mxu0 %v6760
        %6793 = vmatpush.msra.mxu0 %v6759
        %6794 = vmatpush.msra.mxu0 %v6758
        %6795 = vmatmul.f32.gmra.mxu0 %v6749
        %v6796 = vpop.f32.mrf.mxu0
        %v6797 = vadd.f32 %v6777, %v6796
        %6798 = vmatmul.f32.gmra.mxu0 %v6750
        %v6799 = vpop.f32.mrf.mxu0
        %v6800 = vadd.f32 %v6777, %v6799
        %6801 = vmatmul.f32.gmra.mxu0 %v6751
        %v6802 = vpop.f32.mrf.mxu0
        %v6803 = vadd.f32 %v6777, %v6802
        %6804 = vmatmul.f32.gmra.mxu0 %v6752
        %v6805 = vpop.f32.mrf.mxu0
        %v6806 = vadd.f32 %v6777, %v6805
        %6807 = vmatmul.f32.gmra.mxu0 %v6753
        %v6808 = vpop.f32.mrf.mxu0
        %v6809 = vadd.f32 %v6777, %v6808
        %6810 = vmatmul.f32.gmra.mxu0 %v6754
        %v6811 = vpop.f32.mrf.mxu0
        %v6812 = vadd.f32 %v6777, %v6811
        %6813 = vmatmul.f32.gmra.mxu0 %v6755
        %v6814 = vpop.f32.mrf.mxu0
        %v6815 = vadd.f32 %v6777, %v6814
        %6816 = vmatmul.f32.gmra.mxu0 %v6756
        %v6817 = vpop.f32.mrf.mxu0
        %v6818 = vadd.f32 %v6777, %v6817
        %6819 = vdwg.mxu0
        %v6820 = vadd.f32 %v6662, %v6797
        %v6821 = vadd.f32 %v6663, %v6800
        %v6822 = vadd.f32 %v6664, %v6803
        %v6823 = vadd.f32 %v6665, %v6806
        %v6824 = vadd.f32 %v6666, %v6809
        %v6825 = vadd.f32 %v6667, %v6812
        %v6826 = vadd.f32 %v6668, %v6815
        %v6827 = vadd.f32 %v6669, %v6818
        %s6828 = scalar_lea.vmem %s13, 2
        %v6829 = vld [vmem:[%s6828] sm:$0x1]
        %s6830 = scalar_lea.vmem %s14, 2
        %v6831 = vld [vmem:[%s6830] sm:$0x1]
        %v6832 = vsel %vm637, %v6820, 0.0
        %6833 = vadd.xlane.f32.xlu0 %v6832
        %v6834 = vpop.xlane.xlu0 %6833
        %v6835 = vsel %vm637, %v6821, 0.0
        %6836 = vadd.xlane.f32.xlu0 %v6835
        %v6837 = vpop.xlane.xlu0 %6836
        %v6838 = vsel %vm637, %v6822, 0.0
        %6839 = vadd.xlane.f32.xlu0 %v6838
        %v6840 = vpop.xlane.xlu0 %6839
        %v6841 = vsel %vm637, %v6823, 0.0
        %6842 = vadd.xlane.f32.xlu0 %v6841
        %v6843 = vpop.xlane.xlu0 %6842
        %v6844 = vsel %vm637, %v6824, 0.0
        %6845 = vadd.xlane.f32.xlu0 %v6844
        %v6846 = vpop.xlane.xlu0 %6845
        %v6847 = vsel %vm637, %v6825, 0.0
        %6848 = vadd.xlane.f32.xlu0 %v6847
        %v6849 = vpop.xlane.xlu0 %6848
        %v6850 = vsel %vm637, %v6826, 0.0
        %6851 = vadd.xlane.f32.xlu0 %v6850
        %v6852 = vpop.xlane.xlu0 %6851
        %v6853 = vsel %vm637, %v6827, 0.0
        %6854 = vadd.xlane.f32.xlu0 %v6853
        %v6855 = vpop.xlane.xlu0 %6854
        %v6856 = vmul.f32 %v6834, %v2291
        %v6857 = vmul.f32 %v6837, %v2291
        %v6858 = vmul.f32 %v6840, %v2291
        %v6859 = vmul.f32 %v6843, %v2291
        %v6860 = vmul.f32 %v6846, %v2291
        %v6861 = vmul.f32 %v6849, %v2291
        %v6862 = vmul.f32 %v6852, %v2291
        %v6863 = vmul.f32 %v6855, %v2291
        %v6864 = vsub.f32 %v6820, %v6856
        %v6865 = vsub.f32 %v6821, %v6857
        %v6866 = vsub.f32 %v6822, %v6858
        %v6867 = vsub.f32 %v6823, %v6859
        %v6868 = vsub.f32 %v6824, %v6860
        %v6869 = vsub.f32 %v6825, %v6861
        %v6870 = vsub.f32 %v6826, %v6862
        %v6871 = vsub.f32 %v6827, %v6863
        %v6872 = vmul.f32 %v6864, %v6864
        %v6873 = vmul.f32 %v6865, %v6865
        %v6874 = vmul.f32 %v6866, %v6866
        %v6875 = vmul.f32 %v6867, %v6867
        %v6876 = vmul.f32 %v6868, %v6868
        %v6877 = vmul.f32 %v6869, %v6869
        %v6878 = vmul.f32 %v6870, %v6870
        %v6879 = vmul.f32 %v6871, %v6871
        %v6880 = vsel %vm637, %v6872, 0.0
        %6881 = vadd.xlane.f32.xlu0 %v6880
        %v6882 = vpop.xlane.xlu0 %6881
        %v6883 = vsel %vm637, %v6873, 0.0
        %6884 = vadd.xlane.f32.xlu0 %v6883
        %v6885 = vpop.xlane.xlu0 %6884
        %v6886 = vsel %vm637, %v6874, 0.0
        %6887 = vadd.xlane.f32.xlu0 %v6886
        %v6888 = vpop.xlane.xlu0 %6887
        %v6889 = vsel %vm637, %v6875, 0.0
        %6890 = vadd.xlane.f32.xlu0 %v6889
        %v6891 = vpop.xlane.xlu0 %6890
        %v6892 = vsel %vm637, %v6876, 0.0
        %6893 = vadd.xlane.f32.xlu0 %v6892
        %v6894 = vpop.xlane.xlu0 %6893
        %v6895 = vsel %vm637, %v6877, 0.0
        %6896 = vadd.xlane.f32.xlu0 %v6895
        %v6897 = vpop.xlane.xlu0 %6896
        %v6898 = vsel %vm637, %v6878, 0.0
        %6899 = vadd.xlane.f32.xlu0 %v6898
        %v6900 = vpop.xlane.xlu0 %6899
        %v6901 = vsel %vm637, %v6879, 0.0
        %6902 = vadd.xlane.f32.xlu0 %v6901
        %v6903 = vpop.xlane.xlu0 %6902
        %v6904 = vmul.f32 %v6882, %v2291
        %v6905 = vmul.f32 %v6885, %v2291
        %v6906 = vmul.f32 %v6888, %v2291
        %v6907 = vmul.f32 %v6891, %v2291
        %v6908 = vmul.f32 %v6894, %v2291
        %v6909 = vmul.f32 %v6897, %v2291
        %v6910 = vmul.f32 %v6900, %v2291
        %v6911 = vmul.f32 %v6903, %v2291
        %v6912 = vadd.f32 %v6904, 1e-05
        %v6913 = vadd.f32 %v6905, 1e-05
        %v6914 = vadd.f32 %v6906, 1e-05
        %v6915 = vadd.f32 %v6907, 1e-05
        %v6916 = vadd.f32 %v6908, 1e-05
        %v6917 = vadd.f32 %v6909, 1e-05
        %v6918 = vadd.f32 %v6910, 1e-05
        %v6919 = vadd.f32 %v6911, 1e-05
        %v6920 = vrsqrt.pop %v6912
        %v6921 = vmul.f32 %v6920, %v6912
        %v6922 = vmul.f32 %v6921, %v6920
        %v6923 = vmul.f32 0.5, %v6922
        %v6924 = vsub.f32 1.5, %v6923
        %v6925 = vmul.f32 %v6920, %v6924
        %vm6926 = vweird.f32 %v6912
        %vm6927 = vweird.f32 %v6920
        %vm6928 = vmor %vm6926, %vm6927
        %v6929 = vsel %vm6928, %v6920, %v6925
        %v6930 = vrsqrt.pop %v6913
        %v6931 = vmul.f32 %v6930, %v6913
        %v6932 = vmul.f32 %v6931, %v6930
        %v6933 = vmul.f32 0.5, %v6932
        %v6934 = vsub.f32 1.5, %v6933
        %v6935 = vmul.f32 %v6930, %v6934
        %vm6936 = vweird.f32 %v6913
        %vm6937 = vweird.f32 %v6930
        %vm6938 = vmor %vm6936, %vm6937
        %v6939 = vsel %vm6938, %v6930, %v6935
        %v6940 = vrsqrt.pop %v6914
        %v6941 = vmul.f32 %v6940, %v6914
        %v6942 = vmul.f32 %v6941, %v6940
        %v6943 = vmul.f32 0.5, %v6942
        %v6944 = vsub.f32 1.5, %v6943
        %v6945 = vmul.f32 %v6940, %v6944
        %vm6946 = vweird.f32 %v6914
        %vm6947 = vweird.f32 %v6940
        %vm6948 = vmor %vm6946, %vm6947
        %v6949 = vsel %vm6948, %v6940, %v6945
        %v6950 = vrsqrt.pop %v6915
        %v6951 = vmul.f32 %v6950, %v6915
        %v6952 = vmul.f32 %v6951, %v6950
        %v6953 = vmul.f32 0.5, %v6952
        %v6954 = vsub.f32 1.5, %v6953
        %v6955 = vmul.f32 %v6950, %v6954
        %vm6956 = vweird.f32 %v6915
        %vm6957 = vweird.f32 %v6950
        %vm6958 = vmor %vm6956, %vm6957
        %v6959 = vsel %vm6958, %v6950, %v6955
        %v6960 = vrsqrt.pop %v6916
        %v6961 = vmul.f32 %v6960, %v6916
        %v6962 = vmul.f32 %v6961, %v6960
        %v6963 = vmul.f32 0.5, %v6962
        %v6964 = vsub.f32 1.5, %v6963
        %v6965 = vmul.f32 %v6960, %v6964
        %vm6966 = vweird.f32 %v6916
        %vm6967 = vweird.f32 %v6960
        %vm6968 = vmor %vm6966, %vm6967
        %v6969 = vsel %vm6968, %v6960, %v6965
        %v6970 = vrsqrt.pop %v6917
        %v6971 = vmul.f32 %v6970, %v6917
        %v6972 = vmul.f32 %v6971, %v6970
        %v6973 = vmul.f32 0.5, %v6972
        %v6974 = vsub.f32 1.5, %v6973
        %v6975 = vmul.f32 %v6970, %v6974
        %vm6976 = vweird.f32 %v6917
        %vm6977 = vweird.f32 %v6970
        %vm6978 = vmor %vm6976, %vm6977
        %v6979 = vsel %vm6978, %v6970, %v6975
        %v6980 = vrsqrt.pop %v6918
        %v6981 = vmul.f32 %v6980, %v6918
        %v6982 = vmul.f32 %v6981, %v6980
        %v6983 = vmul.f32 0.5, %v6982
        %v6984 = vsub.f32 1.5, %v6983
        %v6985 = vmul.f32 %v6980, %v6984
        %vm6986 = vweird.f32 %v6918
        %vm6987 = vweird.f32 %v6980
        %vm6988 = vmor %vm6986, %vm6987
        %v6989 = vsel %vm6988, %v6980, %v6985
        %v6990 = vrsqrt.pop %v6919
        %v6991 = vmul.f32 %v6990, %v6919
        %v6992 = vmul.f32 %v6991, %v6990
        %v6993 = vmul.f32 0.5, %v6992
        %v6994 = vsub.f32 1.5, %v6993
        %v6995 = vmul.f32 %v6990, %v6994
        %vm6996 = vweird.f32 %v6919
        %vm6997 = vweird.f32 %v6990
        %vm6998 = vmor %vm6996, %vm6997
        %v6999 = vsel %vm6998, %v6990, %v6995
        %v7000 = vmul.f32 %v6864, %v6929
        %v7001 = vmul.f32 %v6865, %v6939
        %v7002 = vmul.f32 %v6866, %v6949
        %v7003 = vmul.f32 %v6867, %v6959
        %v7004 = vmul.f32 %v6868, %v6969
        %v7005 = vmul.f32 %v6869, %v6979
        %v7006 = vmul.f32 %v6870, %v6989
        %v7007 = vmul.f32 %v6871, %v6999
        %v7009 = vperm.slane %v6829, 0
        %v7011 = vmul.f32 %v7000, %v7009
        %v7012 = vmul.f32 %v7001, %v7009
        %v7013 = vmul.f32 %v7002, %v7009
        %v7014 = vmul.f32 %v7003, %v7009
        %v7015 = vmul.f32 %v7004, %v7009
        %v7016 = vmul.f32 %v7005, %v7009
        %v7017 = vmul.f32 %v7006, %v7009
        %v7018 = vmul.f32 %v7007, %v7009
        %v7020 = vperm.slane %v6831, 0
        %v7022 = vadd.f32 %v7011, %v7020
        %v7023 = vadd.f32 %v7012, %v7020
        %v7024 = vadd.f32 %v7013, %v7020
        %v7025 = vadd.f32 %v7014, %v7020
        %v7026 = vadd.f32 %v7015, %v7020
        %v7027 = vadd.f32 %v7016, %v7020
        %v7028 = vadd.f32 %v7017, %v7020
        %v7029 = vadd.f32 %v7018, %v7020
        %7030 = vst.msk [vmem:[#allocation2] sm:$0xff] %vm637, %v7022
        %7031 = vst.msk [vmem:[#allocation2 + $0x8] sm:$0xff] %vm637, %v7023
        %7032 = vst.msk [vmem:[#allocation2 + $0x10] sm:$0xff] %vm637, %v7024
        %7033 = vst.msk [vmem:[#allocation2 + $0x18] sm:$0xff] %vm637, %v7025
        %7034 = vst.msk [vmem:[#allocation2 + $0x20] sm:$0xff] %vm637, %v7026
        %7035 = vst.msk [vmem:[#allocation2 + $0x28] sm:$0xff] %vm637, %v7027
        %7036 = vst.msk [vmem:[#allocation2 + $0x30] sm:$0xff] %vm637, %v7028
        %7037 = vst.msk [vmem:[#allocation2 + $0x38] sm:$0xff] %vm637, %v7029
        %v7038 = vld [vmem:[%s15] sm:$0xf]
        %v7039 = vld [vmem:[#allocation2] sm:$0xff]
        %v7040 = vld [vmem:[#allocation2 + $0x8] sm:$0xff]
        %v7041 = vld [vmem:[#allocation2 + $0x10] sm:$0xff]
        %v7042 = vld [vmem:[#allocation2 + $0x18] sm:$0xff]
        %v7043 = vld [vmem:[#allocation2 + $0x20] sm:$0xff]
        %v7044 = vld [vmem:[#allocation2 + $0x28] sm:$0xff]
        %v7045 = vld [vmem:[#allocation2 + $0x30] sm:$0xff]
        %v7046 = vld [vmem:[#allocation2 + $0x38] sm:$0xff]
        %v7048 = vsel %vm637, %v7038, 0
        %7050 = vmatpush.msra.mxu0 0.0
        %7051 = vmatpush.msra.mxu0 0.0
        %7052 = vmatpush.msra.mxu0 0.0
        %7053 = vmatpush.msra.mxu0 0.0
        %7054 = vmatpush.msra.mxu0 0.0
        %7055 = vmatpush.msra.mxu0 0.0
        %7056 = vmatpush.msra.mxu0 0.0
        %7057 = vmatpush.msra.mxu0 0.0
        %7058 = vmatpush.msra.mxu0 %v7046
        %7059 = vmatpush.msra.mxu0 %v7045
        %7060 = vmatpush.msra.mxu0 %v7044
        %7061 = vmatpush.msra.mxu0 %v7043
        %7062 = vmatpush.msra.mxu0 %v7042
        %7063 = vmatpush.msra.mxu0 %v7041
        %7064 = vmatpush.msra.mxu0 %v7040
        %7065 = vmatpush.msra.mxu0 %v7039
        %7066 = vmatmul.f32.gmra.mxu0 %v7048
        %v7067 = vpop.f32.mrf.mxu0
        %v7068 = vadd.f32 0.0, %v7067
        %7069 = vdwg.mxu0
        %v7070 = vld [vmem:[%s16] sm:$0xff]
        %v7071 = vld [vmem:[%s16 + $0x8] sm:$0xff]
        %v7072 = vld [vmem:[%s16 + $0x10] sm:$0xff]
        %v7073 = vld [vmem:[%s16 + $0x18] sm:$0xff]
        %v7074 = vld [vmem:[%s16 + $0x20] sm:$0xff]
        %v7075 = vld [vmem:[%s16 + $0x28] sm:$0xff]
        %v7076 = vld [vmem:[%s16 + $0x30] sm:$0xff]
        %v7077 = vld [vmem:[%s16 + $0x38] sm:$0xff]
        %v7078 = vld [vmem:[%s17] sm:$0x1]
        %v7080 = vperm.slane %v7078, 0
        %v7083 = vsel %vm637, %v7068, 0
        %7085 = vmatpush.msra.mxu0 0.0
        %7086 = vmatpush.msra.mxu0 0.0
        %7087 = vmatpush.msra.mxu0 0.0
        %7088 = vmatpush.msra.mxu0 0.0
        %7089 = vmatpush.msra.mxu0 0.0
        %7090 = vmatpush.msra.mxu0 0.0
        %7091 = vmatpush.msra.mxu0 0.0
        %7092 = vmatpush.msra.mxu0 0.0
        %7093 = vmatpush.msra.mxu0 %v7077
        %7094 = vmatpush.msra.mxu0 %v7076
        %7095 = vmatpush.msra.mxu0 %v7075
        %7096 = vmatpush.msra.mxu0 %v7074
        %7097 = vmatpush.msra.mxu0 %v7073
        %7098 = vmatpush.msra.mxu0 %v7072
        %7099 = vmatpush.msra.mxu0 %v7071
        %7100 = vmatpush.msra.mxu0 %v7070
        %7101 = vmatmul.f32.gmra.mxu0 %v7083
        %v7102 = vpop.f32.mrf.mxu0
        %v7103 = vadd.f32 %v7080, %v7102
        %7104 = vdwg.mxu0
        %vm7105 = vcmask 93184
        %7106 = vst.msk [vmem:[%s568] sm:$0xf] %vm7105, %v7103
        %s7107 = sand.u32 %s423, 1
        %s7108 = scalar_lea.sflag [#allocation6], %s7107
        %s7109 = sand.u32 %s423, 1
        %s7110 = smul.addr %s7109, 4
        %s7111 = scalar_lea.vmem [#allocation5], %s7110
        // Predicated region
        $region93: #{transformer_time_model.1} parent=91 // pred_check
          %p7112 = pneg %p433
        $region94: #{transformer_time_model.1} parent=91 // pred_check_branch
          %7114 = sbr.rel (%p7112) target = $region96
        $region95: #{transformer_time_model.1} parent=91 // pred_region
          %7116 = vsyncadd %s7108, 0
          %s7117 = smul.addr %s32, 4
          %s7118 = scalar_lea.hbm %s18, %s7117
          %s7120 = sshll.u32 %s7111, 4
          %s7121 = int_to_ptr.vmem [resolvable:$true] %s7120
          %s7122 = sshll.u32 %s7118, 4
          %s7123 = int_to_ptr.hbm [resolvable:$true] %s7122
          %7125 = dma.vmem_to_hbm [thread:$0]  %s7121, 64, %s7123, %s7108
        $region96: #{transformer_time_model.1} parent=91 // pred_fallthru
          _
      $region92: #{transformer_time_model.1} parent=5 // pred_fallthru
        _
      %p7126 = scmp.le.s32.totalorder 2, %s27
      // Predicated region
      $region97: #{transformer_time_model.1} parent=5 // pred_check
        %p7127 = pneg %p7126
      $region98: #{transformer_time_model.1} parent=5 // pred_check_branch
        %7129 = sbr.rel (%p7127) target = $region100
      $region99: #{transformer_time_model.1} parent=5 // pred_region
        %s7130 = ssub.s32 %s27, 2
        // Predicated region
        $region101: #{transformer_time_model.1} parent=99 // pred_check
          %p7131 = pneg %p439
        $region102: #{transformer_time_model.1} parent=99 // pred_check_branch
          %7133 = sbr.rel (%p7131) target = $region104
        $region103: #{transformer_time_model.1} parent=99 // pred_region
          %s7134 = sand.u32 %s424, 1
          %s7135 = scalar_lea.sflag [#allocation6], %s7134
          %s7136 = sand.u32 %s424, 1
          %s7137 = smul.addr %s7136, 4
          %s7138 = scalar_lea.vmem [#allocation5], %s7137
          %7140 = dma.done %s7135, 64
        $region104: #{transformer_time_model.1} parent=99 // pred_fallthru
          _
      $region100: #{transformer_time_model.1} parent=5 // pred_fallthru
        _
    $region6: #{transformer_time_model.1} parent=1 // loop_footer
      %s31 = sadd.s32 1, %s27
    $region7: #{transformer_time_model.1} parent=1 // loop_footer_branch
      %26 = sbr.rel target = $region3
    $region8: #{transformer_time_model.1} parent=1 // loop_exit
      _
    %7141 = vsyncpa [#allocation6], 1
    %s7142 = scalar_lea.sflag [#allocation6], 1
    %7143 = vsyncpa %s7142, 1

</llo_original>
